<compile_context>
chip_gen: v7x
topology: tpu7x:2x2x1
jax: 0.10.0
libtpu: 0.0.40
codegen_flags: <defaults>
</compile_context>

<pallas_src>
import functools

import jax
import jax.numpy as jnp
from jax import lax
from jax.experimental import pallas as pl
from jax.experimental.pallas import tpu as pltpu

EPS = 1e-5
# Scoped-VMEM budget: at/below the v6e/v7x defaults and far below every chip's
# physical VMEM (64 MiB on v7x); the per-step blocks here are << 1 MiB.
_VMEM_LIMIT_BYTES = 32 * 1024 * 1024


def _bn_stats_kernel(x_ref, s_ref):
    """One-pass per-channel sum / sum-of-squares, accumulated over the batch grid.

    x_ref: (Cin, H*W) f32   one image's channels (lane-dense)
    s_ref: (Cin, 2)   f32   col 0 = sum, col 1 = sum of squares (grid-resident)
    """
    @pl.when(pl.program_id(0) == 0)
    def _init():
        s_ref[...] = jnp.zeros_like(s_ref)

    x = x_ref[...]
    ssum = jnp.sum(x, axis=1, keepdims=True)       # (Cin, 1)
    ssq = jnp.sum(x * x, axis=1, keepdims=True)    # (Cin, 1)
    s_ref[...] += jnp.concatenate([ssum, ssq], axis=1)


def _bn_relu_conv_kernel(x_ref, scale_ref, shift_ref, w_ref, b_ref, y_ref, *,
                         H, W, use_im2col):
    """Fused BN (precomputed affine) -> ReLU -> Conv2d(3x3, pad=1) for one image.

    x_ref:     (Cin, H*W)       input channels (lane-dense)
    scale_ref: (Cin, 1)         gamma / sqrt(var + eps)
    shift_ref: (Cin, 1)         beta - mean * scale
    w_ref:     (Cout, 9*Cin)    if use_im2col (k = (3*dy+dx)*Cin + ci)
               (9, Cout, Cin)   otherwise (tap-major)
    b_ref:     (Cout, 1)        conv bias
    y_ref:     (Cout, H*W)      output slice (lane-dense store)
    """
    hw = H * W
    x = x_ref[...]                                   # (Cin, HW) f32
    cin = x.shape[0]
    cout = y_ref.shape[0]

    # BatchNorm (per-channel affine) + ReLU in f32.
    a = jnp.maximum(x * scale_ref[...] + shift_ref[...], 0.0)

    # Zero-pad H and W by 1 in value space (no scratch-ref round trip).
    a = a.reshape(cin, H, W)
    zrow = jnp.zeros((cin, 1, W), jnp.float32)
    a = jnp.concatenate([zrow, a, zrow], axis=1)     # (Cin, H+2, W)
    zcol = jnp.zeros((cin, H + 2, 1), jnp.float32)
    a = jnp.concatenate([zcol, a, zcol], axis=2)     # (Cin, H+2, W+2)

    # 9 shifted taps in (dy, dx) order; cast to bf16 only at the MXU boundary.
    taps = [a[:, dy:dy + H, dx:dx + W].reshape(cin, hw)
            for dy in range(3) for dx in range(3)]

    if use_im2col:
        # Small Cin: a single matmul with K = 9*Cin keeps the MXU pass count low.
        pmat = jnp.concatenate(taps, axis=0).astype(jnp.bfloat16)   # (9*Cin, HW)
        out = jnp.dot(w_ref[...].astype(jnp.bfloat16), pmat,
                      preferred_element_type=jnp.float32)
    else:
        # Large Cin: 9 accumulated K=Cin matmuls, no im2col materialization.
        out = jnp.zeros((cout, hw), jnp.float32)
        for t in range(9):
            out = out + jnp.dot(w_ref[t].astype(jnp.bfloat16),
                                taps[t].astype(jnp.bfloat16),
                                preferred_element_type=jnp.float32)

    y_ref[...] = out + b_ref[...]                    # (Cout, HW) f32, lane-dense


def _bn_scale_shift(x_arr, cin, gamma, beta, *, hw):
    """Training-mode BN per-channel scale/shift from the one-pass stats kernel."""
    n = x_arr.shape[0]
    stats = pl.pallas_call(
        _bn_stats_kernel,
        out_shape=jax.ShapeDtypeStruct((cin, 2), jnp.float32),
        grid=(n,),
        in_specs=[pl.BlockSpec((None, cin, hw), lambda i: (i, 0, 0))],
        out_specs=pl.BlockSpec((cin, 2), lambda i: (0, 0)),
        compiler_params=pltpu.CompilerParams(
            dimension_semantics=("arbitrary",),
            vmem_limit_bytes=_VMEM_LIMIT_BYTES),
    )(x_arr)
    count = float(n * hw)
    mean = stats[:, 0] / count
    var = jnp.maximum(stats[:, 1] / count - mean * mean, 0.0)   # biased variance
    scale = gamma * lax.rsqrt(var + EPS)
    shift = beta - mean * scale
    return scale.reshape(cin, 1), shift.reshape(cin, 1)


def _conv_block_call(x_arr, cin, scale, shift, w, b, *, H, W,
                     out_shape, out_c_block, alias_input):
    """One conv_block (BN -> ReLU -> 3x3 conv). Writes a (Cout, H*W) slice per image.

    x_arr:       (N, C, H*W) slab (or standalone input); channels [0, cin) are read.
    out_shape:   full output array shape (aliased slab, or (N, Cout, H*W)).
    out_c_block: output channel block index (units of Cout).
    alias_input: write in place into x_arr's buffer (dense-concat fusion).
    """
    # TODO(synk): for larger H*W, add an H-row-strip grid axis with a 1-row halo.
    n = x_arr.shape[0]
    hw = H * W
    cout = w.shape[0]
    use_im2col = cin < 128
    if use_im2col:   # (Cout, 9*Cin), k = (3*dy+dx)*Cin + ci
        wk = jnp.transpose(w, (0, 2, 3, 1)).reshape(cout, 9 * cin)
    else:            # (9, Cout, Cin), tap-major
        wk = jnp.transpose(w, (2, 3, 0, 1)).reshape(9, cout, cin)

    kernel = functools.partial(_bn_relu_conv_kernel, H=H, W=W,
                               use_im2col=use_im2col)
    return pl.pallas_call(
        kernel,
        out_shape=jax.ShapeDtypeStruct(out_shape, jnp.float32),
        grid=(n,),
        in_specs=[
            pl.BlockSpec((None, cin, hw), lambda i: (i, 0, 0)),
            pl.BlockSpec((cin, 1), lambda i: (0, 0)),
            pl.BlockSpec((cin, 1), lambda i: (0, 0)),
            pl.BlockSpec(wk.shape, lambda i: (0,) * wk.ndim),
            pl.BlockSpec((cout, 1), lambda i: (0, 0)),
        ],
        out_specs=pl.BlockSpec((None, cout, hw),
                               lambda i: (i, out_c_block, 0)),
        input_output_aliases=({0: 0} if alias_input else {}),
        compiler_params=pltpu.CompilerParams(
            dimension_semantics=("parallel",),   # megacore split over batch (v7x)
            vmem_limit_bytes=_VMEM_LIMIT_BYTES),
    )(x_arr, scale, shift, wk, b.reshape(cout, 1))


def dense_block_forward(x_nchw, params):
    """DenseBlock.forward: X = cat(X, blk(X)) over all conv_blocks. NCHW in/out."""
    if not params:
        return x_nchw
    n, c0, H, W = x_nchw.shape
    hw = H * W
    cout = params[0][2].shape[0]
    c_total = c0 + len(params) * cout

    # Fused path: one preallocated (N, C_total, H*W) slab; every layer reads its
    # input channels from it and writes its Cout slice in place (aliased output),
    # so the dense concat never re-copies the growing tensor through HBM.
    if c0 % cout == 0 and cout % 8 == 0:
        slab = jnp.concatenate(
            [x_nchw.astype(jnp.float32).reshape(n, c0, hw),
             jnp.zeros((n, c_total - c0, hw), jnp.float32)], axis=1)
        cin = c0
        for gamma, beta, w, b in params:
            scale, shift = _bn_scale_shift(slab, cin, gamma, beta, hw=hw)
            slab = _conv_block_call(slab, cin, scale, shift, w, b, H=H, W=W,
                                    out_shape=slab.shape,
                                    out_c_block=cin // cout,
                                    alias_input=True)
            cin += cout
        return slab.reshape(n, c_total, H, W)

    # TODO(synk): channel counts that are not multiples of 8 (f32 sublane tile)
    # fall back to per-layer outputs plus a wrapper-side concatenation.
    x = x_nchw.astype(jnp.float32).reshape(n, c0, hw)
    for gamma, beta, w, b in params:
        cin = x.shape[1]
        co = w.shape[0]
        scale, shift = _bn_scale_shift(x, cin, gamma, beta, hw=hw)
        y = _conv_block_call(x, cin, scale, shift, w, b, H=H, W=W,
                             out_shape=(n, co, hw), out_c_block=0,
                             alias_input=False)
        x = jnp.concatenate([x, y], axis=1)
    return x.reshape(n, x.shape[1], H, W)


def init_dense_block_params(key, num_convs, input_channels, num_channels):
    """Deterministic parameter init matching the PyTorch module's shapes."""
    params = []
    for i in range(num_convs):
        cin = num_channels * i + input_channels
        key, k_w, k_b, k_g, k_bt = jax.random.split(key, 5)
        w = jax.random.normal(k_w, (num_channels, cin, 3, 3), jnp.float32) * 0.1
        b = jax.random.normal(k_b, (num_channels,), jnp.float32) * 0.1
        gamma = 1.0 + 0.1 * jax.random.normal(k_g, (cin,), jnp.float32)
        beta = 0.1 * jax.random.normal(k_bt, (cin,), jnp.float32)
        params.append((gamma, beta, w, b))
    return params


def _reference_forward(x, params):
    """Pure-JAX reference (BN training mode -> ReLU -> conv3x3 pad=1, dense concat)."""
    for gamma, beta, w, b in params:
        mean = jnp.mean(x, axis=(0, 2, 3), keepdims=True)
        var = jnp.mean((x - mean) ** 2, axis=(0, 2, 3), keepdims=True)
        a = (x - mean) * (gamma.reshape(1, -1, 1, 1) * lax.rsqrt(var + EPS))
        a = jnp.maximum(a + beta.reshape(1, -1, 1, 1), 0.0)
        y = lax.conv_general_dilated(
            a, w, window_strides=(1, 1), padding=((1, 1), (1, 1)),
            dimension_numbers=("NCHW", "OIHW", "NCHW"))
        y = y + b.reshape(1, -1, 1, 1)
        x = jnp.concatenate([x, y], axis=1)
    return x


if __name__ == "__main__":
    num_convs = 2
    # Channel counts chosen as multiples of 8 (f32 sublane tile) so the fused
    # in-place-slab path is exercised; other configs use the fallback path.
    input_channels = 8
    num_channels = 8
    N, H, W = 2, 16, 16

    key = jax.random.PRNGKey(0)
    key, kx = jax.random.split(key)
    x = jax.random.normal(kx, (N, input_channels, H, W), jnp.float32)
    params = init_dense_block_params(key, num_convs, input_channels, num_channels)

    fwd = jax.jit(dense_block_forward)
    out = jax.block_until_ready(fwd(x, params))

    expected_c = input_channels + num_convs * num_channels
    assert out.shape == (N, expected_c, H, W), out.shape

    ref = _reference_forward(x, params)
    err = float(jnp.max(jnp.abs(out - ref)))
    assert err < 1e-1, f"max abs error vs reference: {err}"
    print("KERNEL_OK")
</pallas_src>

<mosaic_0001>
module attributes {stable_mosaic.version = 11 : i64} {
  func.func @_bn_stats_kernel(%arg0: i32, %arg1: memref<1x8x256xf32, #tpu.memory_space<vmem>>, %arg2: memref<8x2xf32, #tpu.memory_space<vmem>>) attributes {dimension_semantics = [#tpu.dimension_semantics<arbitrary>], iteration_bounds = array<i64: 2>, scalar_prefetch = 0 : i64, scratch_operands = 0 : i64, tpu.core_type = #tpu.core_type<tc>, window_params = [{transform_indices = @transform_0, window_bounds = array<i64: 1, 8, 256>}, {pipeline_mode = #tpu.pipeline_mode<synchronous>, transform_indices = @transform_1, window_bounds = array<i64: 8, 2>}]} {
    %c0_i32 = arith.constant 0 : i32
    %0 = arith.cmpi eq, %arg0, %c0_i32 : i32
    %1 = arith.extui %0 : i1 to i32
    %c0_i32_0 = arith.constant 0 : i32
    %2 = arith.cmpi ne, %1, %c0_i32_0 : i32
    scf.if %2 {
      %cst_8 = arith.constant 0.000000e+00 : f32
      %14 = vector.broadcast %cst_8 : f32 to vector<8x2xf32>
      %c0_9 = arith.constant 0 : index
      %c0_10 = arith.constant 0 : index
      %15 = vector.load %arg2[%c0_9, %c0_10] : memref<8x2xf32, #tpu.memory_space<vmem>>, vector<8x2xf32>
      tpu.vector_store %arg2[%c0_9, %c0_10], %14 {strides = array<i32>} : memref<8x2xf32, #tpu.memory_space<vmem>>, vector<8x2xf32>,
    } else {
    }
    %c0 = arith.constant 0 : index
    %c0_1 = arith.constant 0 : index
    %c0_2 = arith.constant 0 : index
    %3 = vector.load %arg1[%c0, %c0_1, %c0_2] : memref<1x8x256xf32, #tpu.memory_space<vmem>>, vector<1x8x256xf32>
    %4 = vector.shape_cast %3 : vector<1x8x256xf32> to vector<8x256xf32>
    %cst = arith.constant dense<0.000000e+00> : vector<8xf32>
    %5 = vector.multi_reduction <add>, %4, %cst [1] : vector<8x256xf32> to vector<8xf32>
    %6 = vector.shape_cast %5 : vector<8xf32> to vector<8x1xf32>
    %7 = arith.mulf %4, %4 : vector<8x256xf32>
    %cst_3 = arith.constant dense<0.000000e+00> : vector<8xf32>
    %8 = vector.multi_reduction <add>, %7, %cst_3 [1] : vector<8x256xf32> to vector<8xf32>
    %9 = vector.shape_cast %8 : vector<8xf32> to vector<8x1xf32>
    %c0_4 = arith.constant 0 : index
    %c0_5 = arith.constant 0 : index
    %10 = vector.load %arg2[%c0_4, %c0_5] : memref<8x2xf32, #tpu.memory_space<vmem>>, vector<8x2xf32>
    %11 = tpu.concatenate %6, %9 in 1 : vector<8x1xf32>, vector<8x1xf32> -> vector<8x2xf32>
    %12 = arith.addf %10, %11 : vector<8x2xf32>
    %c0_6 = arith.constant 0 : index
    %c0_7 = arith.constant 0 : index
    %13 = vector.load %arg2[%c0_6, %c0_7] : memref<8x2xf32, #tpu.memory_space<vmem>>, vector<8x2xf32>
    tpu.vector_store %arg2[%c0_6, %c0_7], %12 {strides = array<i32>} : memref<8x2xf32, #tpu.memory_space<vmem>>, vector<8x2xf32>,
    return
  }
  func.func @transform_0(%arg0: i32) -> (i32, i32, i32) {
    %c0_i32 = arith.constant 0 : i32
    %c0_i32_0 = arith.constant 0 : i32
    %c0_i32_1 = arith.constant 0 : i32
    return %arg0, %c0_i32, %c0_i32_0 : i32, i32, i32
  }
  func.func @transform_1(%arg0: i32) -> (i32, i32) {
    %c0_i32 = arith.constant 0 : i32
    %c0_i32_0 = arith.constant 0 : i32
    %c0_i32_1 = arith.constant 0 : i32
    return %c0_i32, %c0_i32_0 : i32, i32
  }
}

module attributes {stable_mosaic.version = 11 : i64} {
  func.func @_bn_relu_conv_kernel(%arg0: i32, %arg1: memref<1x8x256xf32, #tpu.memory_space<vmem>>, %arg2: memref<8x1xf32, #tpu.memory_space<vmem>>, %arg3: memref<8x1xf32, #tpu.memory_space<vmem>>, %arg4: memref<8x72xf32, #tpu.memory_space<vmem>>, %arg5: memref<8x1xf32, #tpu.memory_space<vmem>>, %arg6: memref<1x8x256xf32, #tpu.memory_space<vmem>>) attributes {dimension_semantics = [#tpu.dimension_semantics<parallel>], iteration_bounds = array<i64: 2>, scalar_prefetch = 0 : i64, scratch_operands = 0 : i64, tpu.core_type = #tpu.core_type<tc>, window_params = [{transform_indices = @transform_0, window_bounds = array<i64: 1, 8, 256>}, {pipeline_mode = #tpu.pipeline_mode<synchronous>, transform_indices = @transform_1, window_bounds = array<i64: 8, 1>}, {pipeline_mode = #tpu.pipeline_mode<synchronous>, transform_indices = @transform_2, window_bounds = array<i64: 8, 1>}, {pipeline_mode = #tpu.pipeline_mode<synchronous>, transform_indices = @transform_3, window_bounds = array<i64: 8, 72>}, {pipeline_mode = #tpu.pipeline_mode<synchronous>, transform_indices = @transform_4, window_bounds = array<i64: 8, 1>}, {transform_indices = @transform_5, window_bounds = array<i64: 1, 8, 256>}]} {
    %c0 = arith.constant 0 : index
    %c0_0 = arith.constant 0 : index
    %c0_1 = arith.constant 0 : index
    %0 = vector.load %arg1[%c0, %c0_0, %c0_1] : memref<1x8x256xf32, #tpu.memory_space<vmem>>, vector<1x8x256xf32>
    %1 = vector.shape_cast %0 : vector<1x8x256xf32> to vector<8x256xf32>
    %c0_2 = arith.constant 0 : index
    %c0_3 = arith.constant 0 : index
    %2 = vector.load %arg2[%c0_2, %c0_3] : memref<8x1xf32, #tpu.memory_space<vmem>>, vector<8x1xf32>
    %3 = vector.broadcast %2 : vector<8x1xf32> to vector<8x256xf32>
    %4 = arith.mulf %1, %3 : vector<8x256xf32>
    %c0_4 = arith.constant 0 : index
    %c0_5 = arith.constant 0 : index
    %5 = vector.load %arg3[%c0_4, %c0_5] : memref<8x1xf32, #tpu.memory_space<vmem>>, vector<8x1xf32>
    %6 = vector.broadcast %5 : vector<8x1xf32> to vector<8x256xf32>
    %7 = arith.addf %4, %6 : vector<8x256xf32>
    %cst = arith.constant 0.000000e+00 : f32
    %8 = vector.broadcast %cst : f32 to vector<8x256xf32>
    %9 = arith.maximumf %7, %8 : vector<8x256xf32>
    %10 = vector.shape_cast %9 : vector<8x256xf32> to vector<8x16x16xf32>
    %cst_6 = arith.constant 0.000000e+00 : f32
    %11 = vector.broadcast %cst_6 : f32 to vector<8x1x16xf32>
    %12 = tpu.concatenate %11, %10, %11 in 1 : vector<8x1x16xf32>, vector<8x16x16xf32>, vector<8x1x16xf32> -> vector<8x18x16xf32>
    %cst_7 = arith.constant 0.000000e+00 : f32
    %13 = vector.broadcast %cst_7 : f32 to vector<8x18x1xf32>
    %14 = tpu.concatenate %13, %12, %13 in 2 : vector<8x18x1xf32>, vector<8x18x16xf32>, vector<8x18x1xf32> -> vector<8x18x18xf32>
    %15 = vector.extract_strided_slice %14 {offsets = [0, 0, 0], sizes = [8, 16, 16], strides = [1, 1, 1]} : vector<8x18x18xf32> to vector<8x16x16xf32>
    %16 = vector.shape_cast %15 : vector<8x16x16xf32> to vector<8x256xf32>
    %17 = vector.extract_strided_slice %14 {offsets = [0, 0, 1], sizes = [8, 16, 16], strides = [1, 1, 1]} : vector<8x18x18xf32> to vector<8x16x16xf32>
    %18 = vector.shape_cast %17 : vector<8x16x16xf32> to vector<8x256xf32>
    %19 = vector.extract_strided_slice %14 {offsets = [0, 0, 2], sizes = [8, 16, 16], strides = [1, 1, 1]} : vector<8x18x18xf32> to vector<8x16x16xf32>
    %20 = vector.shape_cast %19 : vector<8x16x16xf32> to vector<8x256xf32>
    %21 = vector.extract_strided_slice %14 {offsets = [0, 1, 0], sizes = [8, 16, 16], strides = [1, 1, 1]} : vector<8x18x18xf32> to vector<8x16x16xf32>
    %22 = vector.shape_cast %21 : vector<8x16x16xf32> to vector<8x256xf32>
    %23 = vector.extract_strided_slice %14 {offsets = [0, 1, 1], sizes = [8, 16, 16], strides = [1, 1, 1]} : vector<8x18x18xf32> to vector<8x16x16xf32>
    %24 = vector.shape_cast %23 : vector<8x16x16xf32> to vector<8x256xf32>
    %25 = vector.extract_strided_slice %14 {offsets = [0, 1, 2], sizes = [8, 16, 16], strides = [1, 1, 1]} : vector<8x18x18xf32> to vector<8x16x16xf32>
    %26 = vector.shape_cast %25 : vector<8x16x16xf32> to vector<8x256xf32>
    %27 = vector.extract_strided_slice %14 {offsets = [0, 2, 0], sizes = [8, 16, 16], strides = [1, 1, 1]} : vector<8x18x18xf32> to vector<8x16x16xf32>
    %28 = vector.shape_cast %27 : vector<8x16x16xf32> to vector<8x256xf32>
    %29 = vector.extract_strided_slice %14 {offsets = [0, 2, 1], sizes = [8, 16, 16], strides = [1, 1, 1]} : vector<8x18x18xf32> to vector<8x16x16xf32>
    %30 = vector.shape_cast %29 : vector<8x16x16xf32> to vector<8x256xf32>
    %31 = vector.extract_strided_slice %14 {offsets = [0, 2, 2], sizes = [8, 16, 16], strides = [1, 1, 1]} : vector<8x18x18xf32> to vector<8x16x16xf32>
    %32 = vector.shape_cast %31 : vector<8x16x16xf32> to vector<8x256xf32>
    %33 = tpu.concatenate %16, %18, %20, %22, %24, %26, %28, %30, %32 in 0 : vector<8x256xf32>, vector<8x256xf32>, vector<8x256xf32>, vector<8x256xf32>, vector<8x256xf32>, vector<8x256xf32>, vector<8x256xf32>, vector<8x256xf32>, vector<8x256xf32> -> vector<72x256xf32>
    %34 = arith.truncf %33 : vector<72x256xf32> to vector<72x256xbf16>
    %c0_8 = arith.constant 0 : index
    %c0_9 = arith.constant 0 : index
    %35 = vector.load %arg4[%c0_8, %c0_9] : memref<8x72xf32, #tpu.memory_space<vmem>>, vector<8x72xf32>
    %36 = arith.truncf %35 : vector<8x72xf32> to vector<8x72xbf16>
    %cst_10 = arith.constant dense<0.000000e+00> : vector<8x256xf32>
    %37 = tpu.matmul %36, %34, %cst_10 {dimension_numbers = #tpu.dot_dimension_numbers<[1], [0], [0], [1], [0, 0, 1, 1], [], []>} : vector<8x72xbf16>, vector<72x256xbf16>, vector<8x256xf32> -> vector<8x256xf32>
    %c0_11 = arith.constant 0 : index
    %c0_12 = arith.constant 0 : index
    %38 = vector.load %arg5[%c0_11, %c0_12] : memref<8x1xf32, #tpu.memory_space<vmem>>, vector<8x1xf32>
    %39 = vector.broadcast %38 : vector<8x1xf32> to vector<8x256xf32>
    %40 = arith.addf %37, %39 : vector<8x256xf32>
    %c0_13 = arith.constant 0 : index
    %c0_14 = arith.constant 0 : index
    %c0_15 = arith.constant 0 : index
    %41 = vector.load %arg6[%c0_13, %c0_14, %c0_15] : memref<1x8x256xf32, #tpu.memory_space<vmem>>, vector<1x8x256xf32>
    %42 = vector.shape_cast %41 : vector<1x8x256xf32> to vector<8x256xf32>
    %43 = vector.shape_cast %40 : vector<8x256xf32> to vector<1x8x256xf32>
    tpu.vector_store %arg6[%c0_13, %c0_14, %c0_15], %43 {strides = array<i32>} : memref<1x8x256xf32, #tpu.memory_space<vmem>>, vector<1x8x256xf32>,
    return
  }
  func.func @transform_0(%arg0: i32) -> (i32, i32, i32) {
    %c0_i32 = arith.constant 0 : i32
    %c0_i32_0 = arith.constant 0 : i32
    %c0_i32_1 = arith.constant 0 : i32
    return %arg0, %c0_i32, %c0_i32_0 : i32, i32, i32
  }
  func.func @transform_1(%arg0: i32) -> (i32, i32) {
    %c0_i32 = arith.constant 0 : i32
    %c0_i32_0 = arith.constant 0 : i32
    %c0_i32_1 = arith.constant 0 : i32
    return %c0_i32, %c0_i32_0 : i32, i32
  }
  func.func @transform_2(%arg0: i32) -> (i32, i32) {
    %c0_i32 = arith.constant 0 : i32
    %c0_i32_0 = arith.constant 0 : i32
    %c0_i32_1 = arith.constant 0 : i32
    return %c0_i32, %c0_i32_0 : i32, i32
  }
  func.func @transform_3(%arg0: i32) -> (i32, i32) {
    %c0_i32 = arith.constant 0 : i32
    %c0_i32_0 = arith.constant 0 : i32
    %c0_i32_1 = arith.constant 0 : i32
    return %c0_i32, %c0_i32_0 : i32, i32
  }
  func.func @transform_4(%arg0: i32) -> (i32, i32) {
    %c0_i32 = arith.constant 0 : i32
    %c0_i32_0 = arith.constant 0 : i32
    %c0_i32_1 = arith.constant 0 : i32
    return %c0_i32, %c0_i32_0 : i32, i32
  }
  func.func @transform_5(%arg0: i32) -> (i32, i32, i32) {
    %c1_i32 = arith.constant 1 : i32
    %c0_i32 = arith.constant 0 : i32
    %c0_i32_0 = arith.constant 0 : i32
    return %arg0, %c1_i32, %c0_i32 : i32, i32, i32
  }
}

module attributes {stable_mosaic.version = 11 : i64} {
  func.func @_bn_stats_kernel(%arg0: i32, %arg1: memref<1x16x256xf32, #tpu.memory_space<vmem>>, %arg2: memref<16x2xf32, #tpu.memory_space<vmem>>) attributes {dimension_semantics = [#tpu.dimension_semantics<arbitrary>], iteration_bounds = array<i64: 2>, scalar_prefetch = 0 : i64, scratch_operands = 0 : i64, tpu.core_type = #tpu.core_type<tc>, window_params = [{transform_indices = @transform_0, window_bounds = array<i64: 1, 16, 256>}, {pipeline_mode = #tpu.pipeline_mode<synchronous>, transform_indices = @transform_1, window_bounds = array<i64: 16, 2>}]} {
    %c0_i32 = arith.constant 0 : i32
    %0 = arith.cmpi eq, %arg0, %c0_i32 : i32
    %1 = arith.extui %0 : i1 to i32
    %c0_i32_0 = arith.constant 0 : i32
    %2 = arith.cmpi ne, %1, %c0_i32_0 : i32
    scf.if %2 {
      %cst_8 = arith.constant 0.000000e+00 : f32
      %14 = vector.broadcast %cst_8 : f32 to vector<16x2xf32>
      %c0_9 = arith.constant 0 : index
      %c0_10 = arith.constant 0 : index
      %15 = vector.load %arg2[%c0_9, %c0_10] : memref<16x2xf32, #tpu.memory_space<vmem>>, vector<16x2xf32>
      tpu.vector_store %arg2[%c0_9, %c0_10], %14 {strides = array<i32>} : memref<16x2xf32, #tpu.memory_space<vmem>>, vector<16x2xf32>,
    } else {
    }
    %c0 = arith.constant 0 : index
    %c0_1 = arith.constant 0 : index
    %c0_2 = arith.constant 0 : index
    %3 = vector.load %arg1[%c0, %c0_1, %c0_2] : memref<1x16x256xf32, #tpu.memory_space<vmem>>, vector<1x16x256xf32>
    %4 = vector.shape_cast %3 : vector<1x16x256xf32> to vector<16x256xf32>
    %cst = arith.constant dense<0.000000e+00> : vector<16xf32>
    %5 = vector.multi_reduction <add>, %4, %cst [1] : vector<16x256xf32> to vector<16xf32>
    %6 = vector.shape_cast %5 : vector<16xf32> to vector<16x1xf32>
    %7 = arith.mulf %4, %4 : vector<16x256xf32>
    %cst_3 = arith.constant dense<0.000000e+00> : vector<16xf32>
    %8 = vector.multi_reduction <add>, %7, %cst_3 [1] : vector<16x256xf32> to vector<16xf32>
    %9 = vector.shape_cast %8 : vector<16xf32> to vector<16x1xf32>
    %c0_4 = arith.constant 0 : index
    %c0_5 = arith.constant 0 : index
    %10 = vector.load %arg2[%c0_4, %c0_5] : memref<16x2xf32, #tpu.memory_space<vmem>>, vector<16x2xf32>
    %11 = tpu.concatenate %6, %9 in 1 : vector<16x1xf32>, vector<16x1xf32> -> vector<16x2xf32>
    %12 = arith.addf %10, %11 : vector<16x2xf32>
    %c0_6 = arith.constant 0 : index
    %c0_7 = arith.constant 0 : index
    %13 = vector.load %arg2[%c0_6, %c0_7] : memref<16x2xf32, #tpu.memory_space<vmem>>, vector<16x2xf32>
    tpu.vector_store %arg2[%c0_6, %c0_7], %12 {strides = array<i32>} : memref<16x2xf32, #tpu.memory_space<vmem>>, vector<16x2xf32>,
    return
  }
  func.func @transform_0(%arg0: i32) -> (i32, i32, i32) {
    %c0_i32 = arith.constant 0 : i32
    %c0_i32_0 = arith.constant 0 : i32
    %c0_i32_1 = arith.constant 0 : i32
    return %arg0, %c0_i32, %c0_i32_0 : i32, i32, i32
  }
  func.func @transform_1(%arg0: i32) -> (i32, i32) {
    %c0_i32 = arith.constant 0 : i32
    %c0_i32_0 = arith.constant 0 : i32
    %c0_i32_1 = arith.constant 0 : i32
    return %c0_i32, %c0_i32_0 : i32, i32
  }
}

module attributes {stable_mosaic.version = 11 : i64} {
  func.func @_bn_relu_conv_kernel(%arg0: i32, %arg1: memref<1x16x256xf32, #tpu.memory_space<vmem>>, %arg2: memref<16x1xf32, #tpu.memory_space<vmem>>, %arg3: memref<16x1xf32, #tpu.memory_space<vmem>>, %arg4: memref<8x144xf32, #tpu.memory_space<vmem>>, %arg5: memref<8x1xf32, #tpu.memory_space<vmem>>, %arg6: memref<1x8x256xf32, #tpu.memory_space<vmem>>) attributes {dimension_semantics = [#tpu.dimension_semantics<parallel>], iteration_bounds = array<i64: 2>, scalar_prefetch = 0 : i64, scratch_operands = 0 : i64, tpu.core_type = #tpu.core_type<tc>, window_params = [{transform_indices = @transform_0, window_bounds = array<i64: 1, 16, 256>}, {pipeline_mode = #tpu.pipeline_mode<synchronous>, transform_indices = @transform_1, window_bounds = array<i64: 16, 1>}, {pipeline_mode = #tpu.pipeline_mode<synchronous>, transform_indices = @transform_2, window_bounds = array<i64: 16, 1>}, {pipeline_mode = #tpu.pipeline_mode<synchronous>, transform_indices = @transform_3, window_bounds = array<i64: 8, 144>}, {pipeline_mode = #tpu.pipeline_mode<synchronous>, transform_indices = @transform_4, window_bounds = array<i64: 8, 1>}, {transform_indices = @transform_5, window_bounds = array<i64: 1, 8, 256>}]} {
    %c0 = arith.constant 0 : index
    %c0_0 = arith.constant 0 : index
    %c0_1 = arith.constant 0 : index
    %0 = vector.load %arg1[%c0, %c0_0, %c0_1] : memref<1x16x256xf32, #tpu.memory_space<vmem>>, vector<1x16x256xf32>
    %1 = vector.shape_cast %0 : vector<1x16x256xf32> to vector<16x256xf32>
    %c0_2 = arith.constant 0 : index
    %c0_3 = arith.constant 0 : index
    %2 = vector.load %arg2[%c0_2, %c0_3] : memref<16x1xf32, #tpu.memory_space<vmem>>, vector<16x1xf32>
    %3 = vector.broadcast %2 : vector<16x1xf32> to vector<16x256xf32>
    %4 = arith.mulf %1, %3 : vector<16x256xf32>
    %c0_4 = arith.constant 0 : index
    %c0_5 = arith.constant 0 : index
    %5 = vector.load %arg3[%c0_4, %c0_5] : memref<16x1xf32, #tpu.memory_space<vmem>>, vector<16x1xf32>
    %6 = vector.broadcast %5 : vector<16x1xf32> to vector<16x256xf32>
    %7 = arith.addf %4, %6 : vector<16x256xf32>
    %cst = arith.constant 0.000000e+00 : f32
    %8 = vector.broadcast %cst : f32 to vector<16x256xf32>
    %9 = arith.maximumf %7, %8 : vector<16x256xf32>
    %10 = vector.shape_cast %9 : vector<16x256xf32> to vector<16x16x16xf32>
    %cst_6 = arith.constant 0.000000e+00 : f32
    %11 = vector.broadcast %cst_6 : f32 to vector<16x1x16xf32>
    %12 = tpu.concatenate %11, %10, %11 in 1 : vector<16x1x16xf32>, vector<16x16x16xf32>, vector<16x1x16xf32> -> vector<16x18x16xf32>
    %cst_7 = arith.constant 0.000000e+00 : f32
    %13 = vector.broadcast %cst_7 : f32 to vector<16x18x1xf32>
    %14 = tpu.concatenate %13, %12, %13 in 2 : vector<16x18x1xf32>, vector<16x18x16xf32>, vector<16x18x1xf32> -> vector<16x18x18xf32>
    %15 = vector.extract_strided_slice %14 {offsets = [0, 0, 0], sizes = [16, 16, 16], strides = [1, 1, 1]} : vector<16x18x18xf32> to vector<16x16x16xf32>
    %16 = vector.shape_cast %15 : vector<16x16x16xf32> to vector<16x256xf32>
    %17 = vector.extract_strided_slice %14 {offsets = [0, 0, 1], sizes = [16, 16, 16], strides = [1, 1, 1]} : vector<16x18x18xf32> to vector<16x16x16xf32>
    %18 = vector.shape_cast %17 : vector<16x16x16xf32> to vector<16x256xf32>
    %19 = vector.extract_strided_slice %14 {offsets = [0, 0, 2], sizes = [16, 16, 16], strides = [1, 1, 1]} : vector<16x18x18xf32> to vector<16x16x16xf32>
    %20 = vector.shape_cast %19 : vector<16x16x16xf32> to vector<16x256xf32>
    %21 = vector.extract_strided_slice %14 {offsets = [0, 1, 0], sizes = [16, 16, 16], strides = [1, 1, 1]} : vector<16x18x18xf32> to vector<16x16x16xf32>
    %22 = vector.shape_cast %21 : vector<16x16x16xf32> to vector<16x256xf32>
    %23 = vector.extract_strided_slice %14 {offsets = [0, 1, 1], sizes = [16, 16, 16], strides = [1, 1, 1]} : vector<16x18x18xf32> to vector<16x16x16xf32>
    %24 = vector.shape_cast %23 : vector<16x16x16xf32> to vector<16x256xf32>
    %25 = vector.extract_strided_slice %14 {offsets = [0, 1, 2], sizes = [16, 16, 16], strides = [1, 1, 1]} : vector<16x18x18xf32> to vector<16x16x16xf32>
    %26 = vector.shape_cast %25 : vector<16x16x16xf32> to vector<16x256xf32>
    %27 = vector.extract_strided_slice %14 {offsets = [0, 2, 0], sizes = [16, 16, 16], strides = [1, 1, 1]} : vector<16x18x18xf32> to vector<16x16x16xf32>
    %28 = vector.shape_cast %27 : vector<16x16x16xf32> to vector<16x256xf32>
    %29 = vector.extract_strided_slice %14 {offsets = [0, 2, 1], sizes = [16, 16, 16], strides = [1, 1, 1]} : vector<16x18x18xf32> to vector<16x16x16xf32>
    %30 = vector.shape_cast %29 : vector<16x16x16xf32> to vector<16x256xf32>
    %31 = vector.extract_strided_slice %14 {offsets = [0, 2, 2], sizes = [16, 16, 16], strides = [1, 1, 1]} : vector<16x18x18xf32> to vector<16x16x16xf32>
    %32 = vector.shape_cast %31 : vector<16x16x16xf32> to vector<16x256xf32>
    %33 = tpu.concatenate %16, %18, %20, %22, %24, %26, %28, %30, %32 in 0 : vector<16x256xf32>, vector<16x256xf32>, vector<16x256xf32>, vector<16x256xf32>, vector<16x256xf32>, vector<16x256xf32>, vector<16x256xf32>, vector<16x256xf32>, vector<16x256xf32> -> vector<144x256xf32>
    %34 = arith.truncf %33 : vector<144x256xf32> to vector<144x256xbf16>
    %c0_8 = arith.constant 0 : index
    %c0_9 = arith.constant 0 : index
    %35 = vector.load %arg4[%c0_8, %c0_9] : memref<8x144xf32, #tpu.memory_space<vmem>>, vector<8x144xf32>
    %36 = arith.truncf %35 : vector<8x144xf32> to vector<8x144xbf16>
    %cst_10 = arith.constant dense<0.000000e+00> : vector<8x256xf32>
    %37 = tpu.matmul %36, %34, %cst_10 {dimension_numbers = #tpu.dot_dimension_numbers<[1], [0], [0], [1], [0, 0, 1, 1], [], []>} : vector<8x144xbf16>, vector<144x256xbf16>, vector<8x256xf32> -> vector<8x256xf32>
    %c0_11 = arith.constant 0 : index
    %c0_12 = arith.constant 0 : index
    %38 = vector.load %arg5[%c0_11, %c0_12] : memref<8x1xf32, #tpu.memory_space<vmem>>, vector<8x1xf32>
    %39 = vector.broadcast %38 : vector<8x1xf32> to vector<8x256xf32>
    %40 = arith.addf %37, %39 : vector<8x256xf32>
    %c0_13 = arith.constant 0 : index
    %c0_14 = arith.constant 0 : index
    %c0_15 = arith.constant 0 : index
    %41 = vector.load %arg6[%c0_13, %c0_14, %c0_15] : memref<1x8x256xf32, #tpu.memory_space<vmem>>, vector<1x8x256xf32>
    %42 = vector.shape_cast %41 : vector<1x8x256xf32> to vector<8x256xf32>
    %43 = vector.shape_cast %40 : vector<8x256xf32> to vector<1x8x256xf32>
    tpu.vector_store %arg6[%c0_13, %c0_14, %c0_15], %43 {strides = array<i32>} : memref<1x8x256xf32, #tpu.memory_space<vmem>>, vector<1x8x256xf32>,
    return
  }
  func.func @transform_0(%arg0: i32) -> (i32, i32, i32) {
    %c0_i32 = arith.constant 0 : i32
    %c0_i32_0 = arith.constant 0 : i32
    %c0_i32_1 = arith.constant 0 : i32
    return %arg0, %c0_i32, %c0_i32_0 : i32, i32, i32
  }
  func.func @transform_1(%arg0: i32) -> (i32, i32) {
    %c0_i32 = arith.constant 0 : i32
    %c0_i32_0 = arith.constant 0 : i32
    %c0_i32_1 = arith.constant 0 : i32
    return %c0_i32, %c0_i32_0 : i32, i32
  }
  func.func @transform_2(%arg0: i32) -> (i32, i32) {
    %c0_i32 = arith.constant 0 : i32
    %c0_i32_0 = arith.constant 0 : i32
    %c0_i32_1 = arith.constant 0 : i32
    return %c0_i32, %c0_i32_0 : i32, i32
  }
  func.func @transform_3(%arg0: i32) -> (i32, i32) {
    %c0_i32 = arith.constant 0 : i32
    %c0_i32_0 = arith.constant 0 : i32
    %c0_i32_1 = arith.constant 0 : i32
    return %c0_i32, %c0_i32_0 : i32, i32
  }
  func.func @transform_4(%arg0: i32) -> (i32, i32) {
    %c0_i32 = arith.constant 0 : i32
    %c0_i32_0 = arith.constant 0 : i32
    %c0_i32_1 = arith.constant 0 : i32
    return %c0_i32, %c0_i32_0 : i32, i32
  }
  func.func @transform_5(%arg0: i32) -> (i32, i32, i32) {
    %c2_i32 = arith.constant 2 : i32
    %c0_i32 = arith.constant 0 : i32
    %c0_i32_0 = arith.constant 0 : i32
    return %arg0, %c2_i32, %c0_i32 : i32, i32, i32
  }
}

</mosaic_0001>

<llo_original>
// kernel: dense_block_forward.4
$region0: #{dense_block_forward.4}
  #allocation0 [shape = 'u32[]', space=smem, size = 0x4, offset = 0x4, fixed_abs, tag = 'smem constant byte address 0x4 - core index']
  #allocation1 [shape = 'u32[144,128]{1,0:T(1,128)}', space=vmem, size = 0x12000, scoped, tag = 'internal scratch']
  %s0 = inlined_call_operand.vmem [shape: f32[2,24,256], index: 0, kind: input, shape index: {}]
  %s1 = inlined_call_operand.vmem [shape: f32[8,2], index: 1, kind: output, shape index: {}]
  %s2 = sld [smem:[#allocation0]]
  $region41: #{dense_block_forward.4} parent=0
    _
  %s4 = ssub.s32 1, %s2
  %s5 = scalar_select 0, %s4, %s2
  loop: start=0, step=1, limit=4
  $region2: #{dense_block_forward.4} parent=0 // loop_pre_header
    _
  $region3: #{dense_block_forward.4} parent=0 // loop_header
    %s7 = sphi 0, %s11
    %p8 = scmp.ge.s32.totalorder %s7, 4
    %s17 = sphi 0, %s19
    %s20 = sphi 0, %s17
    %s21 = sphi 0, %s20
    %s37 = sphi 0, %s21
    %s41 = sphi 0, %s41
    %s43 = sphi 0, %s41
    %s44 = sphi 0, %s43
    %s58 = sphi 0, %s44
  $region4: #{dense_block_forward.4} parent=0 // loop_header_branch
    %10 = sbr.rel (%p8) target = $region8
  $region5: #{dense_block_forward.4} parent=0 // loop_body
    %s12 = ssub.s32 %s7, 1
    %s13 = ssub.s32 %s7, 2
    %s14 = sadd.s32 %s7, 1
    %s15 = ssub.s32 %s7, %s14
    %p16 = scmp.eq.s32.totalorder %s15, 0
    %s18 = sadd.s32 %s17, 1
    %s19 = scalar_select %p16, %s17, %s18
    %p22 = pneg %p16
    %p23 = scmp.eq.s32.totalorder %s7, 1
    %p24 = por %p22, %p23
    %p25 = scmp.ne.s32.totalorder %s17, %s20
    %p26 = scmp.eq.s32.totalorder %s7, 0
    %p27 = por %p25, %p26
    %p28 = scmp.ne.s32.totalorder %s17, %s20
    %p29 = scmp.eq.s32.totalorder %s12, 1
    %p30 = por %p28, %p29
    %p31 = scmp.ne.s32.totalorder %s20, %s21
    %p32 = scmp.eq.s32.totalorder %s12, 0
    %p33 = por %p31, %p32
    %p34 = scmp.ne.s32.totalorder %s20, %s21
    %p35 = scmp.eq.s32.totalorder %s13, 1
    %p36 = por %p34, %p35
    %p38 = scmp.ne.s32.totalorder %s21, %s37
    %p39 = scmp.eq.s32.totalorder %s13, 0
    %p40 = por %p38, %p39
    %s42 = sadd.s32 %s41, 1
    %p45 = scmp.eq.s32.totalorder %s7, 1
    %p46 = scmp.ne.s32.totalorder %s41, %s43
    %p47 = scmp.eq.s32.totalorder %s7, 0
    %p48 = por %p46, %p47
    %p49 = scmp.ne.s32.totalorder %s41, %s43
    %p50 = scmp.eq.s32.totalorder %s12, 1
    %p51 = por %p49, %p50
    %p52 = scmp.ne.s32.totalorder %s43, %s44
    %p53 = scmp.eq.s32.totalorder %s12, 0
    %p54 = por %p52, %p53
    %p55 = scmp.ne.s32.totalorder %s43, %s44
    %p56 = scmp.eq.s32.totalorder %s13, 1
    %p57 = por %p55, %p56
    %p59 = scmp.ne.s32.totalorder %s44, %s58
    %p60 = scmp.eq.s32.totalorder %s13, 0
    %p61 = por %p59, %p60
    %p62 = scmp.le.s32.totalorder 1, %s7
    %p63 = scmp.lt.s32.totalorder %s7, 3
    %p64 = pnand %p62, %p63
    %p65 = pneg %p64
    // Predicated region
    $region9: #{dense_block_forward.4} parent=5 // pred_check
      _
    $region10: #{dense_block_forward.4} parent=5 // pred_check_branch
      %67 = sbr.rel (%p64) target = $region12
    $region11: #{dense_block_forward.4} parent=5 // pred_region
      %s68 = ssub.s32 %s7, 1
    $region12: #{dense_block_forward.4} parent=5 // pred_fallthru
      _
    %p69 = scmp.lt.s32.totalorder %s7, 2
    // Predicated region
    $region13: #{dense_block_forward.4} parent=5 // pred_check
      %p70 = pneg %p69
    $region14: #{dense_block_forward.4} parent=5 // pred_check_branch
      %72 = sbr.rel (%p70) target = $region16
    $region15: #{dense_block_forward.4} parent=5 // pred_region
      // Predicated region
      $region17: #{dense_block_forward.4} parent=15 // pred_check
        %p73 = pneg %p27
      $region18: #{dense_block_forward.4} parent=15 // pred_check_branch
        %75 = sbr.rel (%p73) target = $region20
      $region19: #{dense_block_forward.4} parent=15 // pred_region
        %p76 = scmp.lt.s32.totalorder %s7, 1
        %s77 = scalar_select %p76, %s7, 1
        %s78 = smul.addr %s77, 6
        %s79 = smul.addr %s78, 8
        %s80 = scalar_lea.vmem %s0, %s79
      $region20: #{dense_block_forward.4} parent=15 // pred_fallthru
        _
    $region16: #{dense_block_forward.4} parent=5 // pred_fallthru
      _
    %p81 = scmp.le.s32.totalorder 1, %s7
    %p82 = scmp.lt.s32.totalorder %s7, 3
    %p83 = pnand %p81, %p82
    %p84 = pneg %p83
    // Predicated region
    $region21: #{dense_block_forward.4} parent=5 // pred_check
      _
    $region22: #{dense_block_forward.4} parent=5 // pred_check_branch
      %86 = sbr.rel (%p83) target = $region24
    $region23: #{dense_block_forward.4} parent=5 // pred_region
      %s87 = ssub.s32 %s7, 1
      %p88 = scmp.lt.s32.totalorder %s12, 1
      %s89 = scalar_select %p88, %s12, 1
      %s90 = smul.addr %s89, 6
      %s91 = smul.addr %s90, 8
      %s92 = scalar_lea.vmem %s0, %s91
      %p93 = pneg %p33
      %p94 = pneg %p30
      %p95 = pneg %p54
      %p96 = pneg %p51
      %p97 = scmp.lt.s32.totalorder %s12, 1
      %s98 = scalar_select %p97, %s12, 1
      %s99 = smul.addr %s98, 6
      %s100 = smul.addr %s99, 8
      %s101 = scalar_lea.vmem %s0, %s100
      %p102 = scmp.eq.s32.totalorder %s12, 0
      // Predicated region
      $region25: #{dense_block_forward.4} parent=23 // pred_check
        %p103 = pneg %p102
      $region26: #{dense_block_forward.4} parent=23 // pred_check_branch
        %105 = sbr.rel (%p103) target = $region28
      $region27: #{dense_block_forward.4} parent=23 // pred_region
        %vm106 = vcmask 15360
        %107 = vst.msk [vmem:[%s1] sm:$0xff] %vm106, 0.0
      $region28: #{dense_block_forward.4} parent=23 // pred_fallthru
        _
      %v108 = vld [vmem:[%s101] sm:$0xff]
      %v109 = vld [vmem:[%s101 + $0x8] sm:$0xff]
      %v110 = vadd.f32 %v108, %v109
      %111 = vadd.xlane.f32.xlu0 %v110
      %v112 = vpop.xlane.xlu0 %111
      %v113 = vmul.f32 %v108, %v108
      %v114 = vmul.f32 %v109, %v109
      %v115 = vadd.f32 %v113, %v114
      %116 = vadd.xlane.f32.xlu0 %v115
      %v117 = vpop.xlane.xlu0 %116
      %v118 = vld [vmem:[%s1] sm:$0xff]
      %vm119 = vcmask 7168
      %v120 = vsel %vm119, %v112, %v117
      %v121 = vadd.f32 %v118, %v120
      %vm122 = vcmask 15360
      %123 = vst.msk [vmem:[%s1] sm:$0xff] %vm122, %v121
      // Predicated region
      $region29: #{dense_block_forward.4} parent=23 // pred_check
        %p124 = pneg %p51
      $region30: #{dense_block_forward.4} parent=23 // pred_check_branch
        %126 = sbr.rel (%p124) target = $region32
      $region31: #{dense_block_forward.4} parent=23 // pred_region
        _
      $region32: #{dense_block_forward.4} parent=23 // pred_fallthru
        _
      // Predicated region
      $region33: #{dense_block_forward.4} parent=23 // pred_check
        %p127 = pneg %p51
      $region34: #{dense_block_forward.4} parent=23 // pred_check_branch
        %129 = sbr.rel (%p127) target = $region36
      $region35: #{dense_block_forward.4} parent=23 // pred_region
        _
      $region36: #{dense_block_forward.4} parent=23 // pred_fallthru
        _
    $region24: #{dense_block_forward.4} parent=5 // pred_fallthru
      _
    %p130 = scmp.le.s32.totalorder 2, %s7
    // Predicated region
    $region37: #{dense_block_forward.4} parent=5 // pred_check
      %p131 = pneg %p130
    $region38: #{dense_block_forward.4} parent=5 // pred_check_branch
      %133 = sbr.rel (%p131) target = $region40
    $region39: #{dense_block_forward.4} parent=5 // pred_region
      %s134 = ssub.s32 %s7, 2
    $region40: #{dense_block_forward.4} parent=5 // pred_fallthru
      _
  $region6: #{dense_block_forward.4} parent=0 // loop_footer
    %s11 = sadd.s32 1, %s7
  $region7: #{dense_block_forward.4} parent=0 // loop_footer_branch
    %6 = sbr.rel target = $region3
  $region8: #{dense_block_forward.4} parent=0 // loop_exit
    _

// kernel: dense_block_forward.6
$region0: #{dense_block_forward.6}
  #allocation0 [shape = 'u32[]', space=smem, size = 0x4, offset = 0x4, fixed_abs, tag = 'smem constant byte address 0x4 - core index']
  #allocation1 [shape = 'u32[144,128]{1,0:T(1,128)}', space=vmem, size = 0x12000, scoped, tag = 'internal scratch']
  %s0 = inlined_call_operand.vmem [shape: f32[2,24,256], index: 0, kind: input, shape index: {}]
  %s1 = inlined_call_operand.vmem [shape: f32[16,2], index: 1, kind: output, shape index: {}]
  %s2 = sld [smem:[#allocation0]]
  $region41: #{dense_block_forward.6} parent=0
    _
  %s4 = ssub.s32 1, %s2
  %s5 = scalar_select 0, %s4, %s2
  loop: start=0, step=1, limit=4
  $region2: #{dense_block_forward.6} parent=0 // loop_pre_header
    _
  $region3: #{dense_block_forward.6} parent=0 // loop_header
    %s7 = sphi 0, %s11
    %p8 = scmp.ge.s32.totalorder %s7, 4
    %s17 = sphi 0, %s19
    %s20 = sphi 0, %s17
    %s21 = sphi 0, %s20
    %s37 = sphi 0, %s21
    %s41 = sphi 0, %s41
    %s43 = sphi 0, %s41
    %s44 = sphi 0, %s43
    %s58 = sphi 0, %s44
  $region4: #{dense_block_forward.6} parent=0 // loop_header_branch
    %10 = sbr.rel (%p8) target = $region8
  $region5: #{dense_block_forward.6} parent=0 // loop_body
    %s12 = ssub.s32 %s7, 1
    %s13 = ssub.s32 %s7, 2
    %s14 = sadd.s32 %s7, 1
    %s15 = ssub.s32 %s7, %s14
    %p16 = scmp.eq.s32.totalorder %s15, 0
    %s18 = sadd.s32 %s17, 1
    %s19 = scalar_select %p16, %s17, %s18
    %p22 = pneg %p16
    %p23 = scmp.eq.s32.totalorder %s7, 1
    %p24 = por %p22, %p23
    %p25 = scmp.ne.s32.totalorder %s17, %s20
    %p26 = scmp.eq.s32.totalorder %s7, 0
    %p27 = por %p25, %p26
    %p28 = scmp.ne.s32.totalorder %s17, %s20
    %p29 = scmp.eq.s32.totalorder %s12, 1
    %p30 = por %p28, %p29
    %p31 = scmp.ne.s32.totalorder %s20, %s21
    %p32 = scmp.eq.s32.totalorder %s12, 0
    %p33 = por %p31, %p32
    %p34 = scmp.ne.s32.totalorder %s20, %s21
    %p35 = scmp.eq.s32.totalorder %s13, 1
    %p36 = por %p34, %p35
    %p38 = scmp.ne.s32.totalorder %s21, %s37
    %p39 = scmp.eq.s32.totalorder %s13, 0
    %p40 = por %p38, %p39
    %s42 = sadd.s32 %s41, 1
    %p45 = scmp.eq.s32.totalorder %s7, 1
    %p46 = scmp.ne.s32.totalorder %s41, %s43
    %p47 = scmp.eq.s32.totalorder %s7, 0
    %p48 = por %p46, %p47
    %p49 = scmp.ne.s32.totalorder %s41, %s43
    %p50 = scmp.eq.s32.totalorder %s12, 1
    %p51 = por %p49, %p50
    %p52 = scmp.ne.s32.totalorder %s43, %s44
    %p53 = scmp.eq.s32.totalorder %s12, 0
    %p54 = por %p52, %p53
    %p55 = scmp.ne.s32.totalorder %s43, %s44
    %p56 = scmp.eq.s32.totalorder %s13, 1
    %p57 = por %p55, %p56
    %p59 = scmp.ne.s32.totalorder %s44, %s58
    %p60 = scmp.eq.s32.totalorder %s13, 0
    %p61 = por %p59, %p60
    %p62 = scmp.le.s32.totalorder 1, %s7
    %p63 = scmp.lt.s32.totalorder %s7, 3
    %p64 = pnand %p62, %p63
    %p65 = pneg %p64
    // Predicated region
    $region9: #{dense_block_forward.6} parent=5 // pred_check
      _
    $region10: #{dense_block_forward.6} parent=5 // pred_check_branch
      %67 = sbr.rel (%p64) target = $region12
    $region11: #{dense_block_forward.6} parent=5 // pred_region
      %s68 = ssub.s32 %s7, 1
    $region12: #{dense_block_forward.6} parent=5 // pred_fallthru
      _
    %p69 = scmp.lt.s32.totalorder %s7, 2
    // Predicated region
    $region13: #{dense_block_forward.6} parent=5 // pred_check
      %p70 = pneg %p69
    $region14: #{dense_block_forward.6} parent=5 // pred_check_branch
      %72 = sbr.rel (%p70) target = $region16
    $region15: #{dense_block_forward.6} parent=5 // pred_region
      // Predicated region
      $region17: #{dense_block_forward.6} parent=15 // pred_check
        %p73 = pneg %p27
      $region18: #{dense_block_forward.6} parent=15 // pred_check_branch
        %75 = sbr.rel (%p73) target = $region20
      $region19: #{dense_block_forward.6} parent=15 // pred_region
        %p76 = scmp.lt.s32.totalorder %s7, 1
        %s77 = scalar_select %p76, %s7, 1
        %s78 = smul.addr %s77, 6
        %s79 = smul.addr %s78, 8
        %s80 = scalar_lea.vmem %s0, %s79
      $region20: #{dense_block_forward.6} parent=15 // pred_fallthru
        _
    $region16: #{dense_block_forward.6} parent=5 // pred_fallthru
      _
    %p81 = scmp.le.s32.totalorder 1, %s7
    %p82 = scmp.lt.s32.totalorder %s7, 3
    %p83 = pnand %p81, %p82
    %p84 = pneg %p83
    // Predicated region
    $region21: #{dense_block_forward.6} parent=5 // pred_check
      _
    $region22: #{dense_block_forward.6} parent=5 // pred_check_branch
      %86 = sbr.rel (%p83) target = $region24
    $region23: #{dense_block_forward.6} parent=5 // pred_region
      %s87 = ssub.s32 %s7, 1
      %p88 = scmp.lt.s32.totalorder %s12, 1
      %s89 = scalar_select %p88, %s12, 1
      %s90 = smul.addr %s89, 6
      %s91 = smul.addr %s90, 8
      %s92 = scalar_lea.vmem %s0, %s91
      %p93 = pneg %p33
      %p94 = pneg %p30
      %p95 = pneg %p54
      %p96 = pneg %p51
      %p97 = scmp.lt.s32.totalorder %s12, 1
      %s98 = scalar_select %p97, %s12, 1
      %s99 = smul.addr %s98, 6
      %s100 = smul.addr %s99, 8
      %s101 = scalar_lea.vmem %s0, %s100
      %p102 = scmp.eq.s32.totalorder %s12, 0
      // Predicated region
      $region25: #{dense_block_forward.6} parent=23 // pred_check
        %p103 = pneg %p102
      $region26: #{dense_block_forward.6} parent=23 // pred_check_branch
        %105 = sbr.rel (%p103) target = $region28
      $region27: #{dense_block_forward.6} parent=23 // pred_region
        %vm106 = vcmask 15360
        %107 = vst.msk [vmem:[%s1] sm:$0xff] %vm106, 0.0
        %108 = vst.msk [vmem:[%s1 + $0x8] sm:$0xff] %vm106, 0.0
      $region28: #{dense_block_forward.6} parent=23 // pred_fallthru
        _
      %v109 = vld [vmem:[%s101] sm:$0xff]
      %v110 = vld [vmem:[%s101 + $0x8] sm:$0xff]
      %v111 = vld [vmem:[%s101 + $0x10] sm:$0xff]
      %v112 = vld [vmem:[%s101 + $0x18] sm:$0xff]
      %v113 = vadd.f32 %v109, %v110
      %114 = vadd.xlane.f32.xlu0 %v113
      %v115 = vpop.xlane.xlu0 %114
      %v116 = vadd.f32 %v111, %v112
      %117 = vadd.xlane.f32.xlu0 %v116
      %v118 = vpop.xlane.xlu0 %117
      %v119 = vmul.f32 %v109, %v109
      %v120 = vmul.f32 %v110, %v110
      %v121 = vmul.f32 %v111, %v111
      %v122 = vmul.f32 %v112, %v112
      %v123 = vadd.f32 %v119, %v120
      %124 = vadd.xlane.f32.xlu0 %v123
      %v125 = vpop.xlane.xlu0 %124
      %v126 = vadd.f32 %v121, %v122
      %127 = vadd.xlane.f32.xlu0 %v126
      %v128 = vpop.xlane.xlu0 %127
      %v129 = vld [vmem:[%s1] sm:$0xff]
      %v130 = vld [vmem:[%s1 + $0x8] sm:$0xff]
      %vm131 = vcmask 7168
      %v132 = vsel %vm131, %v115, %v125
      %v133 = vsel %vm131, %v118, %v128
      %v134 = vadd.f32 %v129, %v132
      %v135 = vadd.f32 %v130, %v133
      %vm136 = vcmask 15360
      %137 = vst.msk [vmem:[%s1] sm:$0xff] %vm136, %v134
      %138 = vst.msk [vmem:[%s1 + $0x8] sm:$0xff] %vm136, %v135
      // Predicated region
      $region29: #{dense_block_forward.6} parent=23 // pred_check
        %p139 = pneg %p51
      $region30: #{dense_block_forward.6} parent=23 // pred_check_branch
        %141 = sbr.rel (%p139) target = $region32
      $region31: #{dense_block_forward.6} parent=23 // pred_region
        _
      $region32: #{dense_block_forward.6} parent=23 // pred_fallthru
        _
      // Predicated region
      $region33: #{dense_block_forward.6} parent=23 // pred_check
        %p142 = pneg %p51
      $region34: #{dense_block_forward.6} parent=23 // pred_check_branch
        %144 = sbr.rel (%p142) target = $region36
      $region35: #{dense_block_forward.6} parent=23 // pred_region
        _
      $region36: #{dense_block_forward.6} parent=23 // pred_fallthru
        _
    $region24: #{dense_block_forward.6} parent=5 // pred_fallthru
      _
    %p145 = scmp.le.s32.totalorder 2, %s7
    // Predicated region
    $region37: #{dense_block_forward.6} parent=5 // pred_check
      %p146 = pneg %p145
    $region38: #{dense_block_forward.6} parent=5 // pred_check_branch
      %148 = sbr.rel (%p146) target = $region40
    $region39: #{dense_block_forward.6} parent=5 // pred_region
      %s149 = ssub.s32 %s7, 2
    $region40: #{dense_block_forward.6} parent=5 // pred_fallthru
      _
  $region6: #{dense_block_forward.6} parent=0 // loop_footer
    %s11 = sadd.s32 1, %s7
  $region7: #{dense_block_forward.6} parent=0 // loop_footer_branch
    %6 = sbr.rel target = $region3
  $region8: #{dense_block_forward.6} parent=0 // loop_exit
    _

// kernel: dense_block_forward.5
$region0: #{dense_block_forward.5}
  #allocation0 [shape = 'u32[]', space=smem, size = 0x4, offset = 0x4, fixed_abs, tag = 'smem constant byte address 0x4 - core index']
  #allocation1 [shape = 'u32[144,128]{1,0:T(1,128)}', space=vmem, size = 0x12000, scoped, tag = 'internal scratch']
  %s0 = inlined_call_operand.vmem [shape: f32[2,24,256], index: 0, kind: input, shape index: {}, may-alias: {0,5}]
  %s1 = inlined_call_operand.vmem [shape: f32[8,1], index: 1, kind: input, shape index: {}]
  %s2 = inlined_call_operand.vmem [shape: f32[8,1], index: 2, kind: input, shape index: {}]
  %s3 = inlined_call_operand.vmem [shape: f32[8,72], index: 3, kind: input, shape index: {}]
  %s4 = inlined_call_operand.vmem [shape: f32[8,1], index: 4, kind: input, shape index: {}]
  %s5 = inlined_call_operand.vmem [shape: f32[2,24,256], index: 5, kind: output, shape index: {}, may-alias: {0,5}]
  %s6 = sld [smem:[#allocation0]]
  $region53: #{dense_block_forward.5} parent=0
    _
  %s8 = ssub.s32 1, %s6
  %s9 = scalar_select 0, %s8, %s6
  loop: start=0, step=1, limit=4
  $region2: #{dense_block_forward.5} parent=0 // loop_pre_header
    _
  $region3: #{dense_block_forward.5} parent=0 // loop_header
    %s11 = sphi 0, %s15
    %p12 = scmp.ge.s32.totalorder %s11, 4
    %s21 = sphi 0, %s23
    %s24 = sphi 0, %s21
    %s25 = sphi 0, %s24
    %s41 = sphi 0, %s25
    %s45 = sphi 0, %s45
    %s47 = sphi 0, %s45
    %s48 = sphi 0, %s47
    %s62 = sphi 0, %s48
    %s66 = sphi 0, %s66
    %s68 = sphi 0, %s66
    %s69 = sphi 0, %s68
    %s83 = sphi 0, %s69
    %s87 = sphi 0, %s87
    %s89 = sphi 0, %s87
    %s90 = sphi 0, %s89
    %s104 = sphi 0, %s90
    %s108 = sphi 0, %s108
    %s110 = sphi 0, %s108
    %s111 = sphi 0, %s110
    %s125 = sphi 0, %s111
    %s131 = sphi 0, %s133
    %s134 = sphi 0, %s131
    %s135 = sphi 0, %s134
    %s151 = sphi 0, %s135
  $region4: #{dense_block_forward.5} parent=0 // loop_header_branch
    %14 = sbr.rel (%p12) target = $region8
  $region5: #{dense_block_forward.5} parent=0 // loop_body
    %s16 = ssub.s32 %s11, 1
    %s17 = ssub.s32 %s11, 2
    %s18 = sadd.s32 %s11, 1
    %s19 = ssub.s32 %s11, %s18
    %p20 = scmp.eq.s32.totalorder %s19, 0
    %s22 = sadd.s32 %s21, 1
    %s23 = scalar_select %p20, %s21, %s22
    %p26 = pneg %p20
    %p27 = scmp.eq.s32.totalorder %s11, 1
    %p28 = por %p26, %p27
    %p29 = scmp.ne.s32.totalorder %s21, %s24
    %p30 = scmp.eq.s32.totalorder %s11, 0
    %p31 = por %p29, %p30
    %p32 = scmp.ne.s32.totalorder %s21, %s24
    %p33 = scmp.eq.s32.totalorder %s16, 1
    %p34 = por %p32, %p33
    %p35 = scmp.ne.s32.totalorder %s24, %s25
    %p36 = scmp.eq.s32.totalorder %s16, 0
    %p37 = por %p35, %p36
    %p38 = scmp.ne.s32.totalorder %s24, %s25
    %p39 = scmp.eq.s32.totalorder %s17, 1
    %p40 = por %p38, %p39
    %p42 = scmp.ne.s32.totalorder %s25, %s41
    %p43 = scmp.eq.s32.totalorder %s17, 0
    %p44 = por %p42, %p43
    %s46 = sadd.s32 %s45, 1
    %p49 = scmp.eq.s32.totalorder %s11, 1
    %p50 = scmp.ne.s32.totalorder %s45, %s47
    %p51 = scmp.eq.s32.totalorder %s11, 0
    %p52 = por %p50, %p51
    %p53 = scmp.ne.s32.totalorder %s45, %s47
    %p54 = scmp.eq.s32.totalorder %s16, 1
    %p55 = por %p53, %p54
    %p56 = scmp.ne.s32.totalorder %s47, %s48
    %p57 = scmp.eq.s32.totalorder %s16, 0
    %p58 = por %p56, %p57
    %p59 = scmp.ne.s32.totalorder %s47, %s48
    %p60 = scmp.eq.s32.totalorder %s17, 1
    %p61 = por %p59, %p60
    %p63 = scmp.ne.s32.totalorder %s48, %s62
    %p64 = scmp.eq.s32.totalorder %s17, 0
    %p65 = por %p63, %p64
    %s67 = sadd.s32 %s66, 1
    %p70 = scmp.eq.s32.totalorder %s11, 1
    %p71 = scmp.ne.s32.totalorder %s66, %s68
    %p72 = scmp.eq.s32.totalorder %s11, 0
    %p73 = por %p71, %p72
    %p74 = scmp.ne.s32.totalorder %s66, %s68
    %p75 = scmp.eq.s32.totalorder %s16, 1
    %p76 = por %p74, %p75
    %p77 = scmp.ne.s32.totalorder %s68, %s69
    %p78 = scmp.eq.s32.totalorder %s16, 0
    %p79 = por %p77, %p78
    %p80 = scmp.ne.s32.totalorder %s68, %s69
    %p81 = scmp.eq.s32.totalorder %s17, 1
    %p82 = por %p80, %p81
    %p84 = scmp.ne.s32.totalorder %s69, %s83
    %p85 = scmp.eq.s32.totalorder %s17, 0
    %p86 = por %p84, %p85
    %s88 = sadd.s32 %s87, 1
    %p91 = scmp.eq.s32.totalorder %s11, 1
    %p92 = scmp.ne.s32.totalorder %s87, %s89
    %p93 = scmp.eq.s32.totalorder %s11, 0
    %p94 = por %p92, %p93
    %p95 = scmp.ne.s32.totalorder %s87, %s89
    %p96 = scmp.eq.s32.totalorder %s16, 1
    %p97 = por %p95, %p96
    %p98 = scmp.ne.s32.totalorder %s89, %s90
    %p99 = scmp.eq.s32.totalorder %s16, 0
    %p100 = por %p98, %p99
    %p101 = scmp.ne.s32.totalorder %s89, %s90
    %p102 = scmp.eq.s32.totalorder %s17, 1
    %p103 = por %p101, %p102
    %p105 = scmp.ne.s32.totalorder %s90, %s104
    %p106 = scmp.eq.s32.totalorder %s17, 0
    %p107 = por %p105, %p106
    %s109 = sadd.s32 %s108, 1
    %p112 = scmp.eq.s32.totalorder %s11, 1
    %p113 = scmp.ne.s32.totalorder %s108, %s110
    %p114 = scmp.eq.s32.totalorder %s11, 0
    %p115 = por %p113, %p114
    %p116 = scmp.ne.s32.totalorder %s108, %s110
    %p117 = scmp.eq.s32.totalorder %s16, 1
    %p118 = por %p116, %p117
    %p119 = scmp.ne.s32.totalorder %s110, %s111
    %p120 = scmp.eq.s32.totalorder %s16, 0
    %p121 = por %p119, %p120
    %p122 = scmp.ne.s32.totalorder %s110, %s111
    %p123 = scmp.eq.s32.totalorder %s17, 1
    %p124 = por %p122, %p123
    %p126 = scmp.ne.s32.totalorder %s111, %s125
    %p127 = scmp.eq.s32.totalorder %s17, 0
    %p128 = por %p126, %p127
    %s129 = ssub.s32 %s11, %s18
    %p130 = scmp.eq.s32.totalorder %s129, 0
    %s132 = sadd.s32 %s131, 1
    %s133 = scalar_select %p130, %s131, %s132
    %p136 = pneg %p130
    %p137 = scmp.eq.s32.totalorder %s11, 1
    %p138 = por %p136, %p137
    %p139 = scmp.ne.s32.totalorder %s131, %s134
    %p140 = scmp.eq.s32.totalorder %s11, 0
    %p141 = por %p139, %p140
    %p142 = scmp.ne.s32.totalorder %s131, %s134
    %p143 = scmp.eq.s32.totalorder %s16, 1
    %p144 = por %p142, %p143
    %p145 = scmp.ne.s32.totalorder %s134, %s135
    %p146 = scmp.eq.s32.totalorder %s16, 0
    %p147 = por %p145, %p146
    %p148 = scmp.ne.s32.totalorder %s134, %s135
    %p149 = scmp.eq.s32.totalorder %s17, 1
    %p150 = por %p148, %p149
    %p152 = scmp.ne.s32.totalorder %s135, %s151
    %p153 = scmp.eq.s32.totalorder %s17, 0
    %p154 = por %p152, %p153
    %p155 = scmp.le.s32.totalorder 1, %s11
    %p156 = scmp.lt.s32.totalorder %s11, 3
    %p157 = pnand %p155, %p156
    %p158 = pneg %p157
    // Predicated region
    $region9: #{dense_block_forward.5} parent=5 // pred_check
      _
    $region10: #{dense_block_forward.5} parent=5 // pred_check_branch
      %160 = sbr.rel (%p157) target = $region12
    $region11: #{dense_block_forward.5} parent=5 // pred_region
      %s161 = ssub.s32 %s11, 1
      // Predicated region
      $region13: #{dense_block_forward.5} parent=11 // pred_check
        %p162 = pneg %p58
      $region14: #{dense_block_forward.5} parent=11 // pred_check_branch
        %164 = sbr.rel (%p162) target = $region16
      $region15: #{dense_block_forward.5} parent=11 // pred_region
        _
      $region16: #{dense_block_forward.5} parent=11 // pred_fallthru
        _
      // Predicated region
      $region17: #{dense_block_forward.5} parent=11 // pred_check
        %p165 = pneg %p79
      $region18: #{dense_block_forward.5} parent=11 // pred_check_branch
        %167 = sbr.rel (%p165) target = $region20
      $region19: #{dense_block_forward.5} parent=11 // pred_region
        _
      $region20: #{dense_block_forward.5} parent=11 // pred_fallthru
        _
      // Predicated region
      $region21: #{dense_block_forward.5} parent=11 // pred_check
        %p168 = pneg %p100
      $region22: #{dense_block_forward.5} parent=11 // pred_check_branch
        %170 = sbr.rel (%p168) target = $region24
      $region23: #{dense_block_forward.5} parent=11 // pred_region
        _
      $region24: #{dense_block_forward.5} parent=11 // pred_fallthru
        _
      // Predicated region
      $region25: #{dense_block_forward.5} parent=11 // pred_check
        %p171 = pneg %p121
      $region26: #{dense_block_forward.5} parent=11 // pred_check_branch
        %173 = sbr.rel (%p171) target = $region28
      $region27: #{dense_block_forward.5} parent=11 // pred_region
        _
      $region28: #{dense_block_forward.5} parent=11 // pred_fallthru
        _
    $region12: #{dense_block_forward.5} parent=5 // pred_fallthru
      _
    %p174 = scmp.lt.s32.totalorder %s11, 2
    // Predicated region
    $region29: #{dense_block_forward.5} parent=5 // pred_check
      %p175 = pneg %p174
    $region30: #{dense_block_forward.5} parent=5 // pred_check_branch
      %177 = sbr.rel (%p175) target = $region32
    $region31: #{dense_block_forward.5} parent=5 // pred_region
      // Predicated region
      $region33: #{dense_block_forward.5} parent=31 // pred_check
        %p178 = pneg %p31
      $region34: #{dense_block_forward.5} parent=31 // pred_check_branch
        %180 = sbr.rel (%p178) target = $region36
      $region35: #{dense_block_forward.5} parent=31 // pred_region
        %p181 = scmp.lt.s32.totalorder %s11, 1
        %s182 = scalar_select %p181, %s11, 1
        %s183 = smul.addr %s182, 6
        %s184 = smul.addr %s183, 8
        %s185 = scalar_lea.vmem %s0, %s184
      $region36: #{dense_block_forward.5} parent=31 // pred_fallthru
        _
    $region32: #{dense_block_forward.5} parent=5 // pred_fallthru
      _
    %p186 = scmp.le.s32.totalorder 1, %s11
    %p187 = scmp.lt.s32.totalorder %s11, 3
    %p188 = pnand %p186, %p187
    %p189 = pneg %p188
    // Predicated region
    $region37: #{dense_block_forward.5} parent=5 // pred_check
      _
    $region38: #{dense_block_forward.5} parent=5 // pred_check_branch
      %191 = sbr.rel (%p188) target = $region40
    $region39: #{dense_block_forward.5} parent=5 // pred_region
      %s192 = ssub.s32 %s11, 1
      %p193 = scmp.lt.s32.totalorder %s16, 1
      %s194 = scalar_select %p193, %s16, 1
      %s195 = smul.addr %s194, 6
      %s196 = smul.addr %s195, 8
      %s197 = scalar_lea.vmem %s0, %s196
      %p198 = pneg %p37
      %p199 = pneg %p34
      %p200 = pneg %p58
      %p201 = pneg %p55
      %p202 = pneg %p79
      %p203 = pneg %p76
      %p204 = pneg %p100
      %p205 = pneg %p97
      %p206 = pneg %p121
      %p207 = pneg %p118
      %p208 = pneg %p147
      %p209 = pneg %p144
      %p210 = scmp.lt.s32.totalorder %s16, 1
      %s211 = scalar_select %p210, %s16, 1
      %s212 = smul.addr %s211, 6
      %s213 = sadd.s32 2, %s212
      %s214 = smul.addr %s213, 8
      %s215 = scalar_lea.vmem %s5, %s214
      %p216 = scmp.lt.s32.totalorder %s16, 1
      %s217 = scalar_select %p216, %s16, 1
      %s218 = smul.addr %s217, 6
      %s219 = smul.addr %s218, 8
      %s220 = scalar_lea.vmem %s0, %s219
      %p221 = scmp.lt.s32.totalorder %s16, 1
      %s222 = scalar_select %p221, %s16, 1
      %s223 = smul.addr %s222, 6
      %s224 = sadd.s32 2, %s223
      %s225 = smul.addr %s224, 8
      %s226 = scalar_lea.vmem %s5, %s225
      %v228 = vld [vmem:[%s220] sm:$0xff]
      %v229 = vld [vmem:[%s220 + $0x8] sm:$0xff]
      %v230 = vld [vmem:[%s1] sm:$0xff]
      %232 = vset.pattern.permute.xlu0 0
      %233 = vperm.xlu0 %232, %v230
      %v234 = vpop.permute.xlu0 %233
      %v236 = vmul.f32 %v228, %v234
      %v237 = vmul.f32 %v229, %v234
      %v238 = vld [vmem:[%s2] sm:$0xff]
      %240 = vset.pattern.permute.xlu0 0
      %241 = vperm.xlu0 %240, %v238
      %v242 = vpop.permute.xlu0 %241
      %v244 = vadd.f32 %v236, %v242
      %v245 = vadd.f32 %v237, %v242
      %v246 = vmax.f32 %v244, 0.0
      %v247 = vmax.f32 %v245, 0.0
      %249 = vrot.lane.b32.xlu0 %v246, 112
      %v250 = vpop.permute.xlu0 %249
      %252 = vrot.lane.b32.xlu0 %v246, 96
      %v253 = vpop.permute.xlu0 %252
      %255 = vrot.lane.b32.xlu0 %v246, 80
      %v256 = vpop.permute.xlu0 %255
      %258 = vrot.lane.b32.xlu0 %v246, 64
      %v259 = vpop.permute.xlu0 %258
      %261 = vrot.lane.b32.xlu0 %v246, 48
      %v262 = vpop.permute.xlu0 %261
      %264 = vrot.lane.b32.xlu0 %v246, 32
      %v265 = vpop.permute.xlu0 %264
      %267 = vrot.lane.b32.xlu0 %v246, 16
      %v268 = vpop.permute.xlu0 %267
      %271 = vrot.lane.b32.xlu0 %v247, 112
      %v272 = vpop.permute.xlu0 %271
      %274 = vrot.lane.b32.xlu0 %v247, 96
      %v275 = vpop.permute.xlu0 %274
      %277 = vrot.lane.b32.xlu0 %v247, 80
      %v278 = vpop.permute.xlu0 %277
      %280 = vrot.lane.b32.xlu0 %v247, 64
      %v281 = vpop.permute.xlu0 %280
      %283 = vrot.lane.b32.xlu0 %v247, 48
      %v284 = vpop.permute.xlu0 %283
      %286 = vrot.lane.b32.xlu0 %v247, 32
      %v287 = vpop.permute.xlu0 %286
      %289 = vrot.lane.b32.xlu0 %v247, 16
      %v290 = vpop.permute.xlu0 %289
      %v292 = vcombine.low %v246, %v253
      %v293 = vcombine.high %v246, %v253
      %v295 = vunpack.c.l.s4 1983009808
      %v296 = vunpack.c.0.s8 %v295
      %v297 = vlaneseq
      %v298 = vshrl.u32 %v297, 7
      %v299 = vsub.s32 %v296, %v298
      %v300 = vrot.slane %v292, %v299
      %v302 = vunpack.c.l.s4 1983009808
      %v303 = vunpack.c.0.s8 %v302
      %v304 = vlaneseq
      %v305 = vshrl.u32 %v304, 7
      %v306 = vsub.s32 %v303, %v305
      %v307 = vrot.slane %v293, %v306
      %v308 = vcombine.low %v250, %v256
      %v309 = vcombine.high %v250, %v256
      %v311 = vunpack.c.l.s4 1983009808
      %v312 = vunpack.c.0.s8 %v311
      %v313 = vlaneseq
      %v314 = vshrl.u32 %v313, 7
      %v315 = vsub.s32 %v312, %v314
      %v316 = vrot.slane %v308, %v315
      %v318 = vunpack.c.l.s4 1983009808
      %v319 = vunpack.c.0.s8 %v318
      %v320 = vlaneseq
      %v321 = vshrl.u32 %v320, 7
      %v322 = vsub.s32 %v319, %v321
      %v323 = vrot.slane %v309, %v322
      %v324 = vcombine.low %v259, %v265
      %v325 = vcombine.high %v259, %v265
      %v327 = vunpack.c.l.s4 1983009808
      %v328 = vunpack.c.0.s8 %v327
      %v329 = vlaneseq
      %v330 = vshrl.u32 %v329, 7
      %v331 = vsub.s32 %v328, %v330
      %v332 = vrot.slane %v324, %v331
      %v334 = vunpack.c.l.s4 1983009808
      %v335 = vunpack.c.0.s8 %v334
      %v336 = vlaneseq
      %v337 = vshrl.u32 %v336, 7
      %v338 = vsub.s32 %v335, %v337
      %v339 = vrot.slane %v325, %v338
      %v340 = vcombine.low %v262, %v268
      %v341 = vcombine.high %v262, %v268
      %v343 = vunpack.c.l.s4 1983009808
      %v344 = vunpack.c.0.s8 %v343
      %v345 = vlaneseq
      %v346 = vshrl.u32 %v345, 7
      %v347 = vsub.s32 %v344, %v346
      %v348 = vrot.slane %v340, %v347
      %v350 = vunpack.c.l.s4 1983009808
      %v351 = vunpack.c.0.s8 %v350
      %v352 = vlaneseq
      %v353 = vshrl.u32 %v352, 7
      %v354 = vsub.s32 %v351, %v353
      %v355 = vrot.slane %v341, %v354
      %v356 = vcombine.low %v300, %v316
      %v357 = vcombine.high %v300, %v316
      %v359 = vunpack.c.l.s4 1934713408
      %v360 = vunpack.c.0.s8 %v359
      %v361 = vlaneseq
      %v362 = vshrl.u32 %v361, 7
      %v363 = vsub.s32 %v360, %v362
      %v364 = vrot.slane %v356, %v363
      %v366 = vunpack.c.l.s4 1934713408
      %v367 = vunpack.c.0.s8 %v366
      %v368 = vlaneseq
      %v369 = vshrl.u32 %v368, 7
      %v370 = vsub.s32 %v367, %v369
      %v371 = vrot.slane %v357, %v370
      %v372 = vcombine.low %v307, %v323
      %v373 = vcombine.high %v307, %v323
      %v375 = vunpack.c.l.s4 1934713408
      %v376 = vunpack.c.0.s8 %v375
      %v377 = vlaneseq
      %v378 = vshrl.u32 %v377, 7
      %v379 = vsub.s32 %v376, %v378
      %v380 = vrot.slane %v372, %v379
      %v382 = vunpack.c.l.s4 1934713408
      %v383 = vunpack.c.0.s8 %v382
      %v384 = vlaneseq
      %v385 = vshrl.u32 %v384, 7
      %v386 = vsub.s32 %v383, %v385
      %v387 = vrot.slane %v373, %v386
      %v388 = vcombine.low %v332, %v348
      %v389 = vcombine.high %v332, %v348
      %v391 = vunpack.c.l.s4 1934713408
      %v392 = vunpack.c.0.s8 %v391
      %v393 = vlaneseq
      %v394 = vshrl.u32 %v393, 7
      %v395 = vsub.s32 %v392, %v394
      %v396 = vrot.slane %v388, %v395
      %v398 = vunpack.c.l.s4 1934713408
      %v399 = vunpack.c.0.s8 %v398
      %v400 = vlaneseq
      %v401 = vshrl.u32 %v400, 7
      %v402 = vsub.s32 %v399, %v401
      %v403 = vrot.slane %v389, %v402
      %v404 = vcombine.low %v339, %v355
      %v405 = vcombine.high %v339, %v355
      %v407 = vunpack.c.l.s4 1934713408
      %v408 = vunpack.c.0.s8 %v407
      %v409 = vlaneseq
      %v410 = vshrl.u32 %v409, 7
      %v411 = vsub.s32 %v408, %v410
      %v412 = vrot.slane %v404, %v411
      %v414 = vunpack.c.l.s4 1934713408
      %v415 = vunpack.c.0.s8 %v414
      %v416 = vlaneseq
      %v417 = vshrl.u32 %v416, 7
      %v418 = vsub.s32 %v415, %v417
      %v419 = vrot.slane %v405, %v418
      %v420 = vcombine.low %v364, %v396
      %v421 = vcombine.high %v364, %v396
      %v422 = vcombine.low %v371, %v403
      %v423 = vcombine.high %v371, %v403
      %v424 = vcombine.low %v380, %v412
      %v425 = vcombine.high %v380, %v412
      %v426 = vcombine.low %v387, %v419
      %v427 = vcombine.high %v387, %v419
      %v428 = vcombine.low %v247, %v275
      %v429 = vcombine.high %v247, %v275
      %v431 = vunpack.c.l.s4 1983009808
      %v432 = vunpack.c.0.s8 %v431
      %v433 = vlaneseq
      %v434 = vshrl.u32 %v433, 7
      %v435 = vsub.s32 %v432, %v434
      %v436 = vrot.slane %v428, %v435
      %v438 = vunpack.c.l.s4 1983009808
      %v439 = vunpack.c.0.s8 %v438
      %v440 = vlaneseq
      %v441 = vshrl.u32 %v440, 7
      %v442 = vsub.s32 %v439, %v441
      %v443 = vrot.slane %v429, %v442
      %v444 = vcombine.low %v272, %v278
      %v445 = vcombine.high %v272, %v278
      %v447 = vunpack.c.l.s4 1983009808
      %v448 = vunpack.c.0.s8 %v447
      %v449 = vlaneseq
      %v450 = vshrl.u32 %v449, 7
      %v451 = vsub.s32 %v448, %v450
      %v452 = vrot.slane %v444, %v451
      %v454 = vunpack.c.l.s4 1983009808
      %v455 = vunpack.c.0.s8 %v454
      %v456 = vlaneseq
      %v457 = vshrl.u32 %v456, 7
      %v458 = vsub.s32 %v455, %v457
      %v459 = vrot.slane %v445, %v458
      %v460 = vcombine.low %v281, %v287
      %v461 = vcombine.high %v281, %v287
      %v463 = vunpack.c.l.s4 1983009808
      %v464 = vunpack.c.0.s8 %v463
      %v465 = vlaneseq
      %v466 = vshrl.u32 %v465, 7
      %v467 = vsub.s32 %v464, %v466
      %v468 = vrot.slane %v460, %v467
      %v470 = vunpack.c.l.s4 1983009808
      %v471 = vunpack.c.0.s8 %v470
      %v472 = vlaneseq
      %v473 = vshrl.u32 %v472, 7
      %v474 = vsub.s32 %v471, %v473
      %v475 = vrot.slane %v461, %v474
      %v476 = vcombine.low %v284, %v290
      %v477 = vcombine.high %v284, %v290
      %v479 = vunpack.c.l.s4 1983009808
      %v480 = vunpack.c.0.s8 %v479
      %v481 = vlaneseq
      %v482 = vshrl.u32 %v481, 7
      %v483 = vsub.s32 %v480, %v482
      %v484 = vrot.slane %v476, %v483
      %v486 = vunpack.c.l.s4 1983009808
      %v487 = vunpack.c.0.s8 %v486
      %v488 = vlaneseq
      %v489 = vshrl.u32 %v488, 7
      %v490 = vsub.s32 %v487, %v489
      %v491 = vrot.slane %v477, %v490
      %v492 = vcombine.low %v436, %v452
      %v493 = vcombine.high %v436, %v452
      %v495 = vunpack.c.l.s4 1934713408
      %v496 = vunpack.c.0.s8 %v495
      %v497 = vlaneseq
      %v498 = vshrl.u32 %v497, 7
      %v499 = vsub.s32 %v496, %v498
      %v500 = vrot.slane %v492, %v499
      %v502 = vunpack.c.l.s4 1934713408
      %v503 = vunpack.c.0.s8 %v502
      %v504 = vlaneseq
      %v505 = vshrl.u32 %v504, 7
      %v506 = vsub.s32 %v503, %v505
      %v507 = vrot.slane %v493, %v506
      %v508 = vcombine.low %v443, %v459
      %v509 = vcombine.high %v443, %v459
      %v511 = vunpack.c.l.s4 1934713408
      %v512 = vunpack.c.0.s8 %v511
      %v513 = vlaneseq
      %v514 = vshrl.u32 %v513, 7
      %v515 = vsub.s32 %v512, %v514
      %v516 = vrot.slane %v508, %v515
      %v518 = vunpack.c.l.s4 1934713408
      %v519 = vunpack.c.0.s8 %v518
      %v520 = vlaneseq
      %v521 = vshrl.u32 %v520, 7
      %v522 = vsub.s32 %v519, %v521
      %v523 = vrot.slane %v509, %v522
      %v524 = vcombine.low %v468, %v484
      %v525 = vcombine.high %v468, %v484
      %v527 = vunpack.c.l.s4 1934713408
      %v528 = vunpack.c.0.s8 %v527
      %v529 = vlaneseq
      %v530 = vshrl.u32 %v529, 7
      %v531 = vsub.s32 %v528, %v530
      %v532 = vrot.slane %v524, %v531
      %v534 = vunpack.c.l.s4 1934713408
      %v535 = vunpack.c.0.s8 %v534
      %v536 = vlaneseq
      %v537 = vshrl.u32 %v536, 7
      %v538 = vsub.s32 %v535, %v537
      %v539 = vrot.slane %v525, %v538
      %v540 = vcombine.low %v475, %v491
      %v541 = vcombine.high %v475, %v491
      %v543 = vunpack.c.l.s4 1934713408
      %v544 = vunpack.c.0.s8 %v543
      %v545 = vlaneseq
      %v546 = vshrl.u32 %v545, 7
      %v547 = vsub.s32 %v544, %v546
      %v548 = vrot.slane %v540, %v547
      %v550 = vunpack.c.l.s4 1934713408
      %v551 = vunpack.c.0.s8 %v550
      %v552 = vlaneseq
      %v553 = vshrl.u32 %v552, 7
      %v554 = vsub.s32 %v551, %v553
      %v555 = vrot.slane %v541, %v554
      %v556 = vcombine.low %v500, %v532
      %v557 = vcombine.high %v500, %v532
      %v558 = vcombine.low %v507, %v539
      %v559 = vcombine.high %v507, %v539
      %v560 = vcombine.low %v516, %v548
      %v561 = vcombine.high %v516, %v548
      %v562 = vcombine.low %v523, %v555
      %v563 = vcombine.high %v523, %v555
      %vm580 = vcmask 1040384
      %v581 = vrot.slane %v420, 7
      %v582 = vrot.slane %v556, 7
      %v583 = vsel %vm580, %v581, %v582
      %v584 = vrot.slane %v421, 7
      %v585 = vrot.slane %v557, 7
      %v586 = vsel %vm580, %v584, %v585
      %v587 = vrot.slane %v422, 7
      %v588 = vrot.slane %v558, 7
      %v589 = vsel %vm580, %v587, %v588
      %v590 = vrot.slane %v423, 7
      %v591 = vrot.slane %v559, 7
      %v592 = vsel %vm580, %v590, %v591
      %v593 = vrot.slane %v424, 7
      %v594 = vrot.slane %v560, 7
      %v595 = vsel %vm580, %v593, %v594
      %v596 = vrot.slane %v425, 7
      %v597 = vrot.slane %v561, 7
      %v598 = vsel %vm580, %v596, %v597
      %v599 = vrot.slane %v426, 7
      %v600 = vrot.slane %v562, 7
      %v601 = vsel %vm580, %v599, %v600
      %v602 = vrot.slane %v427, 7
      %v603 = vrot.slane %v563, 7
      %v604 = vsel %vm580, %v602, %v603
      %v621 = vsel %vm580, 0.0, %v581
      %v622 = vsel %vm580, 0.0, %v584
      %v623 = vsel %vm580, 0.0, %v587
      %v624 = vsel %vm580, 0.0, %v590
      %v625 = vsel %vm580, 0.0, %v593
      %v626 = vsel %vm580, 0.0, %v596
      %v627 = vsel %vm580, 0.0, %v599
      %v628 = vsel %vm580, 0.0, %v602
      %v629 = vsel %vm580, %v582, 0.0
      %v630 = vsel %vm580, %v585, 0.0
      %v631 = vsel %vm580, %v588, 0.0
      %v632 = vsel %vm580, %v591, 0.0
      %v633 = vsel %vm580, %v594, 0.0
      %v634 = vsel %vm580, %v597, 0.0
      %v635 = vsel %vm580, %v600, 0.0
      %v636 = vsel %vm580, %v603, 0.0
      %653 = vrot.lane.b32.xlu0 %v621, 1
      %v654 = vpop.permute.xlu0 %653
      %655 = vrot.lane.b32.xlu0 %v583, 1
      %v656 = vpop.permute.xlu0 %655
      %657 = vrot.lane.b32.xlu0 %v629, 1
      %v658 = vpop.permute.xlu0 %657
      %659 = vrot.lane.b32.xlu0 %v622, 1
      %v660 = vpop.permute.xlu0 %659
      %661 = vrot.lane.b32.xlu0 %v586, 1
      %v662 = vpop.permute.xlu0 %661
      %663 = vrot.lane.b32.xlu0 %v630, 1
      %v664 = vpop.permute.xlu0 %663
      %665 = vrot.lane.b32.xlu0 %v623, 1
      %v666 = vpop.permute.xlu0 %665
      %667 = vrot.lane.b32.xlu0 %v589, 1
      %v668 = vpop.permute.xlu0 %667
      %669 = vrot.lane.b32.xlu0 %v631, 1
      %v670 = vpop.permute.xlu0 %669
      %671 = vrot.lane.b32.xlu0 %v624, 1
      %v672 = vpop.permute.xlu0 %671
      %673 = vrot.lane.b32.xlu0 %v592, 1
      %v674 = vpop.permute.xlu0 %673
      %675 = vrot.lane.b32.xlu0 %v632, 1
      %v676 = vpop.permute.xlu0 %675
      %677 = vrot.lane.b32.xlu0 %v625, 1
      %v678 = vpop.permute.xlu0 %677
      %679 = vrot.lane.b32.xlu0 %v595, 1
      %v680 = vpop.permute.xlu0 %679
      %681 = vrot.lane.b32.xlu0 %v633, 1
      %v682 = vpop.permute.xlu0 %681
      %683 = vrot.lane.b32.xlu0 %v626, 1
      %v684 = vpop.permute.xlu0 %683
      %685 = vrot.lane.b32.xlu0 %v598, 1
      %v686 = vpop.permute.xlu0 %685
      %687 = vrot.lane.b32.xlu0 %v634, 1
      %v688 = vpop.permute.xlu0 %687
      %689 = vrot.lane.b32.xlu0 %v627, 1
      %v690 = vpop.permute.xlu0 %689
      %691 = vrot.lane.b32.xlu0 %v601, 1
      %v692 = vpop.permute.xlu0 %691
      %693 = vrot.lane.b32.xlu0 %v635, 1
      %v694 = vpop.permute.xlu0 %693
      %695 = vrot.lane.b32.xlu0 %v628, 1
      %v696 = vpop.permute.xlu0 %695
      %697 = vrot.lane.b32.xlu0 %v604, 1
      %v698 = vpop.permute.xlu0 %697
      %699 = vrot.lane.b32.xlu0 %v636, 1
      %v700 = vpop.permute.xlu0 %699
      %vm725 = vcmask 7168
      %v726 = vsel %vm725, 0.0, %v654
      %v727 = vsel %vm725, 0.0, %v656
      %v728 = vsel %vm725, 0.0, %v658
      %v729 = vsel %vm725, 0.0, %v660
      %v730 = vsel %vm725, 0.0, %v662
      %v731 = vsel %vm725, 0.0, %v664
      %v732 = vsel %vm725, 0.0, %v666
      %v733 = vsel %vm725, 0.0, %v668
      %v734 = vsel %vm725, 0.0, %v670
      %v735 = vsel %vm725, 0.0, %v672
      %v736 = vsel %vm725, 0.0, %v674
      %v737 = vsel %vm725, 0.0, %v676
      %v738 = vsel %vm725, 0.0, %v678
      %v739 = vsel %vm725, 0.0, %v680
      %v740 = vsel %vm725, 0.0, %v682
      %v741 = vsel %vm725, 0.0, %v684
      %v742 = vsel %vm725, 0.0, %v686
      %v743 = vsel %vm725, 0.0, %v688
      %v744 = vsel %vm725, 0.0, %v690
      %v745 = vsel %vm725, 0.0, %v692
      %v746 = vsel %vm725, 0.0, %v694
      %v747 = vsel %vm725, 0.0, %v696
      %v748 = vsel %vm725, 0.0, %v698
      %v749 = vsel %vm725, 0.0, %v700
      %vm750 = vcmask 138240
      %v751 = vsel %vm750, %v726, 0.0
      %v752 = vsel %vm750, %v727, 0.0
      %v753 = vsel %vm750, %v728, 0.0
      %v754 = vsel %vm750, %v729, 0.0
      %v755 = vsel %vm750, %v730, 0.0
      %v756 = vsel %vm750, %v731, 0.0
      %v757 = vsel %vm750, %v732, 0.0
      %v758 = vsel %vm750, %v733, 0.0
      %v759 = vsel %vm750, %v734, 0.0
      %v760 = vsel %vm750, %v735, 0.0
      %v761 = vsel %vm750, %v736, 0.0
      %v762 = vsel %vm750, %v737, 0.0
      %v763 = vsel %vm750, %v738, 0.0
      %v764 = vsel %vm750, %v739, 0.0
      %v765 = vsel %vm750, %v740, 0.0
      %v766 = vsel %vm750, %v741, 0.0
      %v767 = vsel %vm750, %v742, 0.0
      %v768 = vsel %vm750, %v743, 0.0
      %v769 = vsel %vm750, %v744, 0.0
      %v770 = vsel %vm750, %v745, 0.0
      %v771 = vsel %vm750, %v746, 0.0
      %v772 = vsel %vm750, %v747, 0.0
      %v773 = vsel %vm750, %v748, 0.0
      %v774 = vsel %vm750, %v749, 0.0
      %v775 = vcombine.low %v751, %v757
      %v776 = vcombine.high %v751, %v757
      %v778 = vunpack.c.l.s4 1983009808
      %v779 = vunpack.c.0.s8 %v778
      %v780 = vlaneseq
      %v781 = vshrl.u32 %v780, 7
      %v782 = vsub.s32 %v779, %v781
      %v783 = vrot.slane %v775, %v782
      %v785 = vunpack.c.l.s4 1983009808
      %v786 = vunpack.c.0.s8 %v785
      %v787 = vlaneseq
      %v788 = vshrl.u32 %v787, 7
      %v789 = vsub.s32 %v786, %v788
      %v790 = vrot.slane %v776, %v789
      %v791 = vcombine.low %v754, %v760
      %v792 = vcombine.high %v754, %v760
      %v794 = vunpack.c.l.s4 1983009808
      %v795 = vunpack.c.0.s8 %v794
      %v796 = vlaneseq
      %v797 = vshrl.u32 %v796, 7
      %v798 = vsub.s32 %v795, %v797
      %v799 = vrot.slane %v791, %v798
      %v801 = vunpack.c.l.s4 1983009808
      %v802 = vunpack.c.0.s8 %v801
      %v803 = vlaneseq
      %v804 = vshrl.u32 %v803, 7
      %v805 = vsub.s32 %v802, %v804
      %v806 = vrot.slane %v792, %v805
      %v807 = vcombine.low %v763, %v769
      %v808 = vcombine.high %v763, %v769
      %v810 = vunpack.c.l.s4 1983009808
      %v811 = vunpack.c.0.s8 %v810
      %v812 = vlaneseq
      %v813 = vshrl.u32 %v812, 7
      %v814 = vsub.s32 %v811, %v813
      %v815 = vrot.slane %v807, %v814
      %v817 = vunpack.c.l.s4 1983009808
      %v818 = vunpack.c.0.s8 %v817
      %v819 = vlaneseq
      %v820 = vshrl.u32 %v819, 7
      %v821 = vsub.s32 %v818, %v820
      %v822 = vrot.slane %v808, %v821
      %v823 = vcombine.low %v766, %v772
      %v824 = vcombine.high %v766, %v772
      %v826 = vunpack.c.l.s4 1983009808
      %v827 = vunpack.c.0.s8 %v826
      %v828 = vlaneseq
      %v829 = vshrl.u32 %v828, 7
      %v830 = vsub.s32 %v827, %v829
      %v831 = vrot.slane %v823, %v830
      %v833 = vunpack.c.l.s4 1983009808
      %v834 = vunpack.c.0.s8 %v833
      %v835 = vlaneseq
      %v836 = vshrl.u32 %v835, 7
      %v837 = vsub.s32 %v834, %v836
      %v838 = vrot.slane %v824, %v837
      %v839 = vcombine.low %v783, %v799
      %v840 = vcombine.high %v783, %v799
      %v842 = vunpack.c.l.s4 1934713408
      %v843 = vunpack.c.0.s8 %v842
      %v844 = vlaneseq
      %v845 = vshrl.u32 %v844, 7
      %v846 = vsub.s32 %v843, %v845
      %v847 = vrot.slane %v839, %v846
      %v849 = vunpack.c.l.s4 1934713408
      %v850 = vunpack.c.0.s8 %v849
      %v851 = vlaneseq
      %v852 = vshrl.u32 %v851, 7
      %v853 = vsub.s32 %v850, %v852
      %v854 = vrot.slane %v840, %v853
      %v855 = vcombine.low %v790, %v806
      %v856 = vcombine.high %v790, %v806
      %v858 = vunpack.c.l.s4 1934713408
      %v859 = vunpack.c.0.s8 %v858
      %v860 = vlaneseq
      %v861 = vshrl.u32 %v860, 7
      %v862 = vsub.s32 %v859, %v861
      %v863 = vrot.slane %v855, %v862
      %v865 = vunpack.c.l.s4 1934713408
      %v866 = vunpack.c.0.s8 %v865
      %v867 = vlaneseq
      %v868 = vshrl.u32 %v867, 7
      %v869 = vsub.s32 %v866, %v868
      %v870 = vrot.slane %v856, %v869
      %v871 = vcombine.low %v815, %v831
      %v872 = vcombine.high %v815, %v831
      %v874 = vunpack.c.l.s4 1934713408
      %v875 = vunpack.c.0.s8 %v874
      %v876 = vlaneseq
      %v877 = vshrl.u32 %v876, 7
      %v878 = vsub.s32 %v875, %v877
      %v879 = vrot.slane %v871, %v878
      %v881 = vunpack.c.l.s4 1934713408
      %v882 = vunpack.c.0.s8 %v881
      %v883 = vlaneseq
      %v884 = vshrl.u32 %v883, 7
      %v885 = vsub.s32 %v882, %v884
      %v886 = vrot.slane %v872, %v885
      %v887 = vcombine.low %v822, %v838
      %v888 = vcombine.high %v822, %v838
      %v890 = vunpack.c.l.s4 1934713408
      %v891 = vunpack.c.0.s8 %v890
      %v892 = vlaneseq
      %v893 = vshrl.u32 %v892, 7
      %v894 = vsub.s32 %v891, %v893
      %v895 = vrot.slane %v887, %v894
      %v897 = vunpack.c.l.s4 1934713408
      %v898 = vunpack.c.0.s8 %v897
      %v899 = vlaneseq
      %v900 = vshrl.u32 %v899, 7
      %v901 = vsub.s32 %v898, %v900
      %v902 = vrot.slane %v888, %v901
      %v903 = vcombine.low %v847, %v879
      %v904 = vcombine.high %v847, %v879
      %v905 = vcombine.low %v854, %v886
      %v906 = vcombine.high %v854, %v886
      %v907 = vcombine.low %v863, %v895
      %v908 = vcombine.high %v863, %v895
      %v909 = vcombine.low %v870, %v902
      %v910 = vcombine.high %v870, %v902
      %v911 = vcombine.low %v752, %v758
      %v912 = vcombine.high %v752, %v758
      %v914 = vunpack.c.l.s4 1983009808
      %v915 = vunpack.c.0.s8 %v914
      %v916 = vlaneseq
      %v917 = vshrl.u32 %v916, 7
      %v918 = vsub.s32 %v915, %v917
      %v919 = vrot.slane %v911, %v918
      %v921 = vunpack.c.l.s4 1983009808
      %v922 = vunpack.c.0.s8 %v921
      %v923 = vlaneseq
      %v924 = vshrl.u32 %v923, 7
      %v925 = vsub.s32 %v922, %v924
      %v926 = vrot.slane %v912, %v925
      %v927 = vcombine.low %v755, %v761
      %v928 = vcombine.high %v755, %v761
      %v930 = vunpack.c.l.s4 1983009808
      %v931 = vunpack.c.0.s8 %v930
      %v932 = vlaneseq
      %v933 = vshrl.u32 %v932, 7
      %v934 = vsub.s32 %v931, %v933
      %v935 = vrot.slane %v927, %v934
      %v937 = vunpack.c.l.s4 1983009808
      %v938 = vunpack.c.0.s8 %v937
      %v939 = vlaneseq
      %v940 = vshrl.u32 %v939, 7
      %v941 = vsub.s32 %v938, %v940
      %v942 = vrot.slane %v928, %v941
      %v943 = vcombine.low %v764, %v770
      %v944 = vcombine.high %v764, %v770
      %v946 = vunpack.c.l.s4 1983009808
      %v947 = vunpack.c.0.s8 %v946
      %v948 = vlaneseq
      %v949 = vshrl.u32 %v948, 7
      %v950 = vsub.s32 %v947, %v949
      %v951 = vrot.slane %v943, %v950
      %v953 = vunpack.c.l.s4 1983009808
      %v954 = vunpack.c.0.s8 %v953
      %v955 = vlaneseq
      %v956 = vshrl.u32 %v955, 7
      %v957 = vsub.s32 %v954, %v956
      %v958 = vrot.slane %v944, %v957
      %v959 = vcombine.low %v767, %v773
      %v960 = vcombine.high %v767, %v773
      %v962 = vunpack.c.l.s4 1983009808
      %v963 = vunpack.c.0.s8 %v962
      %v964 = vlaneseq
      %v965 = vshrl.u32 %v964, 7
      %v966 = vsub.s32 %v963, %v965
      %v967 = vrot.slane %v959, %v966
      %v969 = vunpack.c.l.s4 1983009808
      %v970 = vunpack.c.0.s8 %v969
      %v971 = vlaneseq
      %v972 = vshrl.u32 %v971, 7
      %v973 = vsub.s32 %v970, %v972
      %v974 = vrot.slane %v960, %v973
      %v975 = vcombine.low %v919, %v935
      %v976 = vcombine.high %v919, %v935
      %v978 = vunpack.c.l.s4 1934713408
      %v979 = vunpack.c.0.s8 %v978
      %v980 = vlaneseq
      %v981 = vshrl.u32 %v980, 7
      %v982 = vsub.s32 %v979, %v981
      %v983 = vrot.slane %v975, %v982
      %v985 = vunpack.c.l.s4 1934713408
      %v986 = vunpack.c.0.s8 %v985
      %v987 = vlaneseq
      %v988 = vshrl.u32 %v987, 7
      %v989 = vsub.s32 %v986, %v988
      %v990 = vrot.slane %v976, %v989
      %v991 = vcombine.low %v926, %v942
      %v992 = vcombine.high %v926, %v942
      %v994 = vunpack.c.l.s4 1934713408
      %v995 = vunpack.c.0.s8 %v994
      %v996 = vlaneseq
      %v997 = vshrl.u32 %v996, 7
      %v998 = vsub.s32 %v995, %v997
      %v999 = vrot.slane %v991, %v998
      %v1001 = vunpack.c.l.s4 1934713408
      %v1002 = vunpack.c.0.s8 %v1001
      %v1003 = vlaneseq
      %v1004 = vshrl.u32 %v1003, 7
      %v1005 = vsub.s32 %v1002, %v1004
      %v1006 = vrot.slane %v992, %v1005
      %v1007 = vcombine.low %v951, %v967
      %v1008 = vcombine.high %v951, %v967
      %v1010 = vunpack.c.l.s4 1934713408
      %v1011 = vunpack.c.0.s8 %v1010
      %v1012 = vlaneseq
      %v1013 = vshrl.u32 %v1012, 7
      %v1014 = vsub.s32 %v1011, %v1013
      %v1015 = vrot.slane %v1007, %v1014
      %v1017 = vunpack.c.l.s4 1934713408
      %v1018 = vunpack.c.0.s8 %v1017
      %v1019 = vlaneseq
      %v1020 = vshrl.u32 %v1019, 7
      %v1021 = vsub.s32 %v1018, %v1020
      %v1022 = vrot.slane %v1008, %v1021
      %v1023 = vcombine.low %v958, %v974
      %v1024 = vcombine.high %v958, %v974
      %v1026 = vunpack.c.l.s4 1934713408
      %v1027 = vunpack.c.0.s8 %v1026
      %v1028 = vlaneseq
      %v1029 = vshrl.u32 %v1028, 7
      %v1030 = vsub.s32 %v1027, %v1029
      %v1031 = vrot.slane %v1023, %v1030
      %v1033 = vunpack.c.l.s4 1934713408
      %v1034 = vunpack.c.0.s8 %v1033
      %v1035 = vlaneseq
      %v1036 = vshrl.u32 %v1035, 7
      %v1037 = vsub.s32 %v1034, %v1036
      %v1038 = vrot.slane %v1024, %v1037
      %v1039 = vcombine.low %v983, %v1015
      %v1040 = vcombine.high %v983, %v1015
      %v1041 = vcombine.low %v990, %v1022
      %v1042 = vcombine.high %v990, %v1022
      %v1043 = vcombine.low %v999, %v1031
      %v1044 = vcombine.high %v999, %v1031
      %v1045 = vcombine.low %v1006, %v1038
      %v1046 = vcombine.high %v1006, %v1038
      %1048 = vrot.lane.b32.xlu0 %v904, 16
      %v1049 = vpop.permute.xlu0 %1048
      %1052 = vrot.lane.b32.xlu0 %v905, 32
      %v1053 = vpop.permute.xlu0 %1052
      %1056 = vrot.lane.b32.xlu0 %v906, 48
      %v1057 = vpop.permute.xlu0 %1056
      %1060 = vrot.lane.b32.xlu0 %v907, 64
      %v1061 = vpop.permute.xlu0 %1060
      %1064 = vrot.lane.b32.xlu0 %v908, 80
      %v1065 = vpop.permute.xlu0 %1064
      %1068 = vrot.lane.b32.xlu0 %v909, 96
      %v1069 = vpop.permute.xlu0 %1068
      %1072 = vrot.lane.b32.xlu0 %v910, 112
      %v1073 = vpop.permute.xlu0 %1072
      %1076 = vrot.lane.b32.xlu0 %v1040, 16
      %v1077 = vpop.permute.xlu0 %1076
      %1080 = vrot.lane.b32.xlu0 %v1041, 32
      %v1081 = vpop.permute.xlu0 %1080
      %1084 = vrot.lane.b32.xlu0 %v1042, 48
      %v1085 = vpop.permute.xlu0 %1084
      %1088 = vrot.lane.b32.xlu0 %v1043, 64
      %v1089 = vpop.permute.xlu0 %1088
      %1092 = vrot.lane.b32.xlu0 %v1044, 80
      %v1093 = vpop.permute.xlu0 %1092
      %1096 = vrot.lane.b32.xlu0 %v1045, 96
      %v1097 = vpop.permute.xlu0 %1096
      %1100 = vrot.lane.b32.xlu0 %v1046, 112
      %v1101 = vpop.permute.xlu0 %1100
      %vm1103 = vcmask 130048
      %v1104 = vsel %vm1103, %v903, %v1049
      %vm1105 = vcmask 261120
      %v1106 = vsel %vm1105, %v1104, %v1053
      %vm1107 = vcmask 392192
      %v1108 = vsel %vm1107, %v1106, %v1057
      %vm1109 = vcmask 523264
      %v1110 = vsel %vm1109, %v1108, %v1061
      %vm1111 = vcmask 654336
      %v1112 = vsel %vm1111, %v1110, %v1065
      %vm1113 = vcmask 785408
      %v1114 = vsel %vm1113, %v1112, %v1069
      %vm1115 = vcmask 916480
      %v1116 = vsel %vm1115, %v1114, %v1073
      %v1117 = vsel %vm1103, %v1039, %v1077
      %v1118 = vsel %vm1105, %v1117, %v1081
      %v1119 = vsel %vm1107, %v1118, %v1085
      %v1120 = vsel %vm1109, %v1119, %v1089
      %v1121 = vsel %vm1111, %v1120, %v1093
      %v1122 = vsel %vm1113, %v1121, %v1097
      %v1123 = vsel %vm1115, %v1122, %v1101
      %1140 = vrot.lane.b32.xlu0 %v751, 127
      %v1141 = vpop.permute.xlu0 %1140
      %1142 = vrot.lane.b32.xlu0 %v752, 127
      %v1143 = vpop.permute.xlu0 %1142
      %1144 = vrot.lane.b32.xlu0 %v754, 127
      %v1145 = vpop.permute.xlu0 %1144
      %1146 = vrot.lane.b32.xlu0 %v755, 127
      %v1147 = vpop.permute.xlu0 %1146
      %1148 = vrot.lane.b32.xlu0 %v757, 127
      %v1149 = vpop.permute.xlu0 %1148
      %1150 = vrot.lane.b32.xlu0 %v758, 127
      %v1151 = vpop.permute.xlu0 %1150
      %1152 = vrot.lane.b32.xlu0 %v760, 127
      %v1153 = vpop.permute.xlu0 %1152
      %1154 = vrot.lane.b32.xlu0 %v761, 127
      %v1155 = vpop.permute.xlu0 %1154
      %1156 = vrot.lane.b32.xlu0 %v763, 127
      %v1157 = vpop.permute.xlu0 %1156
      %1158 = vrot.lane.b32.xlu0 %v764, 127
      %v1159 = vpop.permute.xlu0 %1158
      %1160 = vrot.lane.b32.xlu0 %v766, 127
      %v1161 = vpop.permute.xlu0 %1160
      %1162 = vrot.lane.b32.xlu0 %v767, 127
      %v1163 = vpop.permute.xlu0 %1162
      %1164 = vrot.lane.b32.xlu0 %v769, 127
      %v1165 = vpop.permute.xlu0 %1164
      %1166 = vrot.lane.b32.xlu0 %v770, 127
      %v1167 = vpop.permute.xlu0 %1166
      %1168 = vrot.lane.b32.xlu0 %v772, 127
      %v1169 = vpop.permute.xlu0 %1168
      %1170 = vrot.lane.b32.xlu0 %v773, 127
      %v1171 = vpop.permute.xlu0 %1170
      %v1188 = vcombine.low %v1141, %v1149
      %v1189 = vcombine.high %v1141, %v1149
      %v1191 = vunpack.c.l.s4 1983009808
      %v1192 = vunpack.c.0.s8 %v1191
      %v1193 = vlaneseq
      %v1194 = vshrl.u32 %v1193, 7
      %v1195 = vsub.s32 %v1192, %v1194
      %v1196 = vrot.slane %v1188, %v1195
      %v1198 = vunpack.c.l.s4 1983009808
      %v1199 = vunpack.c.0.s8 %v1198
      %v1200 = vlaneseq
      %v1201 = vshrl.u32 %v1200, 7
      %v1202 = vsub.s32 %v1199, %v1201
      %v1203 = vrot.slane %v1189, %v1202
      %v1204 = vcombine.low %v1145, %v1153
      %v1205 = vcombine.high %v1145, %v1153
      %v1207 = vunpack.c.l.s4 1983009808
      %v1208 = vunpack.c.0.s8 %v1207
      %v1209 = vlaneseq
      %v1210 = vshrl.u32 %v1209, 7
      %v1211 = vsub.s32 %v1208, %v1210
      %v1212 = vrot.slane %v1204, %v1211
      %v1214 = vunpack.c.l.s4 1983009808
      %v1215 = vunpack.c.0.s8 %v1214
      %v1216 = vlaneseq
      %v1217 = vshrl.u32 %v1216, 7
      %v1218 = vsub.s32 %v1215, %v1217
      %v1219 = vrot.slane %v1205, %v1218
      %v1220 = vcombine.low %v1157, %v1165
      %v1221 = vcombine.high %v1157, %v1165
      %v1223 = vunpack.c.l.s4 1983009808
      %v1224 = vunpack.c.0.s8 %v1223
      %v1225 = vlaneseq
      %v1226 = vshrl.u32 %v1225, 7
      %v1227 = vsub.s32 %v1224, %v1226
      %v1228 = vrot.slane %v1220, %v1227
      %v1230 = vunpack.c.l.s4 1983009808
      %v1231 = vunpack.c.0.s8 %v1230
      %v1232 = vlaneseq
      %v1233 = vshrl.u32 %v1232, 7
      %v1234 = vsub.s32 %v1231, %v1233
      %v1235 = vrot.slane %v1221, %v1234
      %v1236 = vcombine.low %v1161, %v1169
      %v1237 = vcombine.high %v1161, %v1169
      %v1239 = vunpack.c.l.s4 1983009808
      %v1240 = vunpack.c.0.s8 %v1239
      %v1241 = vlaneseq
      %v1242 = vshrl.u32 %v1241, 7
      %v1243 = vsub.s32 %v1240, %v1242
      %v1244 = vrot.slane %v1236, %v1243
      %v1246 = vunpack.c.l.s4 1983009808
      %v1247 = vunpack.c.0.s8 %v1246
      %v1248 = vlaneseq
      %v1249 = vshrl.u32 %v1248, 7
      %v1250 = vsub.s32 %v1247, %v1249
      %v1251 = vrot.slane %v1237, %v1250
      %v1252 = vcombine.low %v1196, %v1212
      %v1253 = vcombine.high %v1196, %v1212
      %v1255 = vunpack.c.l.s4 1934713408
      %v1256 = vunpack.c.0.s8 %v1255
      %v1257 = vlaneseq
      %v1258 = vshrl.u32 %v1257, 7
      %v1259 = vsub.s32 %v1256, %v1258
      %v1260 = vrot.slane %v1252, %v1259
      %v1262 = vunpack.c.l.s4 1934713408
      %v1263 = vunpack.c.0.s8 %v1262
      %v1264 = vlaneseq
      %v1265 = vshrl.u32 %v1264, 7
      %v1266 = vsub.s32 %v1263, %v1265
      %v1267 = vrot.slane %v1253, %v1266
      %v1268 = vcombine.low %v1203, %v1219
      %v1269 = vcombine.high %v1203, %v1219
      %v1271 = vunpack.c.l.s4 1934713408
      %v1272 = vunpack.c.0.s8 %v1271
      %v1273 = vlaneseq
      %v1274 = vshrl.u32 %v1273, 7
      %v1275 = vsub.s32 %v1272, %v1274
      %v1276 = vrot.slane %v1268, %v1275
      %v1278 = vunpack.c.l.s4 1934713408
      %v1279 = vunpack.c.0.s8 %v1278
      %v1280 = vlaneseq
      %v1281 = vshrl.u32 %v1280, 7
      %v1282 = vsub.s32 %v1279, %v1281
      %v1283 = vrot.slane %v1269, %v1282
      %v1284 = vcombine.low %v1228, %v1244
      %v1285 = vcombine.high %v1228, %v1244
      %v1287 = vunpack.c.l.s4 1934713408
      %v1288 = vunpack.c.0.s8 %v1287
      %v1289 = vlaneseq
      %v1290 = vshrl.u32 %v1289, 7
      %v1291 = vsub.s32 %v1288, %v1290
      %v1292 = vrot.slane %v1284, %v1291
      %v1294 = vunpack.c.l.s4 1934713408
      %v1295 = vunpack.c.0.s8 %v1294
      %v1296 = vlaneseq
      %v1297 = vshrl.u32 %v1296, 7
      %v1298 = vsub.s32 %v1295, %v1297
      %v1299 = vrot.slane %v1285, %v1298
      %v1300 = vcombine.low %v1235, %v1251
      %v1301 = vcombine.high %v1235, %v1251
      %v1303 = vunpack.c.l.s4 1934713408
      %v1304 = vunpack.c.0.s8 %v1303
      %v1305 = vlaneseq
      %v1306 = vshrl.u32 %v1305, 7
      %v1307 = vsub.s32 %v1304, %v1306
      %v1308 = vrot.slane %v1300, %v1307
      %v1310 = vunpack.c.l.s4 1934713408
      %v1311 = vunpack.c.0.s8 %v1310
      %v1312 = vlaneseq
      %v1313 = vshrl.u32 %v1312, 7
      %v1314 = vsub.s32 %v1311, %v1313
      %v1315 = vrot.slane %v1301, %v1314
      %v1316 = vcombine.low %v1260, %v1292
      %v1317 = vcombine.high %v1260, %v1292
      %v1318 = vcombine.low %v1267, %v1299
      %v1319 = vcombine.high %v1267, %v1299
      %v1320 = vcombine.low %v1276, %v1308
      %v1321 = vcombine.high %v1276, %v1308
      %v1322 = vcombine.low %v1283, %v1315
      %v1323 = vcombine.high %v1283, %v1315
      %v1324 = vcombine.low %v1143, %v1151
      %v1325 = vcombine.high %v1143, %v1151
      %v1327 = vunpack.c.l.s4 1983009808
      %v1328 = vunpack.c.0.s8 %v1327
      %v1329 = vlaneseq
      %v1330 = vshrl.u32 %v1329, 7
      %v1331 = vsub.s32 %v1328, %v1330
      %v1332 = vrot.slane %v1324, %v1331
      %v1334 = vunpack.c.l.s4 1983009808
      %v1335 = vunpack.c.0.s8 %v1334
      %v1336 = vlaneseq
      %v1337 = vshrl.u32 %v1336, 7
      %v1338 = vsub.s32 %v1335, %v1337
      %v1339 = vrot.slane %v1325, %v1338
      %v1340 = vcombine.low %v1147, %v1155
      %v1341 = vcombine.high %v1147, %v1155
      %v1343 = vunpack.c.l.s4 1983009808
      %v1344 = vunpack.c.0.s8 %v1343
      %v1345 = vlaneseq
      %v1346 = vshrl.u32 %v1345, 7
      %v1347 = vsub.s32 %v1344, %v1346
      %v1348 = vrot.slane %v1340, %v1347
      %v1350 = vunpack.c.l.s4 1983009808
      %v1351 = vunpack.c.0.s8 %v1350
      %v1352 = vlaneseq
      %v1353 = vshrl.u32 %v1352, 7
      %v1354 = vsub.s32 %v1351, %v1353
      %v1355 = vrot.slane %v1341, %v1354
      %v1356 = vcombine.low %v1159, %v1167
      %v1357 = vcombine.high %v1159, %v1167
      %v1359 = vunpack.c.l.s4 1983009808
      %v1360 = vunpack.c.0.s8 %v1359
      %v1361 = vlaneseq
      %v1362 = vshrl.u32 %v1361, 7
      %v1363 = vsub.s32 %v1360, %v1362
      %v1364 = vrot.slane %v1356, %v1363
      %v1366 = vunpack.c.l.s4 1983009808
      %v1367 = vunpack.c.0.s8 %v1366
      %v1368 = vlaneseq
      %v1369 = vshrl.u32 %v1368, 7
      %v1370 = vsub.s32 %v1367, %v1369
      %v1371 = vrot.slane %v1357, %v1370
      %v1372 = vcombine.low %v1163, %v1171
      %v1373 = vcombine.high %v1163, %v1171
      %v1375 = vunpack.c.l.s4 1983009808
      %v1376 = vunpack.c.0.s8 %v1375
      %v1377 = vlaneseq
      %v1378 = vshrl.u32 %v1377, 7
      %v1379 = vsub.s32 %v1376, %v1378
      %v1380 = vrot.slane %v1372, %v1379
      %v1382 = vunpack.c.l.s4 1983009808
      %v1383 = vunpack.c.0.s8 %v1382
      %v1384 = vlaneseq
      %v1385 = vshrl.u32 %v1384, 7
      %v1386 = vsub.s32 %v1383, %v1385
      %v1387 = vrot.slane %v1373, %v1386
      %v1388 = vcombine.low %v1332, %v1348
      %v1389 = vcombine.high %v1332, %v1348
      %v1391 = vunpack.c.l.s4 1934713408
      %v1392 = vunpack.c.0.s8 %v1391
      %v1393 = vlaneseq
      %v1394 = vshrl.u32 %v1393, 7
      %v1395 = vsub.s32 %v1392, %v1394
      %v1396 = vrot.slane %v1388, %v1395
      %v1398 = vunpack.c.l.s4 1934713408
      %v1399 = vunpack.c.0.s8 %v1398
      %v1400 = vlaneseq
      %v1401 = vshrl.u32 %v1400, 7
      %v1402 = vsub.s32 %v1399, %v1401
      %v1403 = vrot.slane %v1389, %v1402
      %v1404 = vcombine.low %v1339, %v1355
      %v1405 = vcombine.high %v1339, %v1355
      %v1407 = vunpack.c.l.s4 1934713408
      %v1408 = vunpack.c.0.s8 %v1407
      %v1409 = vlaneseq
      %v1410 = vshrl.u32 %v1409, 7
      %v1411 = vsub.s32 %v1408, %v1410
      %v1412 = vrot.slane %v1404, %v1411
      %v1414 = vunpack.c.l.s4 1934713408
      %v1415 = vunpack.c.0.s8 %v1414
      %v1416 = vlaneseq
      %v1417 = vshrl.u32 %v1416, 7
      %v1418 = vsub.s32 %v1415, %v1417
      %v1419 = vrot.slane %v1405, %v1418
      %v1420 = vcombine.low %v1364, %v1380
      %v1421 = vcombine.high %v1364, %v1380
      %v1423 = vunpack.c.l.s4 1934713408
      %v1424 = vunpack.c.0.s8 %v1423
      %v1425 = vlaneseq
      %v1426 = vshrl.u32 %v1425, 7
      %v1427 = vsub.s32 %v1424, %v1426
      %v1428 = vrot.slane %v1420, %v1427
      %v1430 = vunpack.c.l.s4 1934713408
      %v1431 = vunpack.c.0.s8 %v1430
      %v1432 = vlaneseq
      %v1433 = vshrl.u32 %v1432, 7
      %v1434 = vsub.s32 %v1431, %v1433
      %v1435 = vrot.slane %v1421, %v1434
      %v1436 = vcombine.low %v1371, %v1387
      %v1437 = vcombine.high %v1371, %v1387
      %v1439 = vunpack.c.l.s4 1934713408
      %v1440 = vunpack.c.0.s8 %v1439
      %v1441 = vlaneseq
      %v1442 = vshrl.u32 %v1441, 7
      %v1443 = vsub.s32 %v1440, %v1442
      %v1444 = vrot.slane %v1436, %v1443
      %v1446 = vunpack.c.l.s4 1934713408
      %v1447 = vunpack.c.0.s8 %v1446
      %v1448 = vlaneseq
      %v1449 = vshrl.u32 %v1448, 7
      %v1450 = vsub.s32 %v1447, %v1449
      %v1451 = vrot.slane %v1437, %v1450
      %v1452 = vcombine.low %v1396, %v1428
      %v1453 = vcombine.high %v1396, %v1428
      %v1454 = vcombine.low %v1403, %v1435
      %v1455 = vcombine.high %v1403, %v1435
      %v1456 = vcombine.low %v1412, %v1444
      %v1457 = vcombine.high %v1412, %v1444
      %v1458 = vcombine.low %v1419, %v1451
      %v1459 = vcombine.high %v1419, %v1451
      %1461 = vrot.lane.b32.xlu0 %v1317, 16
      %v1462 = vpop.permute.xlu0 %1461
      %1465 = vrot.lane.b32.xlu0 %v1318, 32
      %v1466 = vpop.permute.xlu0 %1465
      %1469 = vrot.lane.b32.xlu0 %v1319, 48
      %v1470 = vpop.permute.xlu0 %1469
      %1473 = vrot.lane.b32.xlu0 %v1320, 64
      %v1474 = vpop.permute.xlu0 %1473
      %1477 = vrot.lane.b32.xlu0 %v1321, 80
      %v1478 = vpop.permute.xlu0 %1477
      %1481 = vrot.lane.b32.xlu0 %v1322, 96
      %v1482 = vpop.permute.xlu0 %1481
      %1485 = vrot.lane.b32.xlu0 %v1323, 112
      %v1486 = vpop.permute.xlu0 %1485
      %1489 = vrot.lane.b32.xlu0 %v1453, 16
      %v1490 = vpop.permute.xlu0 %1489
      %1493 = vrot.lane.b32.xlu0 %v1454, 32
      %v1494 = vpop.permute.xlu0 %1493
      %1497 = vrot.lane.b32.xlu0 %v1455, 48
      %v1498 = vpop.permute.xlu0 %1497
      %1501 = vrot.lane.b32.xlu0 %v1456, 64
      %v1502 = vpop.permute.xlu0 %1501
      %1505 = vrot.lane.b32.xlu0 %v1457, 80
      %v1506 = vpop.permute.xlu0 %1505
      %1509 = vrot.lane.b32.xlu0 %v1458, 96
      %v1510 = vpop.permute.xlu0 %1509
      %1513 = vrot.lane.b32.xlu0 %v1459, 112
      %v1514 = vpop.permute.xlu0 %1513
      %v1516 = vsel %vm1103, %v1316, %v1462
      %v1517 = vsel %vm1105, %v1516, %v1466
      %v1518 = vsel %vm1107, %v1517, %v1470
      %v1519 = vsel %vm1109, %v1518, %v1474
      %v1520 = vsel %vm1111, %v1519, %v1478
      %v1521 = vsel %vm1113, %v1520, %v1482
      %v1522 = vsel %vm1115, %v1521, %v1486
      %v1523 = vsel %vm1103, %v1452, %v1490
      %v1524 = vsel %vm1105, %v1523, %v1494
      %v1525 = vsel %vm1107, %v1524, %v1498
      %v1526 = vsel %vm1109, %v1525, %v1502
      %v1527 = vsel %vm1111, %v1526, %v1506
      %v1528 = vsel %vm1113, %v1527, %v1510
      %v1529 = vsel %vm1115, %v1528, %v1514
      %1530 = vrot.lane.b32.xlu0 %v751, 126
      %v1531 = vpop.permute.xlu0 %1530
      %1532 = vrot.lane.b32.xlu0 %v752, 126
      %v1533 = vpop.permute.xlu0 %1532
      %1534 = vrot.lane.b32.xlu0 %v754, 126
      %v1535 = vpop.permute.xlu0 %1534
      %1536 = vrot.lane.b32.xlu0 %v755, 126
      %v1537 = vpop.permute.xlu0 %1536
      %1538 = vrot.lane.b32.xlu0 %v757, 126
      %v1539 = vpop.permute.xlu0 %1538
      %1540 = vrot.lane.b32.xlu0 %v758, 126
      %v1541 = vpop.permute.xlu0 %1540
      %1542 = vrot.lane.b32.xlu0 %v760, 126
      %v1543 = vpop.permute.xlu0 %1542
      %1544 = vrot.lane.b32.xlu0 %v761, 126
      %v1545 = vpop.permute.xlu0 %1544
      %1546 = vrot.lane.b32.xlu0 %v763, 126
      %v1547 = vpop.permute.xlu0 %1546
      %1548 = vrot.lane.b32.xlu0 %v764, 126
      %v1549 = vpop.permute.xlu0 %1548
      %1550 = vrot.lane.b32.xlu0 %v766, 126
      %v1551 = vpop.permute.xlu0 %1550
      %1552 = vrot.lane.b32.xlu0 %v767, 126
      %v1553 = vpop.permute.xlu0 %1552
      %1554 = vrot.lane.b32.xlu0 %v769, 126
      %v1555 = vpop.permute.xlu0 %1554
      %1556 = vrot.lane.b32.xlu0 %v770, 126
      %v1557 = vpop.permute.xlu0 %1556
      %1558 = vrot.lane.b32.xlu0 %v772, 126
      %v1559 = vpop.permute.xlu0 %1558
      %1560 = vrot.lane.b32.xlu0 %v773, 126
      %v1561 = vpop.permute.xlu0 %1560
      %v1578 = vcombine.low %v1531, %v1539
      %v1579 = vcombine.high %v1531, %v1539
      %v1581 = vunpack.c.l.s4 1983009808
      %v1582 = vunpack.c.0.s8 %v1581
      %v1583 = vlaneseq
      %v1584 = vshrl.u32 %v1583, 7
      %v1585 = vsub.s32 %v1582, %v1584
      %v1586 = vrot.slane %v1578, %v1585
      %v1588 = vunpack.c.l.s4 1983009808
      %v1589 = vunpack.c.0.s8 %v1588
      %v1590 = vlaneseq
      %v1591 = vshrl.u32 %v1590, 7
      %v1592 = vsub.s32 %v1589, %v1591
      %v1593 = vrot.slane %v1579, %v1592
      %v1594 = vcombine.low %v1535, %v1543
      %v1595 = vcombine.high %v1535, %v1543
      %v1597 = vunpack.c.l.s4 1983009808
      %v1598 = vunpack.c.0.s8 %v1597
      %v1599 = vlaneseq
      %v1600 = vshrl.u32 %v1599, 7
      %v1601 = vsub.s32 %v1598, %v1600
      %v1602 = vrot.slane %v1594, %v1601
      %v1604 = vunpack.c.l.s4 1983009808
      %v1605 = vunpack.c.0.s8 %v1604
      %v1606 = vlaneseq
      %v1607 = vshrl.u32 %v1606, 7
      %v1608 = vsub.s32 %v1605, %v1607
      %v1609 = vrot.slane %v1595, %v1608
      %v1610 = vcombine.low %v1547, %v1555
      %v1611 = vcombine.high %v1547, %v1555
      %v1613 = vunpack.c.l.s4 1983009808
      %v1614 = vunpack.c.0.s8 %v1613
      %v1615 = vlaneseq
      %v1616 = vshrl.u32 %v1615, 7
      %v1617 = vsub.s32 %v1614, %v1616
      %v1618 = vrot.slane %v1610, %v1617
      %v1620 = vunpack.c.l.s4 1983009808
      %v1621 = vunpack.c.0.s8 %v1620
      %v1622 = vlaneseq
      %v1623 = vshrl.u32 %v1622, 7
      %v1624 = vsub.s32 %v1621, %v1623
      %v1625 = vrot.slane %v1611, %v1624
      %v1626 = vcombine.low %v1551, %v1559
      %v1627 = vcombine.high %v1551, %v1559
      %v1629 = vunpack.c.l.s4 1983009808
      %v1630 = vunpack.c.0.s8 %v1629
      %v1631 = vlaneseq
      %v1632 = vshrl.u32 %v1631, 7
      %v1633 = vsub.s32 %v1630, %v1632
      %v1634 = vrot.slane %v1626, %v1633
      %v1636 = vunpack.c.l.s4 1983009808
      %v1637 = vunpack.c.0.s8 %v1636
      %v1638 = vlaneseq
      %v1639 = vshrl.u32 %v1638, 7
      %v1640 = vsub.s32 %v1637, %v1639
      %v1641 = vrot.slane %v1627, %v1640
      %v1642 = vcombine.low %v1586, %v1602
      %v1643 = vcombine.high %v1586, %v1602
      %v1645 = vunpack.c.l.s4 1934713408
      %v1646 = vunpack.c.0.s8 %v1645
      %v1647 = vlaneseq
      %v1648 = vshrl.u32 %v1647, 7
      %v1649 = vsub.s32 %v1646, %v1648
      %v1650 = vrot.slane %v1642, %v1649
      %v1652 = vunpack.c.l.s4 1934713408
      %v1653 = vunpack.c.0.s8 %v1652
      %v1654 = vlaneseq
      %v1655 = vshrl.u32 %v1654, 7
      %v1656 = vsub.s32 %v1653, %v1655
      %v1657 = vrot.slane %v1643, %v1656
      %v1658 = vcombine.low %v1593, %v1609
      %v1659 = vcombine.high %v1593, %v1609
      %v1661 = vunpack.c.l.s4 1934713408
      %v1662 = vunpack.c.0.s8 %v1661
      %v1663 = vlaneseq
      %v1664 = vshrl.u32 %v1663, 7
      %v1665 = vsub.s32 %v1662, %v1664
      %v1666 = vrot.slane %v1658, %v1665
      %v1668 = vunpack.c.l.s4 1934713408
      %v1669 = vunpack.c.0.s8 %v1668
      %v1670 = vlaneseq
      %v1671 = vshrl.u32 %v1670, 7
      %v1672 = vsub.s32 %v1669, %v1671
      %v1673 = vrot.slane %v1659, %v1672
      %v1674 = vcombine.low %v1618, %v1634
      %v1675 = vcombine.high %v1618, %v1634
      %v1677 = vunpack.c.l.s4 1934713408
      %v1678 = vunpack.c.0.s8 %v1677
      %v1679 = vlaneseq
      %v1680 = vshrl.u32 %v1679, 7
      %v1681 = vsub.s32 %v1678, %v1680
      %v1682 = vrot.slane %v1674, %v1681
      %v1684 = vunpack.c.l.s4 1934713408
      %v1685 = vunpack.c.0.s8 %v1684
      %v1686 = vlaneseq
      %v1687 = vshrl.u32 %v1686, 7
      %v1688 = vsub.s32 %v1685, %v1687
      %v1689 = vrot.slane %v1675, %v1688
      %v1690 = vcombine.low %v1625, %v1641
      %v1691 = vcombine.high %v1625, %v1641
      %v1693 = vunpack.c.l.s4 1934713408
      %v1694 = vunpack.c.0.s8 %v1693
      %v1695 = vlaneseq
      %v1696 = vshrl.u32 %v1695, 7
      %v1697 = vsub.s32 %v1694, %v1696
      %v1698 = vrot.slane %v1690, %v1697
      %v1700 = vunpack.c.l.s4 1934713408
      %v1701 = vunpack.c.0.s8 %v1700
      %v1702 = vlaneseq
      %v1703 = vshrl.u32 %v1702, 7
      %v1704 = vsub.s32 %v1701, %v1703
      %v1705 = vrot.slane %v1691, %v1704
      %v1706 = vcombine.low %v1650, %v1682
      %v1707 = vcombine.high %v1650, %v1682
      %v1708 = vcombine.low %v1657, %v1689
      %v1709 = vcombine.high %v1657, %v1689
      %v1710 = vcombine.low %v1666, %v1698
      %v1711 = vcombine.high %v1666, %v1698
      %v1712 = vcombine.low %v1673, %v1705
      %v1713 = vcombine.high %v1673, %v1705
      %v1714 = vcombine.low %v1533, %v1541
      %v1715 = vcombine.high %v1533, %v1541
      %v1717 = vunpack.c.l.s4 1983009808
      %v1718 = vunpack.c.0.s8 %v1717
      %v1719 = vlaneseq
      %v1720 = vshrl.u32 %v1719, 7
      %v1721 = vsub.s32 %v1718, %v1720
      %v1722 = vrot.slane %v1714, %v1721
      %v1724 = vunpack.c.l.s4 1983009808
      %v1725 = vunpack.c.0.s8 %v1724
      %v1726 = vlaneseq
      %v1727 = vshrl.u32 %v1726, 7
      %v1728 = vsub.s32 %v1725, %v1727
      %v1729 = vrot.slane %v1715, %v1728
      %v1730 = vcombine.low %v1537, %v1545
      %v1731 = vcombine.high %v1537, %v1545
      %v1733 = vunpack.c.l.s4 1983009808
      %v1734 = vunpack.c.0.s8 %v1733
      %v1735 = vlaneseq
      %v1736 = vshrl.u32 %v1735, 7
      %v1737 = vsub.s32 %v1734, %v1736
      %v1738 = vrot.slane %v1730, %v1737
      %v1740 = vunpack.c.l.s4 1983009808
      %v1741 = vunpack.c.0.s8 %v1740
      %v1742 = vlaneseq
      %v1743 = vshrl.u32 %v1742, 7
      %v1744 = vsub.s32 %v1741, %v1743
      %v1745 = vrot.slane %v1731, %v1744
      %v1746 = vcombine.low %v1549, %v1557
      %v1747 = vcombine.high %v1549, %v1557
      %v1749 = vunpack.c.l.s4 1983009808
      %v1750 = vunpack.c.0.s8 %v1749
      %v1751 = vlaneseq
      %v1752 = vshrl.u32 %v1751, 7
      %v1753 = vsub.s32 %v1750, %v1752
      %v1754 = vrot.slane %v1746, %v1753
      %v1756 = vunpack.c.l.s4 1983009808
      %v1757 = vunpack.c.0.s8 %v1756
      %v1758 = vlaneseq
      %v1759 = vshrl.u32 %v1758, 7
      %v1760 = vsub.s32 %v1757, %v1759
      %v1761 = vrot.slane %v1747, %v1760
      %v1762 = vcombine.low %v1553, %v1561
      %v1763 = vcombine.high %v1553, %v1561
      %v1765 = vunpack.c.l.s4 1983009808
      %v1766 = vunpack.c.0.s8 %v1765
      %v1767 = vlaneseq
      %v1768 = vshrl.u32 %v1767, 7
      %v1769 = vsub.s32 %v1766, %v1768
      %v1770 = vrot.slane %v1762, %v1769
      %v1772 = vunpack.c.l.s4 1983009808
      %v1773 = vunpack.c.0.s8 %v1772
      %v1774 = vlaneseq
      %v1775 = vshrl.u32 %v1774, 7
      %v1776 = vsub.s32 %v1773, %v1775
      %v1777 = vrot.slane %v1763, %v1776
      %v1778 = vcombine.low %v1722, %v1738
      %v1779 = vcombine.high %v1722, %v1738
      %v1781 = vunpack.c.l.s4 1934713408
      %v1782 = vunpack.c.0.s8 %v1781
      %v1783 = vlaneseq
      %v1784 = vshrl.u32 %v1783, 7
      %v1785 = vsub.s32 %v1782, %v1784
      %v1786 = vrot.slane %v1778, %v1785
      %v1788 = vunpack.c.l.s4 1934713408
      %v1789 = vunpack.c.0.s8 %v1788
      %v1790 = vlaneseq
      %v1791 = vshrl.u32 %v1790, 7
      %v1792 = vsub.s32 %v1789, %v1791
      %v1793 = vrot.slane %v1779, %v1792
      %v1794 = vcombine.low %v1729, %v1745
      %v1795 = vcombine.high %v1729, %v1745
      %v1797 = vunpack.c.l.s4 1934713408
      %v1798 = vunpack.c.0.s8 %v1797
      %v1799 = vlaneseq
      %v1800 = vshrl.u32 %v1799, 7
      %v1801 = vsub.s32 %v1798, %v1800
      %v1802 = vrot.slane %v1794, %v1801
      %v1804 = vunpack.c.l.s4 1934713408
      %v1805 = vunpack.c.0.s8 %v1804
      %v1806 = vlaneseq
      %v1807 = vshrl.u32 %v1806, 7
      %v1808 = vsub.s32 %v1805, %v1807
      %v1809 = vrot.slane %v1795, %v1808
      %v1810 = vcombine.low %v1754, %v1770
      %v1811 = vcombine.high %v1754, %v1770
      %v1813 = vunpack.c.l.s4 1934713408
      %v1814 = vunpack.c.0.s8 %v1813
      %v1815 = vlaneseq
      %v1816 = vshrl.u32 %v1815, 7
      %v1817 = vsub.s32 %v1814, %v1816
      %v1818 = vrot.slane %v1810, %v1817
      %v1820 = vunpack.c.l.s4 1934713408
      %v1821 = vunpack.c.0.s8 %v1820
      %v1822 = vlaneseq
      %v1823 = vshrl.u32 %v1822, 7
      %v1824 = vsub.s32 %v1821, %v1823
      %v1825 = vrot.slane %v1811, %v1824
      %v1826 = vcombine.low %v1761, %v1777
      %v1827 = vcombine.high %v1761, %v1777
      %v1829 = vunpack.c.l.s4 1934713408
      %v1830 = vunpack.c.0.s8 %v1829
      %v1831 = vlaneseq
      %v1832 = vshrl.u32 %v1831, 7
      %v1833 = vsub.s32 %v1830, %v1832
      %v1834 = vrot.slane %v1826, %v1833
      %v1836 = vunpack.c.l.s4 1934713408
      %v1837 = vunpack.c.0.s8 %v1836
      %v1838 = vlaneseq
      %v1839 = vshrl.u32 %v1838, 7
      %v1840 = vsub.s32 %v1837, %v1839
      %v1841 = vrot.slane %v1827, %v1840
      %v1842 = vcombine.low %v1786, %v1818
      %v1843 = vcombine.high %v1786, %v1818
      %v1844 = vcombine.low %v1793, %v1825
      %v1845 = vcombine.high %v1793, %v1825
      %v1846 = vcombine.low %v1802, %v1834
      %v1847 = vcombine.high %v1802, %v1834
      %v1848 = vcombine.low %v1809, %v1841
      %v1849 = vcombine.high %v1809, %v1841
      %1851 = vrot.lane.b32.xlu0 %v1707, 16
      %v1852 = vpop.permute.xlu0 %1851
      %1855 = vrot.lane.b32.xlu0 %v1708, 32
      %v1856 = vpop.permute.xlu0 %1855
      %1859 = vrot.lane.b32.xlu0 %v1709, 48
      %v1860 = vpop.permute.xlu0 %1859
      %1863 = vrot.lane.b32.xlu0 %v1710, 64
      %v1864 = vpop.permute.xlu0 %1863
      %1867 = vrot.lane.b32.xlu0 %v1711, 80
      %v1868 = vpop.permute.xlu0 %1867
      %1871 = vrot.lane.b32.xlu0 %v1712, 96
      %v1872 = vpop.permute.xlu0 %1871
      %1875 = vrot.lane.b32.xlu0 %v1713, 112
      %v1876 = vpop.permute.xlu0 %1875
      %1879 = vrot.lane.b32.xlu0 %v1843, 16
      %v1880 = vpop.permute.xlu0 %1879
      %1883 = vrot.lane.b32.xlu0 %v1844, 32
      %v1884 = vpop.permute.xlu0 %1883
      %1887 = vrot.lane.b32.xlu0 %v1845, 48
      %v1888 = vpop.permute.xlu0 %1887
      %1891 = vrot.lane.b32.xlu0 %v1846, 64
      %v1892 = vpop.permute.xlu0 %1891
      %1895 = vrot.lane.b32.xlu0 %v1847, 80
      %v1896 = vpop.permute.xlu0 %1895
      %1899 = vrot.lane.b32.xlu0 %v1848, 96
      %v1900 = vpop.permute.xlu0 %1899
      %1903 = vrot.lane.b32.xlu0 %v1849, 112
      %v1904 = vpop.permute.xlu0 %1903
      %v1906 = vsel %vm1103, %v1706, %v1852
      %v1907 = vsel %vm1105, %v1906, %v1856
      %v1908 = vsel %vm1107, %v1907, %v1860
      %v1909 = vsel %vm1109, %v1908, %v1864
      %v1910 = vsel %vm1111, %v1909, %v1868
      %v1911 = vsel %vm1113, %v1910, %v1872
      %v1912 = vsel %vm1115, %v1911, %v1876
      %v1913 = vsel %vm1103, %v1842, %v1880
      %v1914 = vsel %vm1105, %v1913, %v1884
      %v1915 = vsel %vm1107, %v1914, %v1888
      %v1916 = vsel %vm1109, %v1915, %v1892
      %v1917 = vsel %vm1111, %v1916, %v1896
      %v1918 = vsel %vm1113, %v1917, %v1900
      %v1919 = vsel %vm1115, %v1918, %v1904
      %vm1928 = vcmask 1046528
      %v1929 = vrot.slane %v751, 1
      %v1930 = vrot.slane %v752, 1
      %v1931 = vsel %vm1928, %v1929, %v1930
      %v1932 = vrot.slane %v753, 1
      %v1933 = vsel %vm1928, %v1930, %v1932
      %v1934 = vrot.slane %v754, 1
      %v1935 = vrot.slane %v755, 1
      %v1936 = vsel %vm1928, %v1934, %v1935
      %v1937 = vrot.slane %v756, 1
      %v1938 = vsel %vm1928, %v1935, %v1937
      %v1939 = vrot.slane %v757, 1
      %v1940 = vrot.slane %v758, 1
      %v1941 = vsel %vm1928, %v1939, %v1940
      %v1942 = vrot.slane %v759, 1
      %v1943 = vsel %vm1928, %v1940, %v1942
      %v1944 = vrot.slane %v760, 1
      %v1945 = vrot.slane %v761, 1
      %v1946 = vsel %vm1928, %v1944, %v1945
      %v1947 = vrot.slane %v762, 1
      %v1948 = vsel %vm1928, %v1945, %v1947
      %v1949 = vrot.slane %v763, 1
      %v1950 = vrot.slane %v764, 1
      %v1951 = vsel %vm1928, %v1949, %v1950
      %v1952 = vrot.slane %v765, 1
      %v1953 = vsel %vm1928, %v1950, %v1952
      %v1954 = vrot.slane %v766, 1
      %v1955 = vrot.slane %v767, 1
      %v1956 = vsel %vm1928, %v1954, %v1955
      %v1957 = vrot.slane %v768, 1
      %v1958 = vsel %vm1928, %v1955, %v1957
      %v1959 = vrot.slane %v769, 1
      %v1960 = vrot.slane %v770, 1
      %v1961 = vsel %vm1928, %v1959, %v1960
      %v1962 = vrot.slane %v771, 1
      %v1963 = vsel %vm1928, %v1960, %v1962
      %v1964 = vrot.slane %v772, 1
      %v1965 = vrot.slane %v773, 1
      %v1966 = vsel %vm1928, %v1964, %v1965
      %v1967 = vrot.slane %v774, 1
      %v1968 = vsel %vm1928, %v1965, %v1967
      %v1985 = vcombine.low %v1931, %v1941
      %v1986 = vcombine.high %v1931, %v1941
      %v1988 = vunpack.c.l.s4 1983009808
      %v1989 = vunpack.c.0.s8 %v1988
      %v1990 = vlaneseq
      %v1991 = vshrl.u32 %v1990, 7
      %v1992 = vsub.s32 %v1989, %v1991
      %v1993 = vrot.slane %v1985, %v1992
      %v1995 = vunpack.c.l.s4 1983009808
      %v1996 = vunpack.c.0.s8 %v1995
      %v1997 = vlaneseq
      %v1998 = vshrl.u32 %v1997, 7
      %v1999 = vsub.s32 %v1996, %v1998
      %v2000 = vrot.slane %v1986, %v1999
      %v2001 = vcombine.low %v1936, %v1946
      %v2002 = vcombine.high %v1936, %v1946
      %v2004 = vunpack.c.l.s4 1983009808
      %v2005 = vunpack.c.0.s8 %v2004
      %v2006 = vlaneseq
      %v2007 = vshrl.u32 %v2006, 7
      %v2008 = vsub.s32 %v2005, %v2007
      %v2009 = vrot.slane %v2001, %v2008
      %v2011 = vunpack.c.l.s4 1983009808
      %v2012 = vunpack.c.0.s8 %v2011
      %v2013 = vlaneseq
      %v2014 = vshrl.u32 %v2013, 7
      %v2015 = vsub.s32 %v2012, %v2014
      %v2016 = vrot.slane %v2002, %v2015
      %v2017 = vcombine.low %v1951, %v1961
      %v2018 = vcombine.high %v1951, %v1961
      %v2020 = vunpack.c.l.s4 1983009808
      %v2021 = vunpack.c.0.s8 %v2020
      %v2022 = vlaneseq
      %v2023 = vshrl.u32 %v2022, 7
      %v2024 = vsub.s32 %v2021, %v2023
      %v2025 = vrot.slane %v2017, %v2024
      %v2027 = vunpack.c.l.s4 1983009808
      %v2028 = vunpack.c.0.s8 %v2027
      %v2029 = vlaneseq
      %v2030 = vshrl.u32 %v2029, 7
      %v2031 = vsub.s32 %v2028, %v2030
      %v2032 = vrot.slane %v2018, %v2031
      %v2033 = vcombine.low %v1956, %v1966
      %v2034 = vcombine.high %v1956, %v1966
      %v2036 = vunpack.c.l.s4 1983009808
      %v2037 = vunpack.c.0.s8 %v2036
      %v2038 = vlaneseq
      %v2039 = vshrl.u32 %v2038, 7
      %v2040 = vsub.s32 %v2037, %v2039
      %v2041 = vrot.slane %v2033, %v2040
      %v2043 = vunpack.c.l.s4 1983009808
      %v2044 = vunpack.c.0.s8 %v2043
      %v2045 = vlaneseq
      %v2046 = vshrl.u32 %v2045, 7
      %v2047 = vsub.s32 %v2044, %v2046
      %v2048 = vrot.slane %v2034, %v2047
      %v2049 = vcombine.low %v1993, %v2009
      %v2050 = vcombine.high %v1993, %v2009
      %v2052 = vunpack.c.l.s4 1934713408
      %v2053 = vunpack.c.0.s8 %v2052
      %v2054 = vlaneseq
      %v2055 = vshrl.u32 %v2054, 7
      %v2056 = vsub.s32 %v2053, %v2055
      %v2057 = vrot.slane %v2049, %v2056
      %v2059 = vunpack.c.l.s4 1934713408
      %v2060 = vunpack.c.0.s8 %v2059
      %v2061 = vlaneseq
      %v2062 = vshrl.u32 %v2061, 7
      %v2063 = vsub.s32 %v2060, %v2062
      %v2064 = vrot.slane %v2050, %v2063
      %v2065 = vcombine.low %v2000, %v2016
      %v2066 = vcombine.high %v2000, %v2016
      %v2068 = vunpack.c.l.s4 1934713408
      %v2069 = vunpack.c.0.s8 %v2068
      %v2070 = vlaneseq
      %v2071 = vshrl.u32 %v2070, 7
      %v2072 = vsub.s32 %v2069, %v2071
      %v2073 = vrot.slane %v2065, %v2072
      %v2075 = vunpack.c.l.s4 1934713408
      %v2076 = vunpack.c.0.s8 %v2075
      %v2077 = vlaneseq
      %v2078 = vshrl.u32 %v2077, 7
      %v2079 = vsub.s32 %v2076, %v2078
      %v2080 = vrot.slane %v2066, %v2079
      %v2081 = vcombine.low %v2025, %v2041
      %v2082 = vcombine.high %v2025, %v2041
      %v2084 = vunpack.c.l.s4 1934713408
      %v2085 = vunpack.c.0.s8 %v2084
      %v2086 = vlaneseq
      %v2087 = vshrl.u32 %v2086, 7
      %v2088 = vsub.s32 %v2085, %v2087
      %v2089 = vrot.slane %v2081, %v2088
      %v2091 = vunpack.c.l.s4 1934713408
      %v2092 = vunpack.c.0.s8 %v2091
      %v2093 = vlaneseq
      %v2094 = vshrl.u32 %v2093, 7
      %v2095 = vsub.s32 %v2092, %v2094
      %v2096 = vrot.slane %v2082, %v2095
      %v2097 = vcombine.low %v2032, %v2048
      %v2098 = vcombine.high %v2032, %v2048
      %v2100 = vunpack.c.l.s4 1934713408
      %v2101 = vunpack.c.0.s8 %v2100
      %v2102 = vlaneseq
      %v2103 = vshrl.u32 %v2102, 7
      %v2104 = vsub.s32 %v2101, %v2103
      %v2105 = vrot.slane %v2097, %v2104
      %v2107 = vunpack.c.l.s4 1934713408
      %v2108 = vunpack.c.0.s8 %v2107
      %v2109 = vlaneseq
      %v2110 = vshrl.u32 %v2109, 7
      %v2111 = vsub.s32 %v2108, %v2110
      %v2112 = vrot.slane %v2098, %v2111
      %v2113 = vcombine.low %v2057, %v2089
      %v2114 = vcombine.high %v2057, %v2089
      %v2115 = vcombine.low %v2064, %v2096
      %v2116 = vcombine.high %v2064, %v2096
      %v2117 = vcombine.low %v2073, %v2105
      %v2118 = vcombine.high %v2073, %v2105
      %v2119 = vcombine.low %v2080, %v2112
      %v2120 = vcombine.high %v2080, %v2112
      %v2121 = vcombine.low %v1933, %v1943
      %v2122 = vcombine.high %v1933, %v1943
      %v2124 = vunpack.c.l.s4 1983009808
      %v2125 = vunpack.c.0.s8 %v2124
      %v2126 = vlaneseq
      %v2127 = vshrl.u32 %v2126, 7
      %v2128 = vsub.s32 %v2125, %v2127
      %v2129 = vrot.slane %v2121, %v2128
      %v2131 = vunpack.c.l.s4 1983009808
      %v2132 = vunpack.c.0.s8 %v2131
      %v2133 = vlaneseq
      %v2134 = vshrl.u32 %v2133, 7
      %v2135 = vsub.s32 %v2132, %v2134
      %v2136 = vrot.slane %v2122, %v2135
      %v2137 = vcombine.low %v1938, %v1948
      %v2138 = vcombine.high %v1938, %v1948
      %v2140 = vunpack.c.l.s4 1983009808
      %v2141 = vunpack.c.0.s8 %v2140
      %v2142 = vlaneseq
      %v2143 = vshrl.u32 %v2142, 7
      %v2144 = vsub.s32 %v2141, %v2143
      %v2145 = vrot.slane %v2137, %v2144
      %v2147 = vunpack.c.l.s4 1983009808
      %v2148 = vunpack.c.0.s8 %v2147
      %v2149 = vlaneseq
      %v2150 = vshrl.u32 %v2149, 7
      %v2151 = vsub.s32 %v2148, %v2150
      %v2152 = vrot.slane %v2138, %v2151
      %v2153 = vcombine.low %v1953, %v1963
      %v2154 = vcombine.high %v1953, %v1963
      %v2156 = vunpack.c.l.s4 1983009808
      %v2157 = vunpack.c.0.s8 %v2156
      %v2158 = vlaneseq
      %v2159 = vshrl.u32 %v2158, 7
      %v2160 = vsub.s32 %v2157, %v2159
      %v2161 = vrot.slane %v2153, %v2160
      %v2163 = vunpack.c.l.s4 1983009808
      %v2164 = vunpack.c.0.s8 %v2163
      %v2165 = vlaneseq
      %v2166 = vshrl.u32 %v2165, 7
      %v2167 = vsub.s32 %v2164, %v2166
      %v2168 = vrot.slane %v2154, %v2167
      %v2169 = vcombine.low %v1958, %v1968
      %v2170 = vcombine.high %v1958, %v1968
      %v2172 = vunpack.c.l.s4 1983009808
      %v2173 = vunpack.c.0.s8 %v2172
      %v2174 = vlaneseq
      %v2175 = vshrl.u32 %v2174, 7
      %v2176 = vsub.s32 %v2173, %v2175
      %v2177 = vrot.slane %v2169, %v2176
      %v2179 = vunpack.c.l.s4 1983009808
      %v2180 = vunpack.c.0.s8 %v2179
      %v2181 = vlaneseq
      %v2182 = vshrl.u32 %v2181, 7
      %v2183 = vsub.s32 %v2180, %v2182
      %v2184 = vrot.slane %v2170, %v2183
      %v2185 = vcombine.low %v2129, %v2145
      %v2186 = vcombine.high %v2129, %v2145
      %v2188 = vunpack.c.l.s4 1934713408
      %v2189 = vunpack.c.0.s8 %v2188
      %v2190 = vlaneseq
      %v2191 = vshrl.u32 %v2190, 7
      %v2192 = vsub.s32 %v2189, %v2191
      %v2193 = vrot.slane %v2185, %v2192
      %v2195 = vunpack.c.l.s4 1934713408
      %v2196 = vunpack.c.0.s8 %v2195
      %v2197 = vlaneseq
      %v2198 = vshrl.u32 %v2197, 7
      %v2199 = vsub.s32 %v2196, %v2198
      %v2200 = vrot.slane %v2186, %v2199
      %v2201 = vcombine.low %v2136, %v2152
      %v2202 = vcombine.high %v2136, %v2152
      %v2204 = vunpack.c.l.s4 1934713408
      %v2205 = vunpack.c.0.s8 %v2204
      %v2206 = vlaneseq
      %v2207 = vshrl.u32 %v2206, 7
      %v2208 = vsub.s32 %v2205, %v2207
      %v2209 = vrot.slane %v2201, %v2208
      %v2211 = vunpack.c.l.s4 1934713408
      %v2212 = vunpack.c.0.s8 %v2211
      %v2213 = vlaneseq
      %v2214 = vshrl.u32 %v2213, 7
      %v2215 = vsub.s32 %v2212, %v2214
      %v2216 = vrot.slane %v2202, %v2215
      %v2217 = vcombine.low %v2161, %v2177
      %v2218 = vcombine.high %v2161, %v2177
      %v2220 = vunpack.c.l.s4 1934713408
      %v2221 = vunpack.c.0.s8 %v2220
      %v2222 = vlaneseq
      %v2223 = vshrl.u32 %v2222, 7
      %v2224 = vsub.s32 %v2221, %v2223
      %v2225 = vrot.slane %v2217, %v2224
      %v2227 = vunpack.c.l.s4 1934713408
      %v2228 = vunpack.c.0.s8 %v2227
      %v2229 = vlaneseq
      %v2230 = vshrl.u32 %v2229, 7
      %v2231 = vsub.s32 %v2228, %v2230
      %v2232 = vrot.slane %v2218, %v2231
      %v2233 = vcombine.low %v2168, %v2184
      %v2234 = vcombine.high %v2168, %v2184
      %v2236 = vunpack.c.l.s4 1934713408
      %v2237 = vunpack.c.0.s8 %v2236
      %v2238 = vlaneseq
      %v2239 = vshrl.u32 %v2238, 7
      %v2240 = vsub.s32 %v2237, %v2239
      %v2241 = vrot.slane %v2233, %v2240
      %v2243 = vunpack.c.l.s4 1934713408
      %v2244 = vunpack.c.0.s8 %v2243
      %v2245 = vlaneseq
      %v2246 = vshrl.u32 %v2245, 7
      %v2247 = vsub.s32 %v2244, %v2246
      %v2248 = vrot.slane %v2234, %v2247
      %v2249 = vcombine.low %v2193, %v2225
      %v2250 = vcombine.high %v2193, %v2225
      %v2251 = vcombine.low %v2200, %v2232
      %v2252 = vcombine.high %v2200, %v2232
      %v2253 = vcombine.low %v2209, %v2241
      %v2254 = vcombine.high %v2209, %v2241
      %v2255 = vcombine.low %v2216, %v2248
      %v2256 = vcombine.high %v2216, %v2248
      %2258 = vrot.lane.b32.xlu0 %v2114, 16
      %v2259 = vpop.permute.xlu0 %2258
      %2262 = vrot.lane.b32.xlu0 %v2115, 32
      %v2263 = vpop.permute.xlu0 %2262
      %2266 = vrot.lane.b32.xlu0 %v2116, 48
      %v2267 = vpop.permute.xlu0 %2266
      %2270 = vrot.lane.b32.xlu0 %v2117, 64
      %v2271 = vpop.permute.xlu0 %2270
      %2274 = vrot.lane.b32.xlu0 %v2118, 80
      %v2275 = vpop.permute.xlu0 %2274
      %2278 = vrot.lane.b32.xlu0 %v2119, 96
      %v2279 = vpop.permute.xlu0 %2278
      %2282 = vrot.lane.b32.xlu0 %v2120, 112
      %v2283 = vpop.permute.xlu0 %2282
      %2286 = vrot.lane.b32.xlu0 %v2250, 16
      %v2287 = vpop.permute.xlu0 %2286
      %2290 = vrot.lane.b32.xlu0 %v2251, 32
      %v2291 = vpop.permute.xlu0 %2290
      %2294 = vrot.lane.b32.xlu0 %v2252, 48
      %v2295 = vpop.permute.xlu0 %2294
      %2298 = vrot.lane.b32.xlu0 %v2253, 64
      %v2299 = vpop.permute.xlu0 %2298
      %2302 = vrot.lane.b32.xlu0 %v2254, 80
      %v2303 = vpop.permute.xlu0 %2302
      %2306 = vrot.lane.b32.xlu0 %v2255, 96
      %v2307 = vpop.permute.xlu0 %2306
      %2310 = vrot.lane.b32.xlu0 %v2256, 112
      %v2311 = vpop.permute.xlu0 %2310
      %v2313 = vsel %vm1103, %v2113, %v2259
      %v2314 = vsel %vm1105, %v2313, %v2263
      %v2315 = vsel %vm1107, %v2314, %v2267
      %v2316 = vsel %vm1109, %v2315, %v2271
      %v2317 = vsel %vm1111, %v2316, %v2275
      %v2318 = vsel %vm1113, %v2317, %v2279
      %v2319 = vsel %vm1115, %v2318, %v2283
      %v2320 = vsel %vm1103, %v2249, %v2287
      %v2321 = vsel %vm1105, %v2320, %v2291
      %v2322 = vsel %vm1107, %v2321, %v2295
      %v2323 = vsel %vm1109, %v2322, %v2299
      %v2324 = vsel %vm1111, %v2323, %v2303
      %v2325 = vsel %vm1113, %v2324, %v2307
      %v2326 = vsel %vm1115, %v2325, %v2311
      %2327 = vrot.lane.b32.xlu0 %v1931, 127
      %v2328 = vpop.permute.xlu0 %2327
      %2329 = vrot.lane.b32.xlu0 %v1933, 127
      %v2330 = vpop.permute.xlu0 %2329
      %2331 = vrot.lane.b32.xlu0 %v1936, 127
      %v2332 = vpop.permute.xlu0 %2331
      %2333 = vrot.lane.b32.xlu0 %v1938, 127
      %v2334 = vpop.permute.xlu0 %2333
      %2335 = vrot.lane.b32.xlu0 %v1941, 127
      %v2336 = vpop.permute.xlu0 %2335
      %2337 = vrot.lane.b32.xlu0 %v1943, 127
      %v2338 = vpop.permute.xlu0 %2337
      %2339 = vrot.lane.b32.xlu0 %v1946, 127
      %v2340 = vpop.permute.xlu0 %2339
      %2341 = vrot.lane.b32.xlu0 %v1948, 127
      %v2342 = vpop.permute.xlu0 %2341
      %2343 = vrot.lane.b32.xlu0 %v1951, 127
      %v2344 = vpop.permute.xlu0 %2343
      %2345 = vrot.lane.b32.xlu0 %v1953, 127
      %v2346 = vpop.permute.xlu0 %2345
      %2347 = vrot.lane.b32.xlu0 %v1956, 127
      %v2348 = vpop.permute.xlu0 %2347
      %2349 = vrot.lane.b32.xlu0 %v1958, 127
      %v2350 = vpop.permute.xlu0 %2349
      %2351 = vrot.lane.b32.xlu0 %v1961, 127
      %v2352 = vpop.permute.xlu0 %2351
      %2353 = vrot.lane.b32.xlu0 %v1963, 127
      %v2354 = vpop.permute.xlu0 %2353
      %2355 = vrot.lane.b32.xlu0 %v1966, 127
      %v2356 = vpop.permute.xlu0 %2355
      %2357 = vrot.lane.b32.xlu0 %v1968, 127
      %v2358 = vpop.permute.xlu0 %2357
      %v2375 = vcombine.low %v2328, %v2336
      %v2376 = vcombine.high %v2328, %v2336
      %v2378 = vunpack.c.l.s4 1983009808
      %v2379 = vunpack.c.0.s8 %v2378
      %v2380 = vlaneseq
      %v2381 = vshrl.u32 %v2380, 7
      %v2382 = vsub.s32 %v2379, %v2381
      %v2383 = vrot.slane %v2375, %v2382
      %v2385 = vunpack.c.l.s4 1983009808
      %v2386 = vunpack.c.0.s8 %v2385
      %v2387 = vlaneseq
      %v2388 = vshrl.u32 %v2387, 7
      %v2389 = vsub.s32 %v2386, %v2388
      %v2390 = vrot.slane %v2376, %v2389
      %v2391 = vcombine.low %v2332, %v2340
      %v2392 = vcombine.high %v2332, %v2340
      %v2394 = vunpack.c.l.s4 1983009808
      %v2395 = vunpack.c.0.s8 %v2394
      %v2396 = vlaneseq
      %v2397 = vshrl.u32 %v2396, 7
      %v2398 = vsub.s32 %v2395, %v2397
      %v2399 = vrot.slane %v2391, %v2398
      %v2401 = vunpack.c.l.s4 1983009808
      %v2402 = vunpack.c.0.s8 %v2401
      %v2403 = vlaneseq
      %v2404 = vshrl.u32 %v2403, 7
      %v2405 = vsub.s32 %v2402, %v2404
      %v2406 = vrot.slane %v2392, %v2405
      %v2407 = vcombine.low %v2344, %v2352
      %v2408 = vcombine.high %v2344, %v2352
      %v2410 = vunpack.c.l.s4 1983009808
      %v2411 = vunpack.c.0.s8 %v2410
      %v2412 = vlaneseq
      %v2413 = vshrl.u32 %v2412, 7
      %v2414 = vsub.s32 %v2411, %v2413
      %v2415 = vrot.slane %v2407, %v2414
      %v2417 = vunpack.c.l.s4 1983009808
      %v2418 = vunpack.c.0.s8 %v2417
      %v2419 = vlaneseq
      %v2420 = vshrl.u32 %v2419, 7
      %v2421 = vsub.s32 %v2418, %v2420
      %v2422 = vrot.slane %v2408, %v2421
      %v2423 = vcombine.low %v2348, %v2356
      %v2424 = vcombine.high %v2348, %v2356
      %v2426 = vunpack.c.l.s4 1983009808
      %v2427 = vunpack.c.0.s8 %v2426
      %v2428 = vlaneseq
      %v2429 = vshrl.u32 %v2428, 7
      %v2430 = vsub.s32 %v2427, %v2429
      %v2431 = vrot.slane %v2423, %v2430
      %v2433 = vunpack.c.l.s4 1983009808
      %v2434 = vunpack.c.0.s8 %v2433
      %v2435 = vlaneseq
      %v2436 = vshrl.u32 %v2435, 7
      %v2437 = vsub.s32 %v2434, %v2436
      %v2438 = vrot.slane %v2424, %v2437
      %v2439 = vcombine.low %v2383, %v2399
      %v2440 = vcombine.high %v2383, %v2399
      %v2442 = vunpack.c.l.s4 1934713408
      %v2443 = vunpack.c.0.s8 %v2442
      %v2444 = vlaneseq
      %v2445 = vshrl.u32 %v2444, 7
      %v2446 = vsub.s32 %v2443, %v2445
      %v2447 = vrot.slane %v2439, %v2446
      %v2449 = vunpack.c.l.s4 1934713408
      %v2450 = vunpack.c.0.s8 %v2449
      %v2451 = vlaneseq
      %v2452 = vshrl.u32 %v2451, 7
      %v2453 = vsub.s32 %v2450, %v2452
      %v2454 = vrot.slane %v2440, %v2453
      %v2455 = vcombine.low %v2390, %v2406
      %v2456 = vcombine.high %v2390, %v2406
      %v2458 = vunpack.c.l.s4 1934713408
      %v2459 = vunpack.c.0.s8 %v2458
      %v2460 = vlaneseq
      %v2461 = vshrl.u32 %v2460, 7
      %v2462 = vsub.s32 %v2459, %v2461
      %v2463 = vrot.slane %v2455, %v2462
      %v2465 = vunpack.c.l.s4 1934713408
      %v2466 = vunpack.c.0.s8 %v2465
      %v2467 = vlaneseq
      %v2468 = vshrl.u32 %v2467, 7
      %v2469 = vsub.s32 %v2466, %v2468
      %v2470 = vrot.slane %v2456, %v2469
      %v2471 = vcombine.low %v2415, %v2431
      %v2472 = vcombine.high %v2415, %v2431
      %v2474 = vunpack.c.l.s4 1934713408
      %v2475 = vunpack.c.0.s8 %v2474
      %v2476 = vlaneseq
      %v2477 = vshrl.u32 %v2476, 7
      %v2478 = vsub.s32 %v2475, %v2477
      %v2479 = vrot.slane %v2471, %v2478
      %v2481 = vunpack.c.l.s4 1934713408
      %v2482 = vunpack.c.0.s8 %v2481
      %v2483 = vlaneseq
      %v2484 = vshrl.u32 %v2483, 7
      %v2485 = vsub.s32 %v2482, %v2484
      %v2486 = vrot.slane %v2472, %v2485
      %v2487 = vcombine.low %v2422, %v2438
      %v2488 = vcombine.high %v2422, %v2438
      %v2490 = vunpack.c.l.s4 1934713408
      %v2491 = vunpack.c.0.s8 %v2490
      %v2492 = vlaneseq
      %v2493 = vshrl.u32 %v2492, 7
      %v2494 = vsub.s32 %v2491, %v2493
      %v2495 = vrot.slane %v2487, %v2494
      %v2497 = vunpack.c.l.s4 1934713408
      %v2498 = vunpack.c.0.s8 %v2497
      %v2499 = vlaneseq
      %v2500 = vshrl.u32 %v2499, 7
      %v2501 = vsub.s32 %v2498, %v2500
      %v2502 = vrot.slane %v2488, %v2501
      %v2503 = vcombine.low %v2447, %v2479
      %v2504 = vcombine.high %v2447, %v2479
      %v2505 = vcombine.low %v2454, %v2486
      %v2506 = vcombine.high %v2454, %v2486
      %v2507 = vcombine.low %v2463, %v2495
      %v2508 = vcombine.high %v2463, %v2495
      %v2509 = vcombine.low %v2470, %v2502
      %v2510 = vcombine.high %v2470, %v2502
      %v2511 = vcombine.low %v2330, %v2338
      %v2512 = vcombine.high %v2330, %v2338
      %v2514 = vunpack.c.l.s4 1983009808
      %v2515 = vunpack.c.0.s8 %v2514
      %v2516 = vlaneseq
      %v2517 = vshrl.u32 %v2516, 7
      %v2518 = vsub.s32 %v2515, %v2517
      %v2519 = vrot.slane %v2511, %v2518
      %v2521 = vunpack.c.l.s4 1983009808
      %v2522 = vunpack.c.0.s8 %v2521
      %v2523 = vlaneseq
      %v2524 = vshrl.u32 %v2523, 7
      %v2525 = vsub.s32 %v2522, %v2524
      %v2526 = vrot.slane %v2512, %v2525
      %v2527 = vcombine.low %v2334, %v2342
      %v2528 = vcombine.high %v2334, %v2342
      %v2530 = vunpack.c.l.s4 1983009808
      %v2531 = vunpack.c.0.s8 %v2530
      %v2532 = vlaneseq
      %v2533 = vshrl.u32 %v2532, 7
      %v2534 = vsub.s32 %v2531, %v2533
      %v2535 = vrot.slane %v2527, %v2534
      %v2537 = vunpack.c.l.s4 1983009808
      %v2538 = vunpack.c.0.s8 %v2537
      %v2539 = vlaneseq
      %v2540 = vshrl.u32 %v2539, 7
      %v2541 = vsub.s32 %v2538, %v2540
      %v2542 = vrot.slane %v2528, %v2541
      %v2543 = vcombine.low %v2346, %v2354
      %v2544 = vcombine.high %v2346, %v2354
      %v2546 = vunpack.c.l.s4 1983009808
      %v2547 = vunpack.c.0.s8 %v2546
      %v2548 = vlaneseq
      %v2549 = vshrl.u32 %v2548, 7
      %v2550 = vsub.s32 %v2547, %v2549
      %v2551 = vrot.slane %v2543, %v2550
      %v2553 = vunpack.c.l.s4 1983009808
      %v2554 = vunpack.c.0.s8 %v2553
      %v2555 = vlaneseq
      %v2556 = vshrl.u32 %v2555, 7
      %v2557 = vsub.s32 %v2554, %v2556
      %v2558 = vrot.slane %v2544, %v2557
      %v2559 = vcombine.low %v2350, %v2358
      %v2560 = vcombine.high %v2350, %v2358
      %v2562 = vunpack.c.l.s4 1983009808
      %v2563 = vunpack.c.0.s8 %v2562
      %v2564 = vlaneseq
      %v2565 = vshrl.u32 %v2564, 7
      %v2566 = vsub.s32 %v2563, %v2565
      %v2567 = vrot.slane %v2559, %v2566
      %v2569 = vunpack.c.l.s4 1983009808
      %v2570 = vunpack.c.0.s8 %v2569
      %v2571 = vlaneseq
      %v2572 = vshrl.u32 %v2571, 7
      %v2573 = vsub.s32 %v2570, %v2572
      %v2574 = vrot.slane %v2560, %v2573
      %v2575 = vcombine.low %v2519, %v2535
      %v2576 = vcombine.high %v2519, %v2535
      %v2578 = vunpack.c.l.s4 1934713408
      %v2579 = vunpack.c.0.s8 %v2578
      %v2580 = vlaneseq
      %v2581 = vshrl.u32 %v2580, 7
      %v2582 = vsub.s32 %v2579, %v2581
      %v2583 = vrot.slane %v2575, %v2582
      %v2585 = vunpack.c.l.s4 1934713408
      %v2586 = vunpack.c.0.s8 %v2585
      %v2587 = vlaneseq
      %v2588 = vshrl.u32 %v2587, 7
      %v2589 = vsub.s32 %v2586, %v2588
      %v2590 = vrot.slane %v2576, %v2589
      %v2591 = vcombine.low %v2526, %v2542
      %v2592 = vcombine.high %v2526, %v2542
      %v2594 = vunpack.c.l.s4 1934713408
      %v2595 = vunpack.c.0.s8 %v2594
      %v2596 = vlaneseq
      %v2597 = vshrl.u32 %v2596, 7
      %v2598 = vsub.s32 %v2595, %v2597
      %v2599 = vrot.slane %v2591, %v2598
      %v2601 = vunpack.c.l.s4 1934713408
      %v2602 = vunpack.c.0.s8 %v2601
      %v2603 = vlaneseq
      %v2604 = vshrl.u32 %v2603, 7
      %v2605 = vsub.s32 %v2602, %v2604
      %v2606 = vrot.slane %v2592, %v2605
      %v2607 = vcombine.low %v2551, %v2567
      %v2608 = vcombine.high %v2551, %v2567
      %v2610 = vunpack.c.l.s4 1934713408
      %v2611 = vunpack.c.0.s8 %v2610
      %v2612 = vlaneseq
      %v2613 = vshrl.u32 %v2612, 7
      %v2614 = vsub.s32 %v2611, %v2613
      %v2615 = vrot.slane %v2607, %v2614
      %v2617 = vunpack.c.l.s4 1934713408
      %v2618 = vunpack.c.0.s8 %v2617
      %v2619 = vlaneseq
      %v2620 = vshrl.u32 %v2619, 7
      %v2621 = vsub.s32 %v2618, %v2620
      %v2622 = vrot.slane %v2608, %v2621
      %v2623 = vcombine.low %v2558, %v2574
      %v2624 = vcombine.high %v2558, %v2574
      %v2626 = vunpack.c.l.s4 1934713408
      %v2627 = vunpack.c.0.s8 %v2626
      %v2628 = vlaneseq
      %v2629 = vshrl.u32 %v2628, 7
      %v2630 = vsub.s32 %v2627, %v2629
      %v2631 = vrot.slane %v2623, %v2630
      %v2633 = vunpack.c.l.s4 1934713408
      %v2634 = vunpack.c.0.s8 %v2633
      %v2635 = vlaneseq
      %v2636 = vshrl.u32 %v2635, 7
      %v2637 = vsub.s32 %v2634, %v2636
      %v2638 = vrot.slane %v2624, %v2637
      %v2639 = vcombine.low %v2583, %v2615
      %v2640 = vcombine.high %v2583, %v2615
      %v2641 = vcombine.low %v2590, %v2622
      %v2642 = vcombine.high %v2590, %v2622
      %v2643 = vcombine.low %v2599, %v2631
      %v2644 = vcombine.high %v2599, %v2631
      %v2645 = vcombine.low %v2606, %v2638
      %v2646 = vcombine.high %v2606, %v2638
      %2648 = vrot.lane.b32.xlu0 %v2504, 16
      %v2649 = vpop.permute.xlu0 %2648
      %2652 = vrot.lane.b32.xlu0 %v2505, 32
      %v2653 = vpop.permute.xlu0 %2652
      %2656 = vrot.lane.b32.xlu0 %v2506, 48
      %v2657 = vpop.permute.xlu0 %2656
      %2660 = vrot.lane.b32.xlu0 %v2507, 64
      %v2661 = vpop.permute.xlu0 %2660
      %2664 = vrot.lane.b32.xlu0 %v2508, 80
      %v2665 = vpop.permute.xlu0 %2664
      %2668 = vrot.lane.b32.xlu0 %v2509, 96
      %v2669 = vpop.permute.xlu0 %2668
      %2672 = vrot.lane.b32.xlu0 %v2510, 112
      %v2673 = vpop.permute.xlu0 %2672
      %2676 = vrot.lane.b32.xlu0 %v2640, 16
      %v2677 = vpop.permute.xlu0 %2676
      %2680 = vrot.lane.b32.xlu0 %v2641, 32
      %v2681 = vpop.permute.xlu0 %2680
      %2684 = vrot.lane.b32.xlu0 %v2642, 48
      %v2685 = vpop.permute.xlu0 %2684
      %2688 = vrot.lane.b32.xlu0 %v2643, 64
      %v2689 = vpop.permute.xlu0 %2688
      %2692 = vrot.lane.b32.xlu0 %v2644, 80
      %v2693 = vpop.permute.xlu0 %2692
      %2696 = vrot.lane.b32.xlu0 %v2645, 96
      %v2697 = vpop.permute.xlu0 %2696
      %2700 = vrot.lane.b32.xlu0 %v2646, 112
      %v2701 = vpop.permute.xlu0 %2700
      %v2703 = vsel %vm1103, %v2503, %v2649
      %v2704 = vsel %vm1105, %v2703, %v2653
      %v2705 = vsel %vm1107, %v2704, %v2657
      %v2706 = vsel %vm1109, %v2705, %v2661
      %v2707 = vsel %vm1111, %v2706, %v2665
      %v2708 = vsel %vm1113, %v2707, %v2669
      %v2709 = vsel %vm1115, %v2708, %v2673
      %v2710 = vsel %vm1103, %v2639, %v2677
      %v2711 = vsel %vm1105, %v2710, %v2681
      %v2712 = vsel %vm1107, %v2711, %v2685
      %v2713 = vsel %vm1109, %v2712, %v2689
      %v2714 = vsel %vm1111, %v2713, %v2693
      %v2715 = vsel %vm1113, %v2714, %v2697
      %v2716 = vsel %vm1115, %v2715, %v2701
      %2717 = vrot.lane.b32.xlu0 %v1931, 126
      %v2718 = vpop.permute.xlu0 %2717
      %2719 = vrot.lane.b32.xlu0 %v1933, 126
      %v2720 = vpop.permute.xlu0 %2719
      %2721 = vrot.lane.b32.xlu0 %v1936, 126
      %v2722 = vpop.permute.xlu0 %2721
      %2723 = vrot.lane.b32.xlu0 %v1938, 126
      %v2724 = vpop.permute.xlu0 %2723
      %2725 = vrot.lane.b32.xlu0 %v1941, 126
      %v2726 = vpop.permute.xlu0 %2725
      %2727 = vrot.lane.b32.xlu0 %v1943, 126
      %v2728 = vpop.permute.xlu0 %2727
      %2729 = vrot.lane.b32.xlu0 %v1946, 126
      %v2730 = vpop.permute.xlu0 %2729
      %2731 = vrot.lane.b32.xlu0 %v1948, 126
      %v2732 = vpop.permute.xlu0 %2731
      %2733 = vrot.lane.b32.xlu0 %v1951, 126
      %v2734 = vpop.permute.xlu0 %2733
      %2735 = vrot.lane.b32.xlu0 %v1953, 126
      %v2736 = vpop.permute.xlu0 %2735
      %2737 = vrot.lane.b32.xlu0 %v1956, 126
      %v2738 = vpop.permute.xlu0 %2737
      %2739 = vrot.lane.b32.xlu0 %v1958, 126
      %v2740 = vpop.permute.xlu0 %2739
      %2741 = vrot.lane.b32.xlu0 %v1961, 126
      %v2742 = vpop.permute.xlu0 %2741
      %2743 = vrot.lane.b32.xlu0 %v1963, 126
      %v2744 = vpop.permute.xlu0 %2743
      %2745 = vrot.lane.b32.xlu0 %v1966, 126
      %v2746 = vpop.permute.xlu0 %2745
      %2747 = vrot.lane.b32.xlu0 %v1968, 126
      %v2748 = vpop.permute.xlu0 %2747
      %v2765 = vcombine.low %v2718, %v2726
      %v2766 = vcombine.high %v2718, %v2726
      %v2768 = vunpack.c.l.s4 1983009808
      %v2769 = vunpack.c.0.s8 %v2768
      %v2770 = vlaneseq
      %v2771 = vshrl.u32 %v2770, 7
      %v2772 = vsub.s32 %v2769, %v2771
      %v2773 = vrot.slane %v2765, %v2772
      %v2775 = vunpack.c.l.s4 1983009808
      %v2776 = vunpack.c.0.s8 %v2775
      %v2777 = vlaneseq
      %v2778 = vshrl.u32 %v2777, 7
      %v2779 = vsub.s32 %v2776, %v2778
      %v2780 = vrot.slane %v2766, %v2779
      %v2781 = vcombine.low %v2722, %v2730
      %v2782 = vcombine.high %v2722, %v2730
      %v2784 = vunpack.c.l.s4 1983009808
      %v2785 = vunpack.c.0.s8 %v2784
      %v2786 = vlaneseq
      %v2787 = vshrl.u32 %v2786, 7
      %v2788 = vsub.s32 %v2785, %v2787
      %v2789 = vrot.slane %v2781, %v2788
      %v2791 = vunpack.c.l.s4 1983009808
      %v2792 = vunpack.c.0.s8 %v2791
      %v2793 = vlaneseq
      %v2794 = vshrl.u32 %v2793, 7
      %v2795 = vsub.s32 %v2792, %v2794
      %v2796 = vrot.slane %v2782, %v2795
      %v2797 = vcombine.low %v2734, %v2742
      %v2798 = vcombine.high %v2734, %v2742
      %v2800 = vunpack.c.l.s4 1983009808
      %v2801 = vunpack.c.0.s8 %v2800
      %v2802 = vlaneseq
      %v2803 = vshrl.u32 %v2802, 7
      %v2804 = vsub.s32 %v2801, %v2803
      %v2805 = vrot.slane %v2797, %v2804
      %v2807 = vunpack.c.l.s4 1983009808
      %v2808 = vunpack.c.0.s8 %v2807
      %v2809 = vlaneseq
      %v2810 = vshrl.u32 %v2809, 7
      %v2811 = vsub.s32 %v2808, %v2810
      %v2812 = vrot.slane %v2798, %v2811
      %v2813 = vcombine.low %v2738, %v2746
      %v2814 = vcombine.high %v2738, %v2746
      %v2816 = vunpack.c.l.s4 1983009808
      %v2817 = vunpack.c.0.s8 %v2816
      %v2818 = vlaneseq
      %v2819 = vshrl.u32 %v2818, 7
      %v2820 = vsub.s32 %v2817, %v2819
      %v2821 = vrot.slane %v2813, %v2820
      %v2823 = vunpack.c.l.s4 1983009808
      %v2824 = vunpack.c.0.s8 %v2823
      %v2825 = vlaneseq
      %v2826 = vshrl.u32 %v2825, 7
      %v2827 = vsub.s32 %v2824, %v2826
      %v2828 = vrot.slane %v2814, %v2827
      %v2829 = vcombine.low %v2773, %v2789
      %v2830 = vcombine.high %v2773, %v2789
      %v2832 = vunpack.c.l.s4 1934713408
      %v2833 = vunpack.c.0.s8 %v2832
      %v2834 = vlaneseq
      %v2835 = vshrl.u32 %v2834, 7
      %v2836 = vsub.s32 %v2833, %v2835
      %v2837 = vrot.slane %v2829, %v2836
      %v2839 = vunpack.c.l.s4 1934713408
      %v2840 = vunpack.c.0.s8 %v2839
      %v2841 = vlaneseq
      %v2842 = vshrl.u32 %v2841, 7
      %v2843 = vsub.s32 %v2840, %v2842
      %v2844 = vrot.slane %v2830, %v2843
      %v2845 = vcombine.low %v2780, %v2796
      %v2846 = vcombine.high %v2780, %v2796
      %v2848 = vunpack.c.l.s4 1934713408
      %v2849 = vunpack.c.0.s8 %v2848
      %v2850 = vlaneseq
      %v2851 = vshrl.u32 %v2850, 7
      %v2852 = vsub.s32 %v2849, %v2851
      %v2853 = vrot.slane %v2845, %v2852
      %v2855 = vunpack.c.l.s4 1934713408
      %v2856 = vunpack.c.0.s8 %v2855
      %v2857 = vlaneseq
      %v2858 = vshrl.u32 %v2857, 7
      %v2859 = vsub.s32 %v2856, %v2858
      %v2860 = vrot.slane %v2846, %v2859
      %v2861 = vcombine.low %v2805, %v2821
      %v2862 = vcombine.high %v2805, %v2821
      %v2864 = vunpack.c.l.s4 1934713408
      %v2865 = vunpack.c.0.s8 %v2864
      %v2866 = vlaneseq
      %v2867 = vshrl.u32 %v2866, 7
      %v2868 = vsub.s32 %v2865, %v2867
      %v2869 = vrot.slane %v2861, %v2868
      %v2871 = vunpack.c.l.s4 1934713408
      %v2872 = vunpack.c.0.s8 %v2871
      %v2873 = vlaneseq
      %v2874 = vshrl.u32 %v2873, 7
      %v2875 = vsub.s32 %v2872, %v2874
      %v2876 = vrot.slane %v2862, %v2875
      %v2877 = vcombine.low %v2812, %v2828
      %v2878 = vcombine.high %v2812, %v2828
      %v2880 = vunpack.c.l.s4 1934713408
      %v2881 = vunpack.c.0.s8 %v2880
      %v2882 = vlaneseq
      %v2883 = vshrl.u32 %v2882, 7
      %v2884 = vsub.s32 %v2881, %v2883
      %v2885 = vrot.slane %v2877, %v2884
      %v2887 = vunpack.c.l.s4 1934713408
      %v2888 = vunpack.c.0.s8 %v2887
      %v2889 = vlaneseq
      %v2890 = vshrl.u32 %v2889, 7
      %v2891 = vsub.s32 %v2888, %v2890
      %v2892 = vrot.slane %v2878, %v2891
      %v2893 = vcombine.low %v2837, %v2869
      %v2894 = vcombine.high %v2837, %v2869
      %v2895 = vcombine.low %v2844, %v2876
      %v2896 = vcombine.high %v2844, %v2876
      %v2897 = vcombine.low %v2853, %v2885
      %v2898 = vcombine.high %v2853, %v2885
      %v2899 = vcombine.low %v2860, %v2892
      %v2900 = vcombine.high %v2860, %v2892
      %v2901 = vcombine.low %v2720, %v2728
      %v2902 = vcombine.high %v2720, %v2728
      %v2904 = vunpack.c.l.s4 1983009808
      %v2905 = vunpack.c.0.s8 %v2904
      %v2906 = vlaneseq
      %v2907 = vshrl.u32 %v2906, 7
      %v2908 = vsub.s32 %v2905, %v2907
      %v2909 = vrot.slane %v2901, %v2908
      %v2911 = vunpack.c.l.s4 1983009808
      %v2912 = vunpack.c.0.s8 %v2911
      %v2913 = vlaneseq
      %v2914 = vshrl.u32 %v2913, 7
      %v2915 = vsub.s32 %v2912, %v2914
      %v2916 = vrot.slane %v2902, %v2915
      %v2917 = vcombine.low %v2724, %v2732
      %v2918 = vcombine.high %v2724, %v2732
      %v2920 = vunpack.c.l.s4 1983009808
      %v2921 = vunpack.c.0.s8 %v2920
      %v2922 = vlaneseq
      %v2923 = vshrl.u32 %v2922, 7
      %v2924 = vsub.s32 %v2921, %v2923
      %v2925 = vrot.slane %v2917, %v2924
      %v2927 = vunpack.c.l.s4 1983009808
      %v2928 = vunpack.c.0.s8 %v2927
      %v2929 = vlaneseq
      %v2930 = vshrl.u32 %v2929, 7
      %v2931 = vsub.s32 %v2928, %v2930
      %v2932 = vrot.slane %v2918, %v2931
      %v2933 = vcombine.low %v2736, %v2744
      %v2934 = vcombine.high %v2736, %v2744
      %v2936 = vunpack.c.l.s4 1983009808
      %v2937 = vunpack.c.0.s8 %v2936
      %v2938 = vlaneseq
      %v2939 = vshrl.u32 %v2938, 7
      %v2940 = vsub.s32 %v2937, %v2939
      %v2941 = vrot.slane %v2933, %v2940
      %v2943 = vunpack.c.l.s4 1983009808
      %v2944 = vunpack.c.0.s8 %v2943
      %v2945 = vlaneseq
      %v2946 = vshrl.u32 %v2945, 7
      %v2947 = vsub.s32 %v2944, %v2946
      %v2948 = vrot.slane %v2934, %v2947
      %v2949 = vcombine.low %v2740, %v2748
      %v2950 = vcombine.high %v2740, %v2748
      %v2952 = vunpack.c.l.s4 1983009808
      %v2953 = vunpack.c.0.s8 %v2952
      %v2954 = vlaneseq
      %v2955 = vshrl.u32 %v2954, 7
      %v2956 = vsub.s32 %v2953, %v2955
      %v2957 = vrot.slane %v2949, %v2956
      %v2959 = vunpack.c.l.s4 1983009808
      %v2960 = vunpack.c.0.s8 %v2959
      %v2961 = vlaneseq
      %v2962 = vshrl.u32 %v2961, 7
      %v2963 = vsub.s32 %v2960, %v2962
      %v2964 = vrot.slane %v2950, %v2963
      %v2965 = vcombine.low %v2909, %v2925
      %v2966 = vcombine.high %v2909, %v2925
      %v2968 = vunpack.c.l.s4 1934713408
      %v2969 = vunpack.c.0.s8 %v2968
      %v2970 = vlaneseq
      %v2971 = vshrl.u32 %v2970, 7
      %v2972 = vsub.s32 %v2969, %v2971
      %v2973 = vrot.slane %v2965, %v2972
      %v2975 = vunpack.c.l.s4 1934713408
      %v2976 = vunpack.c.0.s8 %v2975
      %v2977 = vlaneseq
      %v2978 = vshrl.u32 %v2977, 7
      %v2979 = vsub.s32 %v2976, %v2978
      %v2980 = vrot.slane %v2966, %v2979
      %v2981 = vcombine.low %v2916, %v2932
      %v2982 = vcombine.high %v2916, %v2932
      %v2984 = vunpack.c.l.s4 1934713408
      %v2985 = vunpack.c.0.s8 %v2984
      %v2986 = vlaneseq
      %v2987 = vshrl.u32 %v2986, 7
      %v2988 = vsub.s32 %v2985, %v2987
      %v2989 = vrot.slane %v2981, %v2988
      %v2991 = vunpack.c.l.s4 1934713408
      %v2992 = vunpack.c.0.s8 %v2991
      %v2993 = vlaneseq
      %v2994 = vshrl.u32 %v2993, 7
      %v2995 = vsub.s32 %v2992, %v2994
      %v2996 = vrot.slane %v2982, %v2995
      %v2997 = vcombine.low %v2941, %v2957
      %v2998 = vcombine.high %v2941, %v2957
      %v3000 = vunpack.c.l.s4 1934713408
      %v3001 = vunpack.c.0.s8 %v3000
      %v3002 = vlaneseq
      %v3003 = vshrl.u32 %v3002, 7
      %v3004 = vsub.s32 %v3001, %v3003
      %v3005 = vrot.slane %v2997, %v3004
      %v3007 = vunpack.c.l.s4 1934713408
      %v3008 = vunpack.c.0.s8 %v3007
      %v3009 = vlaneseq
      %v3010 = vshrl.u32 %v3009, 7
      %v3011 = vsub.s32 %v3008, %v3010
      %v3012 = vrot.slane %v2998, %v3011
      %v3013 = vcombine.low %v2948, %v2964
      %v3014 = vcombine.high %v2948, %v2964
      %v3016 = vunpack.c.l.s4 1934713408
      %v3017 = vunpack.c.0.s8 %v3016
      %v3018 = vlaneseq
      %v3019 = vshrl.u32 %v3018, 7
      %v3020 = vsub.s32 %v3017, %v3019
      %v3021 = vrot.slane %v3013, %v3020
      %v3023 = vunpack.c.l.s4 1934713408
      %v3024 = vunpack.c.0.s8 %v3023
      %v3025 = vlaneseq
      %v3026 = vshrl.u32 %v3025, 7
      %v3027 = vsub.s32 %v3024, %v3026
      %v3028 = vrot.slane %v3014, %v3027
      %v3029 = vcombine.low %v2973, %v3005
      %v3030 = vcombine.high %v2973, %v3005
      %v3031 = vcombine.low %v2980, %v3012
      %v3032 = vcombine.high %v2980, %v3012
      %v3033 = vcombine.low %v2989, %v3021
      %v3034 = vcombine.high %v2989, %v3021
      %v3035 = vcombine.low %v2996, %v3028
      %v3036 = vcombine.high %v2996, %v3028
      %3038 = vrot.lane.b32.xlu0 %v2894, 16
      %v3039 = vpop.permute.xlu0 %3038
      %3042 = vrot.lane.b32.xlu0 %v2895, 32
      %v3043 = vpop.permute.xlu0 %3042
      %3046 = vrot.lane.b32.xlu0 %v2896, 48
      %v3047 = vpop.permute.xlu0 %3046
      %3050 = vrot.lane.b32.xlu0 %v2897, 64
      %v3051 = vpop.permute.xlu0 %3050
      %3054 = vrot.lane.b32.xlu0 %v2898, 80
      %v3055 = vpop.permute.xlu0 %3054
      %3058 = vrot.lane.b32.xlu0 %v2899, 96
      %v3059 = vpop.permute.xlu0 %3058
      %3062 = vrot.lane.b32.xlu0 %v2900, 112
      %v3063 = vpop.permute.xlu0 %3062
      %3066 = vrot.lane.b32.xlu0 %v3030, 16
      %v3067 = vpop.permute.xlu0 %3066
      %3070 = vrot.lane.b32.xlu0 %v3031, 32
      %v3071 = vpop.permute.xlu0 %3070
      %3074 = vrot.lane.b32.xlu0 %v3032, 48
      %v3075 = vpop.permute.xlu0 %3074
      %3078 = vrot.lane.b32.xlu0 %v3033, 64
      %v3079 = vpop.permute.xlu0 %3078
      %3082 = vrot.lane.b32.xlu0 %v3034, 80
      %v3083 = vpop.permute.xlu0 %3082
      %3086 = vrot.lane.b32.xlu0 %v3035, 96
      %v3087 = vpop.permute.xlu0 %3086
      %3090 = vrot.lane.b32.xlu0 %v3036, 112
      %v3091 = vpop.permute.xlu0 %3090
      %v3093 = vsel %vm1103, %v2893, %v3039
      %v3094 = vsel %vm1105, %v3093, %v3043
      %v3095 = vsel %vm1107, %v3094, %v3047
      %v3096 = vsel %vm1109, %v3095, %v3051
      %v3097 = vsel %vm1111, %v3096, %v3055
      %v3098 = vsel %vm1113, %v3097, %v3059
      %v3099 = vsel %vm1115, %v3098, %v3063
      %v3100 = vsel %vm1103, %v3029, %v3067
      %v3101 = vsel %vm1105, %v3100, %v3071
      %v3102 = vsel %vm1107, %v3101, %v3075
      %v3103 = vsel %vm1109, %v3102, %v3079
      %v3104 = vsel %vm1111, %v3103, %v3083
      %v3105 = vsel %vm1113, %v3104, %v3087
      %v3106 = vsel %vm1115, %v3105, %v3091
      %vm3107 = vcmask 1045504
      %v3108 = vrot.slane %v751, 2
      %v3109 = vrot.slane %v752, 2
      %v3110 = vsel %vm3107, %v3108, %v3109
      %v3111 = vrot.slane %v753, 2
      %v3112 = vsel %vm3107, %v3109, %v3111
      %v3113 = vrot.slane %v754, 2
      %v3114 = vrot.slane %v755, 2
      %v3115 = vsel %vm3107, %v3113, %v3114
      %v3116 = vrot.slane %v756, 2
      %v3117 = vsel %vm3107, %v3114, %v3116
      %v3118 = vrot.slane %v757, 2
      %v3119 = vrot.slane %v758, 2
      %v3120 = vsel %vm3107, %v3118, %v3119
      %v3121 = vrot.slane %v759, 2
      %v3122 = vsel %vm3107, %v3119, %v3121
      %v3123 = vrot.slane %v760, 2
      %v3124 = vrot.slane %v761, 2
      %v3125 = vsel %vm3107, %v3123, %v3124
      %v3126 = vrot.slane %v762, 2
      %v3127 = vsel %vm3107, %v3124, %v3126
      %v3128 = vrot.slane %v763, 2
      %v3129 = vrot.slane %v764, 2
      %v3130 = vsel %vm3107, %v3128, %v3129
      %v3131 = vrot.slane %v765, 2
      %v3132 = vsel %vm3107, %v3129, %v3131
      %v3133 = vrot.slane %v766, 2
      %v3134 = vrot.slane %v767, 2
      %v3135 = vsel %vm3107, %v3133, %v3134
      %v3136 = vrot.slane %v768, 2
      %v3137 = vsel %vm3107, %v3134, %v3136
      %v3138 = vrot.slane %v769, 2
      %v3139 = vrot.slane %v770, 2
      %v3140 = vsel %vm3107, %v3138, %v3139
      %v3141 = vrot.slane %v771, 2
      %v3142 = vsel %vm3107, %v3139, %v3141
      %v3143 = vrot.slane %v772, 2
      %v3144 = vrot.slane %v773, 2
      %v3145 = vsel %vm3107, %v3143, %v3144
      %v3146 = vrot.slane %v774, 2
      %v3147 = vsel %vm3107, %v3144, %v3146
      %v3164 = vcombine.low %v3110, %v3120
      %v3165 = vcombine.high %v3110, %v3120
      %v3167 = vunpack.c.l.s4 1983009808
      %v3168 = vunpack.c.0.s8 %v3167
      %v3169 = vlaneseq
      %v3170 = vshrl.u32 %v3169, 7
      %v3171 = vsub.s32 %v3168, %v3170
      %v3172 = vrot.slane %v3164, %v3171
      %v3174 = vunpack.c.l.s4 1983009808
      %v3175 = vunpack.c.0.s8 %v3174
      %v3176 = vlaneseq
      %v3177 = vshrl.u32 %v3176, 7
      %v3178 = vsub.s32 %v3175, %v3177
      %v3179 = vrot.slane %v3165, %v3178
      %v3180 = vcombine.low %v3115, %v3125
      %v3181 = vcombine.high %v3115, %v3125
      %v3183 = vunpack.c.l.s4 1983009808
      %v3184 = vunpack.c.0.s8 %v3183
      %v3185 = vlaneseq
      %v3186 = vshrl.u32 %v3185, 7
      %v3187 = vsub.s32 %v3184, %v3186
      %v3188 = vrot.slane %v3180, %v3187
      %v3190 = vunpack.c.l.s4 1983009808
      %v3191 = vunpack.c.0.s8 %v3190
      %v3192 = vlaneseq
      %v3193 = vshrl.u32 %v3192, 7
      %v3194 = vsub.s32 %v3191, %v3193
      %v3195 = vrot.slane %v3181, %v3194
      %v3196 = vcombine.low %v3130, %v3140
      %v3197 = vcombine.high %v3130, %v3140
      %v3199 = vunpack.c.l.s4 1983009808
      %v3200 = vunpack.c.0.s8 %v3199
      %v3201 = vlaneseq
      %v3202 = vshrl.u32 %v3201, 7
      %v3203 = vsub.s32 %v3200, %v3202
      %v3204 = vrot.slane %v3196, %v3203
      %v3206 = vunpack.c.l.s4 1983009808
      %v3207 = vunpack.c.0.s8 %v3206
      %v3208 = vlaneseq
      %v3209 = vshrl.u32 %v3208, 7
      %v3210 = vsub.s32 %v3207, %v3209
      %v3211 = vrot.slane %v3197, %v3210
      %v3212 = vcombine.low %v3135, %v3145
      %v3213 = vcombine.high %v3135, %v3145
      %v3215 = vunpack.c.l.s4 1983009808
      %v3216 = vunpack.c.0.s8 %v3215
      %v3217 = vlaneseq
      %v3218 = vshrl.u32 %v3217, 7
      %v3219 = vsub.s32 %v3216, %v3218
      %v3220 = vrot.slane %v3212, %v3219
      %v3222 = vunpack.c.l.s4 1983009808
      %v3223 = vunpack.c.0.s8 %v3222
      %v3224 = vlaneseq
      %v3225 = vshrl.u32 %v3224, 7
      %v3226 = vsub.s32 %v3223, %v3225
      %v3227 = vrot.slane %v3213, %v3226
      %v3228 = vcombine.low %v3172, %v3188
      %v3229 = vcombine.high %v3172, %v3188
      %v3231 = vunpack.c.l.s4 1934713408
      %v3232 = vunpack.c.0.s8 %v3231
      %v3233 = vlaneseq
      %v3234 = vshrl.u32 %v3233, 7
      %v3235 = vsub.s32 %v3232, %v3234
      %v3236 = vrot.slane %v3228, %v3235
      %v3238 = vunpack.c.l.s4 1934713408
      %v3239 = vunpack.c.0.s8 %v3238
      %v3240 = vlaneseq
      %v3241 = vshrl.u32 %v3240, 7
      %v3242 = vsub.s32 %v3239, %v3241
      %v3243 = vrot.slane %v3229, %v3242
      %v3244 = vcombine.low %v3179, %v3195
      %v3245 = vcombine.high %v3179, %v3195
      %v3247 = vunpack.c.l.s4 1934713408
      %v3248 = vunpack.c.0.s8 %v3247
      %v3249 = vlaneseq
      %v3250 = vshrl.u32 %v3249, 7
      %v3251 = vsub.s32 %v3248, %v3250
      %v3252 = vrot.slane %v3244, %v3251
      %v3254 = vunpack.c.l.s4 1934713408
      %v3255 = vunpack.c.0.s8 %v3254
      %v3256 = vlaneseq
      %v3257 = vshrl.u32 %v3256, 7
      %v3258 = vsub.s32 %v3255, %v3257
      %v3259 = vrot.slane %v3245, %v3258
      %v3260 = vcombine.low %v3204, %v3220
      %v3261 = vcombine.high %v3204, %v3220
      %v3263 = vunpack.c.l.s4 1934713408
      %v3264 = vunpack.c.0.s8 %v3263
      %v3265 = vlaneseq
      %v3266 = vshrl.u32 %v3265, 7
      %v3267 = vsub.s32 %v3264, %v3266
      %v3268 = vrot.slane %v3260, %v3267
      %v3270 = vunpack.c.l.s4 1934713408
      %v3271 = vunpack.c.0.s8 %v3270
      %v3272 = vlaneseq
      %v3273 = vshrl.u32 %v3272, 7
      %v3274 = vsub.s32 %v3271, %v3273
      %v3275 = vrot.slane %v3261, %v3274
      %v3276 = vcombine.low %v3211, %v3227
      %v3277 = vcombine.high %v3211, %v3227
      %v3279 = vunpack.c.l.s4 1934713408
      %v3280 = vunpack.c.0.s8 %v3279
      %v3281 = vlaneseq
      %v3282 = vshrl.u32 %v3281, 7
      %v3283 = vsub.s32 %v3280, %v3282
      %v3284 = vrot.slane %v3276, %v3283
      %v3286 = vunpack.c.l.s4 1934713408
      %v3287 = vunpack.c.0.s8 %v3286
      %v3288 = vlaneseq
      %v3289 = vshrl.u32 %v3288, 7
      %v3290 = vsub.s32 %v3287, %v3289
      %v3291 = vrot.slane %v3277, %v3290
      %v3292 = vcombine.low %v3236, %v3268
      %v3293 = vcombine.high %v3236, %v3268
      %v3294 = vcombine.low %v3243, %v3275
      %v3295 = vcombine.high %v3243, %v3275
      %v3296 = vcombine.low %v3252, %v3284
      %v3297 = vcombine.high %v3252, %v3284
      %v3298 = vcombine.low %v3259, %v3291
      %v3299 = vcombine.high %v3259, %v3291
      %v3300 = vcombine.low %v3112, %v3122
      %v3301 = vcombine.high %v3112, %v3122
      %v3303 = vunpack.c.l.s4 1983009808
      %v3304 = vunpack.c.0.s8 %v3303
      %v3305 = vlaneseq
      %v3306 = vshrl.u32 %v3305, 7
      %v3307 = vsub.s32 %v3304, %v3306
      %v3308 = vrot.slane %v3300, %v3307
      %v3310 = vunpack.c.l.s4 1983009808
      %v3311 = vunpack.c.0.s8 %v3310
      %v3312 = vlaneseq
      %v3313 = vshrl.u32 %v3312, 7
      %v3314 = vsub.s32 %v3311, %v3313
      %v3315 = vrot.slane %v3301, %v3314
      %v3316 = vcombine.low %v3117, %v3127
      %v3317 = vcombine.high %v3117, %v3127
      %v3319 = vunpack.c.l.s4 1983009808
      %v3320 = vunpack.c.0.s8 %v3319
      %v3321 = vlaneseq
      %v3322 = vshrl.u32 %v3321, 7
      %v3323 = vsub.s32 %v3320, %v3322
      %v3324 = vrot.slane %v3316, %v3323
      %v3326 = vunpack.c.l.s4 1983009808
      %v3327 = vunpack.c.0.s8 %v3326
      %v3328 = vlaneseq
      %v3329 = vshrl.u32 %v3328, 7
      %v3330 = vsub.s32 %v3327, %v3329
      %v3331 = vrot.slane %v3317, %v3330
      %v3332 = vcombine.low %v3132, %v3142
      %v3333 = vcombine.high %v3132, %v3142
      %v3335 = vunpack.c.l.s4 1983009808
      %v3336 = vunpack.c.0.s8 %v3335
      %v3337 = vlaneseq
      %v3338 = vshrl.u32 %v3337, 7
      %v3339 = vsub.s32 %v3336, %v3338
      %v3340 = vrot.slane %v3332, %v3339
      %v3342 = vunpack.c.l.s4 1983009808
      %v3343 = vunpack.c.0.s8 %v3342
      %v3344 = vlaneseq
      %v3345 = vshrl.u32 %v3344, 7
      %v3346 = vsub.s32 %v3343, %v3345
      %v3347 = vrot.slane %v3333, %v3346
      %v3348 = vcombine.low %v3137, %v3147
      %v3349 = vcombine.high %v3137, %v3147
      %v3351 = vunpack.c.l.s4 1983009808
      %v3352 = vunpack.c.0.s8 %v3351
      %v3353 = vlaneseq
      %v3354 = vshrl.u32 %v3353, 7
      %v3355 = vsub.s32 %v3352, %v3354
      %v3356 = vrot.slane %v3348, %v3355
      %v3358 = vunpack.c.l.s4 1983009808
      %v3359 = vunpack.c.0.s8 %v3358
      %v3360 = vlaneseq
      %v3361 = vshrl.u32 %v3360, 7
      %v3362 = vsub.s32 %v3359, %v3361
      %v3363 = vrot.slane %v3349, %v3362
      %v3364 = vcombine.low %v3308, %v3324
      %v3365 = vcombine.high %v3308, %v3324
      %v3367 = vunpack.c.l.s4 1934713408
      %v3368 = vunpack.c.0.s8 %v3367
      %v3369 = vlaneseq
      %v3370 = vshrl.u32 %v3369, 7
      %v3371 = vsub.s32 %v3368, %v3370
      %v3372 = vrot.slane %v3364, %v3371
      %v3374 = vunpack.c.l.s4 1934713408
      %v3375 = vunpack.c.0.s8 %v3374
      %v3376 = vlaneseq
      %v3377 = vshrl.u32 %v3376, 7
      %v3378 = vsub.s32 %v3375, %v3377
      %v3379 = vrot.slane %v3365, %v3378
      %v3380 = vcombine.low %v3315, %v3331
      %v3381 = vcombine.high %v3315, %v3331
      %v3383 = vunpack.c.l.s4 1934713408
      %v3384 = vunpack.c.0.s8 %v3383
      %v3385 = vlaneseq
      %v3386 = vshrl.u32 %v3385, 7
      %v3387 = vsub.s32 %v3384, %v3386
      %v3388 = vrot.slane %v3380, %v3387
      %v3390 = vunpack.c.l.s4 1934713408
      %v3391 = vunpack.c.0.s8 %v3390
      %v3392 = vlaneseq
      %v3393 = vshrl.u32 %v3392, 7
      %v3394 = vsub.s32 %v3391, %v3393
      %v3395 = vrot.slane %v3381, %v3394
      %v3396 = vcombine.low %v3340, %v3356
      %v3397 = vcombine.high %v3340, %v3356
      %v3399 = vunpack.c.l.s4 1934713408
      %v3400 = vunpack.c.0.s8 %v3399
      %v3401 = vlaneseq
      %v3402 = vshrl.u32 %v3401, 7
      %v3403 = vsub.s32 %v3400, %v3402
      %v3404 = vrot.slane %v3396, %v3403
      %v3406 = vunpack.c.l.s4 1934713408
      %v3407 = vunpack.c.0.s8 %v3406
      %v3408 = vlaneseq
      %v3409 = vshrl.u32 %v3408, 7
      %v3410 = vsub.s32 %v3407, %v3409
      %v3411 = vrot.slane %v3397, %v3410
      %v3412 = vcombine.low %v3347, %v3363
      %v3413 = vcombine.high %v3347, %v3363
      %v3415 = vunpack.c.l.s4 1934713408
      %v3416 = vunpack.c.0.s8 %v3415
      %v3417 = vlaneseq
      %v3418 = vshrl.u32 %v3417, 7
      %v3419 = vsub.s32 %v3416, %v3418
      %v3420 = vrot.slane %v3412, %v3419
      %v3422 = vunpack.c.l.s4 1934713408
      %v3423 = vunpack.c.0.s8 %v3422
      %v3424 = vlaneseq
      %v3425 = vshrl.u32 %v3424, 7
      %v3426 = vsub.s32 %v3423, %v3425
      %v3427 = vrot.slane %v3413, %v3426
      %v3428 = vcombine.low %v3372, %v3404
      %v3429 = vcombine.high %v3372, %v3404
      %v3430 = vcombine.low %v3379, %v3411
      %v3431 = vcombine.high %v3379, %v3411
      %v3432 = vcombine.low %v3388, %v3420
      %v3433 = vcombine.high %v3388, %v3420
      %v3434 = vcombine.low %v3395, %v3427
      %v3435 = vcombine.high %v3395, %v3427
      %3437 = vrot.lane.b32.xlu0 %v3293, 16
      %v3438 = vpop.permute.xlu0 %3437
      %3441 = vrot.lane.b32.xlu0 %v3294, 32
      %v3442 = vpop.permute.xlu0 %3441
      %3445 = vrot.lane.b32.xlu0 %v3295, 48
      %v3446 = vpop.permute.xlu0 %3445
      %3449 = vrot.lane.b32.xlu0 %v3296, 64
      %v3450 = vpop.permute.xlu0 %3449
      %3453 = vrot.lane.b32.xlu0 %v3297, 80
      %v3454 = vpop.permute.xlu0 %3453
      %3457 = vrot.lane.b32.xlu0 %v3298, 96
      %v3458 = vpop.permute.xlu0 %3457
      %3461 = vrot.lane.b32.xlu0 %v3299, 112
      %v3462 = vpop.permute.xlu0 %3461
      %3465 = vrot.lane.b32.xlu0 %v3429, 16
      %v3466 = vpop.permute.xlu0 %3465
      %3469 = vrot.lane.b32.xlu0 %v3430, 32
      %v3470 = vpop.permute.xlu0 %3469
      %3473 = vrot.lane.b32.xlu0 %v3431, 48
      %v3474 = vpop.permute.xlu0 %3473
      %3477 = vrot.lane.b32.xlu0 %v3432, 64
      %v3478 = vpop.permute.xlu0 %3477
      %3481 = vrot.lane.b32.xlu0 %v3433, 80
      %v3482 = vpop.permute.xlu0 %3481
      %3485 = vrot.lane.b32.xlu0 %v3434, 96
      %v3486 = vpop.permute.xlu0 %3485
      %3489 = vrot.lane.b32.xlu0 %v3435, 112
      %v3490 = vpop.permute.xlu0 %3489
      %v3492 = vsel %vm1103, %v3292, %v3438
      %v3493 = vsel %vm1105, %v3492, %v3442
      %v3494 = vsel %vm1107, %v3493, %v3446
      %v3495 = vsel %vm1109, %v3494, %v3450
      %v3496 = vsel %vm1111, %v3495, %v3454
      %v3497 = vsel %vm1113, %v3496, %v3458
      %v3498 = vsel %vm1115, %v3497, %v3462
      %v3499 = vsel %vm1103, %v3428, %v3466
      %v3500 = vsel %vm1105, %v3499, %v3470
      %v3501 = vsel %vm1107, %v3500, %v3474
      %v3502 = vsel %vm1109, %v3501, %v3478
      %v3503 = vsel %vm1111, %v3502, %v3482
      %v3504 = vsel %vm1113, %v3503, %v3486
      %v3505 = vsel %vm1115, %v3504, %v3490
      %3506 = vrot.lane.b32.xlu0 %v3110, 127
      %v3507 = vpop.permute.xlu0 %3506
      %3508 = vrot.lane.b32.xlu0 %v3112, 127
      %v3509 = vpop.permute.xlu0 %3508
      %3510 = vrot.lane.b32.xlu0 %v3115, 127
      %v3511 = vpop.permute.xlu0 %3510
      %3512 = vrot.lane.b32.xlu0 %v3117, 127
      %v3513 = vpop.permute.xlu0 %3512
      %3514 = vrot.lane.b32.xlu0 %v3120, 127
      %v3515 = vpop.permute.xlu0 %3514
      %3516 = vrot.lane.b32.xlu0 %v3122, 127
      %v3517 = vpop.permute.xlu0 %3516
      %3518 = vrot.lane.b32.xlu0 %v3125, 127
      %v3519 = vpop.permute.xlu0 %3518
      %3520 = vrot.lane.b32.xlu0 %v3127, 127
      %v3521 = vpop.permute.xlu0 %3520
      %3522 = vrot.lane.b32.xlu0 %v3130, 127
      %v3523 = vpop.permute.xlu0 %3522
      %3524 = vrot.lane.b32.xlu0 %v3132, 127
      %v3525 = vpop.permute.xlu0 %3524
      %3526 = vrot.lane.b32.xlu0 %v3135, 127
      %v3527 = vpop.permute.xlu0 %3526
      %3528 = vrot.lane.b32.xlu0 %v3137, 127
      %v3529 = vpop.permute.xlu0 %3528
      %3530 = vrot.lane.b32.xlu0 %v3140, 127
      %v3531 = vpop.permute.xlu0 %3530
      %3532 = vrot.lane.b32.xlu0 %v3142, 127
      %v3533 = vpop.permute.xlu0 %3532
      %3534 = vrot.lane.b32.xlu0 %v3145, 127
      %v3535 = vpop.permute.xlu0 %3534
      %3536 = vrot.lane.b32.xlu0 %v3147, 127
      %v3537 = vpop.permute.xlu0 %3536
      %v3554 = vcombine.low %v3507, %v3515
      %v3555 = vcombine.high %v3507, %v3515
      %v3557 = vunpack.c.l.s4 1983009808
      %v3558 = vunpack.c.0.s8 %v3557
      %v3559 = vlaneseq
      %v3560 = vshrl.u32 %v3559, 7
      %v3561 = vsub.s32 %v3558, %v3560
      %v3562 = vrot.slane %v3554, %v3561
      %v3564 = vunpack.c.l.s4 1983009808
      %v3565 = vunpack.c.0.s8 %v3564
      %v3566 = vlaneseq
      %v3567 = vshrl.u32 %v3566, 7
      %v3568 = vsub.s32 %v3565, %v3567
      %v3569 = vrot.slane %v3555, %v3568
      %v3570 = vcombine.low %v3511, %v3519
      %v3571 = vcombine.high %v3511, %v3519
      %v3573 = vunpack.c.l.s4 1983009808
      %v3574 = vunpack.c.0.s8 %v3573
      %v3575 = vlaneseq
      %v3576 = vshrl.u32 %v3575, 7
      %v3577 = vsub.s32 %v3574, %v3576
      %v3578 = vrot.slane %v3570, %v3577
      %v3580 = vunpack.c.l.s4 1983009808
      %v3581 = vunpack.c.0.s8 %v3580
      %v3582 = vlaneseq
      %v3583 = vshrl.u32 %v3582, 7
      %v3584 = vsub.s32 %v3581, %v3583
      %v3585 = vrot.slane %v3571, %v3584
      %v3586 = vcombine.low %v3523, %v3531
      %v3587 = vcombine.high %v3523, %v3531
      %v3589 = vunpack.c.l.s4 1983009808
      %v3590 = vunpack.c.0.s8 %v3589
      %v3591 = vlaneseq
      %v3592 = vshrl.u32 %v3591, 7
      %v3593 = vsub.s32 %v3590, %v3592
      %v3594 = vrot.slane %v3586, %v3593
      %v3596 = vunpack.c.l.s4 1983009808
      %v3597 = vunpack.c.0.s8 %v3596
      %v3598 = vlaneseq
      %v3599 = vshrl.u32 %v3598, 7
      %v3600 = vsub.s32 %v3597, %v3599
      %v3601 = vrot.slane %v3587, %v3600
      %v3602 = vcombine.low %v3527, %v3535
      %v3603 = vcombine.high %v3527, %v3535
      %v3605 = vunpack.c.l.s4 1983009808
      %v3606 = vunpack.c.0.s8 %v3605
      %v3607 = vlaneseq
      %v3608 = vshrl.u32 %v3607, 7
      %v3609 = vsub.s32 %v3606, %v3608
      %v3610 = vrot.slane %v3602, %v3609
      %v3612 = vunpack.c.l.s4 1983009808
      %v3613 = vunpack.c.0.s8 %v3612
      %v3614 = vlaneseq
      %v3615 = vshrl.u32 %v3614, 7
      %v3616 = vsub.s32 %v3613, %v3615
      %v3617 = vrot.slane %v3603, %v3616
      %v3618 = vcombine.low %v3562, %v3578
      %v3619 = vcombine.high %v3562, %v3578
      %v3621 = vunpack.c.l.s4 1934713408
      %v3622 = vunpack.c.0.s8 %v3621
      %v3623 = vlaneseq
      %v3624 = vshrl.u32 %v3623, 7
      %v3625 = vsub.s32 %v3622, %v3624
      %v3626 = vrot.slane %v3618, %v3625
      %v3628 = vunpack.c.l.s4 1934713408
      %v3629 = vunpack.c.0.s8 %v3628
      %v3630 = vlaneseq
      %v3631 = vshrl.u32 %v3630, 7
      %v3632 = vsub.s32 %v3629, %v3631
      %v3633 = vrot.slane %v3619, %v3632
      %v3634 = vcombine.low %v3569, %v3585
      %v3635 = vcombine.high %v3569, %v3585
      %v3637 = vunpack.c.l.s4 1934713408
      %v3638 = vunpack.c.0.s8 %v3637
      %v3639 = vlaneseq
      %v3640 = vshrl.u32 %v3639, 7
      %v3641 = vsub.s32 %v3638, %v3640
      %v3642 = vrot.slane %v3634, %v3641
      %v3644 = vunpack.c.l.s4 1934713408
      %v3645 = vunpack.c.0.s8 %v3644
      %v3646 = vlaneseq
      %v3647 = vshrl.u32 %v3646, 7
      %v3648 = vsub.s32 %v3645, %v3647
      %v3649 = vrot.slane %v3635, %v3648
      %v3650 = vcombine.low %v3594, %v3610
      %v3651 = vcombine.high %v3594, %v3610
      %v3653 = vunpack.c.l.s4 1934713408
      %v3654 = vunpack.c.0.s8 %v3653
      %v3655 = vlaneseq
      %v3656 = vshrl.u32 %v3655, 7
      %v3657 = vsub.s32 %v3654, %v3656
      %v3658 = vrot.slane %v3650, %v3657
      %v3660 = vunpack.c.l.s4 1934713408
      %v3661 = vunpack.c.0.s8 %v3660
      %v3662 = vlaneseq
      %v3663 = vshrl.u32 %v3662, 7
      %v3664 = vsub.s32 %v3661, %v3663
      %v3665 = vrot.slane %v3651, %v3664
      %v3666 = vcombine.low %v3601, %v3617
      %v3667 = vcombine.high %v3601, %v3617
      %v3669 = vunpack.c.l.s4 1934713408
      %v3670 = vunpack.c.0.s8 %v3669
      %v3671 = vlaneseq
      %v3672 = vshrl.u32 %v3671, 7
      %v3673 = vsub.s32 %v3670, %v3672
      %v3674 = vrot.slane %v3666, %v3673
      %v3676 = vunpack.c.l.s4 1934713408
      %v3677 = vunpack.c.0.s8 %v3676
      %v3678 = vlaneseq
      %v3679 = vshrl.u32 %v3678, 7
      %v3680 = vsub.s32 %v3677, %v3679
      %v3681 = vrot.slane %v3667, %v3680
      %v3682 = vcombine.low %v3626, %v3658
      %v3683 = vcombine.high %v3626, %v3658
      %v3684 = vcombine.low %v3633, %v3665
      %v3685 = vcombine.high %v3633, %v3665
      %v3686 = vcombine.low %v3642, %v3674
      %v3687 = vcombine.high %v3642, %v3674
      %v3688 = vcombine.low %v3649, %v3681
      %v3689 = vcombine.high %v3649, %v3681
      %v3690 = vcombine.low %v3509, %v3517
      %v3691 = vcombine.high %v3509, %v3517
      %v3693 = vunpack.c.l.s4 1983009808
      %v3694 = vunpack.c.0.s8 %v3693
      %v3695 = vlaneseq
      %v3696 = vshrl.u32 %v3695, 7
      %v3697 = vsub.s32 %v3694, %v3696
      %v3698 = vrot.slane %v3690, %v3697
      %v3700 = vunpack.c.l.s4 1983009808
      %v3701 = vunpack.c.0.s8 %v3700
      %v3702 = vlaneseq
      %v3703 = vshrl.u32 %v3702, 7
      %v3704 = vsub.s32 %v3701, %v3703
      %v3705 = vrot.slane %v3691, %v3704
      %v3706 = vcombine.low %v3513, %v3521
      %v3707 = vcombine.high %v3513, %v3521
      %v3709 = vunpack.c.l.s4 1983009808
      %v3710 = vunpack.c.0.s8 %v3709
      %v3711 = vlaneseq
      %v3712 = vshrl.u32 %v3711, 7
      %v3713 = vsub.s32 %v3710, %v3712
      %v3714 = vrot.slane %v3706, %v3713
      %v3716 = vunpack.c.l.s4 1983009808
      %v3717 = vunpack.c.0.s8 %v3716
      %v3718 = vlaneseq
      %v3719 = vshrl.u32 %v3718, 7
      %v3720 = vsub.s32 %v3717, %v3719
      %v3721 = vrot.slane %v3707, %v3720
      %v3722 = vcombine.low %v3525, %v3533
      %v3723 = vcombine.high %v3525, %v3533
      %v3725 = vunpack.c.l.s4 1983009808
      %v3726 = vunpack.c.0.s8 %v3725
      %v3727 = vlaneseq
      %v3728 = vshrl.u32 %v3727, 7
      %v3729 = vsub.s32 %v3726, %v3728
      %v3730 = vrot.slane %v3722, %v3729
      %v3732 = vunpack.c.l.s4 1983009808
      %v3733 = vunpack.c.0.s8 %v3732
      %v3734 = vlaneseq
      %v3735 = vshrl.u32 %v3734, 7
      %v3736 = vsub.s32 %v3733, %v3735
      %v3737 = vrot.slane %v3723, %v3736
      %v3738 = vcombine.low %v3529, %v3537
      %v3739 = vcombine.high %v3529, %v3537
      %v3741 = vunpack.c.l.s4 1983009808
      %v3742 = vunpack.c.0.s8 %v3741
      %v3743 = vlaneseq
      %v3744 = vshrl.u32 %v3743, 7
      %v3745 = vsub.s32 %v3742, %v3744
      %v3746 = vrot.slane %v3738, %v3745
      %v3748 = vunpack.c.l.s4 1983009808
      %v3749 = vunpack.c.0.s8 %v3748
      %v3750 = vlaneseq
      %v3751 = vshrl.u32 %v3750, 7
      %v3752 = vsub.s32 %v3749, %v3751
      %v3753 = vrot.slane %v3739, %v3752
      %v3754 = vcombine.low %v3698, %v3714
      %v3755 = vcombine.high %v3698, %v3714
      %v3757 = vunpack.c.l.s4 1934713408
      %v3758 = vunpack.c.0.s8 %v3757
      %v3759 = vlaneseq
      %v3760 = vshrl.u32 %v3759, 7
      %v3761 = vsub.s32 %v3758, %v3760
      %v3762 = vrot.slane %v3754, %v3761
      %v3764 = vunpack.c.l.s4 1934713408
      %v3765 = vunpack.c.0.s8 %v3764
      %v3766 = vlaneseq
      %v3767 = vshrl.u32 %v3766, 7
      %v3768 = vsub.s32 %v3765, %v3767
      %v3769 = vrot.slane %v3755, %v3768
      %v3770 = vcombine.low %v3705, %v3721
      %v3771 = vcombine.high %v3705, %v3721
      %v3773 = vunpack.c.l.s4 1934713408
      %v3774 = vunpack.c.0.s8 %v3773
      %v3775 = vlaneseq
      %v3776 = vshrl.u32 %v3775, 7
      %v3777 = vsub.s32 %v3774, %v3776
      %v3778 = vrot.slane %v3770, %v3777
      %v3780 = vunpack.c.l.s4 1934713408
      %v3781 = vunpack.c.0.s8 %v3780
      %v3782 = vlaneseq
      %v3783 = vshrl.u32 %v3782, 7
      %v3784 = vsub.s32 %v3781, %v3783
      %v3785 = vrot.slane %v3771, %v3784
      %v3786 = vcombine.low %v3730, %v3746
      %v3787 = vcombine.high %v3730, %v3746
      %v3789 = vunpack.c.l.s4 1934713408
      %v3790 = vunpack.c.0.s8 %v3789
      %v3791 = vlaneseq
      %v3792 = vshrl.u32 %v3791, 7
      %v3793 = vsub.s32 %v3790, %v3792
      %v3794 = vrot.slane %v3786, %v3793
      %v3796 = vunpack.c.l.s4 1934713408
      %v3797 = vunpack.c.0.s8 %v3796
      %v3798 = vlaneseq
      %v3799 = vshrl.u32 %v3798, 7
      %v3800 = vsub.s32 %v3797, %v3799
      %v3801 = vrot.slane %v3787, %v3800
      %v3802 = vcombine.low %v3737, %v3753
      %v3803 = vcombine.high %v3737, %v3753
      %v3805 = vunpack.c.l.s4 1934713408
      %v3806 = vunpack.c.0.s8 %v3805
      %v3807 = vlaneseq
      %v3808 = vshrl.u32 %v3807, 7
      %v3809 = vsub.s32 %v3806, %v3808
      %v3810 = vrot.slane %v3802, %v3809
      %v3812 = vunpack.c.l.s4 1934713408
      %v3813 = vunpack.c.0.s8 %v3812
      %v3814 = vlaneseq
      %v3815 = vshrl.u32 %v3814, 7
      %v3816 = vsub.s32 %v3813, %v3815
      %v3817 = vrot.slane %v3803, %v3816
      %v3818 = vcombine.low %v3762, %v3794
      %v3819 = vcombine.high %v3762, %v3794
      %v3820 = vcombine.low %v3769, %v3801
      %v3821 = vcombine.high %v3769, %v3801
      %v3822 = vcombine.low %v3778, %v3810
      %v3823 = vcombine.high %v3778, %v3810
      %v3824 = vcombine.low %v3785, %v3817
      %v3825 = vcombine.high %v3785, %v3817
      %3827 = vrot.lane.b32.xlu0 %v3683, 16
      %v3828 = vpop.permute.xlu0 %3827
      %3831 = vrot.lane.b32.xlu0 %v3684, 32
      %v3832 = vpop.permute.xlu0 %3831
      %3835 = vrot.lane.b32.xlu0 %v3685, 48
      %v3836 = vpop.permute.xlu0 %3835
      %3839 = vrot.lane.b32.xlu0 %v3686, 64
      %v3840 = vpop.permute.xlu0 %3839
      %3843 = vrot.lane.b32.xlu0 %v3687, 80
      %v3844 = vpop.permute.xlu0 %3843
      %3847 = vrot.lane.b32.xlu0 %v3688, 96
      %v3848 = vpop.permute.xlu0 %3847
      %3851 = vrot.lane.b32.xlu0 %v3689, 112
      %v3852 = vpop.permute.xlu0 %3851
      %3855 = vrot.lane.b32.xlu0 %v3819, 16
      %v3856 = vpop.permute.xlu0 %3855
      %3859 = vrot.lane.b32.xlu0 %v3820, 32
      %v3860 = vpop.permute.xlu0 %3859
      %3863 = vrot.lane.b32.xlu0 %v3821, 48
      %v3864 = vpop.permute.xlu0 %3863
      %3867 = vrot.lane.b32.xlu0 %v3822, 64
      %v3868 = vpop.permute.xlu0 %3867
      %3871 = vrot.lane.b32.xlu0 %v3823, 80
      %v3872 = vpop.permute.xlu0 %3871
      %3875 = vrot.lane.b32.xlu0 %v3824, 96
      %v3876 = vpop.permute.xlu0 %3875
      %3879 = vrot.lane.b32.xlu0 %v3825, 112
      %v3880 = vpop.permute.xlu0 %3879
      %v3882 = vsel %vm1103, %v3682, %v3828
      %v3883 = vsel %vm1105, %v3882, %v3832
      %v3884 = vsel %vm1107, %v3883, %v3836
      %v3885 = vsel %vm1109, %v3884, %v3840
      %v3886 = vsel %vm1111, %v3885, %v3844
      %v3887 = vsel %vm1113, %v3886, %v3848
      %v3888 = vsel %vm1115, %v3887, %v3852
      %v3889 = vsel %vm1103, %v3818, %v3856
      %v3890 = vsel %vm1105, %v3889, %v3860
      %v3891 = vsel %vm1107, %v3890, %v3864
      %v3892 = vsel %vm1109, %v3891, %v3868
      %v3893 = vsel %vm1111, %v3892, %v3872
      %v3894 = vsel %vm1113, %v3893, %v3876
      %v3895 = vsel %vm1115, %v3894, %v3880
      %3896 = vrot.lane.b32.xlu0 %v3110, 126
      %v3897 = vpop.permute.xlu0 %3896
      %3898 = vrot.lane.b32.xlu0 %v3112, 126
      %v3899 = vpop.permute.xlu0 %3898
      %3900 = vrot.lane.b32.xlu0 %v3115, 126
      %v3901 = vpop.permute.xlu0 %3900
      %3902 = vrot.lane.b32.xlu0 %v3117, 126
      %v3903 = vpop.permute.xlu0 %3902
      %3904 = vrot.lane.b32.xlu0 %v3120, 126
      %v3905 = vpop.permute.xlu0 %3904
      %3906 = vrot.lane.b32.xlu0 %v3122, 126
      %v3907 = vpop.permute.xlu0 %3906
      %3908 = vrot.lane.b32.xlu0 %v3125, 126
      %v3909 = vpop.permute.xlu0 %3908
      %3910 = vrot.lane.b32.xlu0 %v3127, 126
      %v3911 = vpop.permute.xlu0 %3910
      %3912 = vrot.lane.b32.xlu0 %v3130, 126
      %v3913 = vpop.permute.xlu0 %3912
      %3914 = vrot.lane.b32.xlu0 %v3132, 126
      %v3915 = vpop.permute.xlu0 %3914
      %3916 = vrot.lane.b32.xlu0 %v3135, 126
      %v3917 = vpop.permute.xlu0 %3916
      %3918 = vrot.lane.b32.xlu0 %v3137, 126
      %v3919 = vpop.permute.xlu0 %3918
      %3920 = vrot.lane.b32.xlu0 %v3140, 126
      %v3921 = vpop.permute.xlu0 %3920
      %3922 = vrot.lane.b32.xlu0 %v3142, 126
      %v3923 = vpop.permute.xlu0 %3922
      %3924 = vrot.lane.b32.xlu0 %v3145, 126
      %v3925 = vpop.permute.xlu0 %3924
      %3926 = vrot.lane.b32.xlu0 %v3147, 126
      %v3927 = vpop.permute.xlu0 %3926
      %v3944 = vcombine.low %v3897, %v3905
      %v3945 = vcombine.high %v3897, %v3905
      %v3947 = vunpack.c.l.s4 1983009808
      %v3948 = vunpack.c.0.s8 %v3947
      %v3949 = vlaneseq
      %v3950 = vshrl.u32 %v3949, 7
      %v3951 = vsub.s32 %v3948, %v3950
      %v3952 = vrot.slane %v3944, %v3951
      %v3954 = vunpack.c.l.s4 1983009808
      %v3955 = vunpack.c.0.s8 %v3954
      %v3956 = vlaneseq
      %v3957 = vshrl.u32 %v3956, 7
      %v3958 = vsub.s32 %v3955, %v3957
      %v3959 = vrot.slane %v3945, %v3958
      %v3960 = vcombine.low %v3901, %v3909
      %v3961 = vcombine.high %v3901, %v3909
      %v3963 = vunpack.c.l.s4 1983009808
      %v3964 = vunpack.c.0.s8 %v3963
      %v3965 = vlaneseq
      %v3966 = vshrl.u32 %v3965, 7
      %v3967 = vsub.s32 %v3964, %v3966
      %v3968 = vrot.slane %v3960, %v3967
      %v3970 = vunpack.c.l.s4 1983009808
      %v3971 = vunpack.c.0.s8 %v3970
      %v3972 = vlaneseq
      %v3973 = vshrl.u32 %v3972, 7
      %v3974 = vsub.s32 %v3971, %v3973
      %v3975 = vrot.slane %v3961, %v3974
      %v3976 = vcombine.low %v3913, %v3921
      %v3977 = vcombine.high %v3913, %v3921
      %v3979 = vunpack.c.l.s4 1983009808
      %v3980 = vunpack.c.0.s8 %v3979
      %v3981 = vlaneseq
      %v3982 = vshrl.u32 %v3981, 7
      %v3983 = vsub.s32 %v3980, %v3982
      %v3984 = vrot.slane %v3976, %v3983
      %v3986 = vunpack.c.l.s4 1983009808
      %v3987 = vunpack.c.0.s8 %v3986
      %v3988 = vlaneseq
      %v3989 = vshrl.u32 %v3988, 7
      %v3990 = vsub.s32 %v3987, %v3989
      %v3991 = vrot.slane %v3977, %v3990
      %v3992 = vcombine.low %v3917, %v3925
      %v3993 = vcombine.high %v3917, %v3925
      %v3995 = vunpack.c.l.s4 1983009808
      %v3996 = vunpack.c.0.s8 %v3995
      %v3997 = vlaneseq
      %v3998 = vshrl.u32 %v3997, 7
      %v3999 = vsub.s32 %v3996, %v3998
      %v4000 = vrot.slane %v3992, %v3999
      %v4002 = vunpack.c.l.s4 1983009808
      %v4003 = vunpack.c.0.s8 %v4002
      %v4004 = vlaneseq
      %v4005 = vshrl.u32 %v4004, 7
      %v4006 = vsub.s32 %v4003, %v4005
      %v4007 = vrot.slane %v3993, %v4006
      %v4008 = vcombine.low %v3952, %v3968
      %v4009 = vcombine.high %v3952, %v3968
      %v4011 = vunpack.c.l.s4 1934713408
      %v4012 = vunpack.c.0.s8 %v4011
      %v4013 = vlaneseq
      %v4014 = vshrl.u32 %v4013, 7
      %v4015 = vsub.s32 %v4012, %v4014
      %v4016 = vrot.slane %v4008, %v4015
      %v4018 = vunpack.c.l.s4 1934713408
      %v4019 = vunpack.c.0.s8 %v4018
      %v4020 = vlaneseq
      %v4021 = vshrl.u32 %v4020, 7
      %v4022 = vsub.s32 %v4019, %v4021
      %v4023 = vrot.slane %v4009, %v4022
      %v4024 = vcombine.low %v3959, %v3975
      %v4025 = vcombine.high %v3959, %v3975
      %v4027 = vunpack.c.l.s4 1934713408
      %v4028 = vunpack.c.0.s8 %v4027
      %v4029 = vlaneseq
      %v4030 = vshrl.u32 %v4029, 7
      %v4031 = vsub.s32 %v4028, %v4030
      %v4032 = vrot.slane %v4024, %v4031
      %v4034 = vunpack.c.l.s4 1934713408
      %v4035 = vunpack.c.0.s8 %v4034
      %v4036 = vlaneseq
      %v4037 = vshrl.u32 %v4036, 7
      %v4038 = vsub.s32 %v4035, %v4037
      %v4039 = vrot.slane %v4025, %v4038
      %v4040 = vcombine.low %v3984, %v4000
      %v4041 = vcombine.high %v3984, %v4000
      %v4043 = vunpack.c.l.s4 1934713408
      %v4044 = vunpack.c.0.s8 %v4043
      %v4045 = vlaneseq
      %v4046 = vshrl.u32 %v4045, 7
      %v4047 = vsub.s32 %v4044, %v4046
      %v4048 = vrot.slane %v4040, %v4047
      %v4050 = vunpack.c.l.s4 1934713408
      %v4051 = vunpack.c.0.s8 %v4050
      %v4052 = vlaneseq
      %v4053 = vshrl.u32 %v4052, 7
      %v4054 = vsub.s32 %v4051, %v4053
      %v4055 = vrot.slane %v4041, %v4054
      %v4056 = vcombine.low %v3991, %v4007
      %v4057 = vcombine.high %v3991, %v4007
      %v4059 = vunpack.c.l.s4 1934713408
      %v4060 = vunpack.c.0.s8 %v4059
      %v4061 = vlaneseq
      %v4062 = vshrl.u32 %v4061, 7
      %v4063 = vsub.s32 %v4060, %v4062
      %v4064 = vrot.slane %v4056, %v4063
      %v4066 = vunpack.c.l.s4 1934713408
      %v4067 = vunpack.c.0.s8 %v4066
      %v4068 = vlaneseq
      %v4069 = vshrl.u32 %v4068, 7
      %v4070 = vsub.s32 %v4067, %v4069
      %v4071 = vrot.slane %v4057, %v4070
      %v4072 = vcombine.low %v4016, %v4048
      %v4073 = vcombine.high %v4016, %v4048
      %v4074 = vcombine.low %v4023, %v4055
      %v4075 = vcombine.high %v4023, %v4055
      %v4076 = vcombine.low %v4032, %v4064
      %v4077 = vcombine.high %v4032, %v4064
      %v4078 = vcombine.low %v4039, %v4071
      %v4079 = vcombine.high %v4039, %v4071
      %v4080 = vcombine.low %v3899, %v3907
      %v4081 = vcombine.high %v3899, %v3907
      %v4083 = vunpack.c.l.s4 1983009808
      %v4084 = vunpack.c.0.s8 %v4083
      %v4085 = vlaneseq
      %v4086 = vshrl.u32 %v4085, 7
      %v4087 = vsub.s32 %v4084, %v4086
      %v4088 = vrot.slane %v4080, %v4087
      %v4090 = vunpack.c.l.s4 1983009808
      %v4091 = vunpack.c.0.s8 %v4090
      %v4092 = vlaneseq
      %v4093 = vshrl.u32 %v4092, 7
      %v4094 = vsub.s32 %v4091, %v4093
      %v4095 = vrot.slane %v4081, %v4094
      %v4096 = vcombine.low %v3903, %v3911
      %v4097 = vcombine.high %v3903, %v3911
      %v4099 = vunpack.c.l.s4 1983009808
      %v4100 = vunpack.c.0.s8 %v4099
      %v4101 = vlaneseq
      %v4102 = vshrl.u32 %v4101, 7
      %v4103 = vsub.s32 %v4100, %v4102
      %v4104 = vrot.slane %v4096, %v4103
      %v4106 = vunpack.c.l.s4 1983009808
      %v4107 = vunpack.c.0.s8 %v4106
      %v4108 = vlaneseq
      %v4109 = vshrl.u32 %v4108, 7
      %v4110 = vsub.s32 %v4107, %v4109
      %v4111 = vrot.slane %v4097, %v4110
      %v4112 = vcombine.low %v3915, %v3923
      %v4113 = vcombine.high %v3915, %v3923
      %v4115 = vunpack.c.l.s4 1983009808
      %v4116 = vunpack.c.0.s8 %v4115
      %v4117 = vlaneseq
      %v4118 = vshrl.u32 %v4117, 7
      %v4119 = vsub.s32 %v4116, %v4118
      %v4120 = vrot.slane %v4112, %v4119
      %v4122 = vunpack.c.l.s4 1983009808
      %v4123 = vunpack.c.0.s8 %v4122
      %v4124 = vlaneseq
      %v4125 = vshrl.u32 %v4124, 7
      %v4126 = vsub.s32 %v4123, %v4125
      %v4127 = vrot.slane %v4113, %v4126
      %v4128 = vcombine.low %v3919, %v3927
      %v4129 = vcombine.high %v3919, %v3927
      %v4131 = vunpack.c.l.s4 1983009808
      %v4132 = vunpack.c.0.s8 %v4131
      %v4133 = vlaneseq
      %v4134 = vshrl.u32 %v4133, 7
      %v4135 = vsub.s32 %v4132, %v4134
      %v4136 = vrot.slane %v4128, %v4135
      %v4138 = vunpack.c.l.s4 1983009808
      %v4139 = vunpack.c.0.s8 %v4138
      %v4140 = vlaneseq
      %v4141 = vshrl.u32 %v4140, 7
      %v4142 = vsub.s32 %v4139, %v4141
      %v4143 = vrot.slane %v4129, %v4142
      %v4144 = vcombine.low %v4088, %v4104
      %v4145 = vcombine.high %v4088, %v4104
      %v4147 = vunpack.c.l.s4 1934713408
      %v4148 = vunpack.c.0.s8 %v4147
      %v4149 = vlaneseq
      %v4150 = vshrl.u32 %v4149, 7
      %v4151 = vsub.s32 %v4148, %v4150
      %v4152 = vrot.slane %v4144, %v4151
      %v4154 = vunpack.c.l.s4 1934713408
      %v4155 = vunpack.c.0.s8 %v4154
      %v4156 = vlaneseq
      %v4157 = vshrl.u32 %v4156, 7
      %v4158 = vsub.s32 %v4155, %v4157
      %v4159 = vrot.slane %v4145, %v4158
      %v4160 = vcombine.low %v4095, %v4111
      %v4161 = vcombine.high %v4095, %v4111
      %v4163 = vunpack.c.l.s4 1934713408
      %v4164 = vunpack.c.0.s8 %v4163
      %v4165 = vlaneseq
      %v4166 = vshrl.u32 %v4165, 7
      %v4167 = vsub.s32 %v4164, %v4166
      %v4168 = vrot.slane %v4160, %v4167
      %v4170 = vunpack.c.l.s4 1934713408
      %v4171 = vunpack.c.0.s8 %v4170
      %v4172 = vlaneseq
      %v4173 = vshrl.u32 %v4172, 7
      %v4174 = vsub.s32 %v4171, %v4173
      %v4175 = vrot.slane %v4161, %v4174
      %v4176 = vcombine.low %v4120, %v4136
      %v4177 = vcombine.high %v4120, %v4136
      %v4179 = vunpack.c.l.s4 1934713408
      %v4180 = vunpack.c.0.s8 %v4179
      %v4181 = vlaneseq
      %v4182 = vshrl.u32 %v4181, 7
      %v4183 = vsub.s32 %v4180, %v4182
      %v4184 = vrot.slane %v4176, %v4183
      %v4186 = vunpack.c.l.s4 1934713408
      %v4187 = vunpack.c.0.s8 %v4186
      %v4188 = vlaneseq
      %v4189 = vshrl.u32 %v4188, 7
      %v4190 = vsub.s32 %v4187, %v4189
      %v4191 = vrot.slane %v4177, %v4190
      %v4192 = vcombine.low %v4127, %v4143
      %v4193 = vcombine.high %v4127, %v4143
      %v4195 = vunpack.c.l.s4 1934713408
      %v4196 = vunpack.c.0.s8 %v4195
      %v4197 = vlaneseq
      %v4198 = vshrl.u32 %v4197, 7
      %v4199 = vsub.s32 %v4196, %v4198
      %v4200 = vrot.slane %v4192, %v4199
      %v4202 = vunpack.c.l.s4 1934713408
      %v4203 = vunpack.c.0.s8 %v4202
      %v4204 = vlaneseq
      %v4205 = vshrl.u32 %v4204, 7
      %v4206 = vsub.s32 %v4203, %v4205
      %v4207 = vrot.slane %v4193, %v4206
      %v4208 = vcombine.low %v4152, %v4184
      %v4209 = vcombine.high %v4152, %v4184
      %v4210 = vcombine.low %v4159, %v4191
      %v4211 = vcombine.high %v4159, %v4191
      %v4212 = vcombine.low %v4168, %v4200
      %v4213 = vcombine.high %v4168, %v4200
      %v4214 = vcombine.low %v4175, %v4207
      %v4215 = vcombine.high %v4175, %v4207
      %4217 = vrot.lane.b32.xlu0 %v4073, 16
      %v4218 = vpop.permute.xlu0 %4217
      %4221 = vrot.lane.b32.xlu0 %v4074, 32
      %v4222 = vpop.permute.xlu0 %4221
      %4225 = vrot.lane.b32.xlu0 %v4075, 48
      %v4226 = vpop.permute.xlu0 %4225
      %4229 = vrot.lane.b32.xlu0 %v4076, 64
      %v4230 = vpop.permute.xlu0 %4229
      %4233 = vrot.lane.b32.xlu0 %v4077, 80
      %v4234 = vpop.permute.xlu0 %4233
      %4237 = vrot.lane.b32.xlu0 %v4078, 96
      %v4238 = vpop.permute.xlu0 %4237
      %4241 = vrot.lane.b32.xlu0 %v4079, 112
      %v4242 = vpop.permute.xlu0 %4241
      %4245 = vrot.lane.b32.xlu0 %v4209, 16
      %v4246 = vpop.permute.xlu0 %4245
      %4249 = vrot.lane.b32.xlu0 %v4210, 32
      %v4250 = vpop.permute.xlu0 %4249
      %4253 = vrot.lane.b32.xlu0 %v4211, 48
      %v4254 = vpop.permute.xlu0 %4253
      %4257 = vrot.lane.b32.xlu0 %v4212, 64
      %v4258 = vpop.permute.xlu0 %4257
      %4261 = vrot.lane.b32.xlu0 %v4213, 80
      %v4262 = vpop.permute.xlu0 %4261
      %4265 = vrot.lane.b32.xlu0 %v4214, 96
      %v4266 = vpop.permute.xlu0 %4265
      %4269 = vrot.lane.b32.xlu0 %v4215, 112
      %v4270 = vpop.permute.xlu0 %4269
      %v4272 = vsel %vm1103, %v4072, %v4218
      %v4273 = vsel %vm1105, %v4272, %v4222
      %v4274 = vsel %vm1107, %v4273, %v4226
      %v4275 = vsel %vm1109, %v4274, %v4230
      %v4276 = vsel %vm1111, %v4275, %v4234
      %v4277 = vsel %vm1113, %v4276, %v4238
      %v4278 = vsel %vm1115, %v4277, %v4242
      %v4279 = vsel %vm1103, %v4208, %v4246
      %v4280 = vsel %vm1105, %v4279, %v4250
      %v4281 = vsel %vm1107, %v4280, %v4254
      %v4282 = vsel %vm1109, %v4281, %v4258
      %v4283 = vsel %vm1111, %v4282, %v4262
      %v4284 = vsel %vm1113, %v4283, %v4266
      %v4285 = vsel %vm1115, %v4284, %v4270
      %v4286 = vpack.c.bf16 %v1522, %v1116
      %v4287 = vpack.c.bf16 %v1529, %v1123
      %v4288 = vpack.c.bf16 %v2319, %v1912
      %v4289 = vpack.c.bf16 %v2326, %v1919
      %v4290 = vpack.c.bf16 %v3099, %v2709
      %v4291 = vpack.c.bf16 %v3106, %v2716
      %v4292 = vpack.c.bf16 %v3888, %v3498
      %v4293 = vpack.c.bf16 %v3895, %v3505
      %v4294 = vpack.c.bf16 %v4278, %v4278
      %v4295 = vpack.c.bf16 %v4285, %v4285
      %v4296 = vld [vmem:[%s3] sm:$0xff]
      %v4297 = vpack.c.bf16 %v4296, %v4296
      %v4298 = vld [vmem:[%s4] sm:$0xff]
      %4300 = vset.pattern.permute.xlu0 0
      %4301 = vperm.xlu0 %4300, %v4298
      %v4302 = vpop.permute.xlu0 %4301
      %vm4304 = vcmask 588800
      %v4306 = vsel %vm4304, %v4297, 0
      %vm4308 = vcmask 1043456
      %v4310 = vsel %vm4308, %v4294, 0
      %v4313 = vsel %vm4308, %v4295, 0
      %4315 = vmatprep.subr.bf16.mxu0 %v4287
      %4316 = vmatpush1.bf16.msra.mxu0 %v4286
      %4317 = vmatprep.subr.bf16.mxu0 %v4289
      %4318 = vmatpush1.bf16.msra.mxu0 %v4288
      %4319 = vmatprep.subr.bf16.mxu0 %v4291
      %4320 = vmatpush1.bf16.msra.mxu0 %v4290
      %4321 = vmatprep.subr.bf16.mxu0 %v4293
      %4322 = vmatpush1.bf16.msra.mxu0 %v4292
      %4323 = vmatprep.subr.bf16.mxu0 %v4313
      %4324 = vmatpush1.bf16.msra.mxu0 %v4310
      %4325 = vmatprep.subr.bf16.mxu0 0
      %4326 = vmatpush1.bf16.msra.mxu0 0
      %4327 = vmatprep.subr.bf16.mxu0 0
      %4328 = vmatpush1.bf16.msra.mxu0 0
      %4329 = vmatprep.subr.bf16.mxu0 0
      %4330 = vmatpush1.bf16.msra.mxu0 0
      %4331 = vmatprep.subr.bf16.mxu0 0
      %4332 = vmatpush1.bf16.msra.mxu0 0
      %4333 = vmatprep.subr.bf16.mxu0 0
      %4334 = vmatpush1.bf16.msra.mxu0 0
      %4335 = vmatprep.subr.bf16.mxu0 0
      %4336 = vmatpush1.bf16.msra.mxu0 0
      %4337 = vmatprep.subr.bf16.mxu0 0
      %4338 = vmatpush1.bf16.msra.mxu0 0
      %4339 = vmatprep.subr.bf16.mxu0 0
      %4340 = vmatpush1.bf16.msra.mxu0 0
      %4341 = vmatprep.subr.bf16.mxu0 0
      %4342 = vmatpush1.bf16.msra.mxu0 0
      %4343 = vmatprep.subr.bf16.mxu0 0
      %4344 = vmatpush1.bf16.msra.mxu0 0
      %4345 = vmatprep.subr.bf16.mxu0 0
      %4346 = vmatpush1.bf16.msra.mxu0 0
      %4347 = vmatprep.mubr.bf16.mxu0 0
      %4348 = vmatmul.mubr.bf16.gmra.mrb[0].mxu0 %v4306
      %v4349 = vpop.f32.mrb[0].mxu0
      %v4350 = vadd.f32 %v4302, %v4349
      %v4351 = vpop.f32.mrb[0].mxu0
      %v4352 = vadd.f32 %v4302, %v4351
      %v4353 = vpop.f32.mrb[0].mxu0
      %v4354 = vpop.f32.mrb[0].mxu0
      %4355 = vdwg.mxu0
      %4356 = vst [vmem:[%s226] sm:$0xff] %v4350
      %4357 = vst [vmem:[%s226 + $0x8] sm:$0xff] %v4352
      %p4358 = scmp.lt.s32.totalorder %s16, 1
      %s4359 = scalar_select %p4358, %s16, 1
      %s4360 = smul.addr %s4359, 6
      %s4361 = sadd.s32 2, %s4360
      %s4362 = smul.addr %s4361, 8
      %s4363 = scalar_lea.vmem %s5, %s4362
      // Predicated region
      $region41: #{dense_block_forward.5} parent=39 // pred_check
        %p4364 = pneg %p144
      $region42: #{dense_block_forward.5} parent=39 // pred_check_branch
        %4366 = sbr.rel (%p4364) target = $region44
      $region43: #{dense_block_forward.5} parent=39 // pred_region
        _
      $region44: #{dense_block_forward.5} parent=39 // pred_fallthru
        _
    $region40: #{dense_block_forward.5} parent=5 // pred_fallthru
      _
    %p4367 = scmp.le.s32.totalorder 2, %s11
    // Predicated region
    $region45: #{dense_block_forward.5} parent=5 // pred_check
      %p4368 = pneg %p4367
    $region46: #{dense_block_forward.5} parent=5 // pred_check_branch
      %4370 = sbr.rel (%p4368) target = $region48
    $region47: #{dense_block_forward.5} parent=5 // pred_region
      %s4371 = ssub.s32 %s11, 2
      // Predicated region
      $region49: #{dense_block_forward.5} parent=47 // pred_check
        %p4372 = pneg %p150
      $region50: #{dense_block_forward.5} parent=47 // pred_check_branch
        %4374 = sbr.rel (%p4372) target = $region52
      $region51: #{dense_block_forward.5} parent=47 // pred_region
        %p4375 = scmp.lt.s32.totalorder %s17, 1
        %s4376 = scalar_select %p4375, %s17, 1
        %s4377 = smul.addr %s4376, 6
        %s4378 = sadd.s32 2, %s4377
        %s4379 = smul.addr %s4378, 8
        %s4380 = scalar_lea.vmem %s5, %s4379
      $region52: #{dense_block_forward.5} parent=47 // pred_fallthru
        _
    $region48: #{dense_block_forward.5} parent=5 // pred_fallthru
      _
  $region6: #{dense_block_forward.5} parent=0 // loop_footer
    %s15 = sadd.s32 1, %s11
  $region7: #{dense_block_forward.5} parent=0 // loop_footer_branch
    %10 = sbr.rel target = $region3
  $region8: #{dense_block_forward.5} parent=0 // loop_exit
    _

// kernel: dense_block_forward.7
$region0: #{dense_block_forward.7}
  #allocation0 [shape = 'u32[]', space=smem, size = 0x4, offset = 0x4, fixed_abs, tag = 'smem constant byte address 0x4 - core index']
  #allocation1 [shape = 'u32[144,128]{1,0:T(1,128)}', space=vmem, size = 0x12000, scoped, tag = 'internal scratch']
  %s0 = inlined_call_operand.vmem [shape: f32[2,24,256], index: 0, kind: input, shape index: {}, may-alias: {0,5}]
  %s1 = inlined_call_operand.vmem [shape: f32[16,1], index: 1, kind: input, shape index: {}]
  %s2 = inlined_call_operand.vmem [shape: f32[16,1], index: 2, kind: input, shape index: {}]
  %s3 = inlined_call_operand.vmem [shape: f32[8,144], index: 3, kind: input, shape index: {}]
  %s4 = inlined_call_operand.vmem [shape: f32[8,1], index: 4, kind: input, shape index: {}]
  %s5 = inlined_call_operand.vmem [shape: f32[2,24,256], index: 5, kind: output, shape index: {}, may-alias: {0,5}]
  %s6 = sld [smem:[#allocation0]]
  $region53: #{dense_block_forward.7} parent=0
    _
  %s8 = ssub.s32 1, %s6
  %s9 = scalar_select 0, %s8, %s6
  loop: start=0, step=1, limit=4
  $region2: #{dense_block_forward.7} parent=0 // loop_pre_header
    _
  $region3: #{dense_block_forward.7} parent=0 // loop_header
    %s11 = sphi 0, %s15
    %p12 = scmp.ge.s32.totalorder %s11, 4
    %s21 = sphi 0, %s23
    %s24 = sphi 0, %s21
    %s25 = sphi 0, %s24
    %s41 = sphi 0, %s25
    %s45 = sphi 0, %s45
    %s47 = sphi 0, %s45
    %s48 = sphi 0, %s47
    %s62 = sphi 0, %s48
    %s66 = sphi 0, %s66
    %s68 = sphi 0, %s66
    %s69 = sphi 0, %s68
    %s83 = sphi 0, %s69
    %s87 = sphi 0, %s87
    %s89 = sphi 0, %s87
    %s90 = sphi 0, %s89
    %s104 = sphi 0, %s90
    %s108 = sphi 0, %s108
    %s110 = sphi 0, %s108
    %s111 = sphi 0, %s110
    %s125 = sphi 0, %s111
    %s131 = sphi 0, %s133
    %s134 = sphi 0, %s131
    %s135 = sphi 0, %s134
    %s151 = sphi 0, %s135
  $region4: #{dense_block_forward.7} parent=0 // loop_header_branch
    %14 = sbr.rel (%p12) target = $region8
  $region5: #{dense_block_forward.7} parent=0 // loop_body
    %s16 = ssub.s32 %s11, 1
    %s17 = ssub.s32 %s11, 2
    %s18 = sadd.s32 %s11, 1
    %s19 = ssub.s32 %s11, %s18
    %p20 = scmp.eq.s32.totalorder %s19, 0
    %s22 = sadd.s32 %s21, 1
    %s23 = scalar_select %p20, %s21, %s22
    %p26 = pneg %p20
    %p27 = scmp.eq.s32.totalorder %s11, 1
    %p28 = por %p26, %p27
    %p29 = scmp.ne.s32.totalorder %s21, %s24
    %p30 = scmp.eq.s32.totalorder %s11, 0
    %p31 = por %p29, %p30
    %p32 = scmp.ne.s32.totalorder %s21, %s24
    %p33 = scmp.eq.s32.totalorder %s16, 1
    %p34 = por %p32, %p33
    %p35 = scmp.ne.s32.totalorder %s24, %s25
    %p36 = scmp.eq.s32.totalorder %s16, 0
    %p37 = por %p35, %p36
    %p38 = scmp.ne.s32.totalorder %s24, %s25
    %p39 = scmp.eq.s32.totalorder %s17, 1
    %p40 = por %p38, %p39
    %p42 = scmp.ne.s32.totalorder %s25, %s41
    %p43 = scmp.eq.s32.totalorder %s17, 0
    %p44 = por %p42, %p43
    %s46 = sadd.s32 %s45, 1
    %p49 = scmp.eq.s32.totalorder %s11, 1
    %p50 = scmp.ne.s32.totalorder %s45, %s47
    %p51 = scmp.eq.s32.totalorder %s11, 0
    %p52 = por %p50, %p51
    %p53 = scmp.ne.s32.totalorder %s45, %s47
    %p54 = scmp.eq.s32.totalorder %s16, 1
    %p55 = por %p53, %p54
    %p56 = scmp.ne.s32.totalorder %s47, %s48
    %p57 = scmp.eq.s32.totalorder %s16, 0
    %p58 = por %p56, %p57
    %p59 = scmp.ne.s32.totalorder %s47, %s48
    %p60 = scmp.eq.s32.totalorder %s17, 1
    %p61 = por %p59, %p60
    %p63 = scmp.ne.s32.totalorder %s48, %s62
    %p64 = scmp.eq.s32.totalorder %s17, 0
    %p65 = por %p63, %p64
    %s67 = sadd.s32 %s66, 1
    %p70 = scmp.eq.s32.totalorder %s11, 1
    %p71 = scmp.ne.s32.totalorder %s66, %s68
    %p72 = scmp.eq.s32.totalorder %s11, 0
    %p73 = por %p71, %p72
    %p74 = scmp.ne.s32.totalorder %s66, %s68
    %p75 = scmp.eq.s32.totalorder %s16, 1
    %p76 = por %p74, %p75
    %p77 = scmp.ne.s32.totalorder %s68, %s69
    %p78 = scmp.eq.s32.totalorder %s16, 0
    %p79 = por %p77, %p78
    %p80 = scmp.ne.s32.totalorder %s68, %s69
    %p81 = scmp.eq.s32.totalorder %s17, 1
    %p82 = por %p80, %p81
    %p84 = scmp.ne.s32.totalorder %s69, %s83
    %p85 = scmp.eq.s32.totalorder %s17, 0
    %p86 = por %p84, %p85
    %s88 = sadd.s32 %s87, 1
    %p91 = scmp.eq.s32.totalorder %s11, 1
    %p92 = scmp.ne.s32.totalorder %s87, %s89
    %p93 = scmp.eq.s32.totalorder %s11, 0
    %p94 = por %p92, %p93
    %p95 = scmp.ne.s32.totalorder %s87, %s89
    %p96 = scmp.eq.s32.totalorder %s16, 1
    %p97 = por %p95, %p96
    %p98 = scmp.ne.s32.totalorder %s89, %s90
    %p99 = scmp.eq.s32.totalorder %s16, 0
    %p100 = por %p98, %p99
    %p101 = scmp.ne.s32.totalorder %s89, %s90
    %p102 = scmp.eq.s32.totalorder %s17, 1
    %p103 = por %p101, %p102
    %p105 = scmp.ne.s32.totalorder %s90, %s104
    %p106 = scmp.eq.s32.totalorder %s17, 0
    %p107 = por %p105, %p106
    %s109 = sadd.s32 %s108, 1
    %p112 = scmp.eq.s32.totalorder %s11, 1
    %p113 = scmp.ne.s32.totalorder %s108, %s110
    %p114 = scmp.eq.s32.totalorder %s11, 0
    %p115 = por %p113, %p114
    %p116 = scmp.ne.s32.totalorder %s108, %s110
    %p117 = scmp.eq.s32.totalorder %s16, 1
    %p118 = por %p116, %p117
    %p119 = scmp.ne.s32.totalorder %s110, %s111
    %p120 = scmp.eq.s32.totalorder %s16, 0
    %p121 = por %p119, %p120
    %p122 = scmp.ne.s32.totalorder %s110, %s111
    %p123 = scmp.eq.s32.totalorder %s17, 1
    %p124 = por %p122, %p123
    %p126 = scmp.ne.s32.totalorder %s111, %s125
    %p127 = scmp.eq.s32.totalorder %s17, 0
    %p128 = por %p126, %p127
    %s129 = ssub.s32 %s11, %s18
    %p130 = scmp.eq.s32.totalorder %s129, 0
    %s132 = sadd.s32 %s131, 1
    %s133 = scalar_select %p130, %s131, %s132
    %p136 = pneg %p130
    %p137 = scmp.eq.s32.totalorder %s11, 1
    %p138 = por %p136, %p137
    %p139 = scmp.ne.s32.totalorder %s131, %s134
    %p140 = scmp.eq.s32.totalorder %s11, 0
    %p141 = por %p139, %p140
    %p142 = scmp.ne.s32.totalorder %s131, %s134
    %p143 = scmp.eq.s32.totalorder %s16, 1
    %p144 = por %p142, %p143
    %p145 = scmp.ne.s32.totalorder %s134, %s135
    %p146 = scmp.eq.s32.totalorder %s16, 0
    %p147 = por %p145, %p146
    %p148 = scmp.ne.s32.totalorder %s134, %s135
    %p149 = scmp.eq.s32.totalorder %s17, 1
    %p150 = por %p148, %p149
    %p152 = scmp.ne.s32.totalorder %s135, %s151
    %p153 = scmp.eq.s32.totalorder %s17, 0
    %p154 = por %p152, %p153
    %p155 = scmp.le.s32.totalorder 1, %s11
    %p156 = scmp.lt.s32.totalorder %s11, 3
    %p157 = pnand %p155, %p156
    %p158 = pneg %p157
    // Predicated region
    $region9: #{dense_block_forward.7} parent=5 // pred_check
      _
    $region10: #{dense_block_forward.7} parent=5 // pred_check_branch
      %160 = sbr.rel (%p157) target = $region12
    $region11: #{dense_block_forward.7} parent=5 // pred_region
      %s161 = ssub.s32 %s11, 1
      // Predicated region
      $region13: #{dense_block_forward.7} parent=11 // pred_check
        %p162 = pneg %p58
      $region14: #{dense_block_forward.7} parent=11 // pred_check_branch
        %164 = sbr.rel (%p162) target = $region16
      $region15: #{dense_block_forward.7} parent=11 // pred_region
        _
      $region16: #{dense_block_forward.7} parent=11 // pred_fallthru
        _
      // Predicated region
      $region17: #{dense_block_forward.7} parent=11 // pred_check
        %p165 = pneg %p79
      $region18: #{dense_block_forward.7} parent=11 // pred_check_branch
        %167 = sbr.rel (%p165) target = $region20
      $region19: #{dense_block_forward.7} parent=11 // pred_region
        _
      $region20: #{dense_block_forward.7} parent=11 // pred_fallthru
        _
      // Predicated region
      $region21: #{dense_block_forward.7} parent=11 // pred_check
        %p168 = pneg %p100
      $region22: #{dense_block_forward.7} parent=11 // pred_check_branch
        %170 = sbr.rel (%p168) target = $region24
      $region23: #{dense_block_forward.7} parent=11 // pred_region
        _
      $region24: #{dense_block_forward.7} parent=11 // pred_fallthru
        _
      // Predicated region
      $region25: #{dense_block_forward.7} parent=11 // pred_check
        %p171 = pneg %p121
      $region26: #{dense_block_forward.7} parent=11 // pred_check_branch
        %173 = sbr.rel (%p171) target = $region28
      $region27: #{dense_block_forward.7} parent=11 // pred_region
        _
      $region28: #{dense_block_forward.7} parent=11 // pred_fallthru
        _
    $region12: #{dense_block_forward.7} parent=5 // pred_fallthru
      _
    %p174 = scmp.lt.s32.totalorder %s11, 2
    // Predicated region
    $region29: #{dense_block_forward.7} parent=5 // pred_check
      %p175 = pneg %p174
    $region30: #{dense_block_forward.7} parent=5 // pred_check_branch
      %177 = sbr.rel (%p175) target = $region32
    $region31: #{dense_block_forward.7} parent=5 // pred_region
      // Predicated region
      $region33: #{dense_block_forward.7} parent=31 // pred_check
        %p178 = pneg %p31
      $region34: #{dense_block_forward.7} parent=31 // pred_check_branch
        %180 = sbr.rel (%p178) target = $region36
      $region35: #{dense_block_forward.7} parent=31 // pred_region
        %p181 = scmp.lt.s32.totalorder %s11, 1
        %s182 = scalar_select %p181, %s11, 1
        %s183 = smul.addr %s182, 6
        %s184 = smul.addr %s183, 8
        %s185 = scalar_lea.vmem %s0, %s184
      $region36: #{dense_block_forward.7} parent=31 // pred_fallthru
        _
    $region32: #{dense_block_forward.7} parent=5 // pred_fallthru
      _
    %p186 = scmp.le.s32.totalorder 1, %s11
    %p187 = scmp.lt.s32.totalorder %s11, 3
    %p188 = pnand %p186, %p187
    %p189 = pneg %p188
    // Predicated region
    $region37: #{dense_block_forward.7} parent=5 // pred_check
      _
    $region38: #{dense_block_forward.7} parent=5 // pred_check_branch
      %191 = sbr.rel (%p188) target = $region40
    $region39: #{dense_block_forward.7} parent=5 // pred_region
      %s192 = ssub.s32 %s11, 1
      %p193 = scmp.lt.s32.totalorder %s16, 1
      %s194 = scalar_select %p193, %s16, 1
      %s195 = smul.addr %s194, 6
      %s196 = smul.addr %s195, 8
      %s197 = scalar_lea.vmem %s0, %s196
      %p198 = pneg %p37
      %p199 = pneg %p34
      %p200 = pneg %p58
      %p201 = pneg %p55
      %p202 = pneg %p79
      %p203 = pneg %p76
      %p204 = pneg %p100
      %p205 = pneg %p97
      %p206 = pneg %p121
      %p207 = pneg %p118
      %p208 = pneg %p147
      %p209 = pneg %p144
      %p210 = scmp.lt.s32.totalorder %s16, 1
      %s211 = scalar_select %p210, %s16, 1
      %s212 = smul.addr %s211, 6
      %s213 = sadd.s32 4, %s212
      %s214 = smul.addr %s213, 8
      %s215 = scalar_lea.vmem %s5, %s214
      %p216 = scmp.lt.s32.totalorder %s16, 1
      %s217 = scalar_select %p216, %s16, 1
      %s218 = smul.addr %s217, 6
      %s219 = smul.addr %s218, 8
      %s220 = scalar_lea.vmem %s0, %s219
      %p221 = scmp.lt.s32.totalorder %s16, 1
      %s222 = scalar_select %p221, %s16, 1
      %s223 = smul.addr %s222, 6
      %s224 = sadd.s32 4, %s223
      %s225 = smul.addr %s224, 8
      %s226 = scalar_lea.vmem %s5, %s225
      %v228 = vld [vmem:[%s220] sm:$0xff]
      %v229 = vld [vmem:[%s220 + $0x8] sm:$0xff]
      %v230 = vld [vmem:[%s220 + $0x10] sm:$0xff]
      %v231 = vld [vmem:[%s220 + $0x18] sm:$0xff]
      %v232 = vld [vmem:[%s1] sm:$0xff]
      %v233 = vld [vmem:[%s1 + $0x8] sm:$0xff]
      %235 = vset.pattern.permute.xlu0 0
      %236 = vperm.xlu0 %235, %v232
      %v237 = vpop.permute.xlu0 %236
      %240 = vset.pattern.permute.xlu0 0
      %241 = vperm.xlu0 %240, %v233
      %v242 = vpop.permute.xlu0 %241
      %v244 = vmul.f32 %v228, %v237
      %v245 = vmul.f32 %v229, %v237
      %v246 = vmul.f32 %v230, %v242
      %v247 = vmul.f32 %v231, %v242
      %v248 = vld [vmem:[%s2] sm:$0xff]
      %v249 = vld [vmem:[%s2 + $0x8] sm:$0xff]
      %251 = vset.pattern.permute.xlu0 0
      %252 = vperm.xlu0 %251, %v248
      %v253 = vpop.permute.xlu0 %252
      %256 = vset.pattern.permute.xlu0 0
      %257 = vperm.xlu0 %256, %v249
      %v258 = vpop.permute.xlu0 %257
      %v260 = vadd.f32 %v244, %v253
      %v261 = vadd.f32 %v245, %v253
      %v262 = vadd.f32 %v246, %v258
      %v263 = vadd.f32 %v247, %v258
      %v264 = vmax.f32 %v260, 0.0
      %v265 = vmax.f32 %v261, 0.0
      %v266 = vmax.f32 %v262, 0.0
      %v267 = vmax.f32 %v263, 0.0
      %270 = vrot.lane.b32.xlu0 %v264, 112
      %v271 = vpop.permute.xlu0 %270
      %272 = vrot.lane.b32.xlu0 %v266, 112
      %v273 = vpop.permute.xlu0 %272
      %276 = vrot.lane.b32.xlu0 %v264, 96
      %v277 = vpop.permute.xlu0 %276
      %278 = vrot.lane.b32.xlu0 %v266, 96
      %v279 = vpop.permute.xlu0 %278
      %282 = vrot.lane.b32.xlu0 %v264, 80
      %v283 = vpop.permute.xlu0 %282
      %284 = vrot.lane.b32.xlu0 %v266, 80
      %v285 = vpop.permute.xlu0 %284
      %288 = vrot.lane.b32.xlu0 %v264, 64
      %v289 = vpop.permute.xlu0 %288
      %290 = vrot.lane.b32.xlu0 %v266, 64
      %v291 = vpop.permute.xlu0 %290
      %294 = vrot.lane.b32.xlu0 %v264, 48
      %v295 = vpop.permute.xlu0 %294
      %296 = vrot.lane.b32.xlu0 %v266, 48
      %v297 = vpop.permute.xlu0 %296
      %300 = vrot.lane.b32.xlu0 %v264, 32
      %v301 = vpop.permute.xlu0 %300
      %302 = vrot.lane.b32.xlu0 %v266, 32
      %v303 = vpop.permute.xlu0 %302
      %306 = vrot.lane.b32.xlu0 %v264, 16
      %v307 = vpop.permute.xlu0 %306
      %308 = vrot.lane.b32.xlu0 %v266, 16
      %v309 = vpop.permute.xlu0 %308
      %314 = vrot.lane.b32.xlu0 %v265, 112
      %v315 = vpop.permute.xlu0 %314
      %316 = vrot.lane.b32.xlu0 %v267, 112
      %v317 = vpop.permute.xlu0 %316
      %320 = vrot.lane.b32.xlu0 %v265, 96
      %v321 = vpop.permute.xlu0 %320
      %322 = vrot.lane.b32.xlu0 %v267, 96
      %v323 = vpop.permute.xlu0 %322
      %326 = vrot.lane.b32.xlu0 %v265, 80
      %v327 = vpop.permute.xlu0 %326
      %328 = vrot.lane.b32.xlu0 %v267, 80
      %v329 = vpop.permute.xlu0 %328
      %332 = vrot.lane.b32.xlu0 %v265, 64
      %v333 = vpop.permute.xlu0 %332
      %334 = vrot.lane.b32.xlu0 %v267, 64
      %v335 = vpop.permute.xlu0 %334
      %338 = vrot.lane.b32.xlu0 %v265, 48
      %v339 = vpop.permute.xlu0 %338
      %340 = vrot.lane.b32.xlu0 %v267, 48
      %v341 = vpop.permute.xlu0 %340
      %344 = vrot.lane.b32.xlu0 %v265, 32
      %v345 = vpop.permute.xlu0 %344
      %346 = vrot.lane.b32.xlu0 %v267, 32
      %v347 = vpop.permute.xlu0 %346
      %350 = vrot.lane.b32.xlu0 %v265, 16
      %v351 = vpop.permute.xlu0 %350
      %352 = vrot.lane.b32.xlu0 %v267, 16
      %v353 = vpop.permute.xlu0 %352
      %v356 = vcombine.low %v264, %v277
      %v357 = vcombine.high %v264, %v277
      %v359 = vunpack.c.l.s4 1983009808
      %v360 = vunpack.c.0.s8 %v359
      %v361 = vlaneseq
      %v362 = vshrl.u32 %v361, 7
      %v363 = vsub.s32 %v360, %v362
      %v364 = vrot.slane %v356, %v363
      %v366 = vunpack.c.l.s4 1983009808
      %v367 = vunpack.c.0.s8 %v366
      %v368 = vlaneseq
      %v369 = vshrl.u32 %v368, 7
      %v370 = vsub.s32 %v367, %v369
      %v371 = vrot.slane %v357, %v370
      %v372 = vcombine.low %v271, %v283
      %v373 = vcombine.high %v271, %v283
      %v375 = vunpack.c.l.s4 1983009808
      %v376 = vunpack.c.0.s8 %v375
      %v377 = vlaneseq
      %v378 = vshrl.u32 %v377, 7
      %v379 = vsub.s32 %v376, %v378
      %v380 = vrot.slane %v372, %v379
      %v382 = vunpack.c.l.s4 1983009808
      %v383 = vunpack.c.0.s8 %v382
      %v384 = vlaneseq
      %v385 = vshrl.u32 %v384, 7
      %v386 = vsub.s32 %v383, %v385
      %v387 = vrot.slane %v373, %v386
      %v388 = vcombine.low %v289, %v301
      %v389 = vcombine.high %v289, %v301
      %v391 = vunpack.c.l.s4 1983009808
      %v392 = vunpack.c.0.s8 %v391
      %v393 = vlaneseq
      %v394 = vshrl.u32 %v393, 7
      %v395 = vsub.s32 %v392, %v394
      %v396 = vrot.slane %v388, %v395
      %v398 = vunpack.c.l.s4 1983009808
      %v399 = vunpack.c.0.s8 %v398
      %v400 = vlaneseq
      %v401 = vshrl.u32 %v400, 7
      %v402 = vsub.s32 %v399, %v401
      %v403 = vrot.slane %v389, %v402
      %v404 = vcombine.low %v295, %v307
      %v405 = vcombine.high %v295, %v307
      %v407 = vunpack.c.l.s4 1983009808
      %v408 = vunpack.c.0.s8 %v407
      %v409 = vlaneseq
      %v410 = vshrl.u32 %v409, 7
      %v411 = vsub.s32 %v408, %v410
      %v412 = vrot.slane %v404, %v411
      %v414 = vunpack.c.l.s4 1983009808
      %v415 = vunpack.c.0.s8 %v414
      %v416 = vlaneseq
      %v417 = vshrl.u32 %v416, 7
      %v418 = vsub.s32 %v415, %v417
      %v419 = vrot.slane %v405, %v418
      %v420 = vcombine.low %v364, %v380
      %v421 = vcombine.high %v364, %v380
      %v423 = vunpack.c.l.s4 1934713408
      %v424 = vunpack.c.0.s8 %v423
      %v425 = vlaneseq
      %v426 = vshrl.u32 %v425, 7
      %v427 = vsub.s32 %v424, %v426
      %v428 = vrot.slane %v420, %v427
      %v430 = vunpack.c.l.s4 1934713408
      %v431 = vunpack.c.0.s8 %v430
      %v432 = vlaneseq
      %v433 = vshrl.u32 %v432, 7
      %v434 = vsub.s32 %v431, %v433
      %v435 = vrot.slane %v421, %v434
      %v436 = vcombine.low %v371, %v387
      %v437 = vcombine.high %v371, %v387
      %v439 = vunpack.c.l.s4 1934713408
      %v440 = vunpack.c.0.s8 %v439
      %v441 = vlaneseq
      %v442 = vshrl.u32 %v441, 7
      %v443 = vsub.s32 %v440, %v442
      %v444 = vrot.slane %v436, %v443
      %v446 = vunpack.c.l.s4 1934713408
      %v447 = vunpack.c.0.s8 %v446
      %v448 = vlaneseq
      %v449 = vshrl.u32 %v448, 7
      %v450 = vsub.s32 %v447, %v449
      %v451 = vrot.slane %v437, %v450
      %v452 = vcombine.low %v396, %v412
      %v453 = vcombine.high %v396, %v412
      %v455 = vunpack.c.l.s4 1934713408
      %v456 = vunpack.c.0.s8 %v455
      %v457 = vlaneseq
      %v458 = vshrl.u32 %v457, 7
      %v459 = vsub.s32 %v456, %v458
      %v460 = vrot.slane %v452, %v459
      %v462 = vunpack.c.l.s4 1934713408
      %v463 = vunpack.c.0.s8 %v462
      %v464 = vlaneseq
      %v465 = vshrl.u32 %v464, 7
      %v466 = vsub.s32 %v463, %v465
      %v467 = vrot.slane %v453, %v466
      %v468 = vcombine.low %v403, %v419
      %v469 = vcombine.high %v403, %v419
      %v471 = vunpack.c.l.s4 1934713408
      %v472 = vunpack.c.0.s8 %v471
      %v473 = vlaneseq
      %v474 = vshrl.u32 %v473, 7
      %v475 = vsub.s32 %v472, %v474
      %v476 = vrot.slane %v468, %v475
      %v478 = vunpack.c.l.s4 1934713408
      %v479 = vunpack.c.0.s8 %v478
      %v480 = vlaneseq
      %v481 = vshrl.u32 %v480, 7
      %v482 = vsub.s32 %v479, %v481
      %v483 = vrot.slane %v469, %v482
      %v484 = vcombine.low %v428, %v460
      %v485 = vcombine.high %v428, %v460
      %v486 = vcombine.low %v435, %v467
      %v487 = vcombine.high %v435, %v467
      %v488 = vcombine.low %v444, %v476
      %v489 = vcombine.high %v444, %v476
      %v490 = vcombine.low %v451, %v483
      %v491 = vcombine.high %v451, %v483
      %v492 = vcombine.low %v265, %v321
      %v493 = vcombine.high %v265, %v321
      %v495 = vunpack.c.l.s4 1983009808
      %v496 = vunpack.c.0.s8 %v495
      %v497 = vlaneseq
      %v498 = vshrl.u32 %v497, 7
      %v499 = vsub.s32 %v496, %v498
      %v500 = vrot.slane %v492, %v499
      %v502 = vunpack.c.l.s4 1983009808
      %v503 = vunpack.c.0.s8 %v502
      %v504 = vlaneseq
      %v505 = vshrl.u32 %v504, 7
      %v506 = vsub.s32 %v503, %v505
      %v507 = vrot.slane %v493, %v506
      %v508 = vcombine.low %v315, %v327
      %v509 = vcombine.high %v315, %v327
      %v511 = vunpack.c.l.s4 1983009808
      %v512 = vunpack.c.0.s8 %v511
      %v513 = vlaneseq
      %v514 = vshrl.u32 %v513, 7
      %v515 = vsub.s32 %v512, %v514
      %v516 = vrot.slane %v508, %v515
      %v518 = vunpack.c.l.s4 1983009808
      %v519 = vunpack.c.0.s8 %v518
      %v520 = vlaneseq
      %v521 = vshrl.u32 %v520, 7
      %v522 = vsub.s32 %v519, %v521
      %v523 = vrot.slane %v509, %v522
      %v524 = vcombine.low %v333, %v345
      %v525 = vcombine.high %v333, %v345
      %v527 = vunpack.c.l.s4 1983009808
      %v528 = vunpack.c.0.s8 %v527
      %v529 = vlaneseq
      %v530 = vshrl.u32 %v529, 7
      %v531 = vsub.s32 %v528, %v530
      %v532 = vrot.slane %v524, %v531
      %v534 = vunpack.c.l.s4 1983009808
      %v535 = vunpack.c.0.s8 %v534
      %v536 = vlaneseq
      %v537 = vshrl.u32 %v536, 7
      %v538 = vsub.s32 %v535, %v537
      %v539 = vrot.slane %v525, %v538
      %v540 = vcombine.low %v339, %v351
      %v541 = vcombine.high %v339, %v351
      %v543 = vunpack.c.l.s4 1983009808
      %v544 = vunpack.c.0.s8 %v543
      %v545 = vlaneseq
      %v546 = vshrl.u32 %v545, 7
      %v547 = vsub.s32 %v544, %v546
      %v548 = vrot.slane %v540, %v547
      %v550 = vunpack.c.l.s4 1983009808
      %v551 = vunpack.c.0.s8 %v550
      %v552 = vlaneseq
      %v553 = vshrl.u32 %v552, 7
      %v554 = vsub.s32 %v551, %v553
      %v555 = vrot.slane %v541, %v554
      %v556 = vcombine.low %v500, %v516
      %v557 = vcombine.high %v500, %v516
      %v559 = vunpack.c.l.s4 1934713408
      %v560 = vunpack.c.0.s8 %v559
      %v561 = vlaneseq
      %v562 = vshrl.u32 %v561, 7
      %v563 = vsub.s32 %v560, %v562
      %v564 = vrot.slane %v556, %v563
      %v566 = vunpack.c.l.s4 1934713408
      %v567 = vunpack.c.0.s8 %v566
      %v568 = vlaneseq
      %v569 = vshrl.u32 %v568, 7
      %v570 = vsub.s32 %v567, %v569
      %v571 = vrot.slane %v557, %v570
      %v572 = vcombine.low %v507, %v523
      %v573 = vcombine.high %v507, %v523
      %v575 = vunpack.c.l.s4 1934713408
      %v576 = vunpack.c.0.s8 %v575
      %v577 = vlaneseq
      %v578 = vshrl.u32 %v577, 7
      %v579 = vsub.s32 %v576, %v578
      %v580 = vrot.slane %v572, %v579
      %v582 = vunpack.c.l.s4 1934713408
      %v583 = vunpack.c.0.s8 %v582
      %v584 = vlaneseq
      %v585 = vshrl.u32 %v584, 7
      %v586 = vsub.s32 %v583, %v585
      %v587 = vrot.slane %v573, %v586
      %v588 = vcombine.low %v532, %v548
      %v589 = vcombine.high %v532, %v548
      %v591 = vunpack.c.l.s4 1934713408
      %v592 = vunpack.c.0.s8 %v591
      %v593 = vlaneseq
      %v594 = vshrl.u32 %v593, 7
      %v595 = vsub.s32 %v592, %v594
      %v596 = vrot.slane %v588, %v595
      %v598 = vunpack.c.l.s4 1934713408
      %v599 = vunpack.c.0.s8 %v598
      %v600 = vlaneseq
      %v601 = vshrl.u32 %v600, 7
      %v602 = vsub.s32 %v599, %v601
      %v603 = vrot.slane %v589, %v602
      %v604 = vcombine.low %v539, %v555
      %v605 = vcombine.high %v539, %v555
      %v607 = vunpack.c.l.s4 1934713408
      %v608 = vunpack.c.0.s8 %v607
      %v609 = vlaneseq
      %v610 = vshrl.u32 %v609, 7
      %v611 = vsub.s32 %v608, %v610
      %v612 = vrot.slane %v604, %v611
      %v614 = vunpack.c.l.s4 1934713408
      %v615 = vunpack.c.0.s8 %v614
      %v616 = vlaneseq
      %v617 = vshrl.u32 %v616, 7
      %v618 = vsub.s32 %v615, %v617
      %v619 = vrot.slane %v605, %v618
      %v620 = vcombine.low %v564, %v596
      %v621 = vcombine.high %v564, %v596
      %v622 = vcombine.low %v571, %v603
      %v623 = vcombine.high %v571, %v603
      %v624 = vcombine.low %v580, %v612
      %v625 = vcombine.high %v580, %v612
      %v626 = vcombine.low %v587, %v619
      %v627 = vcombine.high %v587, %v619
      %v628 = vcombine.low %v266, %v279
      %v629 = vcombine.high %v266, %v279
      %v631 = vunpack.c.l.s4 1983009808
      %v632 = vunpack.c.0.s8 %v631
      %v633 = vlaneseq
      %v634 = vshrl.u32 %v633, 7
      %v635 = vsub.s32 %v632, %v634
      %v636 = vrot.slane %v628, %v635
      %v638 = vunpack.c.l.s4 1983009808
      %v639 = vunpack.c.0.s8 %v638
      %v640 = vlaneseq
      %v641 = vshrl.u32 %v640, 7
      %v642 = vsub.s32 %v639, %v641
      %v643 = vrot.slane %v629, %v642
      %v644 = vcombine.low %v273, %v285
      %v645 = vcombine.high %v273, %v285
      %v647 = vunpack.c.l.s4 1983009808
      %v648 = vunpack.c.0.s8 %v647
      %v649 = vlaneseq
      %v650 = vshrl.u32 %v649, 7
      %v651 = vsub.s32 %v648, %v650
      %v652 = vrot.slane %v644, %v651
      %v654 = vunpack.c.l.s4 1983009808
      %v655 = vunpack.c.0.s8 %v654
      %v656 = vlaneseq
      %v657 = vshrl.u32 %v656, 7
      %v658 = vsub.s32 %v655, %v657
      %v659 = vrot.slane %v645, %v658
      %v660 = vcombine.low %v291, %v303
      %v661 = vcombine.high %v291, %v303
      %v663 = vunpack.c.l.s4 1983009808
      %v664 = vunpack.c.0.s8 %v663
      %v665 = vlaneseq
      %v666 = vshrl.u32 %v665, 7
      %v667 = vsub.s32 %v664, %v666
      %v668 = vrot.slane %v660, %v667
      %v670 = vunpack.c.l.s4 1983009808
      %v671 = vunpack.c.0.s8 %v670
      %v672 = vlaneseq
      %v673 = vshrl.u32 %v672, 7
      %v674 = vsub.s32 %v671, %v673
      %v675 = vrot.slane %v661, %v674
      %v676 = vcombine.low %v297, %v309
      %v677 = vcombine.high %v297, %v309
      %v679 = vunpack.c.l.s4 1983009808
      %v680 = vunpack.c.0.s8 %v679
      %v681 = vlaneseq
      %v682 = vshrl.u32 %v681, 7
      %v683 = vsub.s32 %v680, %v682
      %v684 = vrot.slane %v676, %v683
      %v686 = vunpack.c.l.s4 1983009808
      %v687 = vunpack.c.0.s8 %v686
      %v688 = vlaneseq
      %v689 = vshrl.u32 %v688, 7
      %v690 = vsub.s32 %v687, %v689
      %v691 = vrot.slane %v677, %v690
      %v692 = vcombine.low %v636, %v652
      %v693 = vcombine.high %v636, %v652
      %v695 = vunpack.c.l.s4 1934713408
      %v696 = vunpack.c.0.s8 %v695
      %v697 = vlaneseq
      %v698 = vshrl.u32 %v697, 7
      %v699 = vsub.s32 %v696, %v698
      %v700 = vrot.slane %v692, %v699
      %v702 = vunpack.c.l.s4 1934713408
      %v703 = vunpack.c.0.s8 %v702
      %v704 = vlaneseq
      %v705 = vshrl.u32 %v704, 7
      %v706 = vsub.s32 %v703, %v705
      %v707 = vrot.slane %v693, %v706
      %v708 = vcombine.low %v643, %v659
      %v709 = vcombine.high %v643, %v659
      %v711 = vunpack.c.l.s4 1934713408
      %v712 = vunpack.c.0.s8 %v711
      %v713 = vlaneseq
      %v714 = vshrl.u32 %v713, 7
      %v715 = vsub.s32 %v712, %v714
      %v716 = vrot.slane %v708, %v715
      %v718 = vunpack.c.l.s4 1934713408
      %v719 = vunpack.c.0.s8 %v718
      %v720 = vlaneseq
      %v721 = vshrl.u32 %v720, 7
      %v722 = vsub.s32 %v719, %v721
      %v723 = vrot.slane %v709, %v722
      %v724 = vcombine.low %v668, %v684
      %v725 = vcombine.high %v668, %v684
      %v727 = vunpack.c.l.s4 1934713408
      %v728 = vunpack.c.0.s8 %v727
      %v729 = vlaneseq
      %v730 = vshrl.u32 %v729, 7
      %v731 = vsub.s32 %v728, %v730
      %v732 = vrot.slane %v724, %v731
      %v734 = vunpack.c.l.s4 1934713408
      %v735 = vunpack.c.0.s8 %v734
      %v736 = vlaneseq
      %v737 = vshrl.u32 %v736, 7
      %v738 = vsub.s32 %v735, %v737
      %v739 = vrot.slane %v725, %v738
      %v740 = vcombine.low %v675, %v691
      %v741 = vcombine.high %v675, %v691
      %v743 = vunpack.c.l.s4 1934713408
      %v744 = vunpack.c.0.s8 %v743
      %v745 = vlaneseq
      %v746 = vshrl.u32 %v745, 7
      %v747 = vsub.s32 %v744, %v746
      %v748 = vrot.slane %v740, %v747
      %v750 = vunpack.c.l.s4 1934713408
      %v751 = vunpack.c.0.s8 %v750
      %v752 = vlaneseq
      %v753 = vshrl.u32 %v752, 7
      %v754 = vsub.s32 %v751, %v753
      %v755 = vrot.slane %v741, %v754
      %v756 = vcombine.low %v700, %v732
      %v757 = vcombine.high %v700, %v732
      %v758 = vcombine.low %v707, %v739
      %v759 = vcombine.high %v707, %v739
      %v760 = vcombine.low %v716, %v748
      %v761 = vcombine.high %v716, %v748
      %v762 = vcombine.low %v723, %v755
      %v763 = vcombine.high %v723, %v755
      %v764 = vcombine.low %v267, %v323
      %v765 = vcombine.high %v267, %v323
      %v767 = vunpack.c.l.s4 1983009808
      %v768 = vunpack.c.0.s8 %v767
      %v769 = vlaneseq
      %v770 = vshrl.u32 %v769, 7
      %v771 = vsub.s32 %v768, %v770
      %v772 = vrot.slane %v764, %v771
      %v774 = vunpack.c.l.s4 1983009808
      %v775 = vunpack.c.0.s8 %v774
      %v776 = vlaneseq
      %v777 = vshrl.u32 %v776, 7
      %v778 = vsub.s32 %v775, %v777
      %v779 = vrot.slane %v765, %v778
      %v780 = vcombine.low %v317, %v329
      %v781 = vcombine.high %v317, %v329
      %v783 = vunpack.c.l.s4 1983009808
      %v784 = vunpack.c.0.s8 %v783
      %v785 = vlaneseq
      %v786 = vshrl.u32 %v785, 7
      %v787 = vsub.s32 %v784, %v786
      %v788 = vrot.slane %v780, %v787
      %v790 = vunpack.c.l.s4 1983009808
      %v791 = vunpack.c.0.s8 %v790
      %v792 = vlaneseq
      %v793 = vshrl.u32 %v792, 7
      %v794 = vsub.s32 %v791, %v793
      %v795 = vrot.slane %v781, %v794
      %v796 = vcombine.low %v335, %v347
      %v797 = vcombine.high %v335, %v347
      %v799 = vunpack.c.l.s4 1983009808
      %v800 = vunpack.c.0.s8 %v799
      %v801 = vlaneseq
      %v802 = vshrl.u32 %v801, 7
      %v803 = vsub.s32 %v800, %v802
      %v804 = vrot.slane %v796, %v803
      %v806 = vunpack.c.l.s4 1983009808
      %v807 = vunpack.c.0.s8 %v806
      %v808 = vlaneseq
      %v809 = vshrl.u32 %v808, 7
      %v810 = vsub.s32 %v807, %v809
      %v811 = vrot.slane %v797, %v810
      %v812 = vcombine.low %v341, %v353
      %v813 = vcombine.high %v341, %v353
      %v815 = vunpack.c.l.s4 1983009808
      %v816 = vunpack.c.0.s8 %v815
      %v817 = vlaneseq
      %v818 = vshrl.u32 %v817, 7
      %v819 = vsub.s32 %v816, %v818
      %v820 = vrot.slane %v812, %v819
      %v822 = vunpack.c.l.s4 1983009808
      %v823 = vunpack.c.0.s8 %v822
      %v824 = vlaneseq
      %v825 = vshrl.u32 %v824, 7
      %v826 = vsub.s32 %v823, %v825
      %v827 = vrot.slane %v813, %v826
      %v828 = vcombine.low %v772, %v788
      %v829 = vcombine.high %v772, %v788
      %v831 = vunpack.c.l.s4 1934713408
      %v832 = vunpack.c.0.s8 %v831
      %v833 = vlaneseq
      %v834 = vshrl.u32 %v833, 7
      %v835 = vsub.s32 %v832, %v834
      %v836 = vrot.slane %v828, %v835
      %v838 = vunpack.c.l.s4 1934713408
      %v839 = vunpack.c.0.s8 %v838
      %v840 = vlaneseq
      %v841 = vshrl.u32 %v840, 7
      %v842 = vsub.s32 %v839, %v841
      %v843 = vrot.slane %v829, %v842
      %v844 = vcombine.low %v779, %v795
      %v845 = vcombine.high %v779, %v795
      %v847 = vunpack.c.l.s4 1934713408
      %v848 = vunpack.c.0.s8 %v847
      %v849 = vlaneseq
      %v850 = vshrl.u32 %v849, 7
      %v851 = vsub.s32 %v848, %v850
      %v852 = vrot.slane %v844, %v851
      %v854 = vunpack.c.l.s4 1934713408
      %v855 = vunpack.c.0.s8 %v854
      %v856 = vlaneseq
      %v857 = vshrl.u32 %v856, 7
      %v858 = vsub.s32 %v855, %v857
      %v859 = vrot.slane %v845, %v858
      %v860 = vcombine.low %v804, %v820
      %v861 = vcombine.high %v804, %v820
      %v863 = vunpack.c.l.s4 1934713408
      %v864 = vunpack.c.0.s8 %v863
      %v865 = vlaneseq
      %v866 = vshrl.u32 %v865, 7
      %v867 = vsub.s32 %v864, %v866
      %v868 = vrot.slane %v860, %v867
      %v870 = vunpack.c.l.s4 1934713408
      %v871 = vunpack.c.0.s8 %v870
      %v872 = vlaneseq
      %v873 = vshrl.u32 %v872, 7
      %v874 = vsub.s32 %v871, %v873
      %v875 = vrot.slane %v861, %v874
      %v876 = vcombine.low %v811, %v827
      %v877 = vcombine.high %v811, %v827
      %v879 = vunpack.c.l.s4 1934713408
      %v880 = vunpack.c.0.s8 %v879
      %v881 = vlaneseq
      %v882 = vshrl.u32 %v881, 7
      %v883 = vsub.s32 %v880, %v882
      %v884 = vrot.slane %v876, %v883
      %v886 = vunpack.c.l.s4 1934713408
      %v887 = vunpack.c.0.s8 %v886
      %v888 = vlaneseq
      %v889 = vshrl.u32 %v888, 7
      %v890 = vsub.s32 %v887, %v889
      %v891 = vrot.slane %v877, %v890
      %v892 = vcombine.low %v836, %v868
      %v893 = vcombine.high %v836, %v868
      %v894 = vcombine.low %v843, %v875
      %v895 = vcombine.high %v843, %v875
      %v896 = vcombine.low %v852, %v884
      %v897 = vcombine.high %v852, %v884
      %v898 = vcombine.low %v859, %v891
      %v899 = vcombine.high %v859, %v891
      %vm932 = vcmask 1040384
      %v933 = vrot.slane %v484, 7
      %v934 = vrot.slane %v620, 7
      %v935 = vsel %vm932, %v933, %v934
      %v936 = vrot.slane %v485, 7
      %v937 = vrot.slane %v621, 7
      %v938 = vsel %vm932, %v936, %v937
      %v939 = vrot.slane %v486, 7
      %v940 = vrot.slane %v622, 7
      %v941 = vsel %vm932, %v939, %v940
      %v942 = vrot.slane %v487, 7
      %v943 = vrot.slane %v623, 7
      %v944 = vsel %vm932, %v942, %v943
      %v945 = vrot.slane %v488, 7
      %v946 = vrot.slane %v624, 7
      %v947 = vsel %vm932, %v945, %v946
      %v948 = vrot.slane %v489, 7
      %v949 = vrot.slane %v625, 7
      %v950 = vsel %vm932, %v948, %v949
      %v951 = vrot.slane %v490, 7
      %v952 = vrot.slane %v626, 7
      %v953 = vsel %vm932, %v951, %v952
      %v954 = vrot.slane %v491, 7
      %v955 = vrot.slane %v627, 7
      %v956 = vsel %vm932, %v954, %v955
      %v957 = vrot.slane %v756, 7
      %v958 = vrot.slane %v892, 7
      %v959 = vsel %vm932, %v957, %v958
      %v960 = vrot.slane %v757, 7
      %v961 = vrot.slane %v893, 7
      %v962 = vsel %vm932, %v960, %v961
      %v963 = vrot.slane %v758, 7
      %v964 = vrot.slane %v894, 7
      %v965 = vsel %vm932, %v963, %v964
      %v966 = vrot.slane %v759, 7
      %v967 = vrot.slane %v895, 7
      %v968 = vsel %vm932, %v966, %v967
      %v969 = vrot.slane %v760, 7
      %v970 = vrot.slane %v896, 7
      %v971 = vsel %vm932, %v969, %v970
      %v972 = vrot.slane %v761, 7
      %v973 = vrot.slane %v897, 7
      %v974 = vsel %vm932, %v972, %v973
      %v975 = vrot.slane %v762, 7
      %v976 = vrot.slane %v898, 7
      %v977 = vsel %vm932, %v975, %v976
      %v978 = vrot.slane %v763, 7
      %v979 = vrot.slane %v899, 7
      %v980 = vsel %vm932, %v978, %v979
      %v1013 = vsel %vm932, 0.0, %v933
      %v1014 = vsel %vm932, 0.0, %v936
      %v1015 = vsel %vm932, 0.0, %v939
      %v1016 = vsel %vm932, 0.0, %v942
      %v1017 = vsel %vm932, 0.0, %v945
      %v1018 = vsel %vm932, 0.0, %v948
      %v1019 = vsel %vm932, 0.0, %v951
      %v1020 = vsel %vm932, 0.0, %v954
      %v1021 = vsel %vm932, 0.0, %v957
      %v1022 = vsel %vm932, 0.0, %v960
      %v1023 = vsel %vm932, 0.0, %v963
      %v1024 = vsel %vm932, 0.0, %v966
      %v1025 = vsel %vm932, 0.0, %v969
      %v1026 = vsel %vm932, 0.0, %v972
      %v1027 = vsel %vm932, 0.0, %v975
      %v1028 = vsel %vm932, 0.0, %v978
      %v1029 = vsel %vm932, %v934, 0.0
      %v1030 = vsel %vm932, %v937, 0.0
      %v1031 = vsel %vm932, %v940, 0.0
      %v1032 = vsel %vm932, %v943, 0.0
      %v1033 = vsel %vm932, %v946, 0.0
      %v1034 = vsel %vm932, %v949, 0.0
      %v1035 = vsel %vm932, %v952, 0.0
      %v1036 = vsel %vm932, %v955, 0.0
      %v1037 = vsel %vm932, %v958, 0.0
      %v1038 = vsel %vm932, %v961, 0.0
      %v1039 = vsel %vm932, %v964, 0.0
      %v1040 = vsel %vm932, %v967, 0.0
      %v1041 = vsel %vm932, %v970, 0.0
      %v1042 = vsel %vm932, %v973, 0.0
      %v1043 = vsel %vm932, %v976, 0.0
      %v1044 = vsel %vm932, %v979, 0.0
      %1077 = vrot.lane.b32.xlu0 %v1013, 1
      %v1078 = vpop.permute.xlu0 %1077
      %1079 = vrot.lane.b32.xlu0 %v935, 1
      %v1080 = vpop.permute.xlu0 %1079
      %1081 = vrot.lane.b32.xlu0 %v1029, 1
      %v1082 = vpop.permute.xlu0 %1081
      %1083 = vrot.lane.b32.xlu0 %v1014, 1
      %v1084 = vpop.permute.xlu0 %1083
      %1085 = vrot.lane.b32.xlu0 %v938, 1
      %v1086 = vpop.permute.xlu0 %1085
      %1087 = vrot.lane.b32.xlu0 %v1030, 1
      %v1088 = vpop.permute.xlu0 %1087
      %1089 = vrot.lane.b32.xlu0 %v1015, 1
      %v1090 = vpop.permute.xlu0 %1089
      %1091 = vrot.lane.b32.xlu0 %v941, 1
      %v1092 = vpop.permute.xlu0 %1091
      %1093 = vrot.lane.b32.xlu0 %v1031, 1
      %v1094 = vpop.permute.xlu0 %1093
      %1095 = vrot.lane.b32.xlu0 %v1016, 1
      %v1096 = vpop.permute.xlu0 %1095
      %1097 = vrot.lane.b32.xlu0 %v944, 1
      %v1098 = vpop.permute.xlu0 %1097
      %1099 = vrot.lane.b32.xlu0 %v1032, 1
      %v1100 = vpop.permute.xlu0 %1099
      %1101 = vrot.lane.b32.xlu0 %v1017, 1
      %v1102 = vpop.permute.xlu0 %1101
      %1103 = vrot.lane.b32.xlu0 %v947, 1
      %v1104 = vpop.permute.xlu0 %1103
      %1105 = vrot.lane.b32.xlu0 %v1033, 1
      %v1106 = vpop.permute.xlu0 %1105
      %1107 = vrot.lane.b32.xlu0 %v1018, 1
      %v1108 = vpop.permute.xlu0 %1107
      %1109 = vrot.lane.b32.xlu0 %v950, 1
      %v1110 = vpop.permute.xlu0 %1109
      %1111 = vrot.lane.b32.xlu0 %v1034, 1
      %v1112 = vpop.permute.xlu0 %1111
      %1113 = vrot.lane.b32.xlu0 %v1019, 1
      %v1114 = vpop.permute.xlu0 %1113
      %1115 = vrot.lane.b32.xlu0 %v953, 1
      %v1116 = vpop.permute.xlu0 %1115
      %1117 = vrot.lane.b32.xlu0 %v1035, 1
      %v1118 = vpop.permute.xlu0 %1117
      %1119 = vrot.lane.b32.xlu0 %v1020, 1
      %v1120 = vpop.permute.xlu0 %1119
      %1121 = vrot.lane.b32.xlu0 %v956, 1
      %v1122 = vpop.permute.xlu0 %1121
      %1123 = vrot.lane.b32.xlu0 %v1036, 1
      %v1124 = vpop.permute.xlu0 %1123
      %1125 = vrot.lane.b32.xlu0 %v1021, 1
      %v1126 = vpop.permute.xlu0 %1125
      %1127 = vrot.lane.b32.xlu0 %v959, 1
      %v1128 = vpop.permute.xlu0 %1127
      %1129 = vrot.lane.b32.xlu0 %v1037, 1
      %v1130 = vpop.permute.xlu0 %1129
      %1131 = vrot.lane.b32.xlu0 %v1022, 1
      %v1132 = vpop.permute.xlu0 %1131
      %1133 = vrot.lane.b32.xlu0 %v962, 1
      %v1134 = vpop.permute.xlu0 %1133
      %1135 = vrot.lane.b32.xlu0 %v1038, 1
      %v1136 = vpop.permute.xlu0 %1135
      %1137 = vrot.lane.b32.xlu0 %v1023, 1
      %v1138 = vpop.permute.xlu0 %1137
      %1139 = vrot.lane.b32.xlu0 %v965, 1
      %v1140 = vpop.permute.xlu0 %1139
      %1141 = vrot.lane.b32.xlu0 %v1039, 1
      %v1142 = vpop.permute.xlu0 %1141
      %1143 = vrot.lane.b32.xlu0 %v1024, 1
      %v1144 = vpop.permute.xlu0 %1143
      %1145 = vrot.lane.b32.xlu0 %v968, 1
      %v1146 = vpop.permute.xlu0 %1145
      %1147 = vrot.lane.b32.xlu0 %v1040, 1
      %v1148 = vpop.permute.xlu0 %1147
      %1149 = vrot.lane.b32.xlu0 %v1025, 1
      %v1150 = vpop.permute.xlu0 %1149
      %1151 = vrot.lane.b32.xlu0 %v971, 1
      %v1152 = vpop.permute.xlu0 %1151
      %1153 = vrot.lane.b32.xlu0 %v1041, 1
      %v1154 = vpop.permute.xlu0 %1153
      %1155 = vrot.lane.b32.xlu0 %v1026, 1
      %v1156 = vpop.permute.xlu0 %1155
      %1157 = vrot.lane.b32.xlu0 %v974, 1
      %v1158 = vpop.permute.xlu0 %1157
      %1159 = vrot.lane.b32.xlu0 %v1042, 1
      %v1160 = vpop.permute.xlu0 %1159
      %1161 = vrot.lane.b32.xlu0 %v1027, 1
      %v1162 = vpop.permute.xlu0 %1161
      %1163 = vrot.lane.b32.xlu0 %v977, 1
      %v1164 = vpop.permute.xlu0 %1163
      %1165 = vrot.lane.b32.xlu0 %v1043, 1
      %v1166 = vpop.permute.xlu0 %1165
      %1167 = vrot.lane.b32.xlu0 %v1028, 1
      %v1168 = vpop.permute.xlu0 %1167
      %1169 = vrot.lane.b32.xlu0 %v980, 1
      %v1170 = vpop.permute.xlu0 %1169
      %1171 = vrot.lane.b32.xlu0 %v1044, 1
      %v1172 = vpop.permute.xlu0 %1171
      %vm1221 = vcmask 7168
      %v1222 = vsel %vm1221, 0.0, %v1078
      %v1223 = vsel %vm1221, 0.0, %v1080
      %v1224 = vsel %vm1221, 0.0, %v1082
      %v1225 = vsel %vm1221, 0.0, %v1084
      %v1226 = vsel %vm1221, 0.0, %v1086
      %v1227 = vsel %vm1221, 0.0, %v1088
      %v1228 = vsel %vm1221, 0.0, %v1090
      %v1229 = vsel %vm1221, 0.0, %v1092
      %v1230 = vsel %vm1221, 0.0, %v1094
      %v1231 = vsel %vm1221, 0.0, %v1096
      %v1232 = vsel %vm1221, 0.0, %v1098
      %v1233 = vsel %vm1221, 0.0, %v1100
      %v1234 = vsel %vm1221, 0.0, %v1102
      %v1235 = vsel %vm1221, 0.0, %v1104
      %v1236 = vsel %vm1221, 0.0, %v1106
      %v1237 = vsel %vm1221, 0.0, %v1108
      %v1238 = vsel %vm1221, 0.0, %v1110
      %v1239 = vsel %vm1221, 0.0, %v1112
      %v1240 = vsel %vm1221, 0.0, %v1114
      %v1241 = vsel %vm1221, 0.0, %v1116
      %v1242 = vsel %vm1221, 0.0, %v1118
      %v1243 = vsel %vm1221, 0.0, %v1120
      %v1244 = vsel %vm1221, 0.0, %v1122
      %v1245 = vsel %vm1221, 0.0, %v1124
      %v1246 = vsel %vm1221, 0.0, %v1126
      %v1247 = vsel %vm1221, 0.0, %v1128
      %v1248 = vsel %vm1221, 0.0, %v1130
      %v1249 = vsel %vm1221, 0.0, %v1132
      %v1250 = vsel %vm1221, 0.0, %v1134
      %v1251 = vsel %vm1221, 0.0, %v1136
      %v1252 = vsel %vm1221, 0.0, %v1138
      %v1253 = vsel %vm1221, 0.0, %v1140
      %v1254 = vsel %vm1221, 0.0, %v1142
      %v1255 = vsel %vm1221, 0.0, %v1144
      %v1256 = vsel %vm1221, 0.0, %v1146
      %v1257 = vsel %vm1221, 0.0, %v1148
      %v1258 = vsel %vm1221, 0.0, %v1150
      %v1259 = vsel %vm1221, 0.0, %v1152
      %v1260 = vsel %vm1221, 0.0, %v1154
      %v1261 = vsel %vm1221, 0.0, %v1156
      %v1262 = vsel %vm1221, 0.0, %v1158
      %v1263 = vsel %vm1221, 0.0, %v1160
      %v1264 = vsel %vm1221, 0.0, %v1162
      %v1265 = vsel %vm1221, 0.0, %v1164
      %v1266 = vsel %vm1221, 0.0, %v1166
      %v1267 = vsel %vm1221, 0.0, %v1168
      %v1268 = vsel %vm1221, 0.0, %v1170
      %v1269 = vsel %vm1221, 0.0, %v1172
      %vm1270 = vcmask 138240
      %v1271 = vsel %vm1270, %v1222, 0.0
      %v1272 = vsel %vm1270, %v1223, 0.0
      %v1273 = vsel %vm1270, %v1224, 0.0
      %v1274 = vsel %vm1270, %v1225, 0.0
      %v1275 = vsel %vm1270, %v1226, 0.0
      %v1276 = vsel %vm1270, %v1227, 0.0
      %v1277 = vsel %vm1270, %v1228, 0.0
      %v1278 = vsel %vm1270, %v1229, 0.0
      %v1279 = vsel %vm1270, %v1230, 0.0
      %v1280 = vsel %vm1270, %v1231, 0.0
      %v1281 = vsel %vm1270, %v1232, 0.0
      %v1282 = vsel %vm1270, %v1233, 0.0
      %v1283 = vsel %vm1270, %v1234, 0.0
      %v1284 = vsel %vm1270, %v1235, 0.0
      %v1285 = vsel %vm1270, %v1236, 0.0
      %v1286 = vsel %vm1270, %v1237, 0.0
      %v1287 = vsel %vm1270, %v1238, 0.0
      %v1288 = vsel %vm1270, %v1239, 0.0
      %v1289 = vsel %vm1270, %v1240, 0.0
      %v1290 = vsel %vm1270, %v1241, 0.0
      %v1291 = vsel %vm1270, %v1242, 0.0
      %v1292 = vsel %vm1270, %v1243, 0.0
      %v1293 = vsel %vm1270, %v1244, 0.0
      %v1294 = vsel %vm1270, %v1245, 0.0
      %v1295 = vsel %vm1270, %v1246, 0.0
      %v1296 = vsel %vm1270, %v1247, 0.0
      %v1297 = vsel %vm1270, %v1248, 0.0
      %v1298 = vsel %vm1270, %v1249, 0.0
      %v1299 = vsel %vm1270, %v1250, 0.0
      %v1300 = vsel %vm1270, %v1251, 0.0
      %v1301 = vsel %vm1270, %v1252, 0.0
      %v1302 = vsel %vm1270, %v1253, 0.0
      %v1303 = vsel %vm1270, %v1254, 0.0
      %v1304 = vsel %vm1270, %v1255, 0.0
      %v1305 = vsel %vm1270, %v1256, 0.0
      %v1306 = vsel %vm1270, %v1257, 0.0
      %v1307 = vsel %vm1270, %v1258, 0.0
      %v1308 = vsel %vm1270, %v1259, 0.0
      %v1309 = vsel %vm1270, %v1260, 0.0
      %v1310 = vsel %vm1270, %v1261, 0.0
      %v1311 = vsel %vm1270, %v1262, 0.0
      %v1312 = vsel %vm1270, %v1263, 0.0
      %v1313 = vsel %vm1270, %v1264, 0.0
      %v1314 = vsel %vm1270, %v1265, 0.0
      %v1315 = vsel %vm1270, %v1266, 0.0
      %v1316 = vsel %vm1270, %v1267, 0.0
      %v1317 = vsel %vm1270, %v1268, 0.0
      %v1318 = vsel %vm1270, %v1269, 0.0
      %v1319 = vcombine.low %v1271, %v1277
      %v1320 = vcombine.high %v1271, %v1277
      %v1322 = vunpack.c.l.s4 1983009808
      %v1323 = vunpack.c.0.s8 %v1322
      %v1324 = vlaneseq
      %v1325 = vshrl.u32 %v1324, 7
      %v1326 = vsub.s32 %v1323, %v1325
      %v1327 = vrot.slane %v1319, %v1326
      %v1329 = vunpack.c.l.s4 1983009808
      %v1330 = vunpack.c.0.s8 %v1329
      %v1331 = vlaneseq
      %v1332 = vshrl.u32 %v1331, 7
      %v1333 = vsub.s32 %v1330, %v1332
      %v1334 = vrot.slane %v1320, %v1333
      %v1335 = vcombine.low %v1274, %v1280
      %v1336 = vcombine.high %v1274, %v1280
      %v1338 = vunpack.c.l.s4 1983009808
      %v1339 = vunpack.c.0.s8 %v1338
      %v1340 = vlaneseq
      %v1341 = vshrl.u32 %v1340, 7
      %v1342 = vsub.s32 %v1339, %v1341
      %v1343 = vrot.slane %v1335, %v1342
      %v1345 = vunpack.c.l.s4 1983009808
      %v1346 = vunpack.c.0.s8 %v1345
      %v1347 = vlaneseq
      %v1348 = vshrl.u32 %v1347, 7
      %v1349 = vsub.s32 %v1346, %v1348
      %v1350 = vrot.slane %v1336, %v1349
      %v1351 = vcombine.low %v1283, %v1289
      %v1352 = vcombine.high %v1283, %v1289
      %v1354 = vunpack.c.l.s4 1983009808
      %v1355 = vunpack.c.0.s8 %v1354
      %v1356 = vlaneseq
      %v1357 = vshrl.u32 %v1356, 7
      %v1358 = vsub.s32 %v1355, %v1357
      %v1359 = vrot.slane %v1351, %v1358
      %v1361 = vunpack.c.l.s4 1983009808
      %v1362 = vunpack.c.0.s8 %v1361
      %v1363 = vlaneseq
      %v1364 = vshrl.u32 %v1363, 7
      %v1365 = vsub.s32 %v1362, %v1364
      %v1366 = vrot.slane %v1352, %v1365
      %v1367 = vcombine.low %v1286, %v1292
      %v1368 = vcombine.high %v1286, %v1292
      %v1370 = vunpack.c.l.s4 1983009808
      %v1371 = vunpack.c.0.s8 %v1370
      %v1372 = vlaneseq
      %v1373 = vshrl.u32 %v1372, 7
      %v1374 = vsub.s32 %v1371, %v1373
      %v1375 = vrot.slane %v1367, %v1374
      %v1377 = vunpack.c.l.s4 1983009808
      %v1378 = vunpack.c.0.s8 %v1377
      %v1379 = vlaneseq
      %v1380 = vshrl.u32 %v1379, 7
      %v1381 = vsub.s32 %v1378, %v1380
      %v1382 = vrot.slane %v1368, %v1381
      %v1383 = vcombine.low %v1327, %v1343
      %v1384 = vcombine.high %v1327, %v1343
      %v1386 = vunpack.c.l.s4 1934713408
      %v1387 = vunpack.c.0.s8 %v1386
      %v1388 = vlaneseq
      %v1389 = vshrl.u32 %v1388, 7
      %v1390 = vsub.s32 %v1387, %v1389
      %v1391 = vrot.slane %v1383, %v1390
      %v1393 = vunpack.c.l.s4 1934713408
      %v1394 = vunpack.c.0.s8 %v1393
      %v1395 = vlaneseq
      %v1396 = vshrl.u32 %v1395, 7
      %v1397 = vsub.s32 %v1394, %v1396
      %v1398 = vrot.slane %v1384, %v1397
      %v1399 = vcombine.low %v1334, %v1350
      %v1400 = vcombine.high %v1334, %v1350
      %v1402 = vunpack.c.l.s4 1934713408
      %v1403 = vunpack.c.0.s8 %v1402
      %v1404 = vlaneseq
      %v1405 = vshrl.u32 %v1404, 7
      %v1406 = vsub.s32 %v1403, %v1405
      %v1407 = vrot.slane %v1399, %v1406
      %v1409 = vunpack.c.l.s4 1934713408
      %v1410 = vunpack.c.0.s8 %v1409
      %v1411 = vlaneseq
      %v1412 = vshrl.u32 %v1411, 7
      %v1413 = vsub.s32 %v1410, %v1412
      %v1414 = vrot.slane %v1400, %v1413
      %v1415 = vcombine.low %v1359, %v1375
      %v1416 = vcombine.high %v1359, %v1375
      %v1418 = vunpack.c.l.s4 1934713408
      %v1419 = vunpack.c.0.s8 %v1418
      %v1420 = vlaneseq
      %v1421 = vshrl.u32 %v1420, 7
      %v1422 = vsub.s32 %v1419, %v1421
      %v1423 = vrot.slane %v1415, %v1422
      %v1425 = vunpack.c.l.s4 1934713408
      %v1426 = vunpack.c.0.s8 %v1425
      %v1427 = vlaneseq
      %v1428 = vshrl.u32 %v1427, 7
      %v1429 = vsub.s32 %v1426, %v1428
      %v1430 = vrot.slane %v1416, %v1429
      %v1431 = vcombine.low %v1366, %v1382
      %v1432 = vcombine.high %v1366, %v1382
      %v1434 = vunpack.c.l.s4 1934713408
      %v1435 = vunpack.c.0.s8 %v1434
      %v1436 = vlaneseq
      %v1437 = vshrl.u32 %v1436, 7
      %v1438 = vsub.s32 %v1435, %v1437
      %v1439 = vrot.slane %v1431, %v1438
      %v1441 = vunpack.c.l.s4 1934713408
      %v1442 = vunpack.c.0.s8 %v1441
      %v1443 = vlaneseq
      %v1444 = vshrl.u32 %v1443, 7
      %v1445 = vsub.s32 %v1442, %v1444
      %v1446 = vrot.slane %v1432, %v1445
      %v1447 = vcombine.low %v1391, %v1423
      %v1448 = vcombine.high %v1391, %v1423
      %v1449 = vcombine.low %v1398, %v1430
      %v1450 = vcombine.high %v1398, %v1430
      %v1451 = vcombine.low %v1407, %v1439
      %v1452 = vcombine.high %v1407, %v1439
      %v1453 = vcombine.low %v1414, %v1446
      %v1454 = vcombine.high %v1414, %v1446
      %v1455 = vcombine.low %v1295, %v1301
      %v1456 = vcombine.high %v1295, %v1301
      %v1458 = vunpack.c.l.s4 1983009808
      %v1459 = vunpack.c.0.s8 %v1458
      %v1460 = vlaneseq
      %v1461 = vshrl.u32 %v1460, 7
      %v1462 = vsub.s32 %v1459, %v1461
      %v1463 = vrot.slane %v1455, %v1462
      %v1465 = vunpack.c.l.s4 1983009808
      %v1466 = vunpack.c.0.s8 %v1465
      %v1467 = vlaneseq
      %v1468 = vshrl.u32 %v1467, 7
      %v1469 = vsub.s32 %v1466, %v1468
      %v1470 = vrot.slane %v1456, %v1469
      %v1471 = vcombine.low %v1298, %v1304
      %v1472 = vcombine.high %v1298, %v1304
      %v1474 = vunpack.c.l.s4 1983009808
      %v1475 = vunpack.c.0.s8 %v1474
      %v1476 = vlaneseq
      %v1477 = vshrl.u32 %v1476, 7
      %v1478 = vsub.s32 %v1475, %v1477
      %v1479 = vrot.slane %v1471, %v1478
      %v1481 = vunpack.c.l.s4 1983009808
      %v1482 = vunpack.c.0.s8 %v1481
      %v1483 = vlaneseq
      %v1484 = vshrl.u32 %v1483, 7
      %v1485 = vsub.s32 %v1482, %v1484
      %v1486 = vrot.slane %v1472, %v1485
      %v1487 = vcombine.low %v1307, %v1313
      %v1488 = vcombine.high %v1307, %v1313
      %v1490 = vunpack.c.l.s4 1983009808
      %v1491 = vunpack.c.0.s8 %v1490
      %v1492 = vlaneseq
      %v1493 = vshrl.u32 %v1492, 7
      %v1494 = vsub.s32 %v1491, %v1493
      %v1495 = vrot.slane %v1487, %v1494
      %v1497 = vunpack.c.l.s4 1983009808
      %v1498 = vunpack.c.0.s8 %v1497
      %v1499 = vlaneseq
      %v1500 = vshrl.u32 %v1499, 7
      %v1501 = vsub.s32 %v1498, %v1500
      %v1502 = vrot.slane %v1488, %v1501
      %v1503 = vcombine.low %v1310, %v1316
      %v1504 = vcombine.high %v1310, %v1316
      %v1506 = vunpack.c.l.s4 1983009808
      %v1507 = vunpack.c.0.s8 %v1506
      %v1508 = vlaneseq
      %v1509 = vshrl.u32 %v1508, 7
      %v1510 = vsub.s32 %v1507, %v1509
      %v1511 = vrot.slane %v1503, %v1510
      %v1513 = vunpack.c.l.s4 1983009808
      %v1514 = vunpack.c.0.s8 %v1513
      %v1515 = vlaneseq
      %v1516 = vshrl.u32 %v1515, 7
      %v1517 = vsub.s32 %v1514, %v1516
      %v1518 = vrot.slane %v1504, %v1517
      %v1519 = vcombine.low %v1463, %v1479
      %v1520 = vcombine.high %v1463, %v1479
      %v1522 = vunpack.c.l.s4 1934713408
      %v1523 = vunpack.c.0.s8 %v1522
      %v1524 = vlaneseq
      %v1525 = vshrl.u32 %v1524, 7
      %v1526 = vsub.s32 %v1523, %v1525
      %v1527 = vrot.slane %v1519, %v1526
      %v1529 = vunpack.c.l.s4 1934713408
      %v1530 = vunpack.c.0.s8 %v1529
      %v1531 = vlaneseq
      %v1532 = vshrl.u32 %v1531, 7
      %v1533 = vsub.s32 %v1530, %v1532
      %v1534 = vrot.slane %v1520, %v1533
      %v1535 = vcombine.low %v1470, %v1486
      %v1536 = vcombine.high %v1470, %v1486
      %v1538 = vunpack.c.l.s4 1934713408
      %v1539 = vunpack.c.0.s8 %v1538
      %v1540 = vlaneseq
      %v1541 = vshrl.u32 %v1540, 7
      %v1542 = vsub.s32 %v1539, %v1541
      %v1543 = vrot.slane %v1535, %v1542
      %v1545 = vunpack.c.l.s4 1934713408
      %v1546 = vunpack.c.0.s8 %v1545
      %v1547 = vlaneseq
      %v1548 = vshrl.u32 %v1547, 7
      %v1549 = vsub.s32 %v1546, %v1548
      %v1550 = vrot.slane %v1536, %v1549
      %v1551 = vcombine.low %v1495, %v1511
      %v1552 = vcombine.high %v1495, %v1511
      %v1554 = vunpack.c.l.s4 1934713408
      %v1555 = vunpack.c.0.s8 %v1554
      %v1556 = vlaneseq
      %v1557 = vshrl.u32 %v1556, 7
      %v1558 = vsub.s32 %v1555, %v1557
      %v1559 = vrot.slane %v1551, %v1558
      %v1561 = vunpack.c.l.s4 1934713408
      %v1562 = vunpack.c.0.s8 %v1561
      %v1563 = vlaneseq
      %v1564 = vshrl.u32 %v1563, 7
      %v1565 = vsub.s32 %v1562, %v1564
      %v1566 = vrot.slane %v1552, %v1565
      %v1567 = vcombine.low %v1502, %v1518
      %v1568 = vcombine.high %v1502, %v1518
      %v1570 = vunpack.c.l.s4 1934713408
      %v1571 = vunpack.c.0.s8 %v1570
      %v1572 = vlaneseq
      %v1573 = vshrl.u32 %v1572, 7
      %v1574 = vsub.s32 %v1571, %v1573
      %v1575 = vrot.slane %v1567, %v1574
      %v1577 = vunpack.c.l.s4 1934713408
      %v1578 = vunpack.c.0.s8 %v1577
      %v1579 = vlaneseq
      %v1580 = vshrl.u32 %v1579, 7
      %v1581 = vsub.s32 %v1578, %v1580
      %v1582 = vrot.slane %v1568, %v1581
      %v1583 = vcombine.low %v1527, %v1559
      %v1584 = vcombine.high %v1527, %v1559
      %v1585 = vcombine.low %v1534, %v1566
      %v1586 = vcombine.high %v1534, %v1566
      %v1587 = vcombine.low %v1543, %v1575
      %v1588 = vcombine.high %v1543, %v1575
      %v1589 = vcombine.low %v1550, %v1582
      %v1590 = vcombine.high %v1550, %v1582
      %v1591 = vcombine.low %v1272, %v1278
      %v1592 = vcombine.high %v1272, %v1278
      %v1594 = vunpack.c.l.s4 1983009808
      %v1595 = vunpack.c.0.s8 %v1594
      %v1596 = vlaneseq
      %v1597 = vshrl.u32 %v1596, 7
      %v1598 = vsub.s32 %v1595, %v1597
      %v1599 = vrot.slane %v1591, %v1598
      %v1601 = vunpack.c.l.s4 1983009808
      %v1602 = vunpack.c.0.s8 %v1601
      %v1603 = vlaneseq
      %v1604 = vshrl.u32 %v1603, 7
      %v1605 = vsub.s32 %v1602, %v1604
      %v1606 = vrot.slane %v1592, %v1605
      %v1607 = vcombine.low %v1275, %v1281
      %v1608 = vcombine.high %v1275, %v1281
      %v1610 = vunpack.c.l.s4 1983009808
      %v1611 = vunpack.c.0.s8 %v1610
      %v1612 = vlaneseq
      %v1613 = vshrl.u32 %v1612, 7
      %v1614 = vsub.s32 %v1611, %v1613
      %v1615 = vrot.slane %v1607, %v1614
      %v1617 = vunpack.c.l.s4 1983009808
      %v1618 = vunpack.c.0.s8 %v1617
      %v1619 = vlaneseq
      %v1620 = vshrl.u32 %v1619, 7
      %v1621 = vsub.s32 %v1618, %v1620
      %v1622 = vrot.slane %v1608, %v1621
      %v1623 = vcombine.low %v1284, %v1290
      %v1624 = vcombine.high %v1284, %v1290
      %v1626 = vunpack.c.l.s4 1983009808
      %v1627 = vunpack.c.0.s8 %v1626
      %v1628 = vlaneseq
      %v1629 = vshrl.u32 %v1628, 7
      %v1630 = vsub.s32 %v1627, %v1629
      %v1631 = vrot.slane %v1623, %v1630
      %v1633 = vunpack.c.l.s4 1983009808
      %v1634 = vunpack.c.0.s8 %v1633
      %v1635 = vlaneseq
      %v1636 = vshrl.u32 %v1635, 7
      %v1637 = vsub.s32 %v1634, %v1636
      %v1638 = vrot.slane %v1624, %v1637
      %v1639 = vcombine.low %v1287, %v1293
      %v1640 = vcombine.high %v1287, %v1293
      %v1642 = vunpack.c.l.s4 1983009808
      %v1643 = vunpack.c.0.s8 %v1642
      %v1644 = vlaneseq
      %v1645 = vshrl.u32 %v1644, 7
      %v1646 = vsub.s32 %v1643, %v1645
      %v1647 = vrot.slane %v1639, %v1646
      %v1649 = vunpack.c.l.s4 1983009808
      %v1650 = vunpack.c.0.s8 %v1649
      %v1651 = vlaneseq
      %v1652 = vshrl.u32 %v1651, 7
      %v1653 = vsub.s32 %v1650, %v1652
      %v1654 = vrot.slane %v1640, %v1653
      %v1655 = vcombine.low %v1599, %v1615
      %v1656 = vcombine.high %v1599, %v1615
      %v1658 = vunpack.c.l.s4 1934713408
      %v1659 = vunpack.c.0.s8 %v1658
      %v1660 = vlaneseq
      %v1661 = vshrl.u32 %v1660, 7
      %v1662 = vsub.s32 %v1659, %v1661
      %v1663 = vrot.slane %v1655, %v1662
      %v1665 = vunpack.c.l.s4 1934713408
      %v1666 = vunpack.c.0.s8 %v1665
      %v1667 = vlaneseq
      %v1668 = vshrl.u32 %v1667, 7
      %v1669 = vsub.s32 %v1666, %v1668
      %v1670 = vrot.slane %v1656, %v1669
      %v1671 = vcombine.low %v1606, %v1622
      %v1672 = vcombine.high %v1606, %v1622
      %v1674 = vunpack.c.l.s4 1934713408
      %v1675 = vunpack.c.0.s8 %v1674
      %v1676 = vlaneseq
      %v1677 = vshrl.u32 %v1676, 7
      %v1678 = vsub.s32 %v1675, %v1677
      %v1679 = vrot.slane %v1671, %v1678
      %v1681 = vunpack.c.l.s4 1934713408
      %v1682 = vunpack.c.0.s8 %v1681
      %v1683 = vlaneseq
      %v1684 = vshrl.u32 %v1683, 7
      %v1685 = vsub.s32 %v1682, %v1684
      %v1686 = vrot.slane %v1672, %v1685
      %v1687 = vcombine.low %v1631, %v1647
      %v1688 = vcombine.high %v1631, %v1647
      %v1690 = vunpack.c.l.s4 1934713408
      %v1691 = vunpack.c.0.s8 %v1690
      %v1692 = vlaneseq
      %v1693 = vshrl.u32 %v1692, 7
      %v1694 = vsub.s32 %v1691, %v1693
      %v1695 = vrot.slane %v1687, %v1694
      %v1697 = vunpack.c.l.s4 1934713408
      %v1698 = vunpack.c.0.s8 %v1697
      %v1699 = vlaneseq
      %v1700 = vshrl.u32 %v1699, 7
      %v1701 = vsub.s32 %v1698, %v1700
      %v1702 = vrot.slane %v1688, %v1701
      %v1703 = vcombine.low %v1638, %v1654
      %v1704 = vcombine.high %v1638, %v1654
      %v1706 = vunpack.c.l.s4 1934713408
      %v1707 = vunpack.c.0.s8 %v1706
      %v1708 = vlaneseq
      %v1709 = vshrl.u32 %v1708, 7
      %v1710 = vsub.s32 %v1707, %v1709
      %v1711 = vrot.slane %v1703, %v1710
      %v1713 = vunpack.c.l.s4 1934713408
      %v1714 = vunpack.c.0.s8 %v1713
      %v1715 = vlaneseq
      %v1716 = vshrl.u32 %v1715, 7
      %v1717 = vsub.s32 %v1714, %v1716
      %v1718 = vrot.slane %v1704, %v1717
      %v1719 = vcombine.low %v1663, %v1695
      %v1720 = vcombine.high %v1663, %v1695
      %v1721 = vcombine.low %v1670, %v1702
      %v1722 = vcombine.high %v1670, %v1702
      %v1723 = vcombine.low %v1679, %v1711
      %v1724 = vcombine.high %v1679, %v1711
      %v1725 = vcombine.low %v1686, %v1718
      %v1726 = vcombine.high %v1686, %v1718
      %v1727 = vcombine.low %v1296, %v1302
      %v1728 = vcombine.high %v1296, %v1302
      %v1730 = vunpack.c.l.s4 1983009808
      %v1731 = vunpack.c.0.s8 %v1730
      %v1732 = vlaneseq
      %v1733 = vshrl.u32 %v1732, 7
      %v1734 = vsub.s32 %v1731, %v1733
      %v1735 = vrot.slane %v1727, %v1734
      %v1737 = vunpack.c.l.s4 1983009808
      %v1738 = vunpack.c.0.s8 %v1737
      %v1739 = vlaneseq
      %v1740 = vshrl.u32 %v1739, 7
      %v1741 = vsub.s32 %v1738, %v1740
      %v1742 = vrot.slane %v1728, %v1741
      %v1743 = vcombine.low %v1299, %v1305
      %v1744 = vcombine.high %v1299, %v1305
      %v1746 = vunpack.c.l.s4 1983009808
      %v1747 = vunpack.c.0.s8 %v1746
      %v1748 = vlaneseq
      %v1749 = vshrl.u32 %v1748, 7
      %v1750 = vsub.s32 %v1747, %v1749
      %v1751 = vrot.slane %v1743, %v1750
      %v1753 = vunpack.c.l.s4 1983009808
      %v1754 = vunpack.c.0.s8 %v1753
      %v1755 = vlaneseq
      %v1756 = vshrl.u32 %v1755, 7
      %v1757 = vsub.s32 %v1754, %v1756
      %v1758 = vrot.slane %v1744, %v1757
      %v1759 = vcombine.low %v1308, %v1314
      %v1760 = vcombine.high %v1308, %v1314
      %v1762 = vunpack.c.l.s4 1983009808
      %v1763 = vunpack.c.0.s8 %v1762
      %v1764 = vlaneseq
      %v1765 = vshrl.u32 %v1764, 7
      %v1766 = vsub.s32 %v1763, %v1765
      %v1767 = vrot.slane %v1759, %v1766
      %v1769 = vunpack.c.l.s4 1983009808
      %v1770 = vunpack.c.0.s8 %v1769
      %v1771 = vlaneseq
      %v1772 = vshrl.u32 %v1771, 7
      %v1773 = vsub.s32 %v1770, %v1772
      %v1774 = vrot.slane %v1760, %v1773
      %v1775 = vcombine.low %v1311, %v1317
      %v1776 = vcombine.high %v1311, %v1317
      %v1778 = vunpack.c.l.s4 1983009808
      %v1779 = vunpack.c.0.s8 %v1778
      %v1780 = vlaneseq
      %v1781 = vshrl.u32 %v1780, 7
      %v1782 = vsub.s32 %v1779, %v1781
      %v1783 = vrot.slane %v1775, %v1782
      %v1785 = vunpack.c.l.s4 1983009808
      %v1786 = vunpack.c.0.s8 %v1785
      %v1787 = vlaneseq
      %v1788 = vshrl.u32 %v1787, 7
      %v1789 = vsub.s32 %v1786, %v1788
      %v1790 = vrot.slane %v1776, %v1789
      %v1791 = vcombine.low %v1735, %v1751
      %v1792 = vcombine.high %v1735, %v1751
      %v1794 = vunpack.c.l.s4 1934713408
      %v1795 = vunpack.c.0.s8 %v1794
      %v1796 = vlaneseq
      %v1797 = vshrl.u32 %v1796, 7
      %v1798 = vsub.s32 %v1795, %v1797
      %v1799 = vrot.slane %v1791, %v1798
      %v1801 = vunpack.c.l.s4 1934713408
      %v1802 = vunpack.c.0.s8 %v1801
      %v1803 = vlaneseq
      %v1804 = vshrl.u32 %v1803, 7
      %v1805 = vsub.s32 %v1802, %v1804
      %v1806 = vrot.slane %v1792, %v1805
      %v1807 = vcombine.low %v1742, %v1758
      %v1808 = vcombine.high %v1742, %v1758
      %v1810 = vunpack.c.l.s4 1934713408
      %v1811 = vunpack.c.0.s8 %v1810
      %v1812 = vlaneseq
      %v1813 = vshrl.u32 %v1812, 7
      %v1814 = vsub.s32 %v1811, %v1813
      %v1815 = vrot.slane %v1807, %v1814
      %v1817 = vunpack.c.l.s4 1934713408
      %v1818 = vunpack.c.0.s8 %v1817
      %v1819 = vlaneseq
      %v1820 = vshrl.u32 %v1819, 7
      %v1821 = vsub.s32 %v1818, %v1820
      %v1822 = vrot.slane %v1808, %v1821
      %v1823 = vcombine.low %v1767, %v1783
      %v1824 = vcombine.high %v1767, %v1783
      %v1826 = vunpack.c.l.s4 1934713408
      %v1827 = vunpack.c.0.s8 %v1826
      %v1828 = vlaneseq
      %v1829 = vshrl.u32 %v1828, 7
      %v1830 = vsub.s32 %v1827, %v1829
      %v1831 = vrot.slane %v1823, %v1830
      %v1833 = vunpack.c.l.s4 1934713408
      %v1834 = vunpack.c.0.s8 %v1833
      %v1835 = vlaneseq
      %v1836 = vshrl.u32 %v1835, 7
      %v1837 = vsub.s32 %v1834, %v1836
      %v1838 = vrot.slane %v1824, %v1837
      %v1839 = vcombine.low %v1774, %v1790
      %v1840 = vcombine.high %v1774, %v1790
      %v1842 = vunpack.c.l.s4 1934713408
      %v1843 = vunpack.c.0.s8 %v1842
      %v1844 = vlaneseq
      %v1845 = vshrl.u32 %v1844, 7
      %v1846 = vsub.s32 %v1843, %v1845
      %v1847 = vrot.slane %v1839, %v1846
      %v1849 = vunpack.c.l.s4 1934713408
      %v1850 = vunpack.c.0.s8 %v1849
      %v1851 = vlaneseq
      %v1852 = vshrl.u32 %v1851, 7
      %v1853 = vsub.s32 %v1850, %v1852
      %v1854 = vrot.slane %v1840, %v1853
      %v1855 = vcombine.low %v1799, %v1831
      %v1856 = vcombine.high %v1799, %v1831
      %v1857 = vcombine.low %v1806, %v1838
      %v1858 = vcombine.high %v1806, %v1838
      %v1859 = vcombine.low %v1815, %v1847
      %v1860 = vcombine.high %v1815, %v1847
      %v1861 = vcombine.low %v1822, %v1854
      %v1862 = vcombine.high %v1822, %v1854
      %1865 = vrot.lane.b32.xlu0 %v1448, 16
      %v1866 = vpop.permute.xlu0 %1865
      %1867 = vrot.lane.b32.xlu0 %v1584, 16
      %v1868 = vpop.permute.xlu0 %1867
      %1873 = vrot.lane.b32.xlu0 %v1449, 32
      %v1874 = vpop.permute.xlu0 %1873
      %1875 = vrot.lane.b32.xlu0 %v1585, 32
      %v1876 = vpop.permute.xlu0 %1875
      %1881 = vrot.lane.b32.xlu0 %v1450, 48
      %v1882 = vpop.permute.xlu0 %1881
      %1883 = vrot.lane.b32.xlu0 %v1586, 48
      %v1884 = vpop.permute.xlu0 %1883
      %1889 = vrot.lane.b32.xlu0 %v1451, 64
      %v1890 = vpop.permute.xlu0 %1889
      %1891 = vrot.lane.b32.xlu0 %v1587, 64
      %v1892 = vpop.permute.xlu0 %1891
      %1897 = vrot.lane.b32.xlu0 %v1452, 80
      %v1898 = vpop.permute.xlu0 %1897
      %1899 = vrot.lane.b32.xlu0 %v1588, 80
      %v1900 = vpop.permute.xlu0 %1899
      %1905 = vrot.lane.b32.xlu0 %v1453, 96
      %v1906 = vpop.permute.xlu0 %1905
      %1907 = vrot.lane.b32.xlu0 %v1589, 96
      %v1908 = vpop.permute.xlu0 %1907
      %1913 = vrot.lane.b32.xlu0 %v1454, 112
      %v1914 = vpop.permute.xlu0 %1913
      %1915 = vrot.lane.b32.xlu0 %v1590, 112
      %v1916 = vpop.permute.xlu0 %1915
      %1921 = vrot.lane.b32.xlu0 %v1720, 16
      %v1922 = vpop.permute.xlu0 %1921
      %1923 = vrot.lane.b32.xlu0 %v1856, 16
      %v1924 = vpop.permute.xlu0 %1923
      %1929 = vrot.lane.b32.xlu0 %v1721, 32
      %v1930 = vpop.permute.xlu0 %1929
      %1931 = vrot.lane.b32.xlu0 %v1857, 32
      %v1932 = vpop.permute.xlu0 %1931
      %1937 = vrot.lane.b32.xlu0 %v1722, 48
      %v1938 = vpop.permute.xlu0 %1937
      %1939 = vrot.lane.b32.xlu0 %v1858, 48
      %v1940 = vpop.permute.xlu0 %1939
      %1945 = vrot.lane.b32.xlu0 %v1723, 64
      %v1946 = vpop.permute.xlu0 %1945
      %1947 = vrot.lane.b32.xlu0 %v1859, 64
      %v1948 = vpop.permute.xlu0 %1947
      %1953 = vrot.lane.b32.xlu0 %v1724, 80
      %v1954 = vpop.permute.xlu0 %1953
      %1955 = vrot.lane.b32.xlu0 %v1860, 80
      %v1956 = vpop.permute.xlu0 %1955
      %1961 = vrot.lane.b32.xlu0 %v1725, 96
      %v1962 = vpop.permute.xlu0 %1961
      %1963 = vrot.lane.b32.xlu0 %v1861, 96
      %v1964 = vpop.permute.xlu0 %1963
      %1969 = vrot.lane.b32.xlu0 %v1726, 112
      %v1970 = vpop.permute.xlu0 %1969
      %1971 = vrot.lane.b32.xlu0 %v1862, 112
      %v1972 = vpop.permute.xlu0 %1971
      %vm1975 = vcmask 130048
      %v1976 = vsel %vm1975, %v1447, %v1866
      %v1977 = vsel %vm1975, %v1583, %v1868
      %vm1978 = vcmask 261120
      %v1979 = vsel %vm1978, %v1976, %v1874
      %v1980 = vsel %vm1978, %v1977, %v1876
      %vm1981 = vcmask 392192
      %v1982 = vsel %vm1981, %v1979, %v1882
      %v1983 = vsel %vm1981, %v1980, %v1884
      %vm1984 = vcmask 523264
      %v1985 = vsel %vm1984, %v1982, %v1890
      %v1986 = vsel %vm1984, %v1983, %v1892
      %vm1987 = vcmask 654336
      %v1988 = vsel %vm1987, %v1985, %v1898
      %v1989 = vsel %vm1987, %v1986, %v1900
      %vm1990 = vcmask 785408
      %v1991 = vsel %vm1990, %v1988, %v1906
      %v1992 = vsel %vm1990, %v1989, %v1908
      %vm1993 = vcmask 916480
      %v1994 = vsel %vm1993, %v1991, %v1914
      %v1995 = vsel %vm1993, %v1992, %v1916
      %v1996 = vsel %vm1975, %v1719, %v1922
      %v1997 = vsel %vm1975, %v1855, %v1924
      %v1998 = vsel %vm1978, %v1996, %v1930
      %v1999 = vsel %vm1978, %v1997, %v1932
      %v2000 = vsel %vm1981, %v1998, %v1938
      %v2001 = vsel %vm1981, %v1999, %v1940
      %v2002 = vsel %vm1984, %v2000, %v1946
      %v2003 = vsel %vm1984, %v2001, %v1948
      %v2004 = vsel %vm1987, %v2002, %v1954
      %v2005 = vsel %vm1987, %v2003, %v1956
      %v2006 = vsel %vm1990, %v2004, %v1962
      %v2007 = vsel %vm1990, %v2005, %v1964
      %v2008 = vsel %vm1993, %v2006, %v1970
      %v2009 = vsel %vm1993, %v2007, %v1972
      %2042 = vrot.lane.b32.xlu0 %v1271, 127
      %v2043 = vpop.permute.xlu0 %2042
      %2044 = vrot.lane.b32.xlu0 %v1272, 127
      %v2045 = vpop.permute.xlu0 %2044
      %2046 = vrot.lane.b32.xlu0 %v1274, 127
      %v2047 = vpop.permute.xlu0 %2046
      %2048 = vrot.lane.b32.xlu0 %v1275, 127
      %v2049 = vpop.permute.xlu0 %2048
      %2050 = vrot.lane.b32.xlu0 %v1277, 127
      %v2051 = vpop.permute.xlu0 %2050
      %2052 = vrot.lane.b32.xlu0 %v1278, 127
      %v2053 = vpop.permute.xlu0 %2052
      %2054 = vrot.lane.b32.xlu0 %v1280, 127
      %v2055 = vpop.permute.xlu0 %2054
      %2056 = vrot.lane.b32.xlu0 %v1281, 127
      %v2057 = vpop.permute.xlu0 %2056
      %2058 = vrot.lane.b32.xlu0 %v1283, 127
      %v2059 = vpop.permute.xlu0 %2058
      %2060 = vrot.lane.b32.xlu0 %v1284, 127
      %v2061 = vpop.permute.xlu0 %2060
      %2062 = vrot.lane.b32.xlu0 %v1286, 127
      %v2063 = vpop.permute.xlu0 %2062
      %2064 = vrot.lane.b32.xlu0 %v1287, 127
      %v2065 = vpop.permute.xlu0 %2064
      %2066 = vrot.lane.b32.xlu0 %v1289, 127
      %v2067 = vpop.permute.xlu0 %2066
      %2068 = vrot.lane.b32.xlu0 %v1290, 127
      %v2069 = vpop.permute.xlu0 %2068
      %2070 = vrot.lane.b32.xlu0 %v1292, 127
      %v2071 = vpop.permute.xlu0 %2070
      %2072 = vrot.lane.b32.xlu0 %v1293, 127
      %v2073 = vpop.permute.xlu0 %2072
      %2074 = vrot.lane.b32.xlu0 %v1295, 127
      %v2075 = vpop.permute.xlu0 %2074
      %2076 = vrot.lane.b32.xlu0 %v1296, 127
      %v2077 = vpop.permute.xlu0 %2076
      %2078 = vrot.lane.b32.xlu0 %v1298, 127
      %v2079 = vpop.permute.xlu0 %2078
      %2080 = vrot.lane.b32.xlu0 %v1299, 127
      %v2081 = vpop.permute.xlu0 %2080
      %2082 = vrot.lane.b32.xlu0 %v1301, 127
      %v2083 = vpop.permute.xlu0 %2082
      %2084 = vrot.lane.b32.xlu0 %v1302, 127
      %v2085 = vpop.permute.xlu0 %2084
      %2086 = vrot.lane.b32.xlu0 %v1304, 127
      %v2087 = vpop.permute.xlu0 %2086
      %2088 = vrot.lane.b32.xlu0 %v1305, 127
      %v2089 = vpop.permute.xlu0 %2088
      %2090 = vrot.lane.b32.xlu0 %v1307, 127
      %v2091 = vpop.permute.xlu0 %2090
      %2092 = vrot.lane.b32.xlu0 %v1308, 127
      %v2093 = vpop.permute.xlu0 %2092
      %2094 = vrot.lane.b32.xlu0 %v1310, 127
      %v2095 = vpop.permute.xlu0 %2094
      %2096 = vrot.lane.b32.xlu0 %v1311, 127
      %v2097 = vpop.permute.xlu0 %2096
      %2098 = vrot.lane.b32.xlu0 %v1313, 127
      %v2099 = vpop.permute.xlu0 %2098
      %2100 = vrot.lane.b32.xlu0 %v1314, 127
      %v2101 = vpop.permute.xlu0 %2100
      %2102 = vrot.lane.b32.xlu0 %v1316, 127
      %v2103 = vpop.permute.xlu0 %2102
      %2104 = vrot.lane.b32.xlu0 %v1317, 127
      %v2105 = vpop.permute.xlu0 %2104
      %v2138 = vcombine.low %v2043, %v2051
      %v2139 = vcombine.high %v2043, %v2051
      %v2141 = vunpack.c.l.s4 1983009808
      %v2142 = vunpack.c.0.s8 %v2141
      %v2143 = vlaneseq
      %v2144 = vshrl.u32 %v2143, 7
      %v2145 = vsub.s32 %v2142, %v2144
      %v2146 = vrot.slane %v2138, %v2145
      %v2148 = vunpack.c.l.s4 1983009808
      %v2149 = vunpack.c.0.s8 %v2148
      %v2150 = vlaneseq
      %v2151 = vshrl.u32 %v2150, 7
      %v2152 = vsub.s32 %v2149, %v2151
      %v2153 = vrot.slane %v2139, %v2152
      %v2154 = vcombine.low %v2047, %v2055
      %v2155 = vcombine.high %v2047, %v2055
      %v2157 = vunpack.c.l.s4 1983009808
      %v2158 = vunpack.c.0.s8 %v2157
      %v2159 = vlaneseq
      %v2160 = vshrl.u32 %v2159, 7
      %v2161 = vsub.s32 %v2158, %v2160
      %v2162 = vrot.slane %v2154, %v2161
      %v2164 = vunpack.c.l.s4 1983009808
      %v2165 = vunpack.c.0.s8 %v2164
      %v2166 = vlaneseq
      %v2167 = vshrl.u32 %v2166, 7
      %v2168 = vsub.s32 %v2165, %v2167
      %v2169 = vrot.slane %v2155, %v2168
      %v2170 = vcombine.low %v2059, %v2067
      %v2171 = vcombine.high %v2059, %v2067
      %v2173 = vunpack.c.l.s4 1983009808
      %v2174 = vunpack.c.0.s8 %v2173
      %v2175 = vlaneseq
      %v2176 = vshrl.u32 %v2175, 7
      %v2177 = vsub.s32 %v2174, %v2176
      %v2178 = vrot.slane %v2170, %v2177
      %v2180 = vunpack.c.l.s4 1983009808
      %v2181 = vunpack.c.0.s8 %v2180
      %v2182 = vlaneseq
      %v2183 = vshrl.u32 %v2182, 7
      %v2184 = vsub.s32 %v2181, %v2183
      %v2185 = vrot.slane %v2171, %v2184
      %v2186 = vcombine.low %v2063, %v2071
      %v2187 = vcombine.high %v2063, %v2071
      %v2189 = vunpack.c.l.s4 1983009808
      %v2190 = vunpack.c.0.s8 %v2189
      %v2191 = vlaneseq
      %v2192 = vshrl.u32 %v2191, 7
      %v2193 = vsub.s32 %v2190, %v2192
      %v2194 = vrot.slane %v2186, %v2193
      %v2196 = vunpack.c.l.s4 1983009808
      %v2197 = vunpack.c.0.s8 %v2196
      %v2198 = vlaneseq
      %v2199 = vshrl.u32 %v2198, 7
      %v2200 = vsub.s32 %v2197, %v2199
      %v2201 = vrot.slane %v2187, %v2200
      %v2202 = vcombine.low %v2146, %v2162
      %v2203 = vcombine.high %v2146, %v2162
      %v2205 = vunpack.c.l.s4 1934713408
      %v2206 = vunpack.c.0.s8 %v2205
      %v2207 = vlaneseq
      %v2208 = vshrl.u32 %v2207, 7
      %v2209 = vsub.s32 %v2206, %v2208
      %v2210 = vrot.slane %v2202, %v2209
      %v2212 = vunpack.c.l.s4 1934713408
      %v2213 = vunpack.c.0.s8 %v2212
      %v2214 = vlaneseq
      %v2215 = vshrl.u32 %v2214, 7
      %v2216 = vsub.s32 %v2213, %v2215
      %v2217 = vrot.slane %v2203, %v2216
      %v2218 = vcombine.low %v2153, %v2169
      %v2219 = vcombine.high %v2153, %v2169
      %v2221 = vunpack.c.l.s4 1934713408
      %v2222 = vunpack.c.0.s8 %v2221
      %v2223 = vlaneseq
      %v2224 = vshrl.u32 %v2223, 7
      %v2225 = vsub.s32 %v2222, %v2224
      %v2226 = vrot.slane %v2218, %v2225
      %v2228 = vunpack.c.l.s4 1934713408
      %v2229 = vunpack.c.0.s8 %v2228
      %v2230 = vlaneseq
      %v2231 = vshrl.u32 %v2230, 7
      %v2232 = vsub.s32 %v2229, %v2231
      %v2233 = vrot.slane %v2219, %v2232
      %v2234 = vcombine.low %v2178, %v2194
      %v2235 = vcombine.high %v2178, %v2194
      %v2237 = vunpack.c.l.s4 1934713408
      %v2238 = vunpack.c.0.s8 %v2237
      %v2239 = vlaneseq
      %v2240 = vshrl.u32 %v2239, 7
      %v2241 = vsub.s32 %v2238, %v2240
      %v2242 = vrot.slane %v2234, %v2241
      %v2244 = vunpack.c.l.s4 1934713408
      %v2245 = vunpack.c.0.s8 %v2244
      %v2246 = vlaneseq
      %v2247 = vshrl.u32 %v2246, 7
      %v2248 = vsub.s32 %v2245, %v2247
      %v2249 = vrot.slane %v2235, %v2248
      %v2250 = vcombine.low %v2185, %v2201
      %v2251 = vcombine.high %v2185, %v2201
      %v2253 = vunpack.c.l.s4 1934713408
      %v2254 = vunpack.c.0.s8 %v2253
      %v2255 = vlaneseq
      %v2256 = vshrl.u32 %v2255, 7
      %v2257 = vsub.s32 %v2254, %v2256
      %v2258 = vrot.slane %v2250, %v2257
      %v2260 = vunpack.c.l.s4 1934713408
      %v2261 = vunpack.c.0.s8 %v2260
      %v2262 = vlaneseq
      %v2263 = vshrl.u32 %v2262, 7
      %v2264 = vsub.s32 %v2261, %v2263
      %v2265 = vrot.slane %v2251, %v2264
      %v2266 = vcombine.low %v2210, %v2242
      %v2267 = vcombine.high %v2210, %v2242
      %v2268 = vcombine.low %v2217, %v2249
      %v2269 = vcombine.high %v2217, %v2249
      %v2270 = vcombine.low %v2226, %v2258
      %v2271 = vcombine.high %v2226, %v2258
      %v2272 = vcombine.low %v2233, %v2265
      %v2273 = vcombine.high %v2233, %v2265
      %v2274 = vcombine.low %v2075, %v2083
      %v2275 = vcombine.high %v2075, %v2083
      %v2277 = vunpack.c.l.s4 1983009808
      %v2278 = vunpack.c.0.s8 %v2277
      %v2279 = vlaneseq
      %v2280 = vshrl.u32 %v2279, 7
      %v2281 = vsub.s32 %v2278, %v2280
      %v2282 = vrot.slane %v2274, %v2281
      %v2284 = vunpack.c.l.s4 1983009808
      %v2285 = vunpack.c.0.s8 %v2284
      %v2286 = vlaneseq
      %v2287 = vshrl.u32 %v2286, 7
      %v2288 = vsub.s32 %v2285, %v2287
      %v2289 = vrot.slane %v2275, %v2288
      %v2290 = vcombine.low %v2079, %v2087
      %v2291 = vcombine.high %v2079, %v2087
      %v2293 = vunpack.c.l.s4 1983009808
      %v2294 = vunpack.c.0.s8 %v2293
      %v2295 = vlaneseq
      %v2296 = vshrl.u32 %v2295, 7
      %v2297 = vsub.s32 %v2294, %v2296
      %v2298 = vrot.slane %v2290, %v2297
      %v2300 = vunpack.c.l.s4 1983009808
      %v2301 = vunpack.c.0.s8 %v2300
      %v2302 = vlaneseq
      %v2303 = vshrl.u32 %v2302, 7
      %v2304 = vsub.s32 %v2301, %v2303
      %v2305 = vrot.slane %v2291, %v2304
      %v2306 = vcombine.low %v2091, %v2099
      %v2307 = vcombine.high %v2091, %v2099
      %v2309 = vunpack.c.l.s4 1983009808
      %v2310 = vunpack.c.0.s8 %v2309
      %v2311 = vlaneseq
      %v2312 = vshrl.u32 %v2311, 7
      %v2313 = vsub.s32 %v2310, %v2312
      %v2314 = vrot.slane %v2306, %v2313
      %v2316 = vunpack.c.l.s4 1983009808
      %v2317 = vunpack.c.0.s8 %v2316
      %v2318 = vlaneseq
      %v2319 = vshrl.u32 %v2318, 7
      %v2320 = vsub.s32 %v2317, %v2319
      %v2321 = vrot.slane %v2307, %v2320
      %v2322 = vcombine.low %v2095, %v2103
      %v2323 = vcombine.high %v2095, %v2103
      %v2325 = vunpack.c.l.s4 1983009808
      %v2326 = vunpack.c.0.s8 %v2325
      %v2327 = vlaneseq
      %v2328 = vshrl.u32 %v2327, 7
      %v2329 = vsub.s32 %v2326, %v2328
      %v2330 = vrot.slane %v2322, %v2329
      %v2332 = vunpack.c.l.s4 1983009808
      %v2333 = vunpack.c.0.s8 %v2332
      %v2334 = vlaneseq
      %v2335 = vshrl.u32 %v2334, 7
      %v2336 = vsub.s32 %v2333, %v2335
      %v2337 = vrot.slane %v2323, %v2336
      %v2338 = vcombine.low %v2282, %v2298
      %v2339 = vcombine.high %v2282, %v2298
      %v2341 = vunpack.c.l.s4 1934713408
      %v2342 = vunpack.c.0.s8 %v2341
      %v2343 = vlaneseq
      %v2344 = vshrl.u32 %v2343, 7
      %v2345 = vsub.s32 %v2342, %v2344
      %v2346 = vrot.slane %v2338, %v2345
      %v2348 = vunpack.c.l.s4 1934713408
      %v2349 = vunpack.c.0.s8 %v2348
      %v2350 = vlaneseq
      %v2351 = vshrl.u32 %v2350, 7
      %v2352 = vsub.s32 %v2349, %v2351
      %v2353 = vrot.slane %v2339, %v2352
      %v2354 = vcombine.low %v2289, %v2305
      %v2355 = vcombine.high %v2289, %v2305
      %v2357 = vunpack.c.l.s4 1934713408
      %v2358 = vunpack.c.0.s8 %v2357
      %v2359 = vlaneseq
      %v2360 = vshrl.u32 %v2359, 7
      %v2361 = vsub.s32 %v2358, %v2360
      %v2362 = vrot.slane %v2354, %v2361
      %v2364 = vunpack.c.l.s4 1934713408
      %v2365 = vunpack.c.0.s8 %v2364
      %v2366 = vlaneseq
      %v2367 = vshrl.u32 %v2366, 7
      %v2368 = vsub.s32 %v2365, %v2367
      %v2369 = vrot.slane %v2355, %v2368
      %v2370 = vcombine.low %v2314, %v2330
      %v2371 = vcombine.high %v2314, %v2330
      %v2373 = vunpack.c.l.s4 1934713408
      %v2374 = vunpack.c.0.s8 %v2373
      %v2375 = vlaneseq
      %v2376 = vshrl.u32 %v2375, 7
      %v2377 = vsub.s32 %v2374, %v2376
      %v2378 = vrot.slane %v2370, %v2377
      %v2380 = vunpack.c.l.s4 1934713408
      %v2381 = vunpack.c.0.s8 %v2380
      %v2382 = vlaneseq
      %v2383 = vshrl.u32 %v2382, 7
      %v2384 = vsub.s32 %v2381, %v2383
      %v2385 = vrot.slane %v2371, %v2384
      %v2386 = vcombine.low %v2321, %v2337
      %v2387 = vcombine.high %v2321, %v2337
      %v2389 = vunpack.c.l.s4 1934713408
      %v2390 = vunpack.c.0.s8 %v2389
      %v2391 = vlaneseq
      %v2392 = vshrl.u32 %v2391, 7
      %v2393 = vsub.s32 %v2390, %v2392
      %v2394 = vrot.slane %v2386, %v2393
      %v2396 = vunpack.c.l.s4 1934713408
      %v2397 = vunpack.c.0.s8 %v2396
      %v2398 = vlaneseq
      %v2399 = vshrl.u32 %v2398, 7
      %v2400 = vsub.s32 %v2397, %v2399
      %v2401 = vrot.slane %v2387, %v2400
      %v2402 = vcombine.low %v2346, %v2378
      %v2403 = vcombine.high %v2346, %v2378
      %v2404 = vcombine.low %v2353, %v2385
      %v2405 = vcombine.high %v2353, %v2385
      %v2406 = vcombine.low %v2362, %v2394
      %v2407 = vcombine.high %v2362, %v2394
      %v2408 = vcombine.low %v2369, %v2401
      %v2409 = vcombine.high %v2369, %v2401
      %v2410 = vcombine.low %v2045, %v2053
      %v2411 = vcombine.high %v2045, %v2053
      %v2413 = vunpack.c.l.s4 1983009808
      %v2414 = vunpack.c.0.s8 %v2413
      %v2415 = vlaneseq
      %v2416 = vshrl.u32 %v2415, 7
      %v2417 = vsub.s32 %v2414, %v2416
      %v2418 = vrot.slane %v2410, %v2417
      %v2420 = vunpack.c.l.s4 1983009808
      %v2421 = vunpack.c.0.s8 %v2420
      %v2422 = vlaneseq
      %v2423 = vshrl.u32 %v2422, 7
      %v2424 = vsub.s32 %v2421, %v2423
      %v2425 = vrot.slane %v2411, %v2424
      %v2426 = vcombine.low %v2049, %v2057
      %v2427 = vcombine.high %v2049, %v2057
      %v2429 = vunpack.c.l.s4 1983009808
      %v2430 = vunpack.c.0.s8 %v2429
      %v2431 = vlaneseq
      %v2432 = vshrl.u32 %v2431, 7
      %v2433 = vsub.s32 %v2430, %v2432
      %v2434 = vrot.slane %v2426, %v2433
      %v2436 = vunpack.c.l.s4 1983009808
      %v2437 = vunpack.c.0.s8 %v2436
      %v2438 = vlaneseq
      %v2439 = vshrl.u32 %v2438, 7
      %v2440 = vsub.s32 %v2437, %v2439
      %v2441 = vrot.slane %v2427, %v2440
      %v2442 = vcombine.low %v2061, %v2069
      %v2443 = vcombine.high %v2061, %v2069
      %v2445 = vunpack.c.l.s4 1983009808
      %v2446 = vunpack.c.0.s8 %v2445
      %v2447 = vlaneseq
      %v2448 = vshrl.u32 %v2447, 7
      %v2449 = vsub.s32 %v2446, %v2448
      %v2450 = vrot.slane %v2442, %v2449
      %v2452 = vunpack.c.l.s4 1983009808
      %v2453 = vunpack.c.0.s8 %v2452
      %v2454 = vlaneseq
      %v2455 = vshrl.u32 %v2454, 7
      %v2456 = vsub.s32 %v2453, %v2455
      %v2457 = vrot.slane %v2443, %v2456
      %v2458 = vcombine.low %v2065, %v2073
      %v2459 = vcombine.high %v2065, %v2073
      %v2461 = vunpack.c.l.s4 1983009808
      %v2462 = vunpack.c.0.s8 %v2461
      %v2463 = vlaneseq
      %v2464 = vshrl.u32 %v2463, 7
      %v2465 = vsub.s32 %v2462, %v2464
      %v2466 = vrot.slane %v2458, %v2465
      %v2468 = vunpack.c.l.s4 1983009808
      %v2469 = vunpack.c.0.s8 %v2468
      %v2470 = vlaneseq
      %v2471 = vshrl.u32 %v2470, 7
      %v2472 = vsub.s32 %v2469, %v2471
      %v2473 = vrot.slane %v2459, %v2472
      %v2474 = vcombine.low %v2418, %v2434
      %v2475 = vcombine.high %v2418, %v2434
      %v2477 = vunpack.c.l.s4 1934713408
      %v2478 = vunpack.c.0.s8 %v2477
      %v2479 = vlaneseq
      %v2480 = vshrl.u32 %v2479, 7
      %v2481 = vsub.s32 %v2478, %v2480
      %v2482 = vrot.slane %v2474, %v2481
      %v2484 = vunpack.c.l.s4 1934713408
      %v2485 = vunpack.c.0.s8 %v2484
      %v2486 = vlaneseq
      %v2487 = vshrl.u32 %v2486, 7
      %v2488 = vsub.s32 %v2485, %v2487
      %v2489 = vrot.slane %v2475, %v2488
      %v2490 = vcombine.low %v2425, %v2441
      %v2491 = vcombine.high %v2425, %v2441
      %v2493 = vunpack.c.l.s4 1934713408
      %v2494 = vunpack.c.0.s8 %v2493
      %v2495 = vlaneseq
      %v2496 = vshrl.u32 %v2495, 7
      %v2497 = vsub.s32 %v2494, %v2496
      %v2498 = vrot.slane %v2490, %v2497
      %v2500 = vunpack.c.l.s4 1934713408
      %v2501 = vunpack.c.0.s8 %v2500
      %v2502 = vlaneseq
      %v2503 = vshrl.u32 %v2502, 7
      %v2504 = vsub.s32 %v2501, %v2503
      %v2505 = vrot.slane %v2491, %v2504
      %v2506 = vcombine.low %v2450, %v2466
      %v2507 = vcombine.high %v2450, %v2466
      %v2509 = vunpack.c.l.s4 1934713408
      %v2510 = vunpack.c.0.s8 %v2509
      %v2511 = vlaneseq
      %v2512 = vshrl.u32 %v2511, 7
      %v2513 = vsub.s32 %v2510, %v2512
      %v2514 = vrot.slane %v2506, %v2513
      %v2516 = vunpack.c.l.s4 1934713408
      %v2517 = vunpack.c.0.s8 %v2516
      %v2518 = vlaneseq
      %v2519 = vshrl.u32 %v2518, 7
      %v2520 = vsub.s32 %v2517, %v2519
      %v2521 = vrot.slane %v2507, %v2520
      %v2522 = vcombine.low %v2457, %v2473
      %v2523 = vcombine.high %v2457, %v2473
      %v2525 = vunpack.c.l.s4 1934713408
      %v2526 = vunpack.c.0.s8 %v2525
      %v2527 = vlaneseq
      %v2528 = vshrl.u32 %v2527, 7
      %v2529 = vsub.s32 %v2526, %v2528
      %v2530 = vrot.slane %v2522, %v2529
      %v2532 = vunpack.c.l.s4 1934713408
      %v2533 = vunpack.c.0.s8 %v2532
      %v2534 = vlaneseq
      %v2535 = vshrl.u32 %v2534, 7
      %v2536 = vsub.s32 %v2533, %v2535
      %v2537 = vrot.slane %v2523, %v2536
      %v2538 = vcombine.low %v2482, %v2514
      %v2539 = vcombine.high %v2482, %v2514
      %v2540 = vcombine.low %v2489, %v2521
      %v2541 = vcombine.high %v2489, %v2521
      %v2542 = vcombine.low %v2498, %v2530
      %v2543 = vcombine.high %v2498, %v2530
      %v2544 = vcombine.low %v2505, %v2537
      %v2545 = vcombine.high %v2505, %v2537
      %v2546 = vcombine.low %v2077, %v2085
      %v2547 = vcombine.high %v2077, %v2085
      %v2549 = vunpack.c.l.s4 1983009808
      %v2550 = vunpack.c.0.s8 %v2549
      %v2551 = vlaneseq
      %v2552 = vshrl.u32 %v2551, 7
      %v2553 = vsub.s32 %v2550, %v2552
      %v2554 = vrot.slane %v2546, %v2553
      %v2556 = vunpack.c.l.s4 1983009808
      %v2557 = vunpack.c.0.s8 %v2556
      %v2558 = vlaneseq
      %v2559 = vshrl.u32 %v2558, 7
      %v2560 = vsub.s32 %v2557, %v2559
      %v2561 = vrot.slane %v2547, %v2560
      %v2562 = vcombine.low %v2081, %v2089
      %v2563 = vcombine.high %v2081, %v2089
      %v2565 = vunpack.c.l.s4 1983009808
      %v2566 = vunpack.c.0.s8 %v2565
      %v2567 = vlaneseq
      %v2568 = vshrl.u32 %v2567, 7
      %v2569 = vsub.s32 %v2566, %v2568
      %v2570 = vrot.slane %v2562, %v2569
      %v2572 = vunpack.c.l.s4 1983009808
      %v2573 = vunpack.c.0.s8 %v2572
      %v2574 = vlaneseq
      %v2575 = vshrl.u32 %v2574, 7
      %v2576 = vsub.s32 %v2573, %v2575
      %v2577 = vrot.slane %v2563, %v2576
      %v2578 = vcombine.low %v2093, %v2101
      %v2579 = vcombine.high %v2093, %v2101
      %v2581 = vunpack.c.l.s4 1983009808
      %v2582 = vunpack.c.0.s8 %v2581
      %v2583 = vlaneseq
      %v2584 = vshrl.u32 %v2583, 7
      %v2585 = vsub.s32 %v2582, %v2584
      %v2586 = vrot.slane %v2578, %v2585
      %v2588 = vunpack.c.l.s4 1983009808
      %v2589 = vunpack.c.0.s8 %v2588
      %v2590 = vlaneseq
      %v2591 = vshrl.u32 %v2590, 7
      %v2592 = vsub.s32 %v2589, %v2591
      %v2593 = vrot.slane %v2579, %v2592
      %v2594 = vcombine.low %v2097, %v2105
      %v2595 = vcombine.high %v2097, %v2105
      %v2597 = vunpack.c.l.s4 1983009808
      %v2598 = vunpack.c.0.s8 %v2597
      %v2599 = vlaneseq
      %v2600 = vshrl.u32 %v2599, 7
      %v2601 = vsub.s32 %v2598, %v2600
      %v2602 = vrot.slane %v2594, %v2601
      %v2604 = vunpack.c.l.s4 1983009808
      %v2605 = vunpack.c.0.s8 %v2604
      %v2606 = vlaneseq
      %v2607 = vshrl.u32 %v2606, 7
      %v2608 = vsub.s32 %v2605, %v2607
      %v2609 = vrot.slane %v2595, %v2608
      %v2610 = vcombine.low %v2554, %v2570
      %v2611 = vcombine.high %v2554, %v2570
      %v2613 = vunpack.c.l.s4 1934713408
      %v2614 = vunpack.c.0.s8 %v2613
      %v2615 = vlaneseq
      %v2616 = vshrl.u32 %v2615, 7
      %v2617 = vsub.s32 %v2614, %v2616
      %v2618 = vrot.slane %v2610, %v2617
      %v2620 = vunpack.c.l.s4 1934713408
      %v2621 = vunpack.c.0.s8 %v2620
      %v2622 = vlaneseq
      %v2623 = vshrl.u32 %v2622, 7
      %v2624 = vsub.s32 %v2621, %v2623
      %v2625 = vrot.slane %v2611, %v2624
      %v2626 = vcombine.low %v2561, %v2577
      %v2627 = vcombine.high %v2561, %v2577
      %v2629 = vunpack.c.l.s4 1934713408
      %v2630 = vunpack.c.0.s8 %v2629
      %v2631 = vlaneseq
      %v2632 = vshrl.u32 %v2631, 7
      %v2633 = vsub.s32 %v2630, %v2632
      %v2634 = vrot.slane %v2626, %v2633
      %v2636 = vunpack.c.l.s4 1934713408
      %v2637 = vunpack.c.0.s8 %v2636
      %v2638 = vlaneseq
      %v2639 = vshrl.u32 %v2638, 7
      %v2640 = vsub.s32 %v2637, %v2639
      %v2641 = vrot.slane %v2627, %v2640
      %v2642 = vcombine.low %v2586, %v2602
      %v2643 = vcombine.high %v2586, %v2602
      %v2645 = vunpack.c.l.s4 1934713408
      %v2646 = vunpack.c.0.s8 %v2645
      %v2647 = vlaneseq
      %v2648 = vshrl.u32 %v2647, 7
      %v2649 = vsub.s32 %v2646, %v2648
      %v2650 = vrot.slane %v2642, %v2649
      %v2652 = vunpack.c.l.s4 1934713408
      %v2653 = vunpack.c.0.s8 %v2652
      %v2654 = vlaneseq
      %v2655 = vshrl.u32 %v2654, 7
      %v2656 = vsub.s32 %v2653, %v2655
      %v2657 = vrot.slane %v2643, %v2656
      %v2658 = vcombine.low %v2593, %v2609
      %v2659 = vcombine.high %v2593, %v2609
      %v2661 = vunpack.c.l.s4 1934713408
      %v2662 = vunpack.c.0.s8 %v2661
      %v2663 = vlaneseq
      %v2664 = vshrl.u32 %v2663, 7
      %v2665 = vsub.s32 %v2662, %v2664
      %v2666 = vrot.slane %v2658, %v2665
      %v2668 = vunpack.c.l.s4 1934713408
      %v2669 = vunpack.c.0.s8 %v2668
      %v2670 = vlaneseq
      %v2671 = vshrl.u32 %v2670, 7
      %v2672 = vsub.s32 %v2669, %v2671
      %v2673 = vrot.slane %v2659, %v2672
      %v2674 = vcombine.low %v2618, %v2650
      %v2675 = vcombine.high %v2618, %v2650
      %v2676 = vcombine.low %v2625, %v2657
      %v2677 = vcombine.high %v2625, %v2657
      %v2678 = vcombine.low %v2634, %v2666
      %v2679 = vcombine.high %v2634, %v2666
      %v2680 = vcombine.low %v2641, %v2673
      %v2681 = vcombine.high %v2641, %v2673
      %2684 = vrot.lane.b32.xlu0 %v2267, 16
      %v2685 = vpop.permute.xlu0 %2684
      %2686 = vrot.lane.b32.xlu0 %v2403, 16
      %v2687 = vpop.permute.xlu0 %2686
      %2692 = vrot.lane.b32.xlu0 %v2268, 32
      %v2693 = vpop.permute.xlu0 %2692
      %2694 = vrot.lane.b32.xlu0 %v2404, 32
      %v2695 = vpop.permute.xlu0 %2694
      %2700 = vrot.lane.b32.xlu0 %v2269, 48
      %v2701 = vpop.permute.xlu0 %2700
      %2702 = vrot.lane.b32.xlu0 %v2405, 48
      %v2703 = vpop.permute.xlu0 %2702
      %2708 = vrot.lane.b32.xlu0 %v2270, 64
      %v2709 = vpop.permute.xlu0 %2708
      %2710 = vrot.lane.b32.xlu0 %v2406, 64
      %v2711 = vpop.permute.xlu0 %2710
      %2716 = vrot.lane.b32.xlu0 %v2271, 80
      %v2717 = vpop.permute.xlu0 %2716
      %2718 = vrot.lane.b32.xlu0 %v2407, 80
      %v2719 = vpop.permute.xlu0 %2718
      %2724 = vrot.lane.b32.xlu0 %v2272, 96
      %v2725 = vpop.permute.xlu0 %2724
      %2726 = vrot.lane.b32.xlu0 %v2408, 96
      %v2727 = vpop.permute.xlu0 %2726
      %2732 = vrot.lane.b32.xlu0 %v2273, 112
      %v2733 = vpop.permute.xlu0 %2732
      %2734 = vrot.lane.b32.xlu0 %v2409, 112
      %v2735 = vpop.permute.xlu0 %2734
      %2740 = vrot.lane.b32.xlu0 %v2539, 16
      %v2741 = vpop.permute.xlu0 %2740
      %2742 = vrot.lane.b32.xlu0 %v2675, 16
      %v2743 = vpop.permute.xlu0 %2742
      %2748 = vrot.lane.b32.xlu0 %v2540, 32
      %v2749 = vpop.permute.xlu0 %2748
      %2750 = vrot.lane.b32.xlu0 %v2676, 32
      %v2751 = vpop.permute.xlu0 %2750
      %2756 = vrot.lane.b32.xlu0 %v2541, 48
      %v2757 = vpop.permute.xlu0 %2756
      %2758 = vrot.lane.b32.xlu0 %v2677, 48
      %v2759 = vpop.permute.xlu0 %2758
      %2764 = vrot.lane.b32.xlu0 %v2542, 64
      %v2765 = vpop.permute.xlu0 %2764
      %2766 = vrot.lane.b32.xlu0 %v2678, 64
      %v2767 = vpop.permute.xlu0 %2766
      %2772 = vrot.lane.b32.xlu0 %v2543, 80
      %v2773 = vpop.permute.xlu0 %2772
      %2774 = vrot.lane.b32.xlu0 %v2679, 80
      %v2775 = vpop.permute.xlu0 %2774
      %2780 = vrot.lane.b32.xlu0 %v2544, 96
      %v2781 = vpop.permute.xlu0 %2780
      %2782 = vrot.lane.b32.xlu0 %v2680, 96
      %v2783 = vpop.permute.xlu0 %2782
      %2788 = vrot.lane.b32.xlu0 %v2545, 112
      %v2789 = vpop.permute.xlu0 %2788
      %2790 = vrot.lane.b32.xlu0 %v2681, 112
      %v2791 = vpop.permute.xlu0 %2790
      %v2794 = vsel %vm1975, %v2266, %v2685
      %v2795 = vsel %vm1975, %v2402, %v2687
      %v2796 = vsel %vm1978, %v2794, %v2693
      %v2797 = vsel %vm1978, %v2795, %v2695
      %v2798 = vsel %vm1981, %v2796, %v2701
      %v2799 = vsel %vm1981, %v2797, %v2703
      %v2800 = vsel %vm1984, %v2798, %v2709
      %v2801 = vsel %vm1984, %v2799, %v2711
      %v2802 = vsel %vm1987, %v2800, %v2717
      %v2803 = vsel %vm1987, %v2801, %v2719
      %v2804 = vsel %vm1990, %v2802, %v2725
      %v2805 = vsel %vm1990, %v2803, %v2727
      %v2806 = vsel %vm1993, %v2804, %v2733
      %v2807 = vsel %vm1993, %v2805, %v2735
      %v2808 = vsel %vm1975, %v2538, %v2741
      %v2809 = vsel %vm1975, %v2674, %v2743
      %v2810 = vsel %vm1978, %v2808, %v2749
      %v2811 = vsel %vm1978, %v2809, %v2751
      %v2812 = vsel %vm1981, %v2810, %v2757
      %v2813 = vsel %vm1981, %v2811, %v2759
      %v2814 = vsel %vm1984, %v2812, %v2765
      %v2815 = vsel %vm1984, %v2813, %v2767
      %v2816 = vsel %vm1987, %v2814, %v2773
      %v2817 = vsel %vm1987, %v2815, %v2775
      %v2818 = vsel %vm1990, %v2816, %v2781
      %v2819 = vsel %vm1990, %v2817, %v2783
      %v2820 = vsel %vm1993, %v2818, %v2789
      %v2821 = vsel %vm1993, %v2819, %v2791
      %2822 = vrot.lane.b32.xlu0 %v1271, 126
      %v2823 = vpop.permute.xlu0 %2822
      %2824 = vrot.lane.b32.xlu0 %v1272, 126
      %v2825 = vpop.permute.xlu0 %2824
      %2826 = vrot.lane.b32.xlu0 %v1274, 126
      %v2827 = vpop.permute.xlu0 %2826
      %2828 = vrot.lane.b32.xlu0 %v1275, 126
      %v2829 = vpop.permute.xlu0 %2828
      %2830 = vrot.lane.b32.xlu0 %v1277, 126
      %v2831 = vpop.permute.xlu0 %2830
      %2832 = vrot.lane.b32.xlu0 %v1278, 126
      %v2833 = vpop.permute.xlu0 %2832
      %2834 = vrot.lane.b32.xlu0 %v1280, 126
      %v2835 = vpop.permute.xlu0 %2834
      %2836 = vrot.lane.b32.xlu0 %v1281, 126
      %v2837 = vpop.permute.xlu0 %2836
      %2838 = vrot.lane.b32.xlu0 %v1283, 126
      %v2839 = vpop.permute.xlu0 %2838
      %2840 = vrot.lane.b32.xlu0 %v1284, 126
      %v2841 = vpop.permute.xlu0 %2840
      %2842 = vrot.lane.b32.xlu0 %v1286, 126
      %v2843 = vpop.permute.xlu0 %2842
      %2844 = vrot.lane.b32.xlu0 %v1287, 126
      %v2845 = vpop.permute.xlu0 %2844
      %2846 = vrot.lane.b32.xlu0 %v1289, 126
      %v2847 = vpop.permute.xlu0 %2846
      %2848 = vrot.lane.b32.xlu0 %v1290, 126
      %v2849 = vpop.permute.xlu0 %2848
      %2850 = vrot.lane.b32.xlu0 %v1292, 126
      %v2851 = vpop.permute.xlu0 %2850
      %2852 = vrot.lane.b32.xlu0 %v1293, 126
      %v2853 = vpop.permute.xlu0 %2852
      %2854 = vrot.lane.b32.xlu0 %v1295, 126
      %v2855 = vpop.permute.xlu0 %2854
      %2856 = vrot.lane.b32.xlu0 %v1296, 126
      %v2857 = vpop.permute.xlu0 %2856
      %2858 = vrot.lane.b32.xlu0 %v1298, 126
      %v2859 = vpop.permute.xlu0 %2858
      %2860 = vrot.lane.b32.xlu0 %v1299, 126
      %v2861 = vpop.permute.xlu0 %2860
      %2862 = vrot.lane.b32.xlu0 %v1301, 126
      %v2863 = vpop.permute.xlu0 %2862
      %2864 = vrot.lane.b32.xlu0 %v1302, 126
      %v2865 = vpop.permute.xlu0 %2864
      %2866 = vrot.lane.b32.xlu0 %v1304, 126
      %v2867 = vpop.permute.xlu0 %2866
      %2868 = vrot.lane.b32.xlu0 %v1305, 126
      %v2869 = vpop.permute.xlu0 %2868
      %2870 = vrot.lane.b32.xlu0 %v1307, 126
      %v2871 = vpop.permute.xlu0 %2870
      %2872 = vrot.lane.b32.xlu0 %v1308, 126
      %v2873 = vpop.permute.xlu0 %2872
      %2874 = vrot.lane.b32.xlu0 %v1310, 126
      %v2875 = vpop.permute.xlu0 %2874
      %2876 = vrot.lane.b32.xlu0 %v1311, 126
      %v2877 = vpop.permute.xlu0 %2876
      %2878 = vrot.lane.b32.xlu0 %v1313, 126
      %v2879 = vpop.permute.xlu0 %2878
      %2880 = vrot.lane.b32.xlu0 %v1314, 126
      %v2881 = vpop.permute.xlu0 %2880
      %2882 = vrot.lane.b32.xlu0 %v1316, 126
      %v2883 = vpop.permute.xlu0 %2882
      %2884 = vrot.lane.b32.xlu0 %v1317, 126
      %v2885 = vpop.permute.xlu0 %2884
      %v2918 = vcombine.low %v2823, %v2831
      %v2919 = vcombine.high %v2823, %v2831
      %v2921 = vunpack.c.l.s4 1983009808
      %v2922 = vunpack.c.0.s8 %v2921
      %v2923 = vlaneseq
      %v2924 = vshrl.u32 %v2923, 7
      %v2925 = vsub.s32 %v2922, %v2924
      %v2926 = vrot.slane %v2918, %v2925
      %v2928 = vunpack.c.l.s4 1983009808
      %v2929 = vunpack.c.0.s8 %v2928
      %v2930 = vlaneseq
      %v2931 = vshrl.u32 %v2930, 7
      %v2932 = vsub.s32 %v2929, %v2931
      %v2933 = vrot.slane %v2919, %v2932
      %v2934 = vcombine.low %v2827, %v2835
      %v2935 = vcombine.high %v2827, %v2835
      %v2937 = vunpack.c.l.s4 1983009808
      %v2938 = vunpack.c.0.s8 %v2937
      %v2939 = vlaneseq
      %v2940 = vshrl.u32 %v2939, 7
      %v2941 = vsub.s32 %v2938, %v2940
      %v2942 = vrot.slane %v2934, %v2941
      %v2944 = vunpack.c.l.s4 1983009808
      %v2945 = vunpack.c.0.s8 %v2944
      %v2946 = vlaneseq
      %v2947 = vshrl.u32 %v2946, 7
      %v2948 = vsub.s32 %v2945, %v2947
      %v2949 = vrot.slane %v2935, %v2948
      %v2950 = vcombine.low %v2839, %v2847
      %v2951 = vcombine.high %v2839, %v2847
      %v2953 = vunpack.c.l.s4 1983009808
      %v2954 = vunpack.c.0.s8 %v2953
      %v2955 = vlaneseq
      %v2956 = vshrl.u32 %v2955, 7
      %v2957 = vsub.s32 %v2954, %v2956
      %v2958 = vrot.slane %v2950, %v2957
      %v2960 = vunpack.c.l.s4 1983009808
      %v2961 = vunpack.c.0.s8 %v2960
      %v2962 = vlaneseq
      %v2963 = vshrl.u32 %v2962, 7
      %v2964 = vsub.s32 %v2961, %v2963
      %v2965 = vrot.slane %v2951, %v2964
      %v2966 = vcombine.low %v2843, %v2851
      %v2967 = vcombine.high %v2843, %v2851
      %v2969 = vunpack.c.l.s4 1983009808
      %v2970 = vunpack.c.0.s8 %v2969
      %v2971 = vlaneseq
      %v2972 = vshrl.u32 %v2971, 7
      %v2973 = vsub.s32 %v2970, %v2972
      %v2974 = vrot.slane %v2966, %v2973
      %v2976 = vunpack.c.l.s4 1983009808
      %v2977 = vunpack.c.0.s8 %v2976
      %v2978 = vlaneseq
      %v2979 = vshrl.u32 %v2978, 7
      %v2980 = vsub.s32 %v2977, %v2979
      %v2981 = vrot.slane %v2967, %v2980
      %v2982 = vcombine.low %v2926, %v2942
      %v2983 = vcombine.high %v2926, %v2942
      %v2985 = vunpack.c.l.s4 1934713408
      %v2986 = vunpack.c.0.s8 %v2985
      %v2987 = vlaneseq
      %v2988 = vshrl.u32 %v2987, 7
      %v2989 = vsub.s32 %v2986, %v2988
      %v2990 = vrot.slane %v2982, %v2989
      %v2992 = vunpack.c.l.s4 1934713408
      %v2993 = vunpack.c.0.s8 %v2992
      %v2994 = vlaneseq
      %v2995 = vshrl.u32 %v2994, 7
      %v2996 = vsub.s32 %v2993, %v2995
      %v2997 = vrot.slane %v2983, %v2996
      %v2998 = vcombine.low %v2933, %v2949
      %v2999 = vcombine.high %v2933, %v2949
      %v3001 = vunpack.c.l.s4 1934713408
      %v3002 = vunpack.c.0.s8 %v3001
      %v3003 = vlaneseq
      %v3004 = vshrl.u32 %v3003, 7
      %v3005 = vsub.s32 %v3002, %v3004
      %v3006 = vrot.slane %v2998, %v3005
      %v3008 = vunpack.c.l.s4 1934713408
      %v3009 = vunpack.c.0.s8 %v3008
      %v3010 = vlaneseq
      %v3011 = vshrl.u32 %v3010, 7
      %v3012 = vsub.s32 %v3009, %v3011
      %v3013 = vrot.slane %v2999, %v3012
      %v3014 = vcombine.low %v2958, %v2974
      %v3015 = vcombine.high %v2958, %v2974
      %v3017 = vunpack.c.l.s4 1934713408
      %v3018 = vunpack.c.0.s8 %v3017
      %v3019 = vlaneseq
      %v3020 = vshrl.u32 %v3019, 7
      %v3021 = vsub.s32 %v3018, %v3020
      %v3022 = vrot.slane %v3014, %v3021
      %v3024 = vunpack.c.l.s4 1934713408
      %v3025 = vunpack.c.0.s8 %v3024
      %v3026 = vlaneseq
      %v3027 = vshrl.u32 %v3026, 7
      %v3028 = vsub.s32 %v3025, %v3027
      %v3029 = vrot.slane %v3015, %v3028
      %v3030 = vcombine.low %v2965, %v2981
      %v3031 = vcombine.high %v2965, %v2981
      %v3033 = vunpack.c.l.s4 1934713408
      %v3034 = vunpack.c.0.s8 %v3033
      %v3035 = vlaneseq
      %v3036 = vshrl.u32 %v3035, 7
      %v3037 = vsub.s32 %v3034, %v3036
      %v3038 = vrot.slane %v3030, %v3037
      %v3040 = vunpack.c.l.s4 1934713408
      %v3041 = vunpack.c.0.s8 %v3040
      %v3042 = vlaneseq
      %v3043 = vshrl.u32 %v3042, 7
      %v3044 = vsub.s32 %v3041, %v3043
      %v3045 = vrot.slane %v3031, %v3044
      %v3046 = vcombine.low %v2990, %v3022
      %v3047 = vcombine.high %v2990, %v3022
      %v3048 = vcombine.low %v2997, %v3029
      %v3049 = vcombine.high %v2997, %v3029
      %v3050 = vcombine.low %v3006, %v3038
      %v3051 = vcombine.high %v3006, %v3038
      %v3052 = vcombine.low %v3013, %v3045
      %v3053 = vcombine.high %v3013, %v3045
      %v3054 = vcombine.low %v2855, %v2863
      %v3055 = vcombine.high %v2855, %v2863
      %v3057 = vunpack.c.l.s4 1983009808
      %v3058 = vunpack.c.0.s8 %v3057
      %v3059 = vlaneseq
      %v3060 = vshrl.u32 %v3059, 7
      %v3061 = vsub.s32 %v3058, %v3060
      %v3062 = vrot.slane %v3054, %v3061
      %v3064 = vunpack.c.l.s4 1983009808
      %v3065 = vunpack.c.0.s8 %v3064
      %v3066 = vlaneseq
      %v3067 = vshrl.u32 %v3066, 7
      %v3068 = vsub.s32 %v3065, %v3067
      %v3069 = vrot.slane %v3055, %v3068
      %v3070 = vcombine.low %v2859, %v2867
      %v3071 = vcombine.high %v2859, %v2867
      %v3073 = vunpack.c.l.s4 1983009808
      %v3074 = vunpack.c.0.s8 %v3073
      %v3075 = vlaneseq
      %v3076 = vshrl.u32 %v3075, 7
      %v3077 = vsub.s32 %v3074, %v3076
      %v3078 = vrot.slane %v3070, %v3077
      %v3080 = vunpack.c.l.s4 1983009808
      %v3081 = vunpack.c.0.s8 %v3080
      %v3082 = vlaneseq
      %v3083 = vshrl.u32 %v3082, 7
      %v3084 = vsub.s32 %v3081, %v3083
      %v3085 = vrot.slane %v3071, %v3084
      %v3086 = vcombine.low %v2871, %v2879
      %v3087 = vcombine.high %v2871, %v2879
      %v3089 = vunpack.c.l.s4 1983009808
      %v3090 = vunpack.c.0.s8 %v3089
      %v3091 = vlaneseq
      %v3092 = vshrl.u32 %v3091, 7
      %v3093 = vsub.s32 %v3090, %v3092
      %v3094 = vrot.slane %v3086, %v3093
      %v3096 = vunpack.c.l.s4 1983009808
      %v3097 = vunpack.c.0.s8 %v3096
      %v3098 = vlaneseq
      %v3099 = vshrl.u32 %v3098, 7
      %v3100 = vsub.s32 %v3097, %v3099
      %v3101 = vrot.slane %v3087, %v3100
      %v3102 = vcombine.low %v2875, %v2883
      %v3103 = vcombine.high %v2875, %v2883
      %v3105 = vunpack.c.l.s4 1983009808
      %v3106 = vunpack.c.0.s8 %v3105
      %v3107 = vlaneseq
      %v3108 = vshrl.u32 %v3107, 7
      %v3109 = vsub.s32 %v3106, %v3108
      %v3110 = vrot.slane %v3102, %v3109
      %v3112 = vunpack.c.l.s4 1983009808
      %v3113 = vunpack.c.0.s8 %v3112
      %v3114 = vlaneseq
      %v3115 = vshrl.u32 %v3114, 7
      %v3116 = vsub.s32 %v3113, %v3115
      %v3117 = vrot.slane %v3103, %v3116
      %v3118 = vcombine.low %v3062, %v3078
      %v3119 = vcombine.high %v3062, %v3078
      %v3121 = vunpack.c.l.s4 1934713408
      %v3122 = vunpack.c.0.s8 %v3121
      %v3123 = vlaneseq
      %v3124 = vshrl.u32 %v3123, 7
      %v3125 = vsub.s32 %v3122, %v3124
      %v3126 = vrot.slane %v3118, %v3125
      %v3128 = vunpack.c.l.s4 1934713408
      %v3129 = vunpack.c.0.s8 %v3128
      %v3130 = vlaneseq
      %v3131 = vshrl.u32 %v3130, 7
      %v3132 = vsub.s32 %v3129, %v3131
      %v3133 = vrot.slane %v3119, %v3132
      %v3134 = vcombine.low %v3069, %v3085
      %v3135 = vcombine.high %v3069, %v3085
      %v3137 = vunpack.c.l.s4 1934713408
      %v3138 = vunpack.c.0.s8 %v3137
      %v3139 = vlaneseq
      %v3140 = vshrl.u32 %v3139, 7
      %v3141 = vsub.s32 %v3138, %v3140
      %v3142 = vrot.slane %v3134, %v3141
      %v3144 = vunpack.c.l.s4 1934713408
      %v3145 = vunpack.c.0.s8 %v3144
      %v3146 = vlaneseq
      %v3147 = vshrl.u32 %v3146, 7
      %v3148 = vsub.s32 %v3145, %v3147
      %v3149 = vrot.slane %v3135, %v3148
      %v3150 = vcombine.low %v3094, %v3110
      %v3151 = vcombine.high %v3094, %v3110
      %v3153 = vunpack.c.l.s4 1934713408
      %v3154 = vunpack.c.0.s8 %v3153
      %v3155 = vlaneseq
      %v3156 = vshrl.u32 %v3155, 7
      %v3157 = vsub.s32 %v3154, %v3156
      %v3158 = vrot.slane %v3150, %v3157
      %v3160 = vunpack.c.l.s4 1934713408
      %v3161 = vunpack.c.0.s8 %v3160
      %v3162 = vlaneseq
      %v3163 = vshrl.u32 %v3162, 7
      %v3164 = vsub.s32 %v3161, %v3163
      %v3165 = vrot.slane %v3151, %v3164
      %v3166 = vcombine.low %v3101, %v3117
      %v3167 = vcombine.high %v3101, %v3117
      %v3169 = vunpack.c.l.s4 1934713408
      %v3170 = vunpack.c.0.s8 %v3169
      %v3171 = vlaneseq
      %v3172 = vshrl.u32 %v3171, 7
      %v3173 = vsub.s32 %v3170, %v3172
      %v3174 = vrot.slane %v3166, %v3173
      %v3176 = vunpack.c.l.s4 1934713408
      %v3177 = vunpack.c.0.s8 %v3176
      %v3178 = vlaneseq
      %v3179 = vshrl.u32 %v3178, 7
      %v3180 = vsub.s32 %v3177, %v3179
      %v3181 = vrot.slane %v3167, %v3180
      %v3182 = vcombine.low %v3126, %v3158
      %v3183 = vcombine.high %v3126, %v3158
      %v3184 = vcombine.low %v3133, %v3165
      %v3185 = vcombine.high %v3133, %v3165
      %v3186 = vcombine.low %v3142, %v3174
      %v3187 = vcombine.high %v3142, %v3174
      %v3188 = vcombine.low %v3149, %v3181
      %v3189 = vcombine.high %v3149, %v3181
      %v3190 = vcombine.low %v2825, %v2833
      %v3191 = vcombine.high %v2825, %v2833
      %v3193 = vunpack.c.l.s4 1983009808
      %v3194 = vunpack.c.0.s8 %v3193
      %v3195 = vlaneseq
      %v3196 = vshrl.u32 %v3195, 7
      %v3197 = vsub.s32 %v3194, %v3196
      %v3198 = vrot.slane %v3190, %v3197
      %v3200 = vunpack.c.l.s4 1983009808
      %v3201 = vunpack.c.0.s8 %v3200
      %v3202 = vlaneseq
      %v3203 = vshrl.u32 %v3202, 7
      %v3204 = vsub.s32 %v3201, %v3203
      %v3205 = vrot.slane %v3191, %v3204
      %v3206 = vcombine.low %v2829, %v2837
      %v3207 = vcombine.high %v2829, %v2837
      %v3209 = vunpack.c.l.s4 1983009808
      %v3210 = vunpack.c.0.s8 %v3209
      %v3211 = vlaneseq
      %v3212 = vshrl.u32 %v3211, 7
      %v3213 = vsub.s32 %v3210, %v3212
      %v3214 = vrot.slane %v3206, %v3213
      %v3216 = vunpack.c.l.s4 1983009808
      %v3217 = vunpack.c.0.s8 %v3216
      %v3218 = vlaneseq
      %v3219 = vshrl.u32 %v3218, 7
      %v3220 = vsub.s32 %v3217, %v3219
      %v3221 = vrot.slane %v3207, %v3220
      %v3222 = vcombine.low %v2841, %v2849
      %v3223 = vcombine.high %v2841, %v2849
      %v3225 = vunpack.c.l.s4 1983009808
      %v3226 = vunpack.c.0.s8 %v3225
      %v3227 = vlaneseq
      %v3228 = vshrl.u32 %v3227, 7
      %v3229 = vsub.s32 %v3226, %v3228
      %v3230 = vrot.slane %v3222, %v3229
      %v3232 = vunpack.c.l.s4 1983009808
      %v3233 = vunpack.c.0.s8 %v3232
      %v3234 = vlaneseq
      %v3235 = vshrl.u32 %v3234, 7
      %v3236 = vsub.s32 %v3233, %v3235
      %v3237 = vrot.slane %v3223, %v3236
      %v3238 = vcombine.low %v2845, %v2853
      %v3239 = vcombine.high %v2845, %v2853
      %v3241 = vunpack.c.l.s4 1983009808
      %v3242 = vunpack.c.0.s8 %v3241
      %v3243 = vlaneseq
      %v3244 = vshrl.u32 %v3243, 7
      %v3245 = vsub.s32 %v3242, %v3244
      %v3246 = vrot.slane %v3238, %v3245
      %v3248 = vunpack.c.l.s4 1983009808
      %v3249 = vunpack.c.0.s8 %v3248
      %v3250 = vlaneseq
      %v3251 = vshrl.u32 %v3250, 7
      %v3252 = vsub.s32 %v3249, %v3251
      %v3253 = vrot.slane %v3239, %v3252
      %v3254 = vcombine.low %v3198, %v3214
      %v3255 = vcombine.high %v3198, %v3214
      %v3257 = vunpack.c.l.s4 1934713408
      %v3258 = vunpack.c.0.s8 %v3257
      %v3259 = vlaneseq
      %v3260 = vshrl.u32 %v3259, 7
      %v3261 = vsub.s32 %v3258, %v3260
      %v3262 = vrot.slane %v3254, %v3261
      %v3264 = vunpack.c.l.s4 1934713408
      %v3265 = vunpack.c.0.s8 %v3264
      %v3266 = vlaneseq
      %v3267 = vshrl.u32 %v3266, 7
      %v3268 = vsub.s32 %v3265, %v3267
      %v3269 = vrot.slane %v3255, %v3268
      %v3270 = vcombine.low %v3205, %v3221
      %v3271 = vcombine.high %v3205, %v3221
      %v3273 = vunpack.c.l.s4 1934713408
      %v3274 = vunpack.c.0.s8 %v3273
      %v3275 = vlaneseq
      %v3276 = vshrl.u32 %v3275, 7
      %v3277 = vsub.s32 %v3274, %v3276
      %v3278 = vrot.slane %v3270, %v3277
      %v3280 = vunpack.c.l.s4 1934713408
      %v3281 = vunpack.c.0.s8 %v3280
      %v3282 = vlaneseq
      %v3283 = vshrl.u32 %v3282, 7
      %v3284 = vsub.s32 %v3281, %v3283
      %v3285 = vrot.slane %v3271, %v3284
      %v3286 = vcombine.low %v3230, %v3246
      %v3287 = vcombine.high %v3230, %v3246
      %v3289 = vunpack.c.l.s4 1934713408
      %v3290 = vunpack.c.0.s8 %v3289
      %v3291 = vlaneseq
      %v3292 = vshrl.u32 %v3291, 7
      %v3293 = vsub.s32 %v3290, %v3292
      %v3294 = vrot.slane %v3286, %v3293
      %v3296 = vunpack.c.l.s4 1934713408
      %v3297 = vunpack.c.0.s8 %v3296
      %v3298 = vlaneseq
      %v3299 = vshrl.u32 %v3298, 7
      %v3300 = vsub.s32 %v3297, %v3299
      %v3301 = vrot.slane %v3287, %v3300
      %v3302 = vcombine.low %v3237, %v3253
      %v3303 = vcombine.high %v3237, %v3253
      %v3305 = vunpack.c.l.s4 1934713408
      %v3306 = vunpack.c.0.s8 %v3305
      %v3307 = vlaneseq
      %v3308 = vshrl.u32 %v3307, 7
      %v3309 = vsub.s32 %v3306, %v3308
      %v3310 = vrot.slane %v3302, %v3309
      %v3312 = vunpack.c.l.s4 1934713408
      %v3313 = vunpack.c.0.s8 %v3312
      %v3314 = vlaneseq
      %v3315 = vshrl.u32 %v3314, 7
      %v3316 = vsub.s32 %v3313, %v3315
      %v3317 = vrot.slane %v3303, %v3316
      %v3318 = vcombine.low %v3262, %v3294
      %v3319 = vcombine.high %v3262, %v3294
      %v3320 = vcombine.low %v3269, %v3301
      %v3321 = vcombine.high %v3269, %v3301
      %v3322 = vcombine.low %v3278, %v3310
      %v3323 = vcombine.high %v3278, %v3310
      %v3324 = vcombine.low %v3285, %v3317
      %v3325 = vcombine.high %v3285, %v3317
      %v3326 = vcombine.low %v2857, %v2865
      %v3327 = vcombine.high %v2857, %v2865
      %v3329 = vunpack.c.l.s4 1983009808
      %v3330 = vunpack.c.0.s8 %v3329
      %v3331 = vlaneseq
      %v3332 = vshrl.u32 %v3331, 7
      %v3333 = vsub.s32 %v3330, %v3332
      %v3334 = vrot.slane %v3326, %v3333
      %v3336 = vunpack.c.l.s4 1983009808
      %v3337 = vunpack.c.0.s8 %v3336
      %v3338 = vlaneseq
      %v3339 = vshrl.u32 %v3338, 7
      %v3340 = vsub.s32 %v3337, %v3339
      %v3341 = vrot.slane %v3327, %v3340
      %v3342 = vcombine.low %v2861, %v2869
      %v3343 = vcombine.high %v2861, %v2869
      %v3345 = vunpack.c.l.s4 1983009808
      %v3346 = vunpack.c.0.s8 %v3345
      %v3347 = vlaneseq
      %v3348 = vshrl.u32 %v3347, 7
      %v3349 = vsub.s32 %v3346, %v3348
      %v3350 = vrot.slane %v3342, %v3349
      %v3352 = vunpack.c.l.s4 1983009808
      %v3353 = vunpack.c.0.s8 %v3352
      %v3354 = vlaneseq
      %v3355 = vshrl.u32 %v3354, 7
      %v3356 = vsub.s32 %v3353, %v3355
      %v3357 = vrot.slane %v3343, %v3356
      %v3358 = vcombine.low %v2873, %v2881
      %v3359 = vcombine.high %v2873, %v2881
      %v3361 = vunpack.c.l.s4 1983009808
      %v3362 = vunpack.c.0.s8 %v3361
      %v3363 = vlaneseq
      %v3364 = vshrl.u32 %v3363, 7
      %v3365 = vsub.s32 %v3362, %v3364
      %v3366 = vrot.slane %v3358, %v3365
      %v3368 = vunpack.c.l.s4 1983009808
      %v3369 = vunpack.c.0.s8 %v3368
      %v3370 = vlaneseq
      %v3371 = vshrl.u32 %v3370, 7
      %v3372 = vsub.s32 %v3369, %v3371
      %v3373 = vrot.slane %v3359, %v3372
      %v3374 = vcombine.low %v2877, %v2885
      %v3375 = vcombine.high %v2877, %v2885
      %v3377 = vunpack.c.l.s4 1983009808
      %v3378 = vunpack.c.0.s8 %v3377
      %v3379 = vlaneseq
      %v3380 = vshrl.u32 %v3379, 7
      %v3381 = vsub.s32 %v3378, %v3380
      %v3382 = vrot.slane %v3374, %v3381
      %v3384 = vunpack.c.l.s4 1983009808
      %v3385 = vunpack.c.0.s8 %v3384
      %v3386 = vlaneseq
      %v3387 = vshrl.u32 %v3386, 7
      %v3388 = vsub.s32 %v3385, %v3387
      %v3389 = vrot.slane %v3375, %v3388
      %v3390 = vcombine.low %v3334, %v3350
      %v3391 = vcombine.high %v3334, %v3350
      %v3393 = vunpack.c.l.s4 1934713408
      %v3394 = vunpack.c.0.s8 %v3393
      %v3395 = vlaneseq
      %v3396 = vshrl.u32 %v3395, 7
      %v3397 = vsub.s32 %v3394, %v3396
      %v3398 = vrot.slane %v3390, %v3397
      %v3400 = vunpack.c.l.s4 1934713408
      %v3401 = vunpack.c.0.s8 %v3400
      %v3402 = vlaneseq
      %v3403 = vshrl.u32 %v3402, 7
      %v3404 = vsub.s32 %v3401, %v3403
      %v3405 = vrot.slane %v3391, %v3404
      %v3406 = vcombine.low %v3341, %v3357
      %v3407 = vcombine.high %v3341, %v3357
      %v3409 = vunpack.c.l.s4 1934713408
      %v3410 = vunpack.c.0.s8 %v3409
      %v3411 = vlaneseq
      %v3412 = vshrl.u32 %v3411, 7
      %v3413 = vsub.s32 %v3410, %v3412
      %v3414 = vrot.slane %v3406, %v3413
      %v3416 = vunpack.c.l.s4 1934713408
      %v3417 = vunpack.c.0.s8 %v3416
      %v3418 = vlaneseq
      %v3419 = vshrl.u32 %v3418, 7
      %v3420 = vsub.s32 %v3417, %v3419
      %v3421 = vrot.slane %v3407, %v3420
      %v3422 = vcombine.low %v3366, %v3382
      %v3423 = vcombine.high %v3366, %v3382
      %v3425 = vunpack.c.l.s4 1934713408
      %v3426 = vunpack.c.0.s8 %v3425
      %v3427 = vlaneseq
      %v3428 = vshrl.u32 %v3427, 7
      %v3429 = vsub.s32 %v3426, %v3428
      %v3430 = vrot.slane %v3422, %v3429
      %v3432 = vunpack.c.l.s4 1934713408
      %v3433 = vunpack.c.0.s8 %v3432
      %v3434 = vlaneseq
      %v3435 = vshrl.u32 %v3434, 7
      %v3436 = vsub.s32 %v3433, %v3435
      %v3437 = vrot.slane %v3423, %v3436
      %v3438 = vcombine.low %v3373, %v3389
      %v3439 = vcombine.high %v3373, %v3389
      %v3441 = vunpack.c.l.s4 1934713408
      %v3442 = vunpack.c.0.s8 %v3441
      %v3443 = vlaneseq
      %v3444 = vshrl.u32 %v3443, 7
      %v3445 = vsub.s32 %v3442, %v3444
      %v3446 = vrot.slane %v3438, %v3445
      %v3448 = vunpack.c.l.s4 1934713408
      %v3449 = vunpack.c.0.s8 %v3448
      %v3450 = vlaneseq
      %v3451 = vshrl.u32 %v3450, 7
      %v3452 = vsub.s32 %v3449, %v3451
      %v3453 = vrot.slane %v3439, %v3452
      %v3454 = vcombine.low %v3398, %v3430
      %v3455 = vcombine.high %v3398, %v3430
      %v3456 = vcombine.low %v3405, %v3437
      %v3457 = vcombine.high %v3405, %v3437
      %v3458 = vcombine.low %v3414, %v3446
      %v3459 = vcombine.high %v3414, %v3446
      %v3460 = vcombine.low %v3421, %v3453
      %v3461 = vcombine.high %v3421, %v3453
      %3464 = vrot.lane.b32.xlu0 %v3047, 16
      %v3465 = vpop.permute.xlu0 %3464
      %3466 = vrot.lane.b32.xlu0 %v3183, 16
      %v3467 = vpop.permute.xlu0 %3466
      %3472 = vrot.lane.b32.xlu0 %v3048, 32
      %v3473 = vpop.permute.xlu0 %3472
      %3474 = vrot.lane.b32.xlu0 %v3184, 32
      %v3475 = vpop.permute.xlu0 %3474
      %3480 = vrot.lane.b32.xlu0 %v3049, 48
      %v3481 = vpop.permute.xlu0 %3480
      %3482 = vrot.lane.b32.xlu0 %v3185, 48
      %v3483 = vpop.permute.xlu0 %3482
      %3488 = vrot.lane.b32.xlu0 %v3050, 64
      %v3489 = vpop.permute.xlu0 %3488
      %3490 = vrot.lane.b32.xlu0 %v3186, 64
      %v3491 = vpop.permute.xlu0 %3490
      %3496 = vrot.lane.b32.xlu0 %v3051, 80
      %v3497 = vpop.permute.xlu0 %3496
      %3498 = vrot.lane.b32.xlu0 %v3187, 80
      %v3499 = vpop.permute.xlu0 %3498
      %3504 = vrot.lane.b32.xlu0 %v3052, 96
      %v3505 = vpop.permute.xlu0 %3504
      %3506 = vrot.lane.b32.xlu0 %v3188, 96
      %v3507 = vpop.permute.xlu0 %3506
      %3512 = vrot.lane.b32.xlu0 %v3053, 112
      %v3513 = vpop.permute.xlu0 %3512
      %3514 = vrot.lane.b32.xlu0 %v3189, 112
      %v3515 = vpop.permute.xlu0 %3514
      %3520 = vrot.lane.b32.xlu0 %v3319, 16
      %v3521 = vpop.permute.xlu0 %3520
      %3522 = vrot.lane.b32.xlu0 %v3455, 16
      %v3523 = vpop.permute.xlu0 %3522
      %3528 = vrot.lane.b32.xlu0 %v3320, 32
      %v3529 = vpop.permute.xlu0 %3528
      %3530 = vrot.lane.b32.xlu0 %v3456, 32
      %v3531 = vpop.permute.xlu0 %3530
      %3536 = vrot.lane.b32.xlu0 %v3321, 48
      %v3537 = vpop.permute.xlu0 %3536
      %3538 = vrot.lane.b32.xlu0 %v3457, 48
      %v3539 = vpop.permute.xlu0 %3538
      %3544 = vrot.lane.b32.xlu0 %v3322, 64
      %v3545 = vpop.permute.xlu0 %3544
      %3546 = vrot.lane.b32.xlu0 %v3458, 64
      %v3547 = vpop.permute.xlu0 %3546
      %3552 = vrot.lane.b32.xlu0 %v3323, 80
      %v3553 = vpop.permute.xlu0 %3552
      %3554 = vrot.lane.b32.xlu0 %v3459, 80
      %v3555 = vpop.permute.xlu0 %3554
      %3560 = vrot.lane.b32.xlu0 %v3324, 96
      %v3561 = vpop.permute.xlu0 %3560
      %3562 = vrot.lane.b32.xlu0 %v3460, 96
      %v3563 = vpop.permute.xlu0 %3562
      %3568 = vrot.lane.b32.xlu0 %v3325, 112
      %v3569 = vpop.permute.xlu0 %3568
      %3570 = vrot.lane.b32.xlu0 %v3461, 112
      %v3571 = vpop.permute.xlu0 %3570
      %v3574 = vsel %vm1975, %v3046, %v3465
      %v3575 = vsel %vm1975, %v3182, %v3467
      %v3576 = vsel %vm1978, %v3574, %v3473
      %v3577 = vsel %vm1978, %v3575, %v3475
      %v3578 = vsel %vm1981, %v3576, %v3481
      %v3579 = vsel %vm1981, %v3577, %v3483
      %v3580 = vsel %vm1984, %v3578, %v3489
      %v3581 = vsel %vm1984, %v3579, %v3491
      %v3582 = vsel %vm1987, %v3580, %v3497
      %v3583 = vsel %vm1987, %v3581, %v3499
      %v3584 = vsel %vm1990, %v3582, %v3505
      %v3585 = vsel %vm1990, %v3583, %v3507
      %v3586 = vsel %vm1993, %v3584, %v3513
      %v3587 = vsel %vm1993, %v3585, %v3515
      %v3588 = vsel %vm1975, %v3318, %v3521
      %v3589 = vsel %vm1975, %v3454, %v3523
      %v3590 = vsel %vm1978, %v3588, %v3529
      %v3591 = vsel %vm1978, %v3589, %v3531
      %v3592 = vsel %vm1981, %v3590, %v3537
      %v3593 = vsel %vm1981, %v3591, %v3539
      %v3594 = vsel %vm1984, %v3592, %v3545
      %v3595 = vsel %vm1984, %v3593, %v3547
      %v3596 = vsel %vm1987, %v3594, %v3553
      %v3597 = vsel %vm1987, %v3595, %v3555
      %v3598 = vsel %vm1990, %v3596, %v3561
      %v3599 = vsel %vm1990, %v3597, %v3563
      %v3600 = vsel %vm1993, %v3598, %v3569
      %v3601 = vsel %vm1993, %v3599, %v3571
      %vm3618 = vcmask 1046528
      %v3619 = vrot.slane %v1271, 1
      %v3620 = vrot.slane %v1272, 1
      %v3621 = vsel %vm3618, %v3619, %v3620
      %v3622 = vrot.slane %v1273, 1
      %v3623 = vsel %vm3618, %v3620, %v3622
      %v3624 = vrot.slane %v1274, 1
      %v3625 = vrot.slane %v1275, 1
      %v3626 = vsel %vm3618, %v3624, %v3625
      %v3627 = vrot.slane %v1276, 1
      %v3628 = vsel %vm3618, %v3625, %v3627
      %v3629 = vrot.slane %v1277, 1
      %v3630 = vrot.slane %v1278, 1
      %v3631 = vsel %vm3618, %v3629, %v3630
      %v3632 = vrot.slane %v1279, 1
      %v3633 = vsel %vm3618, %v3630, %v3632
      %v3634 = vrot.slane %v1280, 1
      %v3635 = vrot.slane %v1281, 1
      %v3636 = vsel %vm3618, %v3634, %v3635
      %v3637 = vrot.slane %v1282, 1
      %v3638 = vsel %vm3618, %v3635, %v3637
      %v3639 = vrot.slane %v1283, 1
      %v3640 = vrot.slane %v1284, 1
      %v3641 = vsel %vm3618, %v3639, %v3640
      %v3642 = vrot.slane %v1285, 1
      %v3643 = vsel %vm3618, %v3640, %v3642
      %v3644 = vrot.slane %v1286, 1
      %v3645 = vrot.slane %v1287, 1
      %v3646 = vsel %vm3618, %v3644, %v3645
      %v3647 = vrot.slane %v1288, 1
      %v3648 = vsel %vm3618, %v3645, %v3647
      %v3649 = vrot.slane %v1289, 1
      %v3650 = vrot.slane %v1290, 1
      %v3651 = vsel %vm3618, %v3649, %v3650
      %v3652 = vrot.slane %v1291, 1
      %v3653 = vsel %vm3618, %v3650, %v3652
      %v3654 = vrot.slane %v1292, 1
      %v3655 = vrot.slane %v1293, 1
      %v3656 = vsel %vm3618, %v3654, %v3655
      %v3657 = vrot.slane %v1294, 1
      %v3658 = vsel %vm3618, %v3655, %v3657
      %v3659 = vrot.slane %v1295, 1
      %v3660 = vrot.slane %v1296, 1
      %v3661 = vsel %vm3618, %v3659, %v3660
      %v3662 = vrot.slane %v1297, 1
      %v3663 = vsel %vm3618, %v3660, %v3662
      %v3664 = vrot.slane %v1298, 1
      %v3665 = vrot.slane %v1299, 1
      %v3666 = vsel %vm3618, %v3664, %v3665
      %v3667 = vrot.slane %v1300, 1
      %v3668 = vsel %vm3618, %v3665, %v3667
      %v3669 = vrot.slane %v1301, 1
      %v3670 = vrot.slane %v1302, 1
      %v3671 = vsel %vm3618, %v3669, %v3670
      %v3672 = vrot.slane %v1303, 1
      %v3673 = vsel %vm3618, %v3670, %v3672
      %v3674 = vrot.slane %v1304, 1
      %v3675 = vrot.slane %v1305, 1
      %v3676 = vsel %vm3618, %v3674, %v3675
      %v3677 = vrot.slane %v1306, 1
      %v3678 = vsel %vm3618, %v3675, %v3677
      %v3679 = vrot.slane %v1307, 1
      %v3680 = vrot.slane %v1308, 1
      %v3681 = vsel %vm3618, %v3679, %v3680
      %v3682 = vrot.slane %v1309, 1
      %v3683 = vsel %vm3618, %v3680, %v3682
      %v3684 = vrot.slane %v1310, 1
      %v3685 = vrot.slane %v1311, 1
      %v3686 = vsel %vm3618, %v3684, %v3685
      %v3687 = vrot.slane %v1312, 1
      %v3688 = vsel %vm3618, %v3685, %v3687
      %v3689 = vrot.slane %v1313, 1
      %v3690 = vrot.slane %v1314, 1
      %v3691 = vsel %vm3618, %v3689, %v3690
      %v3692 = vrot.slane %v1315, 1
      %v3693 = vsel %vm3618, %v3690, %v3692
      %v3694 = vrot.slane %v1316, 1
      %v3695 = vrot.slane %v1317, 1
      %v3696 = vsel %vm3618, %v3694, %v3695
      %v3697 = vrot.slane %v1318, 1
      %v3698 = vsel %vm3618, %v3695, %v3697
      %v3731 = vcombine.low %v3621, %v3631
      %v3732 = vcombine.high %v3621, %v3631
      %v3734 = vunpack.c.l.s4 1983009808
      %v3735 = vunpack.c.0.s8 %v3734
      %v3736 = vlaneseq
      %v3737 = vshrl.u32 %v3736, 7
      %v3738 = vsub.s32 %v3735, %v3737
      %v3739 = vrot.slane %v3731, %v3738
      %v3741 = vunpack.c.l.s4 1983009808
      %v3742 = vunpack.c.0.s8 %v3741
      %v3743 = vlaneseq
      %v3744 = vshrl.u32 %v3743, 7
      %v3745 = vsub.s32 %v3742, %v3744
      %v3746 = vrot.slane %v3732, %v3745
      %v3747 = vcombine.low %v3626, %v3636
      %v3748 = vcombine.high %v3626, %v3636
      %v3750 = vunpack.c.l.s4 1983009808
      %v3751 = vunpack.c.0.s8 %v3750
      %v3752 = vlaneseq
      %v3753 = vshrl.u32 %v3752, 7
      %v3754 = vsub.s32 %v3751, %v3753
      %v3755 = vrot.slane %v3747, %v3754
      %v3757 = vunpack.c.l.s4 1983009808
      %v3758 = vunpack.c.0.s8 %v3757
      %v3759 = vlaneseq
      %v3760 = vshrl.u32 %v3759, 7
      %v3761 = vsub.s32 %v3758, %v3760
      %v3762 = vrot.slane %v3748, %v3761
      %v3763 = vcombine.low %v3641, %v3651
      %v3764 = vcombine.high %v3641, %v3651
      %v3766 = vunpack.c.l.s4 1983009808
      %v3767 = vunpack.c.0.s8 %v3766
      %v3768 = vlaneseq
      %v3769 = vshrl.u32 %v3768, 7
      %v3770 = vsub.s32 %v3767, %v3769
      %v3771 = vrot.slane %v3763, %v3770
      %v3773 = vunpack.c.l.s4 1983009808
      %v3774 = vunpack.c.0.s8 %v3773
      %v3775 = vlaneseq
      %v3776 = vshrl.u32 %v3775, 7
      %v3777 = vsub.s32 %v3774, %v3776
      %v3778 = vrot.slane %v3764, %v3777
      %v3779 = vcombine.low %v3646, %v3656
      %v3780 = vcombine.high %v3646, %v3656
      %v3782 = vunpack.c.l.s4 1983009808
      %v3783 = vunpack.c.0.s8 %v3782
      %v3784 = vlaneseq
      %v3785 = vshrl.u32 %v3784, 7
      %v3786 = vsub.s32 %v3783, %v3785
      %v3787 = vrot.slane %v3779, %v3786
      %v3789 = vunpack.c.l.s4 1983009808
      %v3790 = vunpack.c.0.s8 %v3789
      %v3791 = vlaneseq
      %v3792 = vshrl.u32 %v3791, 7
      %v3793 = vsub.s32 %v3790, %v3792
      %v3794 = vrot.slane %v3780, %v3793
      %v3795 = vcombine.low %v3739, %v3755
      %v3796 = vcombine.high %v3739, %v3755
      %v3798 = vunpack.c.l.s4 1934713408
      %v3799 = vunpack.c.0.s8 %v3798
      %v3800 = vlaneseq
      %v3801 = vshrl.u32 %v3800, 7
      %v3802 = vsub.s32 %v3799, %v3801
      %v3803 = vrot.slane %v3795, %v3802
      %v3805 = vunpack.c.l.s4 1934713408
      %v3806 = vunpack.c.0.s8 %v3805
      %v3807 = vlaneseq
      %v3808 = vshrl.u32 %v3807, 7
      %v3809 = vsub.s32 %v3806, %v3808
      %v3810 = vrot.slane %v3796, %v3809
      %v3811 = vcombine.low %v3746, %v3762
      %v3812 = vcombine.high %v3746, %v3762
      %v3814 = vunpack.c.l.s4 1934713408
      %v3815 = vunpack.c.0.s8 %v3814
      %v3816 = vlaneseq
      %v3817 = vshrl.u32 %v3816, 7
      %v3818 = vsub.s32 %v3815, %v3817
      %v3819 = vrot.slane %v3811, %v3818
      %v3821 = vunpack.c.l.s4 1934713408
      %v3822 = vunpack.c.0.s8 %v3821
      %v3823 = vlaneseq
      %v3824 = vshrl.u32 %v3823, 7
      %v3825 = vsub.s32 %v3822, %v3824
      %v3826 = vrot.slane %v3812, %v3825
      %v3827 = vcombine.low %v3771, %v3787
      %v3828 = vcombine.high %v3771, %v3787
      %v3830 = vunpack.c.l.s4 1934713408
      %v3831 = vunpack.c.0.s8 %v3830
      %v3832 = vlaneseq
      %v3833 = vshrl.u32 %v3832, 7
      %v3834 = vsub.s32 %v3831, %v3833
      %v3835 = vrot.slane %v3827, %v3834
      %v3837 = vunpack.c.l.s4 1934713408
      %v3838 = vunpack.c.0.s8 %v3837
      %v3839 = vlaneseq
      %v3840 = vshrl.u32 %v3839, 7
      %v3841 = vsub.s32 %v3838, %v3840
      %v3842 = vrot.slane %v3828, %v3841
      %v3843 = vcombine.low %v3778, %v3794
      %v3844 = vcombine.high %v3778, %v3794
      %v3846 = vunpack.c.l.s4 1934713408
      %v3847 = vunpack.c.0.s8 %v3846
      %v3848 = vlaneseq
      %v3849 = vshrl.u32 %v3848, 7
      %v3850 = vsub.s32 %v3847, %v3849
      %v3851 = vrot.slane %v3843, %v3850
      %v3853 = vunpack.c.l.s4 1934713408
      %v3854 = vunpack.c.0.s8 %v3853
      %v3855 = vlaneseq
      %v3856 = vshrl.u32 %v3855, 7
      %v3857 = vsub.s32 %v3854, %v3856
      %v3858 = vrot.slane %v3844, %v3857
      %v3859 = vcombine.low %v3803, %v3835
      %v3860 = vcombine.high %v3803, %v3835
      %v3861 = vcombine.low %v3810, %v3842
      %v3862 = vcombine.high %v3810, %v3842
      %v3863 = vcombine.low %v3819, %v3851
      %v3864 = vcombine.high %v3819, %v3851
      %v3865 = vcombine.low %v3826, %v3858
      %v3866 = vcombine.high %v3826, %v3858
      %v3867 = vcombine.low %v3661, %v3671
      %v3868 = vcombine.high %v3661, %v3671
      %v3870 = vunpack.c.l.s4 1983009808
      %v3871 = vunpack.c.0.s8 %v3870
      %v3872 = vlaneseq
      %v3873 = vshrl.u32 %v3872, 7
      %v3874 = vsub.s32 %v3871, %v3873
      %v3875 = vrot.slane %v3867, %v3874
      %v3877 = vunpack.c.l.s4 1983009808
      %v3878 = vunpack.c.0.s8 %v3877
      %v3879 = vlaneseq
      %v3880 = vshrl.u32 %v3879, 7
      %v3881 = vsub.s32 %v3878, %v3880
      %v3882 = vrot.slane %v3868, %v3881
      %v3883 = vcombine.low %v3666, %v3676
      %v3884 = vcombine.high %v3666, %v3676
      %v3886 = vunpack.c.l.s4 1983009808
      %v3887 = vunpack.c.0.s8 %v3886
      %v3888 = vlaneseq
      %v3889 = vshrl.u32 %v3888, 7
      %v3890 = vsub.s32 %v3887, %v3889
      %v3891 = vrot.slane %v3883, %v3890
      %v3893 = vunpack.c.l.s4 1983009808
      %v3894 = vunpack.c.0.s8 %v3893
      %v3895 = vlaneseq
      %v3896 = vshrl.u32 %v3895, 7
      %v3897 = vsub.s32 %v3894, %v3896
      %v3898 = vrot.slane %v3884, %v3897
      %v3899 = vcombine.low %v3681, %v3691
      %v3900 = vcombine.high %v3681, %v3691
      %v3902 = vunpack.c.l.s4 1983009808
      %v3903 = vunpack.c.0.s8 %v3902
      %v3904 = vlaneseq
      %v3905 = vshrl.u32 %v3904, 7
      %v3906 = vsub.s32 %v3903, %v3905
      %v3907 = vrot.slane %v3899, %v3906
      %v3909 = vunpack.c.l.s4 1983009808
      %v3910 = vunpack.c.0.s8 %v3909
      %v3911 = vlaneseq
      %v3912 = vshrl.u32 %v3911, 7
      %v3913 = vsub.s32 %v3910, %v3912
      %v3914 = vrot.slane %v3900, %v3913
      %v3915 = vcombine.low %v3686, %v3696
      %v3916 = vcombine.high %v3686, %v3696
      %v3918 = vunpack.c.l.s4 1983009808
      %v3919 = vunpack.c.0.s8 %v3918
      %v3920 = vlaneseq
      %v3921 = vshrl.u32 %v3920, 7
      %v3922 = vsub.s32 %v3919, %v3921
      %v3923 = vrot.slane %v3915, %v3922
      %v3925 = vunpack.c.l.s4 1983009808
      %v3926 = vunpack.c.0.s8 %v3925
      %v3927 = vlaneseq
      %v3928 = vshrl.u32 %v3927, 7
      %v3929 = vsub.s32 %v3926, %v3928
      %v3930 = vrot.slane %v3916, %v3929
      %v3931 = vcombine.low %v3875, %v3891
      %v3932 = vcombine.high %v3875, %v3891
      %v3934 = vunpack.c.l.s4 1934713408
      %v3935 = vunpack.c.0.s8 %v3934
      %v3936 = vlaneseq
      %v3937 = vshrl.u32 %v3936, 7
      %v3938 = vsub.s32 %v3935, %v3937
      %v3939 = vrot.slane %v3931, %v3938
      %v3941 = vunpack.c.l.s4 1934713408
      %v3942 = vunpack.c.0.s8 %v3941
      %v3943 = vlaneseq
      %v3944 = vshrl.u32 %v3943, 7
      %v3945 = vsub.s32 %v3942, %v3944
      %v3946 = vrot.slane %v3932, %v3945
      %v3947 = vcombine.low %v3882, %v3898
      %v3948 = vcombine.high %v3882, %v3898
      %v3950 = vunpack.c.l.s4 1934713408
      %v3951 = vunpack.c.0.s8 %v3950
      %v3952 = vlaneseq
      %v3953 = vshrl.u32 %v3952, 7
      %v3954 = vsub.s32 %v3951, %v3953
      %v3955 = vrot.slane %v3947, %v3954
      %v3957 = vunpack.c.l.s4 1934713408
      %v3958 = vunpack.c.0.s8 %v3957
      %v3959 = vlaneseq
      %v3960 = vshrl.u32 %v3959, 7
      %v3961 = vsub.s32 %v3958, %v3960
      %v3962 = vrot.slane %v3948, %v3961
      %v3963 = vcombine.low %v3907, %v3923
      %v3964 = vcombine.high %v3907, %v3923
      %v3966 = vunpack.c.l.s4 1934713408
      %v3967 = vunpack.c.0.s8 %v3966
      %v3968 = vlaneseq
      %v3969 = vshrl.u32 %v3968, 7
      %v3970 = vsub.s32 %v3967, %v3969
      %v3971 = vrot.slane %v3963, %v3970
      %v3973 = vunpack.c.l.s4 1934713408
      %v3974 = vunpack.c.0.s8 %v3973
      %v3975 = vlaneseq
      %v3976 = vshrl.u32 %v3975, 7
      %v3977 = vsub.s32 %v3974, %v3976
      %v3978 = vrot.slane %v3964, %v3977
      %v3979 = vcombine.low %v3914, %v3930
      %v3980 = vcombine.high %v3914, %v3930
      %v3982 = vunpack.c.l.s4 1934713408
      %v3983 = vunpack.c.0.s8 %v3982
      %v3984 = vlaneseq
      %v3985 = vshrl.u32 %v3984, 7
      %v3986 = vsub.s32 %v3983, %v3985
      %v3987 = vrot.slane %v3979, %v3986
      %v3989 = vunpack.c.l.s4 1934713408
      %v3990 = vunpack.c.0.s8 %v3989
      %v3991 = vlaneseq
      %v3992 = vshrl.u32 %v3991, 7
      %v3993 = vsub.s32 %v3990, %v3992
      %v3994 = vrot.slane %v3980, %v3993
      %v3995 = vcombine.low %v3939, %v3971
      %v3996 = vcombine.high %v3939, %v3971
      %v3997 = vcombine.low %v3946, %v3978
      %v3998 = vcombine.high %v3946, %v3978
      %v3999 = vcombine.low %v3955, %v3987
      %v4000 = vcombine.high %v3955, %v3987
      %v4001 = vcombine.low %v3962, %v3994
      %v4002 = vcombine.high %v3962, %v3994
      %v4003 = vcombine.low %v3623, %v3633
      %v4004 = vcombine.high %v3623, %v3633
      %v4006 = vunpack.c.l.s4 1983009808
      %v4007 = vunpack.c.0.s8 %v4006
      %v4008 = vlaneseq
      %v4009 = vshrl.u32 %v4008, 7
      %v4010 = vsub.s32 %v4007, %v4009
      %v4011 = vrot.slane %v4003, %v4010
      %v4013 = vunpack.c.l.s4 1983009808
      %v4014 = vunpack.c.0.s8 %v4013
      %v4015 = vlaneseq
      %v4016 = vshrl.u32 %v4015, 7
      %v4017 = vsub.s32 %v4014, %v4016
      %v4018 = vrot.slane %v4004, %v4017
      %v4019 = vcombine.low %v3628, %v3638
      %v4020 = vcombine.high %v3628, %v3638
      %v4022 = vunpack.c.l.s4 1983009808
      %v4023 = vunpack.c.0.s8 %v4022
      %v4024 = vlaneseq
      %v4025 = vshrl.u32 %v4024, 7
      %v4026 = vsub.s32 %v4023, %v4025
      %v4027 = vrot.slane %v4019, %v4026
      %v4029 = vunpack.c.l.s4 1983009808
      %v4030 = vunpack.c.0.s8 %v4029
      %v4031 = vlaneseq
      %v4032 = vshrl.u32 %v4031, 7
      %v4033 = vsub.s32 %v4030, %v4032
      %v4034 = vrot.slane %v4020, %v4033
      %v4035 = vcombine.low %v3643, %v3653
      %v4036 = vcombine.high %v3643, %v3653
      %v4038 = vunpack.c.l.s4 1983009808
      %v4039 = vunpack.c.0.s8 %v4038
      %v4040 = vlaneseq
      %v4041 = vshrl.u32 %v4040, 7
      %v4042 = vsub.s32 %v4039, %v4041
      %v4043 = vrot.slane %v4035, %v4042
      %v4045 = vunpack.c.l.s4 1983009808
      %v4046 = vunpack.c.0.s8 %v4045
      %v4047 = vlaneseq
      %v4048 = vshrl.u32 %v4047, 7
      %v4049 = vsub.s32 %v4046, %v4048
      %v4050 = vrot.slane %v4036, %v4049
      %v4051 = vcombine.low %v3648, %v3658
      %v4052 = vcombine.high %v3648, %v3658
      %v4054 = vunpack.c.l.s4 1983009808
      %v4055 = vunpack.c.0.s8 %v4054
      %v4056 = vlaneseq
      %v4057 = vshrl.u32 %v4056, 7
      %v4058 = vsub.s32 %v4055, %v4057
      %v4059 = vrot.slane %v4051, %v4058
      %v4061 = vunpack.c.l.s4 1983009808
      %v4062 = vunpack.c.0.s8 %v4061
      %v4063 = vlaneseq
      %v4064 = vshrl.u32 %v4063, 7
      %v4065 = vsub.s32 %v4062, %v4064
      %v4066 = vrot.slane %v4052, %v4065
      %v4067 = vcombine.low %v4011, %v4027
      %v4068 = vcombine.high %v4011, %v4027
      %v4070 = vunpack.c.l.s4 1934713408
      %v4071 = vunpack.c.0.s8 %v4070
      %v4072 = vlaneseq
      %v4073 = vshrl.u32 %v4072, 7
      %v4074 = vsub.s32 %v4071, %v4073
      %v4075 = vrot.slane %v4067, %v4074
      %v4077 = vunpack.c.l.s4 1934713408
      %v4078 = vunpack.c.0.s8 %v4077
      %v4079 = vlaneseq
      %v4080 = vshrl.u32 %v4079, 7
      %v4081 = vsub.s32 %v4078, %v4080
      %v4082 = vrot.slane %v4068, %v4081
      %v4083 = vcombine.low %v4018, %v4034
      %v4084 = vcombine.high %v4018, %v4034
      %v4086 = vunpack.c.l.s4 1934713408
      %v4087 = vunpack.c.0.s8 %v4086
      %v4088 = vlaneseq
      %v4089 = vshrl.u32 %v4088, 7
      %v4090 = vsub.s32 %v4087, %v4089
      %v4091 = vrot.slane %v4083, %v4090
      %v4093 = vunpack.c.l.s4 1934713408
      %v4094 = vunpack.c.0.s8 %v4093
      %v4095 = vlaneseq
      %v4096 = vshrl.u32 %v4095, 7
      %v4097 = vsub.s32 %v4094, %v4096
      %v4098 = vrot.slane %v4084, %v4097
      %v4099 = vcombine.low %v4043, %v4059
      %v4100 = vcombine.high %v4043, %v4059
      %v4102 = vunpack.c.l.s4 1934713408
      %v4103 = vunpack.c.0.s8 %v4102
      %v4104 = vlaneseq
      %v4105 = vshrl.u32 %v4104, 7
      %v4106 = vsub.s32 %v4103, %v4105
      %v4107 = vrot.slane %v4099, %v4106
      %v4109 = vunpack.c.l.s4 1934713408
      %v4110 = vunpack.c.0.s8 %v4109
      %v4111 = vlaneseq
      %v4112 = vshrl.u32 %v4111, 7
      %v4113 = vsub.s32 %v4110, %v4112
      %v4114 = vrot.slane %v4100, %v4113
      %v4115 = vcombine.low %v4050, %v4066
      %v4116 = vcombine.high %v4050, %v4066
      %v4118 = vunpack.c.l.s4 1934713408
      %v4119 = vunpack.c.0.s8 %v4118
      %v4120 = vlaneseq
      %v4121 = vshrl.u32 %v4120, 7
      %v4122 = vsub.s32 %v4119, %v4121
      %v4123 = vrot.slane %v4115, %v4122
      %v4125 = vunpack.c.l.s4 1934713408
      %v4126 = vunpack.c.0.s8 %v4125
      %v4127 = vlaneseq
      %v4128 = vshrl.u32 %v4127, 7
      %v4129 = vsub.s32 %v4126, %v4128
      %v4130 = vrot.slane %v4116, %v4129
      %v4131 = vcombine.low %v4075, %v4107
      %v4132 = vcombine.high %v4075, %v4107
      %v4133 = vcombine.low %v4082, %v4114
      %v4134 = vcombine.high %v4082, %v4114
      %v4135 = vcombine.low %v4091, %v4123
      %v4136 = vcombine.high %v4091, %v4123
      %v4137 = vcombine.low %v4098, %v4130
      %v4138 = vcombine.high %v4098, %v4130
      %v4139 = vcombine.low %v3663, %v3673
      %v4140 = vcombine.high %v3663, %v3673
      %v4142 = vunpack.c.l.s4 1983009808
      %v4143 = vunpack.c.0.s8 %v4142
      %v4144 = vlaneseq
      %v4145 = vshrl.u32 %v4144, 7
      %v4146 = vsub.s32 %v4143, %v4145
      %v4147 = vrot.slane %v4139, %v4146
      %v4149 = vunpack.c.l.s4 1983009808
      %v4150 = vunpack.c.0.s8 %v4149
      %v4151 = vlaneseq
      %v4152 = vshrl.u32 %v4151, 7
      %v4153 = vsub.s32 %v4150, %v4152
      %v4154 = vrot.slane %v4140, %v4153
      %v4155 = vcombine.low %v3668, %v3678
      %v4156 = vcombine.high %v3668, %v3678
      %v4158 = vunpack.c.l.s4 1983009808
      %v4159 = vunpack.c.0.s8 %v4158
      %v4160 = vlaneseq
      %v4161 = vshrl.u32 %v4160, 7
      %v4162 = vsub.s32 %v4159, %v4161
      %v4163 = vrot.slane %v4155, %v4162
      %v4165 = vunpack.c.l.s4 1983009808
      %v4166 = vunpack.c.0.s8 %v4165
      %v4167 = vlaneseq
      %v4168 = vshrl.u32 %v4167, 7
      %v4169 = vsub.s32 %v4166, %v4168
      %v4170 = vrot.slane %v4156, %v4169
      %v4171 = vcombine.low %v3683, %v3693
      %v4172 = vcombine.high %v3683, %v3693
      %v4174 = vunpack.c.l.s4 1983009808
      %v4175 = vunpack.c.0.s8 %v4174
      %v4176 = vlaneseq
      %v4177 = vshrl.u32 %v4176, 7
      %v4178 = vsub.s32 %v4175, %v4177
      %v4179 = vrot.slane %v4171, %v4178
      %v4181 = vunpack.c.l.s4 1983009808
      %v4182 = vunpack.c.0.s8 %v4181
      %v4183 = vlaneseq
      %v4184 = vshrl.u32 %v4183, 7
      %v4185 = vsub.s32 %v4182, %v4184
      %v4186 = vrot.slane %v4172, %v4185
      %v4187 = vcombine.low %v3688, %v3698
      %v4188 = vcombine.high %v3688, %v3698
      %v4190 = vunpack.c.l.s4 1983009808
      %v4191 = vunpack.c.0.s8 %v4190
      %v4192 = vlaneseq
      %v4193 = vshrl.u32 %v4192, 7
      %v4194 = vsub.s32 %v4191, %v4193
      %v4195 = vrot.slane %v4187, %v4194
      %v4197 = vunpack.c.l.s4 1983009808
      %v4198 = vunpack.c.0.s8 %v4197
      %v4199 = vlaneseq
      %v4200 = vshrl.u32 %v4199, 7
      %v4201 = vsub.s32 %v4198, %v4200
      %v4202 = vrot.slane %v4188, %v4201
      %v4203 = vcombine.low %v4147, %v4163
      %v4204 = vcombine.high %v4147, %v4163
      %v4206 = vunpack.c.l.s4 1934713408
      %v4207 = vunpack.c.0.s8 %v4206
      %v4208 = vlaneseq
      %v4209 = vshrl.u32 %v4208, 7
      %v4210 = vsub.s32 %v4207, %v4209
      %v4211 = vrot.slane %v4203, %v4210
      %v4213 = vunpack.c.l.s4 1934713408
      %v4214 = vunpack.c.0.s8 %v4213
      %v4215 = vlaneseq
      %v4216 = vshrl.u32 %v4215, 7
      %v4217 = vsub.s32 %v4214, %v4216
      %v4218 = vrot.slane %v4204, %v4217
      %v4219 = vcombine.low %v4154, %v4170
      %v4220 = vcombine.high %v4154, %v4170
      %v4222 = vunpack.c.l.s4 1934713408
      %v4223 = vunpack.c.0.s8 %v4222
      %v4224 = vlaneseq
      %v4225 = vshrl.u32 %v4224, 7
      %v4226 = vsub.s32 %v4223, %v4225
      %v4227 = vrot.slane %v4219, %v4226
      %v4229 = vunpack.c.l.s4 1934713408
      %v4230 = vunpack.c.0.s8 %v4229
      %v4231 = vlaneseq
      %v4232 = vshrl.u32 %v4231, 7
      %v4233 = vsub.s32 %v4230, %v4232
      %v4234 = vrot.slane %v4220, %v4233
      %v4235 = vcombine.low %v4179, %v4195
      %v4236 = vcombine.high %v4179, %v4195
      %v4238 = vunpack.c.l.s4 1934713408
      %v4239 = vunpack.c.0.s8 %v4238
      %v4240 = vlaneseq
      %v4241 = vshrl.u32 %v4240, 7
      %v4242 = vsub.s32 %v4239, %v4241
      %v4243 = vrot.slane %v4235, %v4242
      %v4245 = vunpack.c.l.s4 1934713408
      %v4246 = vunpack.c.0.s8 %v4245
      %v4247 = vlaneseq
      %v4248 = vshrl.u32 %v4247, 7
      %v4249 = vsub.s32 %v4246, %v4248
      %v4250 = vrot.slane %v4236, %v4249
      %v4251 = vcombine.low %v4186, %v4202
      %v4252 = vcombine.high %v4186, %v4202
      %v4254 = vunpack.c.l.s4 1934713408
      %v4255 = vunpack.c.0.s8 %v4254
      %v4256 = vlaneseq
      %v4257 = vshrl.u32 %v4256, 7
      %v4258 = vsub.s32 %v4255, %v4257
      %v4259 = vrot.slane %v4251, %v4258
      %v4261 = vunpack.c.l.s4 1934713408
      %v4262 = vunpack.c.0.s8 %v4261
      %v4263 = vlaneseq
      %v4264 = vshrl.u32 %v4263, 7
      %v4265 = vsub.s32 %v4262, %v4264
      %v4266 = vrot.slane %v4252, %v4265
      %v4267 = vcombine.low %v4211, %v4243
      %v4268 = vcombine.high %v4211, %v4243
      %v4269 = vcombine.low %v4218, %v4250
      %v4270 = vcombine.high %v4218, %v4250
      %v4271 = vcombine.low %v4227, %v4259
      %v4272 = vcombine.high %v4227, %v4259
      %v4273 = vcombine.low %v4234, %v4266
      %v4274 = vcombine.high %v4234, %v4266
      %4277 = vrot.lane.b32.xlu0 %v3860, 16
      %v4278 = vpop.permute.xlu0 %4277
      %4279 = vrot.lane.b32.xlu0 %v3996, 16
      %v4280 = vpop.permute.xlu0 %4279
      %4285 = vrot.lane.b32.xlu0 %v3861, 32
      %v4286 = vpop.permute.xlu0 %4285
      %4287 = vrot.lane.b32.xlu0 %v3997, 32
      %v4288 = vpop.permute.xlu0 %4287
      %4293 = vrot.lane.b32.xlu0 %v3862, 48
      %v4294 = vpop.permute.xlu0 %4293
      %4295 = vrot.lane.b32.xlu0 %v3998, 48
      %v4296 = vpop.permute.xlu0 %4295
      %4301 = vrot.lane.b32.xlu0 %v3863, 64
      %v4302 = vpop.permute.xlu0 %4301
      %4303 = vrot.lane.b32.xlu0 %v3999, 64
      %v4304 = vpop.permute.xlu0 %4303
      %4309 = vrot.lane.b32.xlu0 %v3864, 80
      %v4310 = vpop.permute.xlu0 %4309
      %4311 = vrot.lane.b32.xlu0 %v4000, 80
      %v4312 = vpop.permute.xlu0 %4311
      %4317 = vrot.lane.b32.xlu0 %v3865, 96
      %v4318 = vpop.permute.xlu0 %4317
      %4319 = vrot.lane.b32.xlu0 %v4001, 96
      %v4320 = vpop.permute.xlu0 %4319
      %4325 = vrot.lane.b32.xlu0 %v3866, 112
      %v4326 = vpop.permute.xlu0 %4325
      %4327 = vrot.lane.b32.xlu0 %v4002, 112
      %v4328 = vpop.permute.xlu0 %4327
      %4333 = vrot.lane.b32.xlu0 %v4132, 16
      %v4334 = vpop.permute.xlu0 %4333
      %4335 = vrot.lane.b32.xlu0 %v4268, 16
      %v4336 = vpop.permute.xlu0 %4335
      %4341 = vrot.lane.b32.xlu0 %v4133, 32
      %v4342 = vpop.permute.xlu0 %4341
      %4343 = vrot.lane.b32.xlu0 %v4269, 32
      %v4344 = vpop.permute.xlu0 %4343
      %4349 = vrot.lane.b32.xlu0 %v4134, 48
      %v4350 = vpop.permute.xlu0 %4349
      %4351 = vrot.lane.b32.xlu0 %v4270, 48
      %v4352 = vpop.permute.xlu0 %4351
      %4357 = vrot.lane.b32.xlu0 %v4135, 64
      %v4358 = vpop.permute.xlu0 %4357
      %4359 = vrot.lane.b32.xlu0 %v4271, 64
      %v4360 = vpop.permute.xlu0 %4359
      %4365 = vrot.lane.b32.xlu0 %v4136, 80
      %v4366 = vpop.permute.xlu0 %4365
      %4367 = vrot.lane.b32.xlu0 %v4272, 80
      %v4368 = vpop.permute.xlu0 %4367
      %4373 = vrot.lane.b32.xlu0 %v4137, 96
      %v4374 = vpop.permute.xlu0 %4373
      %4375 = vrot.lane.b32.xlu0 %v4273, 96
      %v4376 = vpop.permute.xlu0 %4375
      %4381 = vrot.lane.b32.xlu0 %v4138, 112
      %v4382 = vpop.permute.xlu0 %4381
      %4383 = vrot.lane.b32.xlu0 %v4274, 112
      %v4384 = vpop.permute.xlu0 %4383
      %v4387 = vsel %vm1975, %v3859, %v4278
      %v4388 = vsel %vm1975, %v3995, %v4280
      %v4389 = vsel %vm1978, %v4387, %v4286
      %v4390 = vsel %vm1978, %v4388, %v4288
      %v4391 = vsel %vm1981, %v4389, %v4294
      %v4392 = vsel %vm1981, %v4390, %v4296
      %v4393 = vsel %vm1984, %v4391, %v4302
      %v4394 = vsel %vm1984, %v4392, %v4304
      %v4395 = vsel %vm1987, %v4393, %v4310
      %v4396 = vsel %vm1987, %v4394, %v4312
      %v4397 = vsel %vm1990, %v4395, %v4318
      %v4398 = vsel %vm1990, %v4396, %v4320
      %v4399 = vsel %vm1993, %v4397, %v4326
      %v4400 = vsel %vm1993, %v4398, %v4328
      %v4401 = vsel %vm1975, %v4131, %v4334
      %v4402 = vsel %vm1975, %v4267, %v4336
      %v4403 = vsel %vm1978, %v4401, %v4342
      %v4404 = vsel %vm1978, %v4402, %v4344
      %v4405 = vsel %vm1981, %v4403, %v4350
      %v4406 = vsel %vm1981, %v4404, %v4352
      %v4407 = vsel %vm1984, %v4405, %v4358
      %v4408 = vsel %vm1984, %v4406, %v4360
      %v4409 = vsel %vm1987, %v4407, %v4366
      %v4410 = vsel %vm1987, %v4408, %v4368
      %v4411 = vsel %vm1990, %v4409, %v4374
      %v4412 = vsel %vm1990, %v4410, %v4376
      %v4413 = vsel %vm1993, %v4411, %v4382
      %v4414 = vsel %vm1993, %v4412, %v4384
      %4415 = vrot.lane.b32.xlu0 %v3621, 127
      %v4416 = vpop.permute.xlu0 %4415
      %4417 = vrot.lane.b32.xlu0 %v3623, 127
      %v4418 = vpop.permute.xlu0 %4417
      %4419 = vrot.lane.b32.xlu0 %v3626, 127
      %v4420 = vpop.permute.xlu0 %4419
      %4421 = vrot.lane.b32.xlu0 %v3628, 127
      %v4422 = vpop.permute.xlu0 %4421
      %4423 = vrot.lane.b32.xlu0 %v3631, 127
      %v4424 = vpop.permute.xlu0 %4423
      %4425 = vrot.lane.b32.xlu0 %v3633, 127
      %v4426 = vpop.permute.xlu0 %4425
      %4427 = vrot.lane.b32.xlu0 %v3636, 127
      %v4428 = vpop.permute.xlu0 %4427
      %4429 = vrot.lane.b32.xlu0 %v3638, 127
      %v4430 = vpop.permute.xlu0 %4429
      %4431 = vrot.lane.b32.xlu0 %v3641, 127
      %v4432 = vpop.permute.xlu0 %4431
      %4433 = vrot.lane.b32.xlu0 %v3643, 127
      %v4434 = vpop.permute.xlu0 %4433
      %4435 = vrot.lane.b32.xlu0 %v3646, 127
      %v4436 = vpop.permute.xlu0 %4435
      %4437 = vrot.lane.b32.xlu0 %v3648, 127
      %v4438 = vpop.permute.xlu0 %4437
      %4439 = vrot.lane.b32.xlu0 %v3651, 127
      %v4440 = vpop.permute.xlu0 %4439
      %4441 = vrot.lane.b32.xlu0 %v3653, 127
      %v4442 = vpop.permute.xlu0 %4441
      %4443 = vrot.lane.b32.xlu0 %v3656, 127
      %v4444 = vpop.permute.xlu0 %4443
      %4445 = vrot.lane.b32.xlu0 %v3658, 127
      %v4446 = vpop.permute.xlu0 %4445
      %4447 = vrot.lane.b32.xlu0 %v3661, 127
      %v4448 = vpop.permute.xlu0 %4447
      %4449 = vrot.lane.b32.xlu0 %v3663, 127
      %v4450 = vpop.permute.xlu0 %4449
      %4451 = vrot.lane.b32.xlu0 %v3666, 127
      %v4452 = vpop.permute.xlu0 %4451
      %4453 = vrot.lane.b32.xlu0 %v3668, 127
      %v4454 = vpop.permute.xlu0 %4453
      %4455 = vrot.lane.b32.xlu0 %v3671, 127
      %v4456 = vpop.permute.xlu0 %4455
      %4457 = vrot.lane.b32.xlu0 %v3673, 127
      %v4458 = vpop.permute.xlu0 %4457
      %4459 = vrot.lane.b32.xlu0 %v3676, 127
      %v4460 = vpop.permute.xlu0 %4459
      %4461 = vrot.lane.b32.xlu0 %v3678, 127
      %v4462 = vpop.permute.xlu0 %4461
      %4463 = vrot.lane.b32.xlu0 %v3681, 127
      %v4464 = vpop.permute.xlu0 %4463
      %4465 = vrot.lane.b32.xlu0 %v3683, 127
      %v4466 = vpop.permute.xlu0 %4465
      %4467 = vrot.lane.b32.xlu0 %v3686, 127
      %v4468 = vpop.permute.xlu0 %4467
      %4469 = vrot.lane.b32.xlu0 %v3688, 127
      %v4470 = vpop.permute.xlu0 %4469
      %4471 = vrot.lane.b32.xlu0 %v3691, 127
      %v4472 = vpop.permute.xlu0 %4471
      %4473 = vrot.lane.b32.xlu0 %v3693, 127
      %v4474 = vpop.permute.xlu0 %4473
      %4475 = vrot.lane.b32.xlu0 %v3696, 127
      %v4476 = vpop.permute.xlu0 %4475
      %4477 = vrot.lane.b32.xlu0 %v3698, 127
      %v4478 = vpop.permute.xlu0 %4477
      %v4511 = vcombine.low %v4416, %v4424
      %v4512 = vcombine.high %v4416, %v4424
      %v4514 = vunpack.c.l.s4 1983009808
      %v4515 = vunpack.c.0.s8 %v4514
      %v4516 = vlaneseq
      %v4517 = vshrl.u32 %v4516, 7
      %v4518 = vsub.s32 %v4515, %v4517
      %v4519 = vrot.slane %v4511, %v4518
      %v4521 = vunpack.c.l.s4 1983009808
      %v4522 = vunpack.c.0.s8 %v4521
      %v4523 = vlaneseq
      %v4524 = vshrl.u32 %v4523, 7
      %v4525 = vsub.s32 %v4522, %v4524
      %v4526 = vrot.slane %v4512, %v4525
      %v4527 = vcombine.low %v4420, %v4428
      %v4528 = vcombine.high %v4420, %v4428
      %v4530 = vunpack.c.l.s4 1983009808
      %v4531 = vunpack.c.0.s8 %v4530
      %v4532 = vlaneseq
      %v4533 = vshrl.u32 %v4532, 7
      %v4534 = vsub.s32 %v4531, %v4533
      %v4535 = vrot.slane %v4527, %v4534
      %v4537 = vunpack.c.l.s4 1983009808
      %v4538 = vunpack.c.0.s8 %v4537
      %v4539 = vlaneseq
      %v4540 = vshrl.u32 %v4539, 7
      %v4541 = vsub.s32 %v4538, %v4540
      %v4542 = vrot.slane %v4528, %v4541
      %v4543 = vcombine.low %v4432, %v4440
      %v4544 = vcombine.high %v4432, %v4440
      %v4546 = vunpack.c.l.s4 1983009808
      %v4547 = vunpack.c.0.s8 %v4546
      %v4548 = vlaneseq
      %v4549 = vshrl.u32 %v4548, 7
      %v4550 = vsub.s32 %v4547, %v4549
      %v4551 = vrot.slane %v4543, %v4550
      %v4553 = vunpack.c.l.s4 1983009808
      %v4554 = vunpack.c.0.s8 %v4553
      %v4555 = vlaneseq
      %v4556 = vshrl.u32 %v4555, 7
      %v4557 = vsub.s32 %v4554, %v4556
      %v4558 = vrot.slane %v4544, %v4557
      %v4559 = vcombine.low %v4436, %v4444
      %v4560 = vcombine.high %v4436, %v4444
      %v4562 = vunpack.c.l.s4 1983009808
      %v4563 = vunpack.c.0.s8 %v4562
      %v4564 = vlaneseq
      %v4565 = vshrl.u32 %v4564, 7
      %v4566 = vsub.s32 %v4563, %v4565
      %v4567 = vrot.slane %v4559, %v4566
      %v4569 = vunpack.c.l.s4 1983009808
      %v4570 = vunpack.c.0.s8 %v4569
      %v4571 = vlaneseq
      %v4572 = vshrl.u32 %v4571, 7
      %v4573 = vsub.s32 %v4570, %v4572
      %v4574 = vrot.slane %v4560, %v4573
      %v4575 = vcombine.low %v4519, %v4535
      %v4576 = vcombine.high %v4519, %v4535
      %v4578 = vunpack.c.l.s4 1934713408
      %v4579 = vunpack.c.0.s8 %v4578
      %v4580 = vlaneseq
      %v4581 = vshrl.u32 %v4580, 7
      %v4582 = vsub.s32 %v4579, %v4581
      %v4583 = vrot.slane %v4575, %v4582
      %v4585 = vunpack.c.l.s4 1934713408
      %v4586 = vunpack.c.0.s8 %v4585
      %v4587 = vlaneseq
      %v4588 = vshrl.u32 %v4587, 7
      %v4589 = vsub.s32 %v4586, %v4588
      %v4590 = vrot.slane %v4576, %v4589
      %v4591 = vcombine.low %v4526, %v4542
      %v4592 = vcombine.high %v4526, %v4542
      %v4594 = vunpack.c.l.s4 1934713408
      %v4595 = vunpack.c.0.s8 %v4594
      %v4596 = vlaneseq
      %v4597 = vshrl.u32 %v4596, 7
      %v4598 = vsub.s32 %v4595, %v4597
      %v4599 = vrot.slane %v4591, %v4598
      %v4601 = vunpack.c.l.s4 1934713408
      %v4602 = vunpack.c.0.s8 %v4601
      %v4603 = vlaneseq
      %v4604 = vshrl.u32 %v4603, 7
      %v4605 = vsub.s32 %v4602, %v4604
      %v4606 = vrot.slane %v4592, %v4605
      %v4607 = vcombine.low %v4551, %v4567
      %v4608 = vcombine.high %v4551, %v4567
      %v4610 = vunpack.c.l.s4 1934713408
      %v4611 = vunpack.c.0.s8 %v4610
      %v4612 = vlaneseq
      %v4613 = vshrl.u32 %v4612, 7
      %v4614 = vsub.s32 %v4611, %v4613
      %v4615 = vrot.slane %v4607, %v4614
      %v4617 = vunpack.c.l.s4 1934713408
      %v4618 = vunpack.c.0.s8 %v4617
      %v4619 = vlaneseq
      %v4620 = vshrl.u32 %v4619, 7
      %v4621 = vsub.s32 %v4618, %v4620
      %v4622 = vrot.slane %v4608, %v4621
      %v4623 = vcombine.low %v4558, %v4574
      %v4624 = vcombine.high %v4558, %v4574
      %v4626 = vunpack.c.l.s4 1934713408
      %v4627 = vunpack.c.0.s8 %v4626
      %v4628 = vlaneseq
      %v4629 = vshrl.u32 %v4628, 7
      %v4630 = vsub.s32 %v4627, %v4629
      %v4631 = vrot.slane %v4623, %v4630
      %v4633 = vunpack.c.l.s4 1934713408
      %v4634 = vunpack.c.0.s8 %v4633
      %v4635 = vlaneseq
      %v4636 = vshrl.u32 %v4635, 7
      %v4637 = vsub.s32 %v4634, %v4636
      %v4638 = vrot.slane %v4624, %v4637
      %v4639 = vcombine.low %v4583, %v4615
      %v4640 = vcombine.high %v4583, %v4615
      %v4641 = vcombine.low %v4590, %v4622
      %v4642 = vcombine.high %v4590, %v4622
      %v4643 = vcombine.low %v4599, %v4631
      %v4644 = vcombine.high %v4599, %v4631
      %v4645 = vcombine.low %v4606, %v4638
      %v4646 = vcombine.high %v4606, %v4638
      %v4647 = vcombine.low %v4448, %v4456
      %v4648 = vcombine.high %v4448, %v4456
      %v4650 = vunpack.c.l.s4 1983009808
      %v4651 = vunpack.c.0.s8 %v4650
      %v4652 = vlaneseq
      %v4653 = vshrl.u32 %v4652, 7
      %v4654 = vsub.s32 %v4651, %v4653
      %v4655 = vrot.slane %v4647, %v4654
      %v4657 = vunpack.c.l.s4 1983009808
      %v4658 = vunpack.c.0.s8 %v4657
      %v4659 = vlaneseq
      %v4660 = vshrl.u32 %v4659, 7
      %v4661 = vsub.s32 %v4658, %v4660
      %v4662 = vrot.slane %v4648, %v4661
      %v4663 = vcombine.low %v4452, %v4460
      %v4664 = vcombine.high %v4452, %v4460
      %v4666 = vunpack.c.l.s4 1983009808
      %v4667 = vunpack.c.0.s8 %v4666
      %v4668 = vlaneseq
      %v4669 = vshrl.u32 %v4668, 7
      %v4670 = vsub.s32 %v4667, %v4669
      %v4671 = vrot.slane %v4663, %v4670
      %v4673 = vunpack.c.l.s4 1983009808
      %v4674 = vunpack.c.0.s8 %v4673
      %v4675 = vlaneseq
      %v4676 = vshrl.u32 %v4675, 7
      %v4677 = vsub.s32 %v4674, %v4676
      %v4678 = vrot.slane %v4664, %v4677
      %v4679 = vcombine.low %v4464, %v4472
      %v4680 = vcombine.high %v4464, %v4472
      %v4682 = vunpack.c.l.s4 1983009808
      %v4683 = vunpack.c.0.s8 %v4682
      %v4684 = vlaneseq
      %v4685 = vshrl.u32 %v4684, 7
      %v4686 = vsub.s32 %v4683, %v4685
      %v4687 = vrot.slane %v4679, %v4686
      %v4689 = vunpack.c.l.s4 1983009808
      %v4690 = vunpack.c.0.s8 %v4689
      %v4691 = vlaneseq
      %v4692 = vshrl.u32 %v4691, 7
      %v4693 = vsub.s32 %v4690, %v4692
      %v4694 = vrot.slane %v4680, %v4693
      %v4695 = vcombine.low %v4468, %v4476
      %v4696 = vcombine.high %v4468, %v4476
      %v4698 = vunpack.c.l.s4 1983009808
      %v4699 = vunpack.c.0.s8 %v4698
      %v4700 = vlaneseq
      %v4701 = vshrl.u32 %v4700, 7
      %v4702 = vsub.s32 %v4699, %v4701
      %v4703 = vrot.slane %v4695, %v4702
      %v4705 = vunpack.c.l.s4 1983009808
      %v4706 = vunpack.c.0.s8 %v4705
      %v4707 = vlaneseq
      %v4708 = vshrl.u32 %v4707, 7
      %v4709 = vsub.s32 %v4706, %v4708
      %v4710 = vrot.slane %v4696, %v4709
      %v4711 = vcombine.low %v4655, %v4671
      %v4712 = vcombine.high %v4655, %v4671
      %v4714 = vunpack.c.l.s4 1934713408
      %v4715 = vunpack.c.0.s8 %v4714
      %v4716 = vlaneseq
      %v4717 = vshrl.u32 %v4716, 7
      %v4718 = vsub.s32 %v4715, %v4717
      %v4719 = vrot.slane %v4711, %v4718
      %v4721 = vunpack.c.l.s4 1934713408
      %v4722 = vunpack.c.0.s8 %v4721
      %v4723 = vlaneseq
      %v4724 = vshrl.u32 %v4723, 7
      %v4725 = vsub.s32 %v4722, %v4724
      %v4726 = vrot.slane %v4712, %v4725
      %v4727 = vcombine.low %v4662, %v4678
      %v4728 = vcombine.high %v4662, %v4678
      %v4730 = vunpack.c.l.s4 1934713408
      %v4731 = vunpack.c.0.s8 %v4730
      %v4732 = vlaneseq
      %v4733 = vshrl.u32 %v4732, 7
      %v4734 = vsub.s32 %v4731, %v4733
      %v4735 = vrot.slane %v4727, %v4734
      %v4737 = vunpack.c.l.s4 1934713408
      %v4738 = vunpack.c.0.s8 %v4737
      %v4739 = vlaneseq
      %v4740 = vshrl.u32 %v4739, 7
      %v4741 = vsub.s32 %v4738, %v4740
      %v4742 = vrot.slane %v4728, %v4741
      %v4743 = vcombine.low %v4687, %v4703
      %v4744 = vcombine.high %v4687, %v4703
      %v4746 = vunpack.c.l.s4 1934713408
      %v4747 = vunpack.c.0.s8 %v4746
      %v4748 = vlaneseq
      %v4749 = vshrl.u32 %v4748, 7
      %v4750 = vsub.s32 %v4747, %v4749
      %v4751 = vrot.slane %v4743, %v4750
      %v4753 = vunpack.c.l.s4 1934713408
      %v4754 = vunpack.c.0.s8 %v4753
      %v4755 = vlaneseq
      %v4756 = vshrl.u32 %v4755, 7
      %v4757 = vsub.s32 %v4754, %v4756
      %v4758 = vrot.slane %v4744, %v4757
      %v4759 = vcombine.low %v4694, %v4710
      %v4760 = vcombine.high %v4694, %v4710
      %v4762 = vunpack.c.l.s4 1934713408
      %v4763 = vunpack.c.0.s8 %v4762
      %v4764 = vlaneseq
      %v4765 = vshrl.u32 %v4764, 7
      %v4766 = vsub.s32 %v4763, %v4765
      %v4767 = vrot.slane %v4759, %v4766
      %v4769 = vunpack.c.l.s4 1934713408
      %v4770 = vunpack.c.0.s8 %v4769
      %v4771 = vlaneseq
      %v4772 = vshrl.u32 %v4771, 7
      %v4773 = vsub.s32 %v4770, %v4772
      %v4774 = vrot.slane %v4760, %v4773
      %v4775 = vcombine.low %v4719, %v4751
      %v4776 = vcombine.high %v4719, %v4751
      %v4777 = vcombine.low %v4726, %v4758
      %v4778 = vcombine.high %v4726, %v4758
      %v4779 = vcombine.low %v4735, %v4767
      %v4780 = vcombine.high %v4735, %v4767
      %v4781 = vcombine.low %v4742, %v4774
      %v4782 = vcombine.high %v4742, %v4774
      %v4783 = vcombine.low %v4418, %v4426
      %v4784 = vcombine.high %v4418, %v4426
      %v4786 = vunpack.c.l.s4 1983009808
      %v4787 = vunpack.c.0.s8 %v4786
      %v4788 = vlaneseq
      %v4789 = vshrl.u32 %v4788, 7
      %v4790 = vsub.s32 %v4787, %v4789
      %v4791 = vrot.slane %v4783, %v4790
      %v4793 = vunpack.c.l.s4 1983009808
      %v4794 = vunpack.c.0.s8 %v4793
      %v4795 = vlaneseq
      %v4796 = vshrl.u32 %v4795, 7
      %v4797 = vsub.s32 %v4794, %v4796
      %v4798 = vrot.slane %v4784, %v4797
      %v4799 = vcombine.low %v4422, %v4430
      %v4800 = vcombine.high %v4422, %v4430
      %v4802 = vunpack.c.l.s4 1983009808
      %v4803 = vunpack.c.0.s8 %v4802
      %v4804 = vlaneseq
      %v4805 = vshrl.u32 %v4804, 7
      %v4806 = vsub.s32 %v4803, %v4805
      %v4807 = vrot.slane %v4799, %v4806
      %v4809 = vunpack.c.l.s4 1983009808
      %v4810 = vunpack.c.0.s8 %v4809
      %v4811 = vlaneseq
      %v4812 = vshrl.u32 %v4811, 7
      %v4813 = vsub.s32 %v4810, %v4812
      %v4814 = vrot.slane %v4800, %v4813
      %v4815 = vcombine.low %v4434, %v4442
      %v4816 = vcombine.high %v4434, %v4442
      %v4818 = vunpack.c.l.s4 1983009808
      %v4819 = vunpack.c.0.s8 %v4818
      %v4820 = vlaneseq
      %v4821 = vshrl.u32 %v4820, 7
      %v4822 = vsub.s32 %v4819, %v4821
      %v4823 = vrot.slane %v4815, %v4822
      %v4825 = vunpack.c.l.s4 1983009808
      %v4826 = vunpack.c.0.s8 %v4825
      %v4827 = vlaneseq
      %v4828 = vshrl.u32 %v4827, 7
      %v4829 = vsub.s32 %v4826, %v4828
      %v4830 = vrot.slane %v4816, %v4829
      %v4831 = vcombine.low %v4438, %v4446
      %v4832 = vcombine.high %v4438, %v4446
      %v4834 = vunpack.c.l.s4 1983009808
      %v4835 = vunpack.c.0.s8 %v4834
      %v4836 = vlaneseq
      %v4837 = vshrl.u32 %v4836, 7
      %v4838 = vsub.s32 %v4835, %v4837
      %v4839 = vrot.slane %v4831, %v4838
      %v4841 = vunpack.c.l.s4 1983009808
      %v4842 = vunpack.c.0.s8 %v4841
      %v4843 = vlaneseq
      %v4844 = vshrl.u32 %v4843, 7
      %v4845 = vsub.s32 %v4842, %v4844
      %v4846 = vrot.slane %v4832, %v4845
      %v4847 = vcombine.low %v4791, %v4807
      %v4848 = vcombine.high %v4791, %v4807
      %v4850 = vunpack.c.l.s4 1934713408
      %v4851 = vunpack.c.0.s8 %v4850
      %v4852 = vlaneseq
      %v4853 = vshrl.u32 %v4852, 7
      %v4854 = vsub.s32 %v4851, %v4853
      %v4855 = vrot.slane %v4847, %v4854
      %v4857 = vunpack.c.l.s4 1934713408
      %v4858 = vunpack.c.0.s8 %v4857
      %v4859 = vlaneseq
      %v4860 = vshrl.u32 %v4859, 7
      %v4861 = vsub.s32 %v4858, %v4860
      %v4862 = vrot.slane %v4848, %v4861
      %v4863 = vcombine.low %v4798, %v4814
      %v4864 = vcombine.high %v4798, %v4814
      %v4866 = vunpack.c.l.s4 1934713408
      %v4867 = vunpack.c.0.s8 %v4866
      %v4868 = vlaneseq
      %v4869 = vshrl.u32 %v4868, 7
      %v4870 = vsub.s32 %v4867, %v4869
      %v4871 = vrot.slane %v4863, %v4870
      %v4873 = vunpack.c.l.s4 1934713408
      %v4874 = vunpack.c.0.s8 %v4873
      %v4875 = vlaneseq
      %v4876 = vshrl.u32 %v4875, 7
      %v4877 = vsub.s32 %v4874, %v4876
      %v4878 = vrot.slane %v4864, %v4877
      %v4879 = vcombine.low %v4823, %v4839
      %v4880 = vcombine.high %v4823, %v4839
      %v4882 = vunpack.c.l.s4 1934713408
      %v4883 = vunpack.c.0.s8 %v4882
      %v4884 = vlaneseq
      %v4885 = vshrl.u32 %v4884, 7
      %v4886 = vsub.s32 %v4883, %v4885
      %v4887 = vrot.slane %v4879, %v4886
      %v4889 = vunpack.c.l.s4 1934713408
      %v4890 = vunpack.c.0.s8 %v4889
      %v4891 = vlaneseq
      %v4892 = vshrl.u32 %v4891, 7
      %v4893 = vsub.s32 %v4890, %v4892
      %v4894 = vrot.slane %v4880, %v4893
      %v4895 = vcombine.low %v4830, %v4846
      %v4896 = vcombine.high %v4830, %v4846
      %v4898 = vunpack.c.l.s4 1934713408
      %v4899 = vunpack.c.0.s8 %v4898
      %v4900 = vlaneseq
      %v4901 = vshrl.u32 %v4900, 7
      %v4902 = vsub.s32 %v4899, %v4901
      %v4903 = vrot.slane %v4895, %v4902
      %v4905 = vunpack.c.l.s4 1934713408
      %v4906 = vunpack.c.0.s8 %v4905
      %v4907 = vlaneseq
      %v4908 = vshrl.u32 %v4907, 7
      %v4909 = vsub.s32 %v4906, %v4908
      %v4910 = vrot.slane %v4896, %v4909
      %v4911 = vcombine.low %v4855, %v4887
      %v4912 = vcombine.high %v4855, %v4887
      %v4913 = vcombine.low %v4862, %v4894
      %v4914 = vcombine.high %v4862, %v4894
      %v4915 = vcombine.low %v4871, %v4903
      %v4916 = vcombine.high %v4871, %v4903
      %v4917 = vcombine.low %v4878, %v4910
      %v4918 = vcombine.high %v4878, %v4910
      %v4919 = vcombine.low %v4450, %v4458
      %v4920 = vcombine.high %v4450, %v4458
      %v4922 = vunpack.c.l.s4 1983009808
      %v4923 = vunpack.c.0.s8 %v4922
      %v4924 = vlaneseq
      %v4925 = vshrl.u32 %v4924, 7
      %v4926 = vsub.s32 %v4923, %v4925
      %v4927 = vrot.slane %v4919, %v4926
      %v4929 = vunpack.c.l.s4 1983009808
      %v4930 = vunpack.c.0.s8 %v4929
      %v4931 = vlaneseq
      %v4932 = vshrl.u32 %v4931, 7
      %v4933 = vsub.s32 %v4930, %v4932
      %v4934 = vrot.slane %v4920, %v4933
      %v4935 = vcombine.low %v4454, %v4462
      %v4936 = vcombine.high %v4454, %v4462
      %v4938 = vunpack.c.l.s4 1983009808
      %v4939 = vunpack.c.0.s8 %v4938
      %v4940 = vlaneseq
      %v4941 = vshrl.u32 %v4940, 7
      %v4942 = vsub.s32 %v4939, %v4941
      %v4943 = vrot.slane %v4935, %v4942
      %v4945 = vunpack.c.l.s4 1983009808
      %v4946 = vunpack.c.0.s8 %v4945
      %v4947 = vlaneseq
      %v4948 = vshrl.u32 %v4947, 7
      %v4949 = vsub.s32 %v4946, %v4948
      %v4950 = vrot.slane %v4936, %v4949
      %v4951 = vcombine.low %v4466, %v4474
      %v4952 = vcombine.high %v4466, %v4474
      %v4954 = vunpack.c.l.s4 1983009808
      %v4955 = vunpack.c.0.s8 %v4954
      %v4956 = vlaneseq
      %v4957 = vshrl.u32 %v4956, 7
      %v4958 = vsub.s32 %v4955, %v4957
      %v4959 = vrot.slane %v4951, %v4958
      %v4961 = vunpack.c.l.s4 1983009808
      %v4962 = vunpack.c.0.s8 %v4961
      %v4963 = vlaneseq
      %v4964 = vshrl.u32 %v4963, 7
      %v4965 = vsub.s32 %v4962, %v4964
      %v4966 = vrot.slane %v4952, %v4965
      %v4967 = vcombine.low %v4470, %v4478
      %v4968 = vcombine.high %v4470, %v4478
      %v4970 = vunpack.c.l.s4 1983009808
      %v4971 = vunpack.c.0.s8 %v4970
      %v4972 = vlaneseq
      %v4973 = vshrl.u32 %v4972, 7
      %v4974 = vsub.s32 %v4971, %v4973
      %v4975 = vrot.slane %v4967, %v4974
      %v4977 = vunpack.c.l.s4 1983009808
      %v4978 = vunpack.c.0.s8 %v4977
      %v4979 = vlaneseq
      %v4980 = vshrl.u32 %v4979, 7
      %v4981 = vsub.s32 %v4978, %v4980
      %v4982 = vrot.slane %v4968, %v4981
      %v4983 = vcombine.low %v4927, %v4943
      %v4984 = vcombine.high %v4927, %v4943
      %v4986 = vunpack.c.l.s4 1934713408
      %v4987 = vunpack.c.0.s8 %v4986
      %v4988 = vlaneseq
      %v4989 = vshrl.u32 %v4988, 7
      %v4990 = vsub.s32 %v4987, %v4989
      %v4991 = vrot.slane %v4983, %v4990
      %v4993 = vunpack.c.l.s4 1934713408
      %v4994 = vunpack.c.0.s8 %v4993
      %v4995 = vlaneseq
      %v4996 = vshrl.u32 %v4995, 7
      %v4997 = vsub.s32 %v4994, %v4996
      %v4998 = vrot.slane %v4984, %v4997
      %v4999 = vcombine.low %v4934, %v4950
      %v5000 = vcombine.high %v4934, %v4950
      %v5002 = vunpack.c.l.s4 1934713408
      %v5003 = vunpack.c.0.s8 %v5002
      %v5004 = vlaneseq
      %v5005 = vshrl.u32 %v5004, 7
      %v5006 = vsub.s32 %v5003, %v5005
      %v5007 = vrot.slane %v4999, %v5006
      %v5009 = vunpack.c.l.s4 1934713408
      %v5010 = vunpack.c.0.s8 %v5009
      %v5011 = vlaneseq
      %v5012 = vshrl.u32 %v5011, 7
      %v5013 = vsub.s32 %v5010, %v5012
      %v5014 = vrot.slane %v5000, %v5013
      %v5015 = vcombine.low %v4959, %v4975
      %v5016 = vcombine.high %v4959, %v4975
      %v5018 = vunpack.c.l.s4 1934713408
      %v5019 = vunpack.c.0.s8 %v5018
      %v5020 = vlaneseq
      %v5021 = vshrl.u32 %v5020, 7
      %v5022 = vsub.s32 %v5019, %v5021
      %v5023 = vrot.slane %v5015, %v5022
      %v5025 = vunpack.c.l.s4 1934713408
      %v5026 = vunpack.c.0.s8 %v5025
      %v5027 = vlaneseq
      %v5028 = vshrl.u32 %v5027, 7
      %v5029 = vsub.s32 %v5026, %v5028
      %v5030 = vrot.slane %v5016, %v5029
      %v5031 = vcombine.low %v4966, %v4982
      %v5032 = vcombine.high %v4966, %v4982
      %v5034 = vunpack.c.l.s4 1934713408
      %v5035 = vunpack.c.0.s8 %v5034
      %v5036 = vlaneseq
      %v5037 = vshrl.u32 %v5036, 7
      %v5038 = vsub.s32 %v5035, %v5037
      %v5039 = vrot.slane %v5031, %v5038
      %v5041 = vunpack.c.l.s4 1934713408
      %v5042 = vunpack.c.0.s8 %v5041
      %v5043 = vlaneseq
      %v5044 = vshrl.u32 %v5043, 7
      %v5045 = vsub.s32 %v5042, %v5044
      %v5046 = vrot.slane %v5032, %v5045
      %v5047 = vcombine.low %v4991, %v5023
      %v5048 = vcombine.high %v4991, %v5023
      %v5049 = vcombine.low %v4998, %v5030
      %v5050 = vcombine.high %v4998, %v5030
      %v5051 = vcombine.low %v5007, %v5039
      %v5052 = vcombine.high %v5007, %v5039
      %v5053 = vcombine.low %v5014, %v5046
      %v5054 = vcombine.high %v5014, %v5046
      %5057 = vrot.lane.b32.xlu0 %v4640, 16
      %v5058 = vpop.permute.xlu0 %5057
      %5059 = vrot.lane.b32.xlu0 %v4776, 16
      %v5060 = vpop.permute.xlu0 %5059
      %5065 = vrot.lane.b32.xlu0 %v4641, 32
      %v5066 = vpop.permute.xlu0 %5065
      %5067 = vrot.lane.b32.xlu0 %v4777, 32
      %v5068 = vpop.permute.xlu0 %5067
      %5073 = vrot.lane.b32.xlu0 %v4642, 48
      %v5074 = vpop.permute.xlu0 %5073
      %5075 = vrot.lane.b32.xlu0 %v4778, 48
      %v5076 = vpop.permute.xlu0 %5075
      %5081 = vrot.lane.b32.xlu0 %v4643, 64
      %v5082 = vpop.permute.xlu0 %5081
      %5083 = vrot.lane.b32.xlu0 %v4779, 64
      %v5084 = vpop.permute.xlu0 %5083
      %5089 = vrot.lane.b32.xlu0 %v4644, 80
      %v5090 = vpop.permute.xlu0 %5089
      %5091 = vrot.lane.b32.xlu0 %v4780, 80
      %v5092 = vpop.permute.xlu0 %5091
      %5097 = vrot.lane.b32.xlu0 %v4645, 96
      %v5098 = vpop.permute.xlu0 %5097
      %5099 = vrot.lane.b32.xlu0 %v4781, 96
      %v5100 = vpop.permute.xlu0 %5099
      %5105 = vrot.lane.b32.xlu0 %v4646, 112
      %v5106 = vpop.permute.xlu0 %5105
      %5107 = vrot.lane.b32.xlu0 %v4782, 112
      %v5108 = vpop.permute.xlu0 %5107
      %5113 = vrot.lane.b32.xlu0 %v4912, 16
      %v5114 = vpop.permute.xlu0 %5113
      %5115 = vrot.lane.b32.xlu0 %v5048, 16
      %v5116 = vpop.permute.xlu0 %5115
      %5121 = vrot.lane.b32.xlu0 %v4913, 32
      %v5122 = vpop.permute.xlu0 %5121
      %5123 = vrot.lane.b32.xlu0 %v5049, 32
      %v5124 = vpop.permute.xlu0 %5123
      %5129 = vrot.lane.b32.xlu0 %v4914, 48
      %v5130 = vpop.permute.xlu0 %5129
      %5131 = vrot.lane.b32.xlu0 %v5050, 48
      %v5132 = vpop.permute.xlu0 %5131
      %5137 = vrot.lane.b32.xlu0 %v4915, 64
      %v5138 = vpop.permute.xlu0 %5137
      %5139 = vrot.lane.b32.xlu0 %v5051, 64
      %v5140 = vpop.permute.xlu0 %5139
      %5145 = vrot.lane.b32.xlu0 %v4916, 80
      %v5146 = vpop.permute.xlu0 %5145
      %5147 = vrot.lane.b32.xlu0 %v5052, 80
      %v5148 = vpop.permute.xlu0 %5147
      %5153 = vrot.lane.b32.xlu0 %v4917, 96
      %v5154 = vpop.permute.xlu0 %5153
      %5155 = vrot.lane.b32.xlu0 %v5053, 96
      %v5156 = vpop.permute.xlu0 %5155
      %5161 = vrot.lane.b32.xlu0 %v4918, 112
      %v5162 = vpop.permute.xlu0 %5161
      %5163 = vrot.lane.b32.xlu0 %v5054, 112
      %v5164 = vpop.permute.xlu0 %5163
      %v5167 = vsel %vm1975, %v4639, %v5058
      %v5168 = vsel %vm1975, %v4775, %v5060
      %v5169 = vsel %vm1978, %v5167, %v5066
      %v5170 = vsel %vm1978, %v5168, %v5068
      %v5171 = vsel %vm1981, %v5169, %v5074
      %v5172 = vsel %vm1981, %v5170, %v5076
      %v5173 = vsel %vm1984, %v5171, %v5082
      %v5174 = vsel %vm1984, %v5172, %v5084
      %v5175 = vsel %vm1987, %v5173, %v5090
      %v5176 = vsel %vm1987, %v5174, %v5092
      %v5177 = vsel %vm1990, %v5175, %v5098
      %v5178 = vsel %vm1990, %v5176, %v5100
      %v5179 = vsel %vm1993, %v5177, %v5106
      %v5180 = vsel %vm1993, %v5178, %v5108
      %v5181 = vsel %vm1975, %v4911, %v5114
      %v5182 = vsel %vm1975, %v5047, %v5116
      %v5183 = vsel %vm1978, %v5181, %v5122
      %v5184 = vsel %vm1978, %v5182, %v5124
      %v5185 = vsel %vm1981, %v5183, %v5130
      %v5186 = vsel %vm1981, %v5184, %v5132
      %v5187 = vsel %vm1984, %v5185, %v5138
      %v5188 = vsel %vm1984, %v5186, %v5140
      %v5189 = vsel %vm1987, %v5187, %v5146
      %v5190 = vsel %vm1987, %v5188, %v5148
      %v5191 = vsel %vm1990, %v5189, %v5154
      %v5192 = vsel %vm1990, %v5190, %v5156
      %v5193 = vsel %vm1993, %v5191, %v5162
      %v5194 = vsel %vm1993, %v5192, %v5164
      %5195 = vrot.lane.b32.xlu0 %v3621, 126
      %v5196 = vpop.permute.xlu0 %5195
      %5197 = vrot.lane.b32.xlu0 %v3623, 126
      %v5198 = vpop.permute.xlu0 %5197
      %5199 = vrot.lane.b32.xlu0 %v3626, 126
      %v5200 = vpop.permute.xlu0 %5199
      %5201 = vrot.lane.b32.xlu0 %v3628, 126
      %v5202 = vpop.permute.xlu0 %5201
      %5203 = vrot.lane.b32.xlu0 %v3631, 126
      %v5204 = vpop.permute.xlu0 %5203
      %5205 = vrot.lane.b32.xlu0 %v3633, 126
      %v5206 = vpop.permute.xlu0 %5205
      %5207 = vrot.lane.b32.xlu0 %v3636, 126
      %v5208 = vpop.permute.xlu0 %5207
      %5209 = vrot.lane.b32.xlu0 %v3638, 126
      %v5210 = vpop.permute.xlu0 %5209
      %5211 = vrot.lane.b32.xlu0 %v3641, 126
      %v5212 = vpop.permute.xlu0 %5211
      %5213 = vrot.lane.b32.xlu0 %v3643, 126
      %v5214 = vpop.permute.xlu0 %5213
      %5215 = vrot.lane.b32.xlu0 %v3646, 126
      %v5216 = vpop.permute.xlu0 %5215
      %5217 = vrot.lane.b32.xlu0 %v3648, 126
      %v5218 = vpop.permute.xlu0 %5217
      %5219 = vrot.lane.b32.xlu0 %v3651, 126
      %v5220 = vpop.permute.xlu0 %5219
      %5221 = vrot.lane.b32.xlu0 %v3653, 126
      %v5222 = vpop.permute.xlu0 %5221
      %5223 = vrot.lane.b32.xlu0 %v3656, 126
      %v5224 = vpop.permute.xlu0 %5223
      %5225 = vrot.lane.b32.xlu0 %v3658, 126
      %v5226 = vpop.permute.xlu0 %5225
      %5227 = vrot.lane.b32.xlu0 %v3661, 126
      %v5228 = vpop.permute.xlu0 %5227
      %5229 = vrot.lane.b32.xlu0 %v3663, 126
      %v5230 = vpop.permute.xlu0 %5229
      %5231 = vrot.lane.b32.xlu0 %v3666, 126
      %v5232 = vpop.permute.xlu0 %5231
      %5233 = vrot.lane.b32.xlu0 %v3668, 126
      %v5234 = vpop.permute.xlu0 %5233
      %5235 = vrot.lane.b32.xlu0 %v3671, 126
      %v5236 = vpop.permute.xlu0 %5235
      %5237 = vrot.lane.b32.xlu0 %v3673, 126
      %v5238 = vpop.permute.xlu0 %5237
      %5239 = vrot.lane.b32.xlu0 %v3676, 126
      %v5240 = vpop.permute.xlu0 %5239
      %5241 = vrot.lane.b32.xlu0 %v3678, 126
      %v5242 = vpop.permute.xlu0 %5241
      %5243 = vrot.lane.b32.xlu0 %v3681, 126
      %v5244 = vpop.permute.xlu0 %5243
      %5245 = vrot.lane.b32.xlu0 %v3683, 126
      %v5246 = vpop.permute.xlu0 %5245
      %5247 = vrot.lane.b32.xlu0 %v3686, 126
      %v5248 = vpop.permute.xlu0 %5247
      %5249 = vrot.lane.b32.xlu0 %v3688, 126
      %v5250 = vpop.permute.xlu0 %5249
      %5251 = vrot.lane.b32.xlu0 %v3691, 126
      %v5252 = vpop.permute.xlu0 %5251
      %5253 = vrot.lane.b32.xlu0 %v3693, 126
      %v5254 = vpop.permute.xlu0 %5253
      %5255 = vrot.lane.b32.xlu0 %v3696, 126
      %v5256 = vpop.permute.xlu0 %5255
      %5257 = vrot.lane.b32.xlu0 %v3698, 126
      %v5258 = vpop.permute.xlu0 %5257
      %v5291 = vcombine.low %v5196, %v5204
      %v5292 = vcombine.high %v5196, %v5204
      %v5294 = vunpack.c.l.s4 1983009808
      %v5295 = vunpack.c.0.s8 %v5294
      %v5296 = vlaneseq
      %v5297 = vshrl.u32 %v5296, 7
      %v5298 = vsub.s32 %v5295, %v5297
      %v5299 = vrot.slane %v5291, %v5298
      %v5301 = vunpack.c.l.s4 1983009808
      %v5302 = vunpack.c.0.s8 %v5301
      %v5303 = vlaneseq
      %v5304 = vshrl.u32 %v5303, 7
      %v5305 = vsub.s32 %v5302, %v5304
      %v5306 = vrot.slane %v5292, %v5305
      %v5307 = vcombine.low %v5200, %v5208
      %v5308 = vcombine.high %v5200, %v5208
      %v5310 = vunpack.c.l.s4 1983009808
      %v5311 = vunpack.c.0.s8 %v5310
      %v5312 = vlaneseq
      %v5313 = vshrl.u32 %v5312, 7
      %v5314 = vsub.s32 %v5311, %v5313
      %v5315 = vrot.slane %v5307, %v5314
      %v5317 = vunpack.c.l.s4 1983009808
      %v5318 = vunpack.c.0.s8 %v5317
      %v5319 = vlaneseq
      %v5320 = vshrl.u32 %v5319, 7
      %v5321 = vsub.s32 %v5318, %v5320
      %v5322 = vrot.slane %v5308, %v5321
      %v5323 = vcombine.low %v5212, %v5220
      %v5324 = vcombine.high %v5212, %v5220
      %v5326 = vunpack.c.l.s4 1983009808
      %v5327 = vunpack.c.0.s8 %v5326
      %v5328 = vlaneseq
      %v5329 = vshrl.u32 %v5328, 7
      %v5330 = vsub.s32 %v5327, %v5329
      %v5331 = vrot.slane %v5323, %v5330
      %v5333 = vunpack.c.l.s4 1983009808
      %v5334 = vunpack.c.0.s8 %v5333
      %v5335 = vlaneseq
      %v5336 = vshrl.u32 %v5335, 7
      %v5337 = vsub.s32 %v5334, %v5336
      %v5338 = vrot.slane %v5324, %v5337
      %v5339 = vcombine.low %v5216, %v5224
      %v5340 = vcombine.high %v5216, %v5224
      %v5342 = vunpack.c.l.s4 1983009808
      %v5343 = vunpack.c.0.s8 %v5342
      %v5344 = vlaneseq
      %v5345 = vshrl.u32 %v5344, 7
      %v5346 = vsub.s32 %v5343, %v5345
      %v5347 = vrot.slane %v5339, %v5346
      %v5349 = vunpack.c.l.s4 1983009808
      %v5350 = vunpack.c.0.s8 %v5349
      %v5351 = vlaneseq
      %v5352 = vshrl.u32 %v5351, 7
      %v5353 = vsub.s32 %v5350, %v5352
      %v5354 = vrot.slane %v5340, %v5353
      %v5355 = vcombine.low %v5299, %v5315
      %v5356 = vcombine.high %v5299, %v5315
      %v5358 = vunpack.c.l.s4 1934713408
      %v5359 = vunpack.c.0.s8 %v5358
      %v5360 = vlaneseq
      %v5361 = vshrl.u32 %v5360, 7
      %v5362 = vsub.s32 %v5359, %v5361
      %v5363 = vrot.slane %v5355, %v5362
      %v5365 = vunpack.c.l.s4 1934713408
      %v5366 = vunpack.c.0.s8 %v5365
      %v5367 = vlaneseq
      %v5368 = vshrl.u32 %v5367, 7
      %v5369 = vsub.s32 %v5366, %v5368
      %v5370 = vrot.slane %v5356, %v5369
      %v5371 = vcombine.low %v5306, %v5322
      %v5372 = vcombine.high %v5306, %v5322
      %v5374 = vunpack.c.l.s4 1934713408
      %v5375 = vunpack.c.0.s8 %v5374
      %v5376 = vlaneseq
      %v5377 = vshrl.u32 %v5376, 7
      %v5378 = vsub.s32 %v5375, %v5377
      %v5379 = vrot.slane %v5371, %v5378
      %v5381 = vunpack.c.l.s4 1934713408
      %v5382 = vunpack.c.0.s8 %v5381
      %v5383 = vlaneseq
      %v5384 = vshrl.u32 %v5383, 7
      %v5385 = vsub.s32 %v5382, %v5384
      %v5386 = vrot.slane %v5372, %v5385
      %v5387 = vcombine.low %v5331, %v5347
      %v5388 = vcombine.high %v5331, %v5347
      %v5390 = vunpack.c.l.s4 1934713408
      %v5391 = vunpack.c.0.s8 %v5390
      %v5392 = vlaneseq
      %v5393 = vshrl.u32 %v5392, 7
      %v5394 = vsub.s32 %v5391, %v5393
      %v5395 = vrot.slane %v5387, %v5394
      %v5397 = vunpack.c.l.s4 1934713408
      %v5398 = vunpack.c.0.s8 %v5397
      %v5399 = vlaneseq
      %v5400 = vshrl.u32 %v5399, 7
      %v5401 = vsub.s32 %v5398, %v5400
      %v5402 = vrot.slane %v5388, %v5401
      %v5403 = vcombine.low %v5338, %v5354
      %v5404 = vcombine.high %v5338, %v5354
      %v5406 = vunpack.c.l.s4 1934713408
      %v5407 = vunpack.c.0.s8 %v5406
      %v5408 = vlaneseq
      %v5409 = vshrl.u32 %v5408, 7
      %v5410 = vsub.s32 %v5407, %v5409
      %v5411 = vrot.slane %v5403, %v5410
      %v5413 = vunpack.c.l.s4 1934713408
      %v5414 = vunpack.c.0.s8 %v5413
      %v5415 = vlaneseq
      %v5416 = vshrl.u32 %v5415, 7
      %v5417 = vsub.s32 %v5414, %v5416
      %v5418 = vrot.slane %v5404, %v5417
      %v5419 = vcombine.low %v5363, %v5395
      %v5420 = vcombine.high %v5363, %v5395
      %v5421 = vcombine.low %v5370, %v5402
      %v5422 = vcombine.high %v5370, %v5402
      %v5423 = vcombine.low %v5379, %v5411
      %v5424 = vcombine.high %v5379, %v5411
      %v5425 = vcombine.low %v5386, %v5418
      %v5426 = vcombine.high %v5386, %v5418
      %v5427 = vcombine.low %v5228, %v5236
      %v5428 = vcombine.high %v5228, %v5236
      %v5430 = vunpack.c.l.s4 1983009808
      %v5431 = vunpack.c.0.s8 %v5430
      %v5432 = vlaneseq
      %v5433 = vshrl.u32 %v5432, 7
      %v5434 = vsub.s32 %v5431, %v5433
      %v5435 = vrot.slane %v5427, %v5434
      %v5437 = vunpack.c.l.s4 1983009808
      %v5438 = vunpack.c.0.s8 %v5437
      %v5439 = vlaneseq
      %v5440 = vshrl.u32 %v5439, 7
      %v5441 = vsub.s32 %v5438, %v5440
      %v5442 = vrot.slane %v5428, %v5441
      %v5443 = vcombine.low %v5232, %v5240
      %v5444 = vcombine.high %v5232, %v5240
      %v5446 = vunpack.c.l.s4 1983009808
      %v5447 = vunpack.c.0.s8 %v5446
      %v5448 = vlaneseq
      %v5449 = vshrl.u32 %v5448, 7
      %v5450 = vsub.s32 %v5447, %v5449
      %v5451 = vrot.slane %v5443, %v5450
      %v5453 = vunpack.c.l.s4 1983009808
      %v5454 = vunpack.c.0.s8 %v5453
      %v5455 = vlaneseq
      %v5456 = vshrl.u32 %v5455, 7
      %v5457 = vsub.s32 %v5454, %v5456
      %v5458 = vrot.slane %v5444, %v5457
      %v5459 = vcombine.low %v5244, %v5252
      %v5460 = vcombine.high %v5244, %v5252
      %v5462 = vunpack.c.l.s4 1983009808
      %v5463 = vunpack.c.0.s8 %v5462
      %v5464 = vlaneseq
      %v5465 = vshrl.u32 %v5464, 7
      %v5466 = vsub.s32 %v5463, %v5465
      %v5467 = vrot.slane %v5459, %v5466
      %v5469 = vunpack.c.l.s4 1983009808
      %v5470 = vunpack.c.0.s8 %v5469
      %v5471 = vlaneseq
      %v5472 = vshrl.u32 %v5471, 7
      %v5473 = vsub.s32 %v5470, %v5472
      %v5474 = vrot.slane %v5460, %v5473
      %v5475 = vcombine.low %v5248, %v5256
      %v5476 = vcombine.high %v5248, %v5256
      %v5478 = vunpack.c.l.s4 1983009808
      %v5479 = vunpack.c.0.s8 %v5478
      %v5480 = vlaneseq
      %v5481 = vshrl.u32 %v5480, 7
      %v5482 = vsub.s32 %v5479, %v5481
      %v5483 = vrot.slane %v5475, %v5482
      %v5485 = vunpack.c.l.s4 1983009808
      %v5486 = vunpack.c.0.s8 %v5485
      %v5487 = vlaneseq
      %v5488 = vshrl.u32 %v5487, 7
      %v5489 = vsub.s32 %v5486, %v5488
      %v5490 = vrot.slane %v5476, %v5489
      %v5491 = vcombine.low %v5435, %v5451
      %v5492 = vcombine.high %v5435, %v5451
      %v5494 = vunpack.c.l.s4 1934713408
      %v5495 = vunpack.c.0.s8 %v5494
      %v5496 = vlaneseq
      %v5497 = vshrl.u32 %v5496, 7
      %v5498 = vsub.s32 %v5495, %v5497
      %v5499 = vrot.slane %v5491, %v5498
      %v5501 = vunpack.c.l.s4 1934713408
      %v5502 = vunpack.c.0.s8 %v5501
      %v5503 = vlaneseq
      %v5504 = vshrl.u32 %v5503, 7
      %v5505 = vsub.s32 %v5502, %v5504
      %v5506 = vrot.slane %v5492, %v5505
      %v5507 = vcombine.low %v5442, %v5458
      %v5508 = vcombine.high %v5442, %v5458
      %v5510 = vunpack.c.l.s4 1934713408
      %v5511 = vunpack.c.0.s8 %v5510
      %v5512 = vlaneseq
      %v5513 = vshrl.u32 %v5512, 7
      %v5514 = vsub.s32 %v5511, %v5513
      %v5515 = vrot.slane %v5507, %v5514
      %v5517 = vunpack.c.l.s4 1934713408
      %v5518 = vunpack.c.0.s8 %v5517
      %v5519 = vlaneseq
      %v5520 = vshrl.u32 %v5519, 7
      %v5521 = vsub.s32 %v5518, %v5520
      %v5522 = vrot.slane %v5508, %v5521
      %v5523 = vcombine.low %v5467, %v5483
      %v5524 = vcombine.high %v5467, %v5483
      %v5526 = vunpack.c.l.s4 1934713408
      %v5527 = vunpack.c.0.s8 %v5526
      %v5528 = vlaneseq
      %v5529 = vshrl.u32 %v5528, 7
      %v5530 = vsub.s32 %v5527, %v5529
      %v5531 = vrot.slane %v5523, %v5530
      %v5533 = vunpack.c.l.s4 1934713408
      %v5534 = vunpack.c.0.s8 %v5533
      %v5535 = vlaneseq
      %v5536 = vshrl.u32 %v5535, 7
      %v5537 = vsub.s32 %v5534, %v5536
      %v5538 = vrot.slane %v5524, %v5537
      %v5539 = vcombine.low %v5474, %v5490
      %v5540 = vcombine.high %v5474, %v5490
      %v5542 = vunpack.c.l.s4 1934713408
      %v5543 = vunpack.c.0.s8 %v5542
      %v5544 = vlaneseq
      %v5545 = vshrl.u32 %v5544, 7
      %v5546 = vsub.s32 %v5543, %v5545
      %v5547 = vrot.slane %v5539, %v5546
      %v5549 = vunpack.c.l.s4 1934713408
      %v5550 = vunpack.c.0.s8 %v5549
      %v5551 = vlaneseq
      %v5552 = vshrl.u32 %v5551, 7
      %v5553 = vsub.s32 %v5550, %v5552
      %v5554 = vrot.slane %v5540, %v5553
      %v5555 = vcombine.low %v5499, %v5531
      %v5556 = vcombine.high %v5499, %v5531
      %v5557 = vcombine.low %v5506, %v5538
      %v5558 = vcombine.high %v5506, %v5538
      %v5559 = vcombine.low %v5515, %v5547
      %v5560 = vcombine.high %v5515, %v5547
      %v5561 = vcombine.low %v5522, %v5554
      %v5562 = vcombine.high %v5522, %v5554
      %v5563 = vcombine.low %v5198, %v5206
      %v5564 = vcombine.high %v5198, %v5206
      %v5566 = vunpack.c.l.s4 1983009808
      %v5567 = vunpack.c.0.s8 %v5566
      %v5568 = vlaneseq
      %v5569 = vshrl.u32 %v5568, 7
      %v5570 = vsub.s32 %v5567, %v5569
      %v5571 = vrot.slane %v5563, %v5570
      %v5573 = vunpack.c.l.s4 1983009808
      %v5574 = vunpack.c.0.s8 %v5573
      %v5575 = vlaneseq
      %v5576 = vshrl.u32 %v5575, 7
      %v5577 = vsub.s32 %v5574, %v5576
      %v5578 = vrot.slane %v5564, %v5577
      %v5579 = vcombine.low %v5202, %v5210
      %v5580 = vcombine.high %v5202, %v5210
      %v5582 = vunpack.c.l.s4 1983009808
      %v5583 = vunpack.c.0.s8 %v5582
      %v5584 = vlaneseq
      %v5585 = vshrl.u32 %v5584, 7
      %v5586 = vsub.s32 %v5583, %v5585
      %v5587 = vrot.slane %v5579, %v5586
      %v5589 = vunpack.c.l.s4 1983009808
      %v5590 = vunpack.c.0.s8 %v5589
      %v5591 = vlaneseq
      %v5592 = vshrl.u32 %v5591, 7
      %v5593 = vsub.s32 %v5590, %v5592
      %v5594 = vrot.slane %v5580, %v5593
      %v5595 = vcombine.low %v5214, %v5222
      %v5596 = vcombine.high %v5214, %v5222
      %v5598 = vunpack.c.l.s4 1983009808
      %v5599 = vunpack.c.0.s8 %v5598
      %v5600 = vlaneseq
      %v5601 = vshrl.u32 %v5600, 7
      %v5602 = vsub.s32 %v5599, %v5601
      %v5603 = vrot.slane %v5595, %v5602
      %v5605 = vunpack.c.l.s4 1983009808
      %v5606 = vunpack.c.0.s8 %v5605
      %v5607 = vlaneseq
      %v5608 = vshrl.u32 %v5607, 7
      %v5609 = vsub.s32 %v5606, %v5608
      %v5610 = vrot.slane %v5596, %v5609
      %v5611 = vcombine.low %v5218, %v5226
      %v5612 = vcombine.high %v5218, %v5226
      %v5614 = vunpack.c.l.s4 1983009808
      %v5615 = vunpack.c.0.s8 %v5614
      %v5616 = vlaneseq
      %v5617 = vshrl.u32 %v5616, 7
      %v5618 = vsub.s32 %v5615, %v5617
      %v5619 = vrot.slane %v5611, %v5618
      %v5621 = vunpack.c.l.s4 1983009808
      %v5622 = vunpack.c.0.s8 %v5621
      %v5623 = vlaneseq
      %v5624 = vshrl.u32 %v5623, 7
      %v5625 = vsub.s32 %v5622, %v5624
      %v5626 = vrot.slane %v5612, %v5625
      %v5627 = vcombine.low %v5571, %v5587
      %v5628 = vcombine.high %v5571, %v5587
      %v5630 = vunpack.c.l.s4 1934713408
      %v5631 = vunpack.c.0.s8 %v5630
      %v5632 = vlaneseq
      %v5633 = vshrl.u32 %v5632, 7
      %v5634 = vsub.s32 %v5631, %v5633
      %v5635 = vrot.slane %v5627, %v5634
      %v5637 = vunpack.c.l.s4 1934713408
      %v5638 = vunpack.c.0.s8 %v5637
      %v5639 = vlaneseq
      %v5640 = vshrl.u32 %v5639, 7
      %v5641 = vsub.s32 %v5638, %v5640
      %v5642 = vrot.slane %v5628, %v5641
      %v5643 = vcombine.low %v5578, %v5594
      %v5644 = vcombine.high %v5578, %v5594
      %v5646 = vunpack.c.l.s4 1934713408
      %v5647 = vunpack.c.0.s8 %v5646
      %v5648 = vlaneseq
      %v5649 = vshrl.u32 %v5648, 7
      %v5650 = vsub.s32 %v5647, %v5649
      %v5651 = vrot.slane %v5643, %v5650
      %v5653 = vunpack.c.l.s4 1934713408
      %v5654 = vunpack.c.0.s8 %v5653
      %v5655 = vlaneseq
      %v5656 = vshrl.u32 %v5655, 7
      %v5657 = vsub.s32 %v5654, %v5656
      %v5658 = vrot.slane %v5644, %v5657
      %v5659 = vcombine.low %v5603, %v5619
      %v5660 = vcombine.high %v5603, %v5619
      %v5662 = vunpack.c.l.s4 1934713408
      %v5663 = vunpack.c.0.s8 %v5662
      %v5664 = vlaneseq
      %v5665 = vshrl.u32 %v5664, 7
      %v5666 = vsub.s32 %v5663, %v5665
      %v5667 = vrot.slane %v5659, %v5666
      %v5669 = vunpack.c.l.s4 1934713408
      %v5670 = vunpack.c.0.s8 %v5669
      %v5671 = vlaneseq
      %v5672 = vshrl.u32 %v5671, 7
      %v5673 = vsub.s32 %v5670, %v5672
      %v5674 = vrot.slane %v5660, %v5673
      %v5675 = vcombine.low %v5610, %v5626
      %v5676 = vcombine.high %v5610, %v5626
      %v5678 = vunpack.c.l.s4 1934713408
      %v5679 = vunpack.c.0.s8 %v5678
      %v5680 = vlaneseq
      %v5681 = vshrl.u32 %v5680, 7
      %v5682 = vsub.s32 %v5679, %v5681
      %v5683 = vrot.slane %v5675, %v5682
      %v5685 = vunpack.c.l.s4 1934713408
      %v5686 = vunpack.c.0.s8 %v5685
      %v5687 = vlaneseq
      %v5688 = vshrl.u32 %v5687, 7
      %v5689 = vsub.s32 %v5686, %v5688
      %v5690 = vrot.slane %v5676, %v5689
      %v5691 = vcombine.low %v5635, %v5667
      %v5692 = vcombine.high %v5635, %v5667
      %v5693 = vcombine.low %v5642, %v5674
      %v5694 = vcombine.high %v5642, %v5674
      %v5695 = vcombine.low %v5651, %v5683
      %v5696 = vcombine.high %v5651, %v5683
      %v5697 = vcombine.low %v5658, %v5690
      %v5698 = vcombine.high %v5658, %v5690
      %v5699 = vcombine.low %v5230, %v5238
      %v5700 = vcombine.high %v5230, %v5238
      %v5702 = vunpack.c.l.s4 1983009808
      %v5703 = vunpack.c.0.s8 %v5702
      %v5704 = vlaneseq
      %v5705 = vshrl.u32 %v5704, 7
      %v5706 = vsub.s32 %v5703, %v5705
      %v5707 = vrot.slane %v5699, %v5706
      %v5709 = vunpack.c.l.s4 1983009808
      %v5710 = vunpack.c.0.s8 %v5709
      %v5711 = vlaneseq
      %v5712 = vshrl.u32 %v5711, 7
      %v5713 = vsub.s32 %v5710, %v5712
      %v5714 = vrot.slane %v5700, %v5713
      %v5715 = vcombine.low %v5234, %v5242
      %v5716 = vcombine.high %v5234, %v5242
      %v5718 = vunpack.c.l.s4 1983009808
      %v5719 = vunpack.c.0.s8 %v5718
      %v5720 = vlaneseq
      %v5721 = vshrl.u32 %v5720, 7
      %v5722 = vsub.s32 %v5719, %v5721
      %v5723 = vrot.slane %v5715, %v5722
      %v5725 = vunpack.c.l.s4 1983009808
      %v5726 = vunpack.c.0.s8 %v5725
      %v5727 = vlaneseq
      %v5728 = vshrl.u32 %v5727, 7
      %v5729 = vsub.s32 %v5726, %v5728
      %v5730 = vrot.slane %v5716, %v5729
      %v5731 = vcombine.low %v5246, %v5254
      %v5732 = vcombine.high %v5246, %v5254
      %v5734 = vunpack.c.l.s4 1983009808
      %v5735 = vunpack.c.0.s8 %v5734
      %v5736 = vlaneseq
      %v5737 = vshrl.u32 %v5736, 7
      %v5738 = vsub.s32 %v5735, %v5737
      %v5739 = vrot.slane %v5731, %v5738
      %v5741 = vunpack.c.l.s4 1983009808
      %v5742 = vunpack.c.0.s8 %v5741
      %v5743 = vlaneseq
      %v5744 = vshrl.u32 %v5743, 7
      %v5745 = vsub.s32 %v5742, %v5744
      %v5746 = vrot.slane %v5732, %v5745
      %v5747 = vcombine.low %v5250, %v5258
      %v5748 = vcombine.high %v5250, %v5258
      %v5750 = vunpack.c.l.s4 1983009808
      %v5751 = vunpack.c.0.s8 %v5750
      %v5752 = vlaneseq
      %v5753 = vshrl.u32 %v5752, 7
      %v5754 = vsub.s32 %v5751, %v5753
      %v5755 = vrot.slane %v5747, %v5754
      %v5757 = vunpack.c.l.s4 1983009808
      %v5758 = vunpack.c.0.s8 %v5757
      %v5759 = vlaneseq
      %v5760 = vshrl.u32 %v5759, 7
      %v5761 = vsub.s32 %v5758, %v5760
      %v5762 = vrot.slane %v5748, %v5761
      %v5763 = vcombine.low %v5707, %v5723
      %v5764 = vcombine.high %v5707, %v5723
      %v5766 = vunpack.c.l.s4 1934713408
      %v5767 = vunpack.c.0.s8 %v5766
      %v5768 = vlaneseq
      %v5769 = vshrl.u32 %v5768, 7
      %v5770 = vsub.s32 %v5767, %v5769
      %v5771 = vrot.slane %v5763, %v5770
      %v5773 = vunpack.c.l.s4 1934713408
      %v5774 = vunpack.c.0.s8 %v5773
      %v5775 = vlaneseq
      %v5776 = vshrl.u32 %v5775, 7
      %v5777 = vsub.s32 %v5774, %v5776
      %v5778 = vrot.slane %v5764, %v5777
      %v5779 = vcombine.low %v5714, %v5730
      %v5780 = vcombine.high %v5714, %v5730
      %v5782 = vunpack.c.l.s4 1934713408
      %v5783 = vunpack.c.0.s8 %v5782
      %v5784 = vlaneseq
      %v5785 = vshrl.u32 %v5784, 7
      %v5786 = vsub.s32 %v5783, %v5785
      %v5787 = vrot.slane %v5779, %v5786
      %v5789 = vunpack.c.l.s4 1934713408
      %v5790 = vunpack.c.0.s8 %v5789
      %v5791 = vlaneseq
      %v5792 = vshrl.u32 %v5791, 7
      %v5793 = vsub.s32 %v5790, %v5792
      %v5794 = vrot.slane %v5780, %v5793
      %v5795 = vcombine.low %v5739, %v5755
      %v5796 = vcombine.high %v5739, %v5755
      %v5798 = vunpack.c.l.s4 1934713408
      %v5799 = vunpack.c.0.s8 %v5798
      %v5800 = vlaneseq
      %v5801 = vshrl.u32 %v5800, 7
      %v5802 = vsub.s32 %v5799, %v5801
      %v5803 = vrot.slane %v5795, %v5802
      %v5805 = vunpack.c.l.s4 1934713408
      %v5806 = vunpack.c.0.s8 %v5805
      %v5807 = vlaneseq
      %v5808 = vshrl.u32 %v5807, 7
      %v5809 = vsub.s32 %v5806, %v5808
      %v5810 = vrot.slane %v5796, %v5809
      %v5811 = vcombine.low %v5746, %v5762
      %v5812 = vcombine.high %v5746, %v5762
      %v5814 = vunpack.c.l.s4 1934713408
      %v5815 = vunpack.c.0.s8 %v5814
      %v5816 = vlaneseq
      %v5817 = vshrl.u32 %v5816, 7
      %v5818 = vsub.s32 %v5815, %v5817
      %v5819 = vrot.slane %v5811, %v5818
      %v5821 = vunpack.c.l.s4 1934713408
      %v5822 = vunpack.c.0.s8 %v5821
      %v5823 = vlaneseq
      %v5824 = vshrl.u32 %v5823, 7
      %v5825 = vsub.s32 %v5822, %v5824
      %v5826 = vrot.slane %v5812, %v5825
      %v5827 = vcombine.low %v5771, %v5803
      %v5828 = vcombine.high %v5771, %v5803
      %v5829 = vcombine.low %v5778, %v5810
      %v5830 = vcombine.high %v5778, %v5810
      %v5831 = vcombine.low %v5787, %v5819
      %v5832 = vcombine.high %v5787, %v5819
      %v5833 = vcombine.low %v5794, %v5826
      %v5834 = vcombine.high %v5794, %v5826
      %5837 = vrot.lane.b32.xlu0 %v5420, 16
      %v5838 = vpop.permute.xlu0 %5837
      %5839 = vrot.lane.b32.xlu0 %v5556, 16
      %v5840 = vpop.permute.xlu0 %5839
      %5845 = vrot.lane.b32.xlu0 %v5421, 32
      %v5846 = vpop.permute.xlu0 %5845
      %5847 = vrot.lane.b32.xlu0 %v5557, 32
      %v5848 = vpop.permute.xlu0 %5847
      %5853 = vrot.lane.b32.xlu0 %v5422, 48
      %v5854 = vpop.permute.xlu0 %5853
      %5855 = vrot.lane.b32.xlu0 %v5558, 48
      %v5856 = vpop.permute.xlu0 %5855
      %5861 = vrot.lane.b32.xlu0 %v5423, 64
      %v5862 = vpop.permute.xlu0 %5861
      %5863 = vrot.lane.b32.xlu0 %v5559, 64
      %v5864 = vpop.permute.xlu0 %5863
      %5869 = vrot.lane.b32.xlu0 %v5424, 80
      %v5870 = vpop.permute.xlu0 %5869
      %5871 = vrot.lane.b32.xlu0 %v5560, 80
      %v5872 = vpop.permute.xlu0 %5871
      %5877 = vrot.lane.b32.xlu0 %v5425, 96
      %v5878 = vpop.permute.xlu0 %5877
      %5879 = vrot.lane.b32.xlu0 %v5561, 96
      %v5880 = vpop.permute.xlu0 %5879
      %5885 = vrot.lane.b32.xlu0 %v5426, 112
      %v5886 = vpop.permute.xlu0 %5885
      %5887 = vrot.lane.b32.xlu0 %v5562, 112
      %v5888 = vpop.permute.xlu0 %5887
      %5893 = vrot.lane.b32.xlu0 %v5692, 16
      %v5894 = vpop.permute.xlu0 %5893
      %5895 = vrot.lane.b32.xlu0 %v5828, 16
      %v5896 = vpop.permute.xlu0 %5895
      %5901 = vrot.lane.b32.xlu0 %v5693, 32
      %v5902 = vpop.permute.xlu0 %5901
      %5903 = vrot.lane.b32.xlu0 %v5829, 32
      %v5904 = vpop.permute.xlu0 %5903
      %5909 = vrot.lane.b32.xlu0 %v5694, 48
      %v5910 = vpop.permute.xlu0 %5909
      %5911 = vrot.lane.b32.xlu0 %v5830, 48
      %v5912 = vpop.permute.xlu0 %5911
      %5917 = vrot.lane.b32.xlu0 %v5695, 64
      %v5918 = vpop.permute.xlu0 %5917
      %5919 = vrot.lane.b32.xlu0 %v5831, 64
      %v5920 = vpop.permute.xlu0 %5919
      %5925 = vrot.lane.b32.xlu0 %v5696, 80
      %v5926 = vpop.permute.xlu0 %5925
      %5927 = vrot.lane.b32.xlu0 %v5832, 80
      %v5928 = vpop.permute.xlu0 %5927
      %5933 = vrot.lane.b32.xlu0 %v5697, 96
      %v5934 = vpop.permute.xlu0 %5933
      %5935 = vrot.lane.b32.xlu0 %v5833, 96
      %v5936 = vpop.permute.xlu0 %5935
      %5941 = vrot.lane.b32.xlu0 %v5698, 112
      %v5942 = vpop.permute.xlu0 %5941
      %5943 = vrot.lane.b32.xlu0 %v5834, 112
      %v5944 = vpop.permute.xlu0 %5943
      %v5947 = vsel %vm1975, %v5419, %v5838
      %v5948 = vsel %vm1975, %v5555, %v5840
      %v5949 = vsel %vm1978, %v5947, %v5846
      %v5950 = vsel %vm1978, %v5948, %v5848
      %v5951 = vsel %vm1981, %v5949, %v5854
      %v5952 = vsel %vm1981, %v5950, %v5856
      %v5953 = vsel %vm1984, %v5951, %v5862
      %v5954 = vsel %vm1984, %v5952, %v5864
      %v5955 = vsel %vm1987, %v5953, %v5870
      %v5956 = vsel %vm1987, %v5954, %v5872
      %v5957 = vsel %vm1990, %v5955, %v5878
      %v5958 = vsel %vm1990, %v5956, %v5880
      %v5959 = vsel %vm1993, %v5957, %v5886
      %v5960 = vsel %vm1993, %v5958, %v5888
      %v5961 = vsel %vm1975, %v5691, %v5894
      %v5962 = vsel %vm1975, %v5827, %v5896
      %v5963 = vsel %vm1978, %v5961, %v5902
      %v5964 = vsel %vm1978, %v5962, %v5904
      %v5965 = vsel %vm1981, %v5963, %v5910
      %v5966 = vsel %vm1981, %v5964, %v5912
      %v5967 = vsel %vm1984, %v5965, %v5918
      %v5968 = vsel %vm1984, %v5966, %v5920
      %v5969 = vsel %vm1987, %v5967, %v5926
      %v5970 = vsel %vm1987, %v5968, %v5928
      %v5971 = vsel %vm1990, %v5969, %v5934
      %v5972 = vsel %vm1990, %v5970, %v5936
      %v5973 = vsel %vm1993, %v5971, %v5942
      %v5974 = vsel %vm1993, %v5972, %v5944
      %vm5975 = vcmask 1045504
      %v5976 = vrot.slane %v1271, 2
      %v5977 = vrot.slane %v1272, 2
      %v5978 = vsel %vm5975, %v5976, %v5977
      %v5979 = vrot.slane %v1273, 2
      %v5980 = vsel %vm5975, %v5977, %v5979
      %v5981 = vrot.slane %v1274, 2
      %v5982 = vrot.slane %v1275, 2
      %v5983 = vsel %vm5975, %v5981, %v5982
      %v5984 = vrot.slane %v1276, 2
      %v5985 = vsel %vm5975, %v5982, %v5984
      %v5986 = vrot.slane %v1277, 2
      %v5987 = vrot.slane %v1278, 2
      %v5988 = vsel %vm5975, %v5986, %v5987
      %v5989 = vrot.slane %v1279, 2
      %v5990 = vsel %vm5975, %v5987, %v5989
      %v5991 = vrot.slane %v1280, 2
      %v5992 = vrot.slane %v1281, 2
      %v5993 = vsel %vm5975, %v5991, %v5992
      %v5994 = vrot.slane %v1282, 2
      %v5995 = vsel %vm5975, %v5992, %v5994
      %v5996 = vrot.slane %v1283, 2
      %v5997 = vrot.slane %v1284, 2
      %v5998 = vsel %vm5975, %v5996, %v5997
      %v5999 = vrot.slane %v1285, 2
      %v6000 = vsel %vm5975, %v5997, %v5999
      %v6001 = vrot.slane %v1286, 2
      %v6002 = vrot.slane %v1287, 2
      %v6003 = vsel %vm5975, %v6001, %v6002
      %v6004 = vrot.slane %v1288, 2
      %v6005 = vsel %vm5975, %v6002, %v6004
      %v6006 = vrot.slane %v1289, 2
      %v6007 = vrot.slane %v1290, 2
      %v6008 = vsel %vm5975, %v6006, %v6007
      %v6009 = vrot.slane %v1291, 2
      %v6010 = vsel %vm5975, %v6007, %v6009
      %v6011 = vrot.slane %v1292, 2
      %v6012 = vrot.slane %v1293, 2
      %v6013 = vsel %vm5975, %v6011, %v6012
      %v6014 = vrot.slane %v1294, 2
      %v6015 = vsel %vm5975, %v6012, %v6014
      %v6016 = vrot.slane %v1295, 2
      %v6017 = vrot.slane %v1296, 2
      %v6018 = vsel %vm5975, %v6016, %v6017
      %v6019 = vrot.slane %v1297, 2
      %v6020 = vsel %vm5975, %v6017, %v6019
      %v6021 = vrot.slane %v1298, 2
      %v6022 = vrot.slane %v1299, 2
      %v6023 = vsel %vm5975, %v6021, %v6022
      %v6024 = vrot.slane %v1300, 2
      %v6025 = vsel %vm5975, %v6022, %v6024
      %v6026 = vrot.slane %v1301, 2
      %v6027 = vrot.slane %v1302, 2
      %v6028 = vsel %vm5975, %v6026, %v6027
      %v6029 = vrot.slane %v1303, 2
      %v6030 = vsel %vm5975, %v6027, %v6029
      %v6031 = vrot.slane %v1304, 2
      %v6032 = vrot.slane %v1305, 2
      %v6033 = vsel %vm5975, %v6031, %v6032
      %v6034 = vrot.slane %v1306, 2
      %v6035 = vsel %vm5975, %v6032, %v6034
      %v6036 = vrot.slane %v1307, 2
      %v6037 = vrot.slane %v1308, 2
      %v6038 = vsel %vm5975, %v6036, %v6037
      %v6039 = vrot.slane %v1309, 2
      %v6040 = vsel %vm5975, %v6037, %v6039
      %v6041 = vrot.slane %v1310, 2
      %v6042 = vrot.slane %v1311, 2
      %v6043 = vsel %vm5975, %v6041, %v6042
      %v6044 = vrot.slane %v1312, 2
      %v6045 = vsel %vm5975, %v6042, %v6044
      %v6046 = vrot.slane %v1313, 2
      %v6047 = vrot.slane %v1314, 2
      %v6048 = vsel %vm5975, %v6046, %v6047
      %v6049 = vrot.slane %v1315, 2
      %v6050 = vsel %vm5975, %v6047, %v6049
      %v6051 = vrot.slane %v1316, 2
      %v6052 = vrot.slane %v1317, 2
      %v6053 = vsel %vm5975, %v6051, %v6052
      %v6054 = vrot.slane %v1318, 2
      %v6055 = vsel %vm5975, %v6052, %v6054
      %v6088 = vcombine.low %v5978, %v5988
      %v6089 = vcombine.high %v5978, %v5988
      %v6091 = vunpack.c.l.s4 1983009808
      %v6092 = vunpack.c.0.s8 %v6091
      %v6093 = vlaneseq
      %v6094 = vshrl.u32 %v6093, 7
      %v6095 = vsub.s32 %v6092, %v6094
      %v6096 = vrot.slane %v6088, %v6095
      %v6098 = vunpack.c.l.s4 1983009808
      %v6099 = vunpack.c.0.s8 %v6098
      %v6100 = vlaneseq
      %v6101 = vshrl.u32 %v6100, 7
      %v6102 = vsub.s32 %v6099, %v6101
      %v6103 = vrot.slane %v6089, %v6102
      %v6104 = vcombine.low %v5983, %v5993
      %v6105 = vcombine.high %v5983, %v5993
      %v6107 = vunpack.c.l.s4 1983009808
      %v6108 = vunpack.c.0.s8 %v6107
      %v6109 = vlaneseq
      %v6110 = vshrl.u32 %v6109, 7
      %v6111 = vsub.s32 %v6108, %v6110
      %v6112 = vrot.slane %v6104, %v6111
      %v6114 = vunpack.c.l.s4 1983009808
      %v6115 = vunpack.c.0.s8 %v6114
      %v6116 = vlaneseq
      %v6117 = vshrl.u32 %v6116, 7
      %v6118 = vsub.s32 %v6115, %v6117
      %v6119 = vrot.slane %v6105, %v6118
      %v6120 = vcombine.low %v5998, %v6008
      %v6121 = vcombine.high %v5998, %v6008
      %v6123 = vunpack.c.l.s4 1983009808
      %v6124 = vunpack.c.0.s8 %v6123
      %v6125 = vlaneseq
      %v6126 = vshrl.u32 %v6125, 7
      %v6127 = vsub.s32 %v6124, %v6126
      %v6128 = vrot.slane %v6120, %v6127
      %v6130 = vunpack.c.l.s4 1983009808
      %v6131 = vunpack.c.0.s8 %v6130
      %v6132 = vlaneseq
      %v6133 = vshrl.u32 %v6132, 7
      %v6134 = vsub.s32 %v6131, %v6133
      %v6135 = vrot.slane %v6121, %v6134
      %v6136 = vcombine.low %v6003, %v6013
      %v6137 = vcombine.high %v6003, %v6013
      %v6139 = vunpack.c.l.s4 1983009808
      %v6140 = vunpack.c.0.s8 %v6139
      %v6141 = vlaneseq
      %v6142 = vshrl.u32 %v6141, 7
      %v6143 = vsub.s32 %v6140, %v6142
      %v6144 = vrot.slane %v6136, %v6143
      %v6146 = vunpack.c.l.s4 1983009808
      %v6147 = vunpack.c.0.s8 %v6146
      %v6148 = vlaneseq
      %v6149 = vshrl.u32 %v6148, 7
      %v6150 = vsub.s32 %v6147, %v6149
      %v6151 = vrot.slane %v6137, %v6150
      %v6152 = vcombine.low %v6096, %v6112
      %v6153 = vcombine.high %v6096, %v6112
      %v6155 = vunpack.c.l.s4 1934713408
      %v6156 = vunpack.c.0.s8 %v6155
      %v6157 = vlaneseq
      %v6158 = vshrl.u32 %v6157, 7
      %v6159 = vsub.s32 %v6156, %v6158
      %v6160 = vrot.slane %v6152, %v6159
      %v6162 = vunpack.c.l.s4 1934713408
      %v6163 = vunpack.c.0.s8 %v6162
      %v6164 = vlaneseq
      %v6165 = vshrl.u32 %v6164, 7
      %v6166 = vsub.s32 %v6163, %v6165
      %v6167 = vrot.slane %v6153, %v6166
      %v6168 = vcombine.low %v6103, %v6119
      %v6169 = vcombine.high %v6103, %v6119
      %v6171 = vunpack.c.l.s4 1934713408
      %v6172 = vunpack.c.0.s8 %v6171
      %v6173 = vlaneseq
      %v6174 = vshrl.u32 %v6173, 7
      %v6175 = vsub.s32 %v6172, %v6174
      %v6176 = vrot.slane %v6168, %v6175
      %v6178 = vunpack.c.l.s4 1934713408
      %v6179 = vunpack.c.0.s8 %v6178
      %v6180 = vlaneseq
      %v6181 = vshrl.u32 %v6180, 7
      %v6182 = vsub.s32 %v6179, %v6181
      %v6183 = vrot.slane %v6169, %v6182
      %v6184 = vcombine.low %v6128, %v6144
      %v6185 = vcombine.high %v6128, %v6144
      %v6187 = vunpack.c.l.s4 1934713408
      %v6188 = vunpack.c.0.s8 %v6187
      %v6189 = vlaneseq
      %v6190 = vshrl.u32 %v6189, 7
      %v6191 = vsub.s32 %v6188, %v6190
      %v6192 = vrot.slane %v6184, %v6191
      %v6194 = vunpack.c.l.s4 1934713408
      %v6195 = vunpack.c.0.s8 %v6194
      %v6196 = vlaneseq
      %v6197 = vshrl.u32 %v6196, 7
      %v6198 = vsub.s32 %v6195, %v6197
      %v6199 = vrot.slane %v6185, %v6198
      %v6200 = vcombine.low %v6135, %v6151
      %v6201 = vcombine.high %v6135, %v6151
      %v6203 = vunpack.c.l.s4 1934713408
      %v6204 = vunpack.c.0.s8 %v6203
      %v6205 = vlaneseq
      %v6206 = vshrl.u32 %v6205, 7
      %v6207 = vsub.s32 %v6204, %v6206
      %v6208 = vrot.slane %v6200, %v6207
      %v6210 = vunpack.c.l.s4 1934713408
      %v6211 = vunpack.c.0.s8 %v6210
      %v6212 = vlaneseq
      %v6213 = vshrl.u32 %v6212, 7
      %v6214 = vsub.s32 %v6211, %v6213
      %v6215 = vrot.slane %v6201, %v6214
      %v6216 = vcombine.low %v6160, %v6192
      %v6217 = vcombine.high %v6160, %v6192
      %v6218 = vcombine.low %v6167, %v6199
      %v6219 = vcombine.high %v6167, %v6199
      %v6220 = vcombine.low %v6176, %v6208
      %v6221 = vcombine.high %v6176, %v6208
      %v6222 = vcombine.low %v6183, %v6215
      %v6223 = vcombine.high %v6183, %v6215
      %v6224 = vcombine.low %v6018, %v6028
      %v6225 = vcombine.high %v6018, %v6028
      %v6227 = vunpack.c.l.s4 1983009808
      %v6228 = vunpack.c.0.s8 %v6227
      %v6229 = vlaneseq
      %v6230 = vshrl.u32 %v6229, 7
      %v6231 = vsub.s32 %v6228, %v6230
      %v6232 = vrot.slane %v6224, %v6231
      %v6234 = vunpack.c.l.s4 1983009808
      %v6235 = vunpack.c.0.s8 %v6234
      %v6236 = vlaneseq
      %v6237 = vshrl.u32 %v6236, 7
      %v6238 = vsub.s32 %v6235, %v6237
      %v6239 = vrot.slane %v6225, %v6238
      %v6240 = vcombine.low %v6023, %v6033
      %v6241 = vcombine.high %v6023, %v6033
      %v6243 = vunpack.c.l.s4 1983009808
      %v6244 = vunpack.c.0.s8 %v6243
      %v6245 = vlaneseq
      %v6246 = vshrl.u32 %v6245, 7
      %v6247 = vsub.s32 %v6244, %v6246
      %v6248 = vrot.slane %v6240, %v6247
      %v6250 = vunpack.c.l.s4 1983009808
      %v6251 = vunpack.c.0.s8 %v6250
      %v6252 = vlaneseq
      %v6253 = vshrl.u32 %v6252, 7
      %v6254 = vsub.s32 %v6251, %v6253
      %v6255 = vrot.slane %v6241, %v6254
      %v6256 = vcombine.low %v6038, %v6048
      %v6257 = vcombine.high %v6038, %v6048
      %v6259 = vunpack.c.l.s4 1983009808
      %v6260 = vunpack.c.0.s8 %v6259
      %v6261 = vlaneseq
      %v6262 = vshrl.u32 %v6261, 7
      %v6263 = vsub.s32 %v6260, %v6262
      %v6264 = vrot.slane %v6256, %v6263
      %v6266 = vunpack.c.l.s4 1983009808
      %v6267 = vunpack.c.0.s8 %v6266
      %v6268 = vlaneseq
      %v6269 = vshrl.u32 %v6268, 7
      %v6270 = vsub.s32 %v6267, %v6269
      %v6271 = vrot.slane %v6257, %v6270
      %v6272 = vcombine.low %v6043, %v6053
      %v6273 = vcombine.high %v6043, %v6053
      %v6275 = vunpack.c.l.s4 1983009808
      %v6276 = vunpack.c.0.s8 %v6275
      %v6277 = vlaneseq
      %v6278 = vshrl.u32 %v6277, 7
      %v6279 = vsub.s32 %v6276, %v6278
      %v6280 = vrot.slane %v6272, %v6279
      %v6282 = vunpack.c.l.s4 1983009808
      %v6283 = vunpack.c.0.s8 %v6282
      %v6284 = vlaneseq
      %v6285 = vshrl.u32 %v6284, 7
      %v6286 = vsub.s32 %v6283, %v6285
      %v6287 = vrot.slane %v6273, %v6286
      %v6288 = vcombine.low %v6232, %v6248
      %v6289 = vcombine.high %v6232, %v6248
      %v6291 = vunpack.c.l.s4 1934713408
      %v6292 = vunpack.c.0.s8 %v6291
      %v6293 = vlaneseq
      %v6294 = vshrl.u32 %v6293, 7
      %v6295 = vsub.s32 %v6292, %v6294
      %v6296 = vrot.slane %v6288, %v6295
      %v6298 = vunpack.c.l.s4 1934713408
      %v6299 = vunpack.c.0.s8 %v6298
      %v6300 = vlaneseq
      %v6301 = vshrl.u32 %v6300, 7
      %v6302 = vsub.s32 %v6299, %v6301
      %v6303 = vrot.slane %v6289, %v6302
      %v6304 = vcombine.low %v6239, %v6255
      %v6305 = vcombine.high %v6239, %v6255
      %v6307 = vunpack.c.l.s4 1934713408
      %v6308 = vunpack.c.0.s8 %v6307
      %v6309 = vlaneseq
      %v6310 = vshrl.u32 %v6309, 7
      %v6311 = vsub.s32 %v6308, %v6310
      %v6312 = vrot.slane %v6304, %v6311
      %v6314 = vunpack.c.l.s4 1934713408
      %v6315 = vunpack.c.0.s8 %v6314
      %v6316 = vlaneseq
      %v6317 = vshrl.u32 %v6316, 7
      %v6318 = vsub.s32 %v6315, %v6317
      %v6319 = vrot.slane %v6305, %v6318
      %v6320 = vcombine.low %v6264, %v6280
      %v6321 = vcombine.high %v6264, %v6280
      %v6323 = vunpack.c.l.s4 1934713408
      %v6324 = vunpack.c.0.s8 %v6323
      %v6325 = vlaneseq
      %v6326 = vshrl.u32 %v6325, 7
      %v6327 = vsub.s32 %v6324, %v6326
      %v6328 = vrot.slane %v6320, %v6327
      %v6330 = vunpack.c.l.s4 1934713408
      %v6331 = vunpack.c.0.s8 %v6330
      %v6332 = vlaneseq
      %v6333 = vshrl.u32 %v6332, 7
      %v6334 = vsub.s32 %v6331, %v6333
      %v6335 = vrot.slane %v6321, %v6334
      %v6336 = vcombine.low %v6271, %v6287
      %v6337 = vcombine.high %v6271, %v6287
      %v6339 = vunpack.c.l.s4 1934713408
      %v6340 = vunpack.c.0.s8 %v6339
      %v6341 = vlaneseq
      %v6342 = vshrl.u32 %v6341, 7
      %v6343 = vsub.s32 %v6340, %v6342
      %v6344 = vrot.slane %v6336, %v6343
      %v6346 = vunpack.c.l.s4 1934713408
      %v6347 = vunpack.c.0.s8 %v6346
      %v6348 = vlaneseq
      %v6349 = vshrl.u32 %v6348, 7
      %v6350 = vsub.s32 %v6347, %v6349
      %v6351 = vrot.slane %v6337, %v6350
      %v6352 = vcombine.low %v6296, %v6328
      %v6353 = vcombine.high %v6296, %v6328
      %v6354 = vcombine.low %v6303, %v6335
      %v6355 = vcombine.high %v6303, %v6335
      %v6356 = vcombine.low %v6312, %v6344
      %v6357 = vcombine.high %v6312, %v6344
      %v6358 = vcombine.low %v6319, %v6351
      %v6359 = vcombine.high %v6319, %v6351
      %v6360 = vcombine.low %v5980, %v5990
      %v6361 = vcombine.high %v5980, %v5990
      %v6363 = vunpack.c.l.s4 1983009808
      %v6364 = vunpack.c.0.s8 %v6363
      %v6365 = vlaneseq
      %v6366 = vshrl.u32 %v6365, 7
      %v6367 = vsub.s32 %v6364, %v6366
      %v6368 = vrot.slane %v6360, %v6367
      %v6370 = vunpack.c.l.s4 1983009808
      %v6371 = vunpack.c.0.s8 %v6370
      %v6372 = vlaneseq
      %v6373 = vshrl.u32 %v6372, 7
      %v6374 = vsub.s32 %v6371, %v6373
      %v6375 = vrot.slane %v6361, %v6374
      %v6376 = vcombine.low %v5985, %v5995
      %v6377 = vcombine.high %v5985, %v5995
      %v6379 = vunpack.c.l.s4 1983009808
      %v6380 = vunpack.c.0.s8 %v6379
      %v6381 = vlaneseq
      %v6382 = vshrl.u32 %v6381, 7
      %v6383 = vsub.s32 %v6380, %v6382
      %v6384 = vrot.slane %v6376, %v6383
      %v6386 = vunpack.c.l.s4 1983009808
      %v6387 = vunpack.c.0.s8 %v6386
      %v6388 = vlaneseq
      %v6389 = vshrl.u32 %v6388, 7
      %v6390 = vsub.s32 %v6387, %v6389
      %v6391 = vrot.slane %v6377, %v6390
      %v6392 = vcombine.low %v6000, %v6010
      %v6393 = vcombine.high %v6000, %v6010
      %v6395 = vunpack.c.l.s4 1983009808
      %v6396 = vunpack.c.0.s8 %v6395
      %v6397 = vlaneseq
      %v6398 = vshrl.u32 %v6397, 7
      %v6399 = vsub.s32 %v6396, %v6398
      %v6400 = vrot.slane %v6392, %v6399
      %v6402 = vunpack.c.l.s4 1983009808
      %v6403 = vunpack.c.0.s8 %v6402
      %v6404 = vlaneseq
      %v6405 = vshrl.u32 %v6404, 7
      %v6406 = vsub.s32 %v6403, %v6405
      %v6407 = vrot.slane %v6393, %v6406
      %v6408 = vcombine.low %v6005, %v6015
      %v6409 = vcombine.high %v6005, %v6015
      %v6411 = vunpack.c.l.s4 1983009808
      %v6412 = vunpack.c.0.s8 %v6411
      %v6413 = vlaneseq
      %v6414 = vshrl.u32 %v6413, 7
      %v6415 = vsub.s32 %v6412, %v6414
      %v6416 = vrot.slane %v6408, %v6415
      %v6418 = vunpack.c.l.s4 1983009808
      %v6419 = vunpack.c.0.s8 %v6418
      %v6420 = vlaneseq
      %v6421 = vshrl.u32 %v6420, 7
      %v6422 = vsub.s32 %v6419, %v6421
      %v6423 = vrot.slane %v6409, %v6422
      %v6424 = vcombine.low %v6368, %v6384
      %v6425 = vcombine.high %v6368, %v6384
      %v6427 = vunpack.c.l.s4 1934713408
      %v6428 = vunpack.c.0.s8 %v6427
      %v6429 = vlaneseq
      %v6430 = vshrl.u32 %v6429, 7
      %v6431 = vsub.s32 %v6428, %v6430
      %v6432 = vrot.slane %v6424, %v6431
      %v6434 = vunpack.c.l.s4 1934713408
      %v6435 = vunpack.c.0.s8 %v6434
      %v6436 = vlaneseq
      %v6437 = vshrl.u32 %v6436, 7
      %v6438 = vsub.s32 %v6435, %v6437
      %v6439 = vrot.slane %v6425, %v6438
      %v6440 = vcombine.low %v6375, %v6391
      %v6441 = vcombine.high %v6375, %v6391
      %v6443 = vunpack.c.l.s4 1934713408
      %v6444 = vunpack.c.0.s8 %v6443
      %v6445 = vlaneseq
      %v6446 = vshrl.u32 %v6445, 7
      %v6447 = vsub.s32 %v6444, %v6446
      %v6448 = vrot.slane %v6440, %v6447
      %v6450 = vunpack.c.l.s4 1934713408
      %v6451 = vunpack.c.0.s8 %v6450
      %v6452 = vlaneseq
      %v6453 = vshrl.u32 %v6452, 7
      %v6454 = vsub.s32 %v6451, %v6453
      %v6455 = vrot.slane %v6441, %v6454
      %v6456 = vcombine.low %v6400, %v6416
      %v6457 = vcombine.high %v6400, %v6416
      %v6459 = vunpack.c.l.s4 1934713408
      %v6460 = vunpack.c.0.s8 %v6459
      %v6461 = vlaneseq
      %v6462 = vshrl.u32 %v6461, 7
      %v6463 = vsub.s32 %v6460, %v6462
      %v6464 = vrot.slane %v6456, %v6463
      %v6466 = vunpack.c.l.s4 1934713408
      %v6467 = vunpack.c.0.s8 %v6466
      %v6468 = vlaneseq
      %v6469 = vshrl.u32 %v6468, 7
      %v6470 = vsub.s32 %v6467, %v6469
      %v6471 = vrot.slane %v6457, %v6470
      %v6472 = vcombine.low %v6407, %v6423
      %v6473 = vcombine.high %v6407, %v6423
      %v6475 = vunpack.c.l.s4 1934713408
      %v6476 = vunpack.c.0.s8 %v6475
      %v6477 = vlaneseq
      %v6478 = vshrl.u32 %v6477, 7
      %v6479 = vsub.s32 %v6476, %v6478
      %v6480 = vrot.slane %v6472, %v6479
      %v6482 = vunpack.c.l.s4 1934713408
      %v6483 = vunpack.c.0.s8 %v6482
      %v6484 = vlaneseq
      %v6485 = vshrl.u32 %v6484, 7
      %v6486 = vsub.s32 %v6483, %v6485
      %v6487 = vrot.slane %v6473, %v6486
      %v6488 = vcombine.low %v6432, %v6464
      %v6489 = vcombine.high %v6432, %v6464
      %v6490 = vcombine.low %v6439, %v6471
      %v6491 = vcombine.high %v6439, %v6471
      %v6492 = vcombine.low %v6448, %v6480
      %v6493 = vcombine.high %v6448, %v6480
      %v6494 = vcombine.low %v6455, %v6487
      %v6495 = vcombine.high %v6455, %v6487
      %v6496 = vcombine.low %v6020, %v6030
      %v6497 = vcombine.high %v6020, %v6030
      %v6499 = vunpack.c.l.s4 1983009808
      %v6500 = vunpack.c.0.s8 %v6499
      %v6501 = vlaneseq
      %v6502 = vshrl.u32 %v6501, 7
      %v6503 = vsub.s32 %v6500, %v6502
      %v6504 = vrot.slane %v6496, %v6503
      %v6506 = vunpack.c.l.s4 1983009808
      %v6507 = vunpack.c.0.s8 %v6506
      %v6508 = vlaneseq
      %v6509 = vshrl.u32 %v6508, 7
      %v6510 = vsub.s32 %v6507, %v6509
      %v6511 = vrot.slane %v6497, %v6510
      %v6512 = vcombine.low %v6025, %v6035
      %v6513 = vcombine.high %v6025, %v6035
      %v6515 = vunpack.c.l.s4 1983009808
      %v6516 = vunpack.c.0.s8 %v6515
      %v6517 = vlaneseq
      %v6518 = vshrl.u32 %v6517, 7
      %v6519 = vsub.s32 %v6516, %v6518
      %v6520 = vrot.slane %v6512, %v6519
      %v6522 = vunpack.c.l.s4 1983009808
      %v6523 = vunpack.c.0.s8 %v6522
      %v6524 = vlaneseq
      %v6525 = vshrl.u32 %v6524, 7
      %v6526 = vsub.s32 %v6523, %v6525
      %v6527 = vrot.slane %v6513, %v6526
      %v6528 = vcombine.low %v6040, %v6050
      %v6529 = vcombine.high %v6040, %v6050
      %v6531 = vunpack.c.l.s4 1983009808
      %v6532 = vunpack.c.0.s8 %v6531
      %v6533 = vlaneseq
      %v6534 = vshrl.u32 %v6533, 7
      %v6535 = vsub.s32 %v6532, %v6534
      %v6536 = vrot.slane %v6528, %v6535
      %v6538 = vunpack.c.l.s4 1983009808
      %v6539 = vunpack.c.0.s8 %v6538
      %v6540 = vlaneseq
      %v6541 = vshrl.u32 %v6540, 7
      %v6542 = vsub.s32 %v6539, %v6541
      %v6543 = vrot.slane %v6529, %v6542
      %v6544 = vcombine.low %v6045, %v6055
      %v6545 = vcombine.high %v6045, %v6055
      %v6547 = vunpack.c.l.s4 1983009808
      %v6548 = vunpack.c.0.s8 %v6547
      %v6549 = vlaneseq
      %v6550 = vshrl.u32 %v6549, 7
      %v6551 = vsub.s32 %v6548, %v6550
      %v6552 = vrot.slane %v6544, %v6551
      %v6554 = vunpack.c.l.s4 1983009808
      %v6555 = vunpack.c.0.s8 %v6554
      %v6556 = vlaneseq
      %v6557 = vshrl.u32 %v6556, 7
      %v6558 = vsub.s32 %v6555, %v6557
      %v6559 = vrot.slane %v6545, %v6558
      %v6560 = vcombine.low %v6504, %v6520
      %v6561 = vcombine.high %v6504, %v6520
      %v6563 = vunpack.c.l.s4 1934713408
      %v6564 = vunpack.c.0.s8 %v6563
      %v6565 = vlaneseq
      %v6566 = vshrl.u32 %v6565, 7
      %v6567 = vsub.s32 %v6564, %v6566
      %v6568 = vrot.slane %v6560, %v6567
      %v6570 = vunpack.c.l.s4 1934713408
      %v6571 = vunpack.c.0.s8 %v6570
      %v6572 = vlaneseq
      %v6573 = vshrl.u32 %v6572, 7
      %v6574 = vsub.s32 %v6571, %v6573
      %v6575 = vrot.slane %v6561, %v6574
      %v6576 = vcombine.low %v6511, %v6527
      %v6577 = vcombine.high %v6511, %v6527
      %v6579 = vunpack.c.l.s4 1934713408
      %v6580 = vunpack.c.0.s8 %v6579
      %v6581 = vlaneseq
      %v6582 = vshrl.u32 %v6581, 7
      %v6583 = vsub.s32 %v6580, %v6582
      %v6584 = vrot.slane %v6576, %v6583
      %v6586 = vunpack.c.l.s4 1934713408
      %v6587 = vunpack.c.0.s8 %v6586
      %v6588 = vlaneseq
      %v6589 = vshrl.u32 %v6588, 7
      %v6590 = vsub.s32 %v6587, %v6589
      %v6591 = vrot.slane %v6577, %v6590
      %v6592 = vcombine.low %v6536, %v6552
      %v6593 = vcombine.high %v6536, %v6552
      %v6595 = vunpack.c.l.s4 1934713408
      %v6596 = vunpack.c.0.s8 %v6595
      %v6597 = vlaneseq
      %v6598 = vshrl.u32 %v6597, 7
      %v6599 = vsub.s32 %v6596, %v6598
      %v6600 = vrot.slane %v6592, %v6599
      %v6602 = vunpack.c.l.s4 1934713408
      %v6603 = vunpack.c.0.s8 %v6602
      %v6604 = vlaneseq
      %v6605 = vshrl.u32 %v6604, 7
      %v6606 = vsub.s32 %v6603, %v6605
      %v6607 = vrot.slane %v6593, %v6606
      %v6608 = vcombine.low %v6543, %v6559
      %v6609 = vcombine.high %v6543, %v6559
      %v6611 = vunpack.c.l.s4 1934713408
      %v6612 = vunpack.c.0.s8 %v6611
      %v6613 = vlaneseq
      %v6614 = vshrl.u32 %v6613, 7
      %v6615 = vsub.s32 %v6612, %v6614
      %v6616 = vrot.slane %v6608, %v6615
      %v6618 = vunpack.c.l.s4 1934713408
      %v6619 = vunpack.c.0.s8 %v6618
      %v6620 = vlaneseq
      %v6621 = vshrl.u32 %v6620, 7
      %v6622 = vsub.s32 %v6619, %v6621
      %v6623 = vrot.slane %v6609, %v6622
      %v6624 = vcombine.low %v6568, %v6600
      %v6625 = vcombine.high %v6568, %v6600
      %v6626 = vcombine.low %v6575, %v6607
      %v6627 = vcombine.high %v6575, %v6607
      %v6628 = vcombine.low %v6584, %v6616
      %v6629 = vcombine.high %v6584, %v6616
      %v6630 = vcombine.low %v6591, %v6623
      %v6631 = vcombine.high %v6591, %v6623
      %6634 = vrot.lane.b32.xlu0 %v6217, 16
      %v6635 = vpop.permute.xlu0 %6634
      %6636 = vrot.lane.b32.xlu0 %v6353, 16
      %v6637 = vpop.permute.xlu0 %6636
      %6642 = vrot.lane.b32.xlu0 %v6218, 32
      %v6643 = vpop.permute.xlu0 %6642
      %6644 = vrot.lane.b32.xlu0 %v6354, 32
      %v6645 = vpop.permute.xlu0 %6644
      %6650 = vrot.lane.b32.xlu0 %v6219, 48
      %v6651 = vpop.permute.xlu0 %6650
      %6652 = vrot.lane.b32.xlu0 %v6355, 48
      %v6653 = vpop.permute.xlu0 %6652
      %6658 = vrot.lane.b32.xlu0 %v6220, 64
      %v6659 = vpop.permute.xlu0 %6658
      %6660 = vrot.lane.b32.xlu0 %v6356, 64
      %v6661 = vpop.permute.xlu0 %6660
      %6666 = vrot.lane.b32.xlu0 %v6221, 80
      %v6667 = vpop.permute.xlu0 %6666
      %6668 = vrot.lane.b32.xlu0 %v6357, 80
      %v6669 = vpop.permute.xlu0 %6668
      %6674 = vrot.lane.b32.xlu0 %v6222, 96
      %v6675 = vpop.permute.xlu0 %6674
      %6676 = vrot.lane.b32.xlu0 %v6358, 96
      %v6677 = vpop.permute.xlu0 %6676
      %6682 = vrot.lane.b32.xlu0 %v6223, 112
      %v6683 = vpop.permute.xlu0 %6682
      %6684 = vrot.lane.b32.xlu0 %v6359, 112
      %v6685 = vpop.permute.xlu0 %6684
      %6690 = vrot.lane.b32.xlu0 %v6489, 16
      %v6691 = vpop.permute.xlu0 %6690
      %6692 = vrot.lane.b32.xlu0 %v6625, 16
      %v6693 = vpop.permute.xlu0 %6692
      %6698 = vrot.lane.b32.xlu0 %v6490, 32
      %v6699 = vpop.permute.xlu0 %6698
      %6700 = vrot.lane.b32.xlu0 %v6626, 32
      %v6701 = vpop.permute.xlu0 %6700
      %6706 = vrot.lane.b32.xlu0 %v6491, 48
      %v6707 = vpop.permute.xlu0 %6706
      %6708 = vrot.lane.b32.xlu0 %v6627, 48
      %v6709 = vpop.permute.xlu0 %6708
      %6714 = vrot.lane.b32.xlu0 %v6492, 64
      %v6715 = vpop.permute.xlu0 %6714
      %6716 = vrot.lane.b32.xlu0 %v6628, 64
      %v6717 = vpop.permute.xlu0 %6716
      %6722 = vrot.lane.b32.xlu0 %v6493, 80
      %v6723 = vpop.permute.xlu0 %6722
      %6724 = vrot.lane.b32.xlu0 %v6629, 80
      %v6725 = vpop.permute.xlu0 %6724
      %6730 = vrot.lane.b32.xlu0 %v6494, 96
      %v6731 = vpop.permute.xlu0 %6730
      %6732 = vrot.lane.b32.xlu0 %v6630, 96
      %v6733 = vpop.permute.xlu0 %6732
      %6738 = vrot.lane.b32.xlu0 %v6495, 112
      %v6739 = vpop.permute.xlu0 %6738
      %6740 = vrot.lane.b32.xlu0 %v6631, 112
      %v6741 = vpop.permute.xlu0 %6740
      %v6744 = vsel %vm1975, %v6216, %v6635
      %v6745 = vsel %vm1975, %v6352, %v6637
      %v6746 = vsel %vm1978, %v6744, %v6643
      %v6747 = vsel %vm1978, %v6745, %v6645
      %v6748 = vsel %vm1981, %v6746, %v6651
      %v6749 = vsel %vm1981, %v6747, %v6653
      %v6750 = vsel %vm1984, %v6748, %v6659
      %v6751 = vsel %vm1984, %v6749, %v6661
      %v6752 = vsel %vm1987, %v6750, %v6667
      %v6753 = vsel %vm1987, %v6751, %v6669
      %v6754 = vsel %vm1990, %v6752, %v6675
      %v6755 = vsel %vm1990, %v6753, %v6677
      %v6756 = vsel %vm1993, %v6754, %v6683
      %v6757 = vsel %vm1993, %v6755, %v6685
      %v6758 = vsel %vm1975, %v6488, %v6691
      %v6759 = vsel %vm1975, %v6624, %v6693
      %v6760 = vsel %vm1978, %v6758, %v6699
      %v6761 = vsel %vm1978, %v6759, %v6701
      %v6762 = vsel %vm1981, %v6760, %v6707
      %v6763 = vsel %vm1981, %v6761, %v6709
      %v6764 = vsel %vm1984, %v6762, %v6715
      %v6765 = vsel %vm1984, %v6763, %v6717
      %v6766 = vsel %vm1987, %v6764, %v6723
      %v6767 = vsel %vm1987, %v6765, %v6725
      %v6768 = vsel %vm1990, %v6766, %v6731
      %v6769 = vsel %vm1990, %v6767, %v6733
      %v6770 = vsel %vm1993, %v6768, %v6739
      %v6771 = vsel %vm1993, %v6769, %v6741
      %6772 = vrot.lane.b32.xlu0 %v5978, 127
      %v6773 = vpop.permute.xlu0 %6772
      %6774 = vrot.lane.b32.xlu0 %v5980, 127
      %v6775 = vpop.permute.xlu0 %6774
      %6776 = vrot.lane.b32.xlu0 %v5983, 127
      %v6777 = vpop.permute.xlu0 %6776
      %6778 = vrot.lane.b32.xlu0 %v5985, 127
      %v6779 = vpop.permute.xlu0 %6778
      %6780 = vrot.lane.b32.xlu0 %v5988, 127
      %v6781 = vpop.permute.xlu0 %6780
      %6782 = vrot.lane.b32.xlu0 %v5990, 127
      %v6783 = vpop.permute.xlu0 %6782
      %6784 = vrot.lane.b32.xlu0 %v5993, 127
      %v6785 = vpop.permute.xlu0 %6784
      %6786 = vrot.lane.b32.xlu0 %v5995, 127
      %v6787 = vpop.permute.xlu0 %6786
      %6788 = vrot.lane.b32.xlu0 %v5998, 127
      %v6789 = vpop.permute.xlu0 %6788
      %6790 = vrot.lane.b32.xlu0 %v6000, 127
      %v6791 = vpop.permute.xlu0 %6790
      %6792 = vrot.lane.b32.xlu0 %v6003, 127
      %v6793 = vpop.permute.xlu0 %6792
      %6794 = vrot.lane.b32.xlu0 %v6005, 127
      %v6795 = vpop.permute.xlu0 %6794
      %6796 = vrot.lane.b32.xlu0 %v6008, 127
      %v6797 = vpop.permute.xlu0 %6796
      %6798 = vrot.lane.b32.xlu0 %v6010, 127
      %v6799 = vpop.permute.xlu0 %6798
      %6800 = vrot.lane.b32.xlu0 %v6013, 127
      %v6801 = vpop.permute.xlu0 %6800
      %6802 = vrot.lane.b32.xlu0 %v6015, 127
      %v6803 = vpop.permute.xlu0 %6802
      %6804 = vrot.lane.b32.xlu0 %v6018, 127
      %v6805 = vpop.permute.xlu0 %6804
      %6806 = vrot.lane.b32.xlu0 %v6020, 127
      %v6807 = vpop.permute.xlu0 %6806
      %6808 = vrot.lane.b32.xlu0 %v6023, 127
      %v6809 = vpop.permute.xlu0 %6808
      %6810 = vrot.lane.b32.xlu0 %v6025, 127
      %v6811 = vpop.permute.xlu0 %6810
      %6812 = vrot.lane.b32.xlu0 %v6028, 127
      %v6813 = vpop.permute.xlu0 %6812
      %6814 = vrot.lane.b32.xlu0 %v6030, 127
      %v6815 = vpop.permute.xlu0 %6814
      %6816 = vrot.lane.b32.xlu0 %v6033, 127
      %v6817 = vpop.permute.xlu0 %6816
      %6818 = vrot.lane.b32.xlu0 %v6035, 127
      %v6819 = vpop.permute.xlu0 %6818
      %6820 = vrot.lane.b32.xlu0 %v6038, 127
      %v6821 = vpop.permute.xlu0 %6820
      %6822 = vrot.lane.b32.xlu0 %v6040, 127
      %v6823 = vpop.permute.xlu0 %6822
      %6824 = vrot.lane.b32.xlu0 %v6043, 127
      %v6825 = vpop.permute.xlu0 %6824
      %6826 = vrot.lane.b32.xlu0 %v6045, 127
      %v6827 = vpop.permute.xlu0 %6826
      %6828 = vrot.lane.b32.xlu0 %v6048, 127
      %v6829 = vpop.permute.xlu0 %6828
      %6830 = vrot.lane.b32.xlu0 %v6050, 127
      %v6831 = vpop.permute.xlu0 %6830
      %6832 = vrot.lane.b32.xlu0 %v6053, 127
      %v6833 = vpop.permute.xlu0 %6832
      %6834 = vrot.lane.b32.xlu0 %v6055, 127
      %v6835 = vpop.permute.xlu0 %6834
      %v6868 = vcombine.low %v6773, %v6781
      %v6869 = vcombine.high %v6773, %v6781
      %v6871 = vunpack.c.l.s4 1983009808
      %v6872 = vunpack.c.0.s8 %v6871
      %v6873 = vlaneseq
      %v6874 = vshrl.u32 %v6873, 7
      %v6875 = vsub.s32 %v6872, %v6874
      %v6876 = vrot.slane %v6868, %v6875
      %v6878 = vunpack.c.l.s4 1983009808
      %v6879 = vunpack.c.0.s8 %v6878
      %v6880 = vlaneseq
      %v6881 = vshrl.u32 %v6880, 7
      %v6882 = vsub.s32 %v6879, %v6881
      %v6883 = vrot.slane %v6869, %v6882
      %v6884 = vcombine.low %v6777, %v6785
      %v6885 = vcombine.high %v6777, %v6785
      %v6887 = vunpack.c.l.s4 1983009808
      %v6888 = vunpack.c.0.s8 %v6887
      %v6889 = vlaneseq
      %v6890 = vshrl.u32 %v6889, 7
      %v6891 = vsub.s32 %v6888, %v6890
      %v6892 = vrot.slane %v6884, %v6891
      %v6894 = vunpack.c.l.s4 1983009808
      %v6895 = vunpack.c.0.s8 %v6894
      %v6896 = vlaneseq
      %v6897 = vshrl.u32 %v6896, 7
      %v6898 = vsub.s32 %v6895, %v6897
      %v6899 = vrot.slane %v6885, %v6898
      %v6900 = vcombine.low %v6789, %v6797
      %v6901 = vcombine.high %v6789, %v6797
      %v6903 = vunpack.c.l.s4 1983009808
      %v6904 = vunpack.c.0.s8 %v6903
      %v6905 = vlaneseq
      %v6906 = vshrl.u32 %v6905, 7
      %v6907 = vsub.s32 %v6904, %v6906
      %v6908 = vrot.slane %v6900, %v6907
      %v6910 = vunpack.c.l.s4 1983009808
      %v6911 = vunpack.c.0.s8 %v6910
      %v6912 = vlaneseq
      %v6913 = vshrl.u32 %v6912, 7
      %v6914 = vsub.s32 %v6911, %v6913
      %v6915 = vrot.slane %v6901, %v6914
      %v6916 = vcombine.low %v6793, %v6801
      %v6917 = vcombine.high %v6793, %v6801
      %v6919 = vunpack.c.l.s4 1983009808
      %v6920 = vunpack.c.0.s8 %v6919
      %v6921 = vlaneseq
      %v6922 = vshrl.u32 %v6921, 7
      %v6923 = vsub.s32 %v6920, %v6922
      %v6924 = vrot.slane %v6916, %v6923
      %v6926 = vunpack.c.l.s4 1983009808
      %v6927 = vunpack.c.0.s8 %v6926
      %v6928 = vlaneseq
      %v6929 = vshrl.u32 %v6928, 7
      %v6930 = vsub.s32 %v6927, %v6929
      %v6931 = vrot.slane %v6917, %v6930
      %v6932 = vcombine.low %v6876, %v6892
      %v6933 = vcombine.high %v6876, %v6892
      %v6935 = vunpack.c.l.s4 1934713408
      %v6936 = vunpack.c.0.s8 %v6935
      %v6937 = vlaneseq
      %v6938 = vshrl.u32 %v6937, 7
      %v6939 = vsub.s32 %v6936, %v6938
      %v6940 = vrot.slane %v6932, %v6939
      %v6942 = vunpack.c.l.s4 1934713408
      %v6943 = vunpack.c.0.s8 %v6942
      %v6944 = vlaneseq
      %v6945 = vshrl.u32 %v6944, 7
      %v6946 = vsub.s32 %v6943, %v6945
      %v6947 = vrot.slane %v6933, %v6946
      %v6948 = vcombine.low %v6883, %v6899
      %v6949 = vcombine.high %v6883, %v6899
      %v6951 = vunpack.c.l.s4 1934713408
      %v6952 = vunpack.c.0.s8 %v6951
      %v6953 = vlaneseq
      %v6954 = vshrl.u32 %v6953, 7
      %v6955 = vsub.s32 %v6952, %v6954
      %v6956 = vrot.slane %v6948, %v6955
      %v6958 = vunpack.c.l.s4 1934713408
      %v6959 = vunpack.c.0.s8 %v6958
      %v6960 = vlaneseq
      %v6961 = vshrl.u32 %v6960, 7
      %v6962 = vsub.s32 %v6959, %v6961
      %v6963 = vrot.slane %v6949, %v6962
      %v6964 = vcombine.low %v6908, %v6924
      %v6965 = vcombine.high %v6908, %v6924
      %v6967 = vunpack.c.l.s4 1934713408
      %v6968 = vunpack.c.0.s8 %v6967
      %v6969 = vlaneseq
      %v6970 = vshrl.u32 %v6969, 7
      %v6971 = vsub.s32 %v6968, %v6970
      %v6972 = vrot.slane %v6964, %v6971
      %v6974 = vunpack.c.l.s4 1934713408
      %v6975 = vunpack.c.0.s8 %v6974
      %v6976 = vlaneseq
      %v6977 = vshrl.u32 %v6976, 7
      %v6978 = vsub.s32 %v6975, %v6977
      %v6979 = vrot.slane %v6965, %v6978
      %v6980 = vcombine.low %v6915, %v6931
      %v6981 = vcombine.high %v6915, %v6931
      %v6983 = vunpack.c.l.s4 1934713408
      %v6984 = vunpack.c.0.s8 %v6983
      %v6985 = vlaneseq
      %v6986 = vshrl.u32 %v6985, 7
      %v6987 = vsub.s32 %v6984, %v6986
      %v6988 = vrot.slane %v6980, %v6987
      %v6990 = vunpack.c.l.s4 1934713408
      %v6991 = vunpack.c.0.s8 %v6990
      %v6992 = vlaneseq
      %v6993 = vshrl.u32 %v6992, 7
      %v6994 = vsub.s32 %v6991, %v6993
      %v6995 = vrot.slane %v6981, %v6994
      %v6996 = vcombine.low %v6940, %v6972
      %v6997 = vcombine.high %v6940, %v6972
      %v6998 = vcombine.low %v6947, %v6979
      %v6999 = vcombine.high %v6947, %v6979
      %v7000 = vcombine.low %v6956, %v6988
      %v7001 = vcombine.high %v6956, %v6988
      %v7002 = vcombine.low %v6963, %v6995
      %v7003 = vcombine.high %v6963, %v6995
      %v7004 = vcombine.low %v6805, %v6813
      %v7005 = vcombine.high %v6805, %v6813
      %v7007 = vunpack.c.l.s4 1983009808
      %v7008 = vunpack.c.0.s8 %v7007
      %v7009 = vlaneseq
      %v7010 = vshrl.u32 %v7009, 7
      %v7011 = vsub.s32 %v7008, %v7010
      %v7012 = vrot.slane %v7004, %v7011
      %v7014 = vunpack.c.l.s4 1983009808
      %v7015 = vunpack.c.0.s8 %v7014
      %v7016 = vlaneseq
      %v7017 = vshrl.u32 %v7016, 7
      %v7018 = vsub.s32 %v7015, %v7017
      %v7019 = vrot.slane %v7005, %v7018
      %v7020 = vcombine.low %v6809, %v6817
      %v7021 = vcombine.high %v6809, %v6817
      %v7023 = vunpack.c.l.s4 1983009808
      %v7024 = vunpack.c.0.s8 %v7023
      %v7025 = vlaneseq
      %v7026 = vshrl.u32 %v7025, 7
      %v7027 = vsub.s32 %v7024, %v7026
      %v7028 = vrot.slane %v7020, %v7027
      %v7030 = vunpack.c.l.s4 1983009808
      %v7031 = vunpack.c.0.s8 %v7030
      %v7032 = vlaneseq
      %v7033 = vshrl.u32 %v7032, 7
      %v7034 = vsub.s32 %v7031, %v7033
      %v7035 = vrot.slane %v7021, %v7034
      %v7036 = vcombine.low %v6821, %v6829
      %v7037 = vcombine.high %v6821, %v6829
      %v7039 = vunpack.c.l.s4 1983009808
      %v7040 = vunpack.c.0.s8 %v7039
      %v7041 = vlaneseq
      %v7042 = vshrl.u32 %v7041, 7
      %v7043 = vsub.s32 %v7040, %v7042
      %v7044 = vrot.slane %v7036, %v7043
      %v7046 = vunpack.c.l.s4 1983009808
      %v7047 = vunpack.c.0.s8 %v7046
      %v7048 = vlaneseq
      %v7049 = vshrl.u32 %v7048, 7
      %v7050 = vsub.s32 %v7047, %v7049
      %v7051 = vrot.slane %v7037, %v7050
      %v7052 = vcombine.low %v6825, %v6833
      %v7053 = vcombine.high %v6825, %v6833
      %v7055 = vunpack.c.l.s4 1983009808
      %v7056 = vunpack.c.0.s8 %v7055
      %v7057 = vlaneseq
      %v7058 = vshrl.u32 %v7057, 7
      %v7059 = vsub.s32 %v7056, %v7058
      %v7060 = vrot.slane %v7052, %v7059
      %v7062 = vunpack.c.l.s4 1983009808
      %v7063 = vunpack.c.0.s8 %v7062
      %v7064 = vlaneseq
      %v7065 = vshrl.u32 %v7064, 7
      %v7066 = vsub.s32 %v7063, %v7065
      %v7067 = vrot.slane %v7053, %v7066
      %v7068 = vcombine.low %v7012, %v7028
      %v7069 = vcombine.high %v7012, %v7028
      %v7071 = vunpack.c.l.s4 1934713408
      %v7072 = vunpack.c.0.s8 %v7071
      %v7073 = vlaneseq
      %v7074 = vshrl.u32 %v7073, 7
      %v7075 = vsub.s32 %v7072, %v7074
      %v7076 = vrot.slane %v7068, %v7075
      %v7078 = vunpack.c.l.s4 1934713408
      %v7079 = vunpack.c.0.s8 %v7078
      %v7080 = vlaneseq
      %v7081 = vshrl.u32 %v7080, 7
      %v7082 = vsub.s32 %v7079, %v7081
      %v7083 = vrot.slane %v7069, %v7082
      %v7084 = vcombine.low %v7019, %v7035
      %v7085 = vcombine.high %v7019, %v7035
      %v7087 = vunpack.c.l.s4 1934713408
      %v7088 = vunpack.c.0.s8 %v7087
      %v7089 = vlaneseq
      %v7090 = vshrl.u32 %v7089, 7
      %v7091 = vsub.s32 %v7088, %v7090
      %v7092 = vrot.slane %v7084, %v7091
      %v7094 = vunpack.c.l.s4 1934713408
      %v7095 = vunpack.c.0.s8 %v7094
      %v7096 = vlaneseq
      %v7097 = vshrl.u32 %v7096, 7
      %v7098 = vsub.s32 %v7095, %v7097
      %v7099 = vrot.slane %v7085, %v7098
      %v7100 = vcombine.low %v7044, %v7060
      %v7101 = vcombine.high %v7044, %v7060
      %v7103 = vunpack.c.l.s4 1934713408
      %v7104 = vunpack.c.0.s8 %v7103
      %v7105 = vlaneseq
      %v7106 = vshrl.u32 %v7105, 7
      %v7107 = vsub.s32 %v7104, %v7106
      %v7108 = vrot.slane %v7100, %v7107
      %v7110 = vunpack.c.l.s4 1934713408
      %v7111 = vunpack.c.0.s8 %v7110
      %v7112 = vlaneseq
      %v7113 = vshrl.u32 %v7112, 7
      %v7114 = vsub.s32 %v7111, %v7113
      %v7115 = vrot.slane %v7101, %v7114
      %v7116 = vcombine.low %v7051, %v7067
      %v7117 = vcombine.high %v7051, %v7067
      %v7119 = vunpack.c.l.s4 1934713408
      %v7120 = vunpack.c.0.s8 %v7119
      %v7121 = vlaneseq
      %v7122 = vshrl.u32 %v7121, 7
      %v7123 = vsub.s32 %v7120, %v7122
      %v7124 = vrot.slane %v7116, %v7123
      %v7126 = vunpack.c.l.s4 1934713408
      %v7127 = vunpack.c.0.s8 %v7126
      %v7128 = vlaneseq
      %v7129 = vshrl.u32 %v7128, 7
      %v7130 = vsub.s32 %v7127, %v7129
      %v7131 = vrot.slane %v7117, %v7130
      %v7132 = vcombine.low %v7076, %v7108
      %v7133 = vcombine.high %v7076, %v7108
      %v7134 = vcombine.low %v7083, %v7115
      %v7135 = vcombine.high %v7083, %v7115
      %v7136 = vcombine.low %v7092, %v7124
      %v7137 = vcombine.high %v7092, %v7124
      %v7138 = vcombine.low %v7099, %v7131
      %v7139 = vcombine.high %v7099, %v7131
      %v7140 = vcombine.low %v6775, %v6783
      %v7141 = vcombine.high %v6775, %v6783
      %v7143 = vunpack.c.l.s4 1983009808
      %v7144 = vunpack.c.0.s8 %v7143
      %v7145 = vlaneseq
      %v7146 = vshrl.u32 %v7145, 7
      %v7147 = vsub.s32 %v7144, %v7146
      %v7148 = vrot.slane %v7140, %v7147
      %v7150 = vunpack.c.l.s4 1983009808
      %v7151 = vunpack.c.0.s8 %v7150
      %v7152 = vlaneseq
      %v7153 = vshrl.u32 %v7152, 7
      %v7154 = vsub.s32 %v7151, %v7153
      %v7155 = vrot.slane %v7141, %v7154
      %v7156 = vcombine.low %v6779, %v6787
      %v7157 = vcombine.high %v6779, %v6787
      %v7159 = vunpack.c.l.s4 1983009808
      %v7160 = vunpack.c.0.s8 %v7159
      %v7161 = vlaneseq
      %v7162 = vshrl.u32 %v7161, 7
      %v7163 = vsub.s32 %v7160, %v7162
      %v7164 = vrot.slane %v7156, %v7163
      %v7166 = vunpack.c.l.s4 1983009808
      %v7167 = vunpack.c.0.s8 %v7166
      %v7168 = vlaneseq
      %v7169 = vshrl.u32 %v7168, 7
      %v7170 = vsub.s32 %v7167, %v7169
      %v7171 = vrot.slane %v7157, %v7170
      %v7172 = vcombine.low %v6791, %v6799
      %v7173 = vcombine.high %v6791, %v6799
      %v7175 = vunpack.c.l.s4 1983009808
      %v7176 = vunpack.c.0.s8 %v7175
      %v7177 = vlaneseq
      %v7178 = vshrl.u32 %v7177, 7
      %v7179 = vsub.s32 %v7176, %v7178
      %v7180 = vrot.slane %v7172, %v7179
      %v7182 = vunpack.c.l.s4 1983009808
      %v7183 = vunpack.c.0.s8 %v7182
      %v7184 = vlaneseq
      %v7185 = vshrl.u32 %v7184, 7
      %v7186 = vsub.s32 %v7183, %v7185
      %v7187 = vrot.slane %v7173, %v7186
      %v7188 = vcombine.low %v6795, %v6803
      %v7189 = vcombine.high %v6795, %v6803
      %v7191 = vunpack.c.l.s4 1983009808
      %v7192 = vunpack.c.0.s8 %v7191
      %v7193 = vlaneseq
      %v7194 = vshrl.u32 %v7193, 7
      %v7195 = vsub.s32 %v7192, %v7194
      %v7196 = vrot.slane %v7188, %v7195
      %v7198 = vunpack.c.l.s4 1983009808
      %v7199 = vunpack.c.0.s8 %v7198
      %v7200 = vlaneseq
      %v7201 = vshrl.u32 %v7200, 7
      %v7202 = vsub.s32 %v7199, %v7201
      %v7203 = vrot.slane %v7189, %v7202
      %v7204 = vcombine.low %v7148, %v7164
      %v7205 = vcombine.high %v7148, %v7164
      %v7207 = vunpack.c.l.s4 1934713408
      %v7208 = vunpack.c.0.s8 %v7207
      %v7209 = vlaneseq
      %v7210 = vshrl.u32 %v7209, 7
      %v7211 = vsub.s32 %v7208, %v7210
      %v7212 = vrot.slane %v7204, %v7211
      %v7214 = vunpack.c.l.s4 1934713408
      %v7215 = vunpack.c.0.s8 %v7214
      %v7216 = vlaneseq
      %v7217 = vshrl.u32 %v7216, 7
      %v7218 = vsub.s32 %v7215, %v7217
      %v7219 = vrot.slane %v7205, %v7218
      %v7220 = vcombine.low %v7155, %v7171
      %v7221 = vcombine.high %v7155, %v7171
      %v7223 = vunpack.c.l.s4 1934713408
      %v7224 = vunpack.c.0.s8 %v7223
      %v7225 = vlaneseq
      %v7226 = vshrl.u32 %v7225, 7
      %v7227 = vsub.s32 %v7224, %v7226
      %v7228 = vrot.slane %v7220, %v7227
      %v7230 = vunpack.c.l.s4 1934713408
      %v7231 = vunpack.c.0.s8 %v7230
      %v7232 = vlaneseq
      %v7233 = vshrl.u32 %v7232, 7
      %v7234 = vsub.s32 %v7231, %v7233
      %v7235 = vrot.slane %v7221, %v7234
      %v7236 = vcombine.low %v7180, %v7196
      %v7237 = vcombine.high %v7180, %v7196
      %v7239 = vunpack.c.l.s4 1934713408
      %v7240 = vunpack.c.0.s8 %v7239
      %v7241 = vlaneseq
      %v7242 = vshrl.u32 %v7241, 7
      %v7243 = vsub.s32 %v7240, %v7242
      %v7244 = vrot.slane %v7236, %v7243
      %v7246 = vunpack.c.l.s4 1934713408
      %v7247 = vunpack.c.0.s8 %v7246
      %v7248 = vlaneseq
      %v7249 = vshrl.u32 %v7248, 7
      %v7250 = vsub.s32 %v7247, %v7249
      %v7251 = vrot.slane %v7237, %v7250
      %v7252 = vcombine.low %v7187, %v7203
      %v7253 = vcombine.high %v7187, %v7203
      %v7255 = vunpack.c.l.s4 1934713408
      %v7256 = vunpack.c.0.s8 %v7255
      %v7257 = vlaneseq
      %v7258 = vshrl.u32 %v7257, 7
      %v7259 = vsub.s32 %v7256, %v7258
      %v7260 = vrot.slane %v7252, %v7259
      %v7262 = vunpack.c.l.s4 1934713408
      %v7263 = vunpack.c.0.s8 %v7262
      %v7264 = vlaneseq
      %v7265 = vshrl.u32 %v7264, 7
      %v7266 = vsub.s32 %v7263, %v7265
      %v7267 = vrot.slane %v7253, %v7266
      %v7268 = vcombine.low %v7212, %v7244
      %v7269 = vcombine.high %v7212, %v7244
      %v7270 = vcombine.low %v7219, %v7251
      %v7271 = vcombine.high %v7219, %v7251
      %v7272 = vcombine.low %v7228, %v7260
      %v7273 = vcombine.high %v7228, %v7260
      %v7274 = vcombine.low %v7235, %v7267
      %v7275 = vcombine.high %v7235, %v7267
      %v7276 = vcombine.low %v6807, %v6815
      %v7277 = vcombine.high %v6807, %v6815
      %v7279 = vunpack.c.l.s4 1983009808
      %v7280 = vunpack.c.0.s8 %v7279
      %v7281 = vlaneseq
      %v7282 = vshrl.u32 %v7281, 7
      %v7283 = vsub.s32 %v7280, %v7282
      %v7284 = vrot.slane %v7276, %v7283
      %v7286 = vunpack.c.l.s4 1983009808
      %v7287 = vunpack.c.0.s8 %v7286
      %v7288 = vlaneseq
      %v7289 = vshrl.u32 %v7288, 7
      %v7290 = vsub.s32 %v7287, %v7289
      %v7291 = vrot.slane %v7277, %v7290
      %v7292 = vcombine.low %v6811, %v6819
      %v7293 = vcombine.high %v6811, %v6819
      %v7295 = vunpack.c.l.s4 1983009808
      %v7296 = vunpack.c.0.s8 %v7295
      %v7297 = vlaneseq
      %v7298 = vshrl.u32 %v7297, 7
      %v7299 = vsub.s32 %v7296, %v7298
      %v7300 = vrot.slane %v7292, %v7299
      %v7302 = vunpack.c.l.s4 1983009808
      %v7303 = vunpack.c.0.s8 %v7302
      %v7304 = vlaneseq
      %v7305 = vshrl.u32 %v7304, 7
      %v7306 = vsub.s32 %v7303, %v7305
      %v7307 = vrot.slane %v7293, %v7306
      %v7308 = vcombine.low %v6823, %v6831
      %v7309 = vcombine.high %v6823, %v6831
      %v7311 = vunpack.c.l.s4 1983009808
      %v7312 = vunpack.c.0.s8 %v7311
      %v7313 = vlaneseq
      %v7314 = vshrl.u32 %v7313, 7
      %v7315 = vsub.s32 %v7312, %v7314
      %v7316 = vrot.slane %v7308, %v7315
      %v7318 = vunpack.c.l.s4 1983009808
      %v7319 = vunpack.c.0.s8 %v7318
      %v7320 = vlaneseq
      %v7321 = vshrl.u32 %v7320, 7
      %v7322 = vsub.s32 %v7319, %v7321
      %v7323 = vrot.slane %v7309, %v7322
      %v7324 = vcombine.low %v6827, %v6835
      %v7325 = vcombine.high %v6827, %v6835
      %v7327 = vunpack.c.l.s4 1983009808
      %v7328 = vunpack.c.0.s8 %v7327
      %v7329 = vlaneseq
      %v7330 = vshrl.u32 %v7329, 7
      %v7331 = vsub.s32 %v7328, %v7330
      %v7332 = vrot.slane %v7324, %v7331
      %v7334 = vunpack.c.l.s4 1983009808
      %v7335 = vunpack.c.0.s8 %v7334
      %v7336 = vlaneseq
      %v7337 = vshrl.u32 %v7336, 7
      %v7338 = vsub.s32 %v7335, %v7337
      %v7339 = vrot.slane %v7325, %v7338
      %v7340 = vcombine.low %v7284, %v7300
      %v7341 = vcombine.high %v7284, %v7300
      %v7343 = vunpack.c.l.s4 1934713408
      %v7344 = vunpack.c.0.s8 %v7343
      %v7345 = vlaneseq
      %v7346 = vshrl.u32 %v7345, 7
      %v7347 = vsub.s32 %v7344, %v7346
      %v7348 = vrot.slane %v7340, %v7347
      %v7350 = vunpack.c.l.s4 1934713408
      %v7351 = vunpack.c.0.s8 %v7350
      %v7352 = vlaneseq
      %v7353 = vshrl.u32 %v7352, 7
      %v7354 = vsub.s32 %v7351, %v7353
      %v7355 = vrot.slane %v7341, %v7354
      %v7356 = vcombine.low %v7291, %v7307
      %v7357 = vcombine.high %v7291, %v7307
      %v7359 = vunpack.c.l.s4 1934713408
      %v7360 = vunpack.c.0.s8 %v7359
      %v7361 = vlaneseq
      %v7362 = vshrl.u32 %v7361, 7
      %v7363 = vsub.s32 %v7360, %v7362
      %v7364 = vrot.slane %v7356, %v7363
      %v7366 = vunpack.c.l.s4 1934713408
      %v7367 = vunpack.c.0.s8 %v7366
      %v7368 = vlaneseq
      %v7369 = vshrl.u32 %v7368, 7
      %v7370 = vsub.s32 %v7367, %v7369
      %v7371 = vrot.slane %v7357, %v7370
      %v7372 = vcombine.low %v7316, %v7332
      %v7373 = vcombine.high %v7316, %v7332
      %v7375 = vunpack.c.l.s4 1934713408
      %v7376 = vunpack.c.0.s8 %v7375
      %v7377 = vlaneseq
      %v7378 = vshrl.u32 %v7377, 7
      %v7379 = vsub.s32 %v7376, %v7378
      %v7380 = vrot.slane %v7372, %v7379
      %v7382 = vunpack.c.l.s4 1934713408
      %v7383 = vunpack.c.0.s8 %v7382
      %v7384 = vlaneseq
      %v7385 = vshrl.u32 %v7384, 7
      %v7386 = vsub.s32 %v7383, %v7385
      %v7387 = vrot.slane %v7373, %v7386
      %v7388 = vcombine.low %v7323, %v7339
      %v7389 = vcombine.high %v7323, %v7339
      %v7391 = vunpack.c.l.s4 1934713408
      %v7392 = vunpack.c.0.s8 %v7391
      %v7393 = vlaneseq
      %v7394 = vshrl.u32 %v7393, 7
      %v7395 = vsub.s32 %v7392, %v7394
      %v7396 = vrot.slane %v7388, %v7395
      %v7398 = vunpack.c.l.s4 1934713408
      %v7399 = vunpack.c.0.s8 %v7398
      %v7400 = vlaneseq
      %v7401 = vshrl.u32 %v7400, 7
      %v7402 = vsub.s32 %v7399, %v7401
      %v7403 = vrot.slane %v7389, %v7402
      %v7404 = vcombine.low %v7348, %v7380
      %v7405 = vcombine.high %v7348, %v7380
      %v7406 = vcombine.low %v7355, %v7387
      %v7407 = vcombine.high %v7355, %v7387
      %v7408 = vcombine.low %v7364, %v7396
      %v7409 = vcombine.high %v7364, %v7396
      %v7410 = vcombine.low %v7371, %v7403
      %v7411 = vcombine.high %v7371, %v7403
      %7414 = vrot.lane.b32.xlu0 %v6997, 16
      %v7415 = vpop.permute.xlu0 %7414
      %7416 = vrot.lane.b32.xlu0 %v7133, 16
      %v7417 = vpop.permute.xlu0 %7416
      %7422 = vrot.lane.b32.xlu0 %v6998, 32
      %v7423 = vpop.permute.xlu0 %7422
      %7424 = vrot.lane.b32.xlu0 %v7134, 32
      %v7425 = vpop.permute.xlu0 %7424
      %7430 = vrot.lane.b32.xlu0 %v6999, 48
      %v7431 = vpop.permute.xlu0 %7430
      %7432 = vrot.lane.b32.xlu0 %v7135, 48
      %v7433 = vpop.permute.xlu0 %7432
      %7438 = vrot.lane.b32.xlu0 %v7000, 64
      %v7439 = vpop.permute.xlu0 %7438
      %7440 = vrot.lane.b32.xlu0 %v7136, 64
      %v7441 = vpop.permute.xlu0 %7440
      %7446 = vrot.lane.b32.xlu0 %v7001, 80
      %v7447 = vpop.permute.xlu0 %7446
      %7448 = vrot.lane.b32.xlu0 %v7137, 80
      %v7449 = vpop.permute.xlu0 %7448
      %7454 = vrot.lane.b32.xlu0 %v7002, 96
      %v7455 = vpop.permute.xlu0 %7454
      %7456 = vrot.lane.b32.xlu0 %v7138, 96
      %v7457 = vpop.permute.xlu0 %7456
      %7462 = vrot.lane.b32.xlu0 %v7003, 112
      %v7463 = vpop.permute.xlu0 %7462
      %7464 = vrot.lane.b32.xlu0 %v7139, 112
      %v7465 = vpop.permute.xlu0 %7464
      %7470 = vrot.lane.b32.xlu0 %v7269, 16
      %v7471 = vpop.permute.xlu0 %7470
      %7472 = vrot.lane.b32.xlu0 %v7405, 16
      %v7473 = vpop.permute.xlu0 %7472
      %7478 = vrot.lane.b32.xlu0 %v7270, 32
      %v7479 = vpop.permute.xlu0 %7478
      %7480 = vrot.lane.b32.xlu0 %v7406, 32
      %v7481 = vpop.permute.xlu0 %7480
      %7486 = vrot.lane.b32.xlu0 %v7271, 48
      %v7487 = vpop.permute.xlu0 %7486
      %7488 = vrot.lane.b32.xlu0 %v7407, 48
      %v7489 = vpop.permute.xlu0 %7488
      %7494 = vrot.lane.b32.xlu0 %v7272, 64
      %v7495 = vpop.permute.xlu0 %7494
      %7496 = vrot.lane.b32.xlu0 %v7408, 64
      %v7497 = vpop.permute.xlu0 %7496
      %7502 = vrot.lane.b32.xlu0 %v7273, 80
      %v7503 = vpop.permute.xlu0 %7502
      %7504 = vrot.lane.b32.xlu0 %v7409, 80
      %v7505 = vpop.permute.xlu0 %7504
      %7510 = vrot.lane.b32.xlu0 %v7274, 96
      %v7511 = vpop.permute.xlu0 %7510
      %7512 = vrot.lane.b32.xlu0 %v7410, 96
      %v7513 = vpop.permute.xlu0 %7512
      %7518 = vrot.lane.b32.xlu0 %v7275, 112
      %v7519 = vpop.permute.xlu0 %7518
      %7520 = vrot.lane.b32.xlu0 %v7411, 112
      %v7521 = vpop.permute.xlu0 %7520
      %v7524 = vsel %vm1975, %v6996, %v7415
      %v7525 = vsel %vm1975, %v7132, %v7417
      %v7526 = vsel %vm1978, %v7524, %v7423
      %v7527 = vsel %vm1978, %v7525, %v7425
      %v7528 = vsel %vm1981, %v7526, %v7431
      %v7529 = vsel %vm1981, %v7527, %v7433
      %v7530 = vsel %vm1984, %v7528, %v7439
      %v7531 = vsel %vm1984, %v7529, %v7441
      %v7532 = vsel %vm1987, %v7530, %v7447
      %v7533 = vsel %vm1987, %v7531, %v7449
      %v7534 = vsel %vm1990, %v7532, %v7455
      %v7535 = vsel %vm1990, %v7533, %v7457
      %v7536 = vsel %vm1993, %v7534, %v7463
      %v7537 = vsel %vm1993, %v7535, %v7465
      %v7538 = vsel %vm1975, %v7268, %v7471
      %v7539 = vsel %vm1975, %v7404, %v7473
      %v7540 = vsel %vm1978, %v7538, %v7479
      %v7541 = vsel %vm1978, %v7539, %v7481
      %v7542 = vsel %vm1981, %v7540, %v7487
      %v7543 = vsel %vm1981, %v7541, %v7489
      %v7544 = vsel %vm1984, %v7542, %v7495
      %v7545 = vsel %vm1984, %v7543, %v7497
      %v7546 = vsel %vm1987, %v7544, %v7503
      %v7547 = vsel %vm1987, %v7545, %v7505
      %v7548 = vsel %vm1990, %v7546, %v7511
      %v7549 = vsel %vm1990, %v7547, %v7513
      %v7550 = vsel %vm1993, %v7548, %v7519
      %v7551 = vsel %vm1993, %v7549, %v7521
      %7552 = vrot.lane.b32.xlu0 %v5978, 126
      %v7553 = vpop.permute.xlu0 %7552
      %7554 = vrot.lane.b32.xlu0 %v5980, 126
      %v7555 = vpop.permute.xlu0 %7554
      %7556 = vrot.lane.b32.xlu0 %v5983, 126
      %v7557 = vpop.permute.xlu0 %7556
      %7558 = vrot.lane.b32.xlu0 %v5985, 126
      %v7559 = vpop.permute.xlu0 %7558
      %7560 = vrot.lane.b32.xlu0 %v5988, 126
      %v7561 = vpop.permute.xlu0 %7560
      %7562 = vrot.lane.b32.xlu0 %v5990, 126
      %v7563 = vpop.permute.xlu0 %7562
      %7564 = vrot.lane.b32.xlu0 %v5993, 126
      %v7565 = vpop.permute.xlu0 %7564
      %7566 = vrot.lane.b32.xlu0 %v5995, 126
      %v7567 = vpop.permute.xlu0 %7566
      %7568 = vrot.lane.b32.xlu0 %v5998, 126
      %v7569 = vpop.permute.xlu0 %7568
      %7570 = vrot.lane.b32.xlu0 %v6000, 126
      %v7571 = vpop.permute.xlu0 %7570
      %7572 = vrot.lane.b32.xlu0 %v6003, 126
      %v7573 = vpop.permute.xlu0 %7572
      %7574 = vrot.lane.b32.xlu0 %v6005, 126
      %v7575 = vpop.permute.xlu0 %7574
      %7576 = vrot.lane.b32.xlu0 %v6008, 126
      %v7577 = vpop.permute.xlu0 %7576
      %7578 = vrot.lane.b32.xlu0 %v6010, 126
      %v7579 = vpop.permute.xlu0 %7578
      %7580 = vrot.lane.b32.xlu0 %v6013, 126
      %v7581 = vpop.permute.xlu0 %7580
      %7582 = vrot.lane.b32.xlu0 %v6015, 126
      %v7583 = vpop.permute.xlu0 %7582
      %7584 = vrot.lane.b32.xlu0 %v6018, 126
      %v7585 = vpop.permute.xlu0 %7584
      %7586 = vrot.lane.b32.xlu0 %v6020, 126
      %v7587 = vpop.permute.xlu0 %7586
      %7588 = vrot.lane.b32.xlu0 %v6023, 126
      %v7589 = vpop.permute.xlu0 %7588
      %7590 = vrot.lane.b32.xlu0 %v6025, 126
      %v7591 = vpop.permute.xlu0 %7590
      %7592 = vrot.lane.b32.xlu0 %v6028, 126
      %v7593 = vpop.permute.xlu0 %7592
      %7594 = vrot.lane.b32.xlu0 %v6030, 126
      %v7595 = vpop.permute.xlu0 %7594
      %7596 = vrot.lane.b32.xlu0 %v6033, 126
      %v7597 = vpop.permute.xlu0 %7596
      %7598 = vrot.lane.b32.xlu0 %v6035, 126
      %v7599 = vpop.permute.xlu0 %7598
      %7600 = vrot.lane.b32.xlu0 %v6038, 126
      %v7601 = vpop.permute.xlu0 %7600
      %7602 = vrot.lane.b32.xlu0 %v6040, 126
      %v7603 = vpop.permute.xlu0 %7602
      %7604 = vrot.lane.b32.xlu0 %v6043, 126
      %v7605 = vpop.permute.xlu0 %7604
      %7606 = vrot.lane.b32.xlu0 %v6045, 126
      %v7607 = vpop.permute.xlu0 %7606
      %7608 = vrot.lane.b32.xlu0 %v6048, 126
      %v7609 = vpop.permute.xlu0 %7608
      %7610 = vrot.lane.b32.xlu0 %v6050, 126
      %v7611 = vpop.permute.xlu0 %7610
      %7612 = vrot.lane.b32.xlu0 %v6053, 126
      %v7613 = vpop.permute.xlu0 %7612
      %7614 = vrot.lane.b32.xlu0 %v6055, 126
      %v7615 = vpop.permute.xlu0 %7614
      %v7648 = vcombine.low %v7553, %v7561
      %v7649 = vcombine.high %v7553, %v7561
      %v7651 = vunpack.c.l.s4 1983009808
      %v7652 = vunpack.c.0.s8 %v7651
      %v7653 = vlaneseq
      %v7654 = vshrl.u32 %v7653, 7
      %v7655 = vsub.s32 %v7652, %v7654
      %v7656 = vrot.slane %v7648, %v7655
      %v7658 = vunpack.c.l.s4 1983009808
      %v7659 = vunpack.c.0.s8 %v7658
      %v7660 = vlaneseq
      %v7661 = vshrl.u32 %v7660, 7
      %v7662 = vsub.s32 %v7659, %v7661
      %v7663 = vrot.slane %v7649, %v7662
      %v7664 = vcombine.low %v7557, %v7565
      %v7665 = vcombine.high %v7557, %v7565
      %v7667 = vunpack.c.l.s4 1983009808
      %v7668 = vunpack.c.0.s8 %v7667
      %v7669 = vlaneseq
      %v7670 = vshrl.u32 %v7669, 7
      %v7671 = vsub.s32 %v7668, %v7670
      %v7672 = vrot.slane %v7664, %v7671
      %v7674 = vunpack.c.l.s4 1983009808
      %v7675 = vunpack.c.0.s8 %v7674
      %v7676 = vlaneseq
      %v7677 = vshrl.u32 %v7676, 7
      %v7678 = vsub.s32 %v7675, %v7677
      %v7679 = vrot.slane %v7665, %v7678
      %v7680 = vcombine.low %v7569, %v7577
      %v7681 = vcombine.high %v7569, %v7577
      %v7683 = vunpack.c.l.s4 1983009808
      %v7684 = vunpack.c.0.s8 %v7683
      %v7685 = vlaneseq
      %v7686 = vshrl.u32 %v7685, 7
      %v7687 = vsub.s32 %v7684, %v7686
      %v7688 = vrot.slane %v7680, %v7687
      %v7690 = vunpack.c.l.s4 1983009808
      %v7691 = vunpack.c.0.s8 %v7690
      %v7692 = vlaneseq
      %v7693 = vshrl.u32 %v7692, 7
      %v7694 = vsub.s32 %v7691, %v7693
      %v7695 = vrot.slane %v7681, %v7694
      %v7696 = vcombine.low %v7573, %v7581
      %v7697 = vcombine.high %v7573, %v7581
      %v7699 = vunpack.c.l.s4 1983009808
      %v7700 = vunpack.c.0.s8 %v7699
      %v7701 = vlaneseq
      %v7702 = vshrl.u32 %v7701, 7
      %v7703 = vsub.s32 %v7700, %v7702
      %v7704 = vrot.slane %v7696, %v7703
      %v7706 = vunpack.c.l.s4 1983009808
      %v7707 = vunpack.c.0.s8 %v7706
      %v7708 = vlaneseq
      %v7709 = vshrl.u32 %v7708, 7
      %v7710 = vsub.s32 %v7707, %v7709
      %v7711 = vrot.slane %v7697, %v7710
      %v7712 = vcombine.low %v7656, %v7672
      %v7713 = vcombine.high %v7656, %v7672
      %v7715 = vunpack.c.l.s4 1934713408
      %v7716 = vunpack.c.0.s8 %v7715
      %v7717 = vlaneseq
      %v7718 = vshrl.u32 %v7717, 7
      %v7719 = vsub.s32 %v7716, %v7718
      %v7720 = vrot.slane %v7712, %v7719
      %v7722 = vunpack.c.l.s4 1934713408
      %v7723 = vunpack.c.0.s8 %v7722
      %v7724 = vlaneseq
      %v7725 = vshrl.u32 %v7724, 7
      %v7726 = vsub.s32 %v7723, %v7725
      %v7727 = vrot.slane %v7713, %v7726
      %v7728 = vcombine.low %v7663, %v7679
      %v7729 = vcombine.high %v7663, %v7679
      %v7731 = vunpack.c.l.s4 1934713408
      %v7732 = vunpack.c.0.s8 %v7731
      %v7733 = vlaneseq
      %v7734 = vshrl.u32 %v7733, 7
      %v7735 = vsub.s32 %v7732, %v7734
      %v7736 = vrot.slane %v7728, %v7735
      %v7738 = vunpack.c.l.s4 1934713408
      %v7739 = vunpack.c.0.s8 %v7738
      %v7740 = vlaneseq
      %v7741 = vshrl.u32 %v7740, 7
      %v7742 = vsub.s32 %v7739, %v7741
      %v7743 = vrot.slane %v7729, %v7742
      %v7744 = vcombine.low %v7688, %v7704
      %v7745 = vcombine.high %v7688, %v7704
      %v7747 = vunpack.c.l.s4 1934713408
      %v7748 = vunpack.c.0.s8 %v7747
      %v7749 = vlaneseq
      %v7750 = vshrl.u32 %v7749, 7
      %v7751 = vsub.s32 %v7748, %v7750
      %v7752 = vrot.slane %v7744, %v7751
      %v7754 = vunpack.c.l.s4 1934713408
      %v7755 = vunpack.c.0.s8 %v7754
      %v7756 = vlaneseq
      %v7757 = vshrl.u32 %v7756, 7
      %v7758 = vsub.s32 %v7755, %v7757
      %v7759 = vrot.slane %v7745, %v7758
      %v7760 = vcombine.low %v7695, %v7711
      %v7761 = vcombine.high %v7695, %v7711
      %v7763 = vunpack.c.l.s4 1934713408
      %v7764 = vunpack.c.0.s8 %v7763
      %v7765 = vlaneseq
      %v7766 = vshrl.u32 %v7765, 7
      %v7767 = vsub.s32 %v7764, %v7766
      %v7768 = vrot.slane %v7760, %v7767
      %v7770 = vunpack.c.l.s4 1934713408
      %v7771 = vunpack.c.0.s8 %v7770
      %v7772 = vlaneseq
      %v7773 = vshrl.u32 %v7772, 7
      %v7774 = vsub.s32 %v7771, %v7773
      %v7775 = vrot.slane %v7761, %v7774
      %v7776 = vcombine.low %v7720, %v7752
      %v7777 = vcombine.high %v7720, %v7752
      %v7778 = vcombine.low %v7727, %v7759
      %v7779 = vcombine.high %v7727, %v7759
      %v7780 = vcombine.low %v7736, %v7768
      %v7781 = vcombine.high %v7736, %v7768
      %v7782 = vcombine.low %v7743, %v7775
      %v7783 = vcombine.high %v7743, %v7775
      %v7784 = vcombine.low %v7585, %v7593
      %v7785 = vcombine.high %v7585, %v7593
      %v7787 = vunpack.c.l.s4 1983009808
      %v7788 = vunpack.c.0.s8 %v7787
      %v7789 = vlaneseq
      %v7790 = vshrl.u32 %v7789, 7
      %v7791 = vsub.s32 %v7788, %v7790
      %v7792 = vrot.slane %v7784, %v7791
      %v7794 = vunpack.c.l.s4 1983009808
      %v7795 = vunpack.c.0.s8 %v7794
      %v7796 = vlaneseq
      %v7797 = vshrl.u32 %v7796, 7
      %v7798 = vsub.s32 %v7795, %v7797
      %v7799 = vrot.slane %v7785, %v7798
      %v7800 = vcombine.low %v7589, %v7597
      %v7801 = vcombine.high %v7589, %v7597
      %v7803 = vunpack.c.l.s4 1983009808
      %v7804 = vunpack.c.0.s8 %v7803
      %v7805 = vlaneseq
      %v7806 = vshrl.u32 %v7805, 7
      %v7807 = vsub.s32 %v7804, %v7806
      %v7808 = vrot.slane %v7800, %v7807
      %v7810 = vunpack.c.l.s4 1983009808
      %v7811 = vunpack.c.0.s8 %v7810
      %v7812 = vlaneseq
      %v7813 = vshrl.u32 %v7812, 7
      %v7814 = vsub.s32 %v7811, %v7813
      %v7815 = vrot.slane %v7801, %v7814
      %v7816 = vcombine.low %v7601, %v7609
      %v7817 = vcombine.high %v7601, %v7609
      %v7819 = vunpack.c.l.s4 1983009808
      %v7820 = vunpack.c.0.s8 %v7819
      %v7821 = vlaneseq
      %v7822 = vshrl.u32 %v7821, 7
      %v7823 = vsub.s32 %v7820, %v7822
      %v7824 = vrot.slane %v7816, %v7823
      %v7826 = vunpack.c.l.s4 1983009808
      %v7827 = vunpack.c.0.s8 %v7826
      %v7828 = vlaneseq
      %v7829 = vshrl.u32 %v7828, 7
      %v7830 = vsub.s32 %v7827, %v7829
      %v7831 = vrot.slane %v7817, %v7830
      %v7832 = vcombine.low %v7605, %v7613
      %v7833 = vcombine.high %v7605, %v7613
      %v7835 = vunpack.c.l.s4 1983009808
      %v7836 = vunpack.c.0.s8 %v7835
      %v7837 = vlaneseq
      %v7838 = vshrl.u32 %v7837, 7
      %v7839 = vsub.s32 %v7836, %v7838
      %v7840 = vrot.slane %v7832, %v7839
      %v7842 = vunpack.c.l.s4 1983009808
      %v7843 = vunpack.c.0.s8 %v7842
      %v7844 = vlaneseq
      %v7845 = vshrl.u32 %v7844, 7
      %v7846 = vsub.s32 %v7843, %v7845
      %v7847 = vrot.slane %v7833, %v7846
      %v7848 = vcombine.low %v7792, %v7808
      %v7849 = vcombine.high %v7792, %v7808
      %v7851 = vunpack.c.l.s4 1934713408
      %v7852 = vunpack.c.0.s8 %v7851
      %v7853 = vlaneseq
      %v7854 = vshrl.u32 %v7853, 7
      %v7855 = vsub.s32 %v7852, %v7854
      %v7856 = vrot.slane %v7848, %v7855
      %v7858 = vunpack.c.l.s4 1934713408
      %v7859 = vunpack.c.0.s8 %v7858
      %v7860 = vlaneseq
      %v7861 = vshrl.u32 %v7860, 7
      %v7862 = vsub.s32 %v7859, %v7861
      %v7863 = vrot.slane %v7849, %v7862
      %v7864 = vcombine.low %v7799, %v7815
      %v7865 = vcombine.high %v7799, %v7815
      %v7867 = vunpack.c.l.s4 1934713408
      %v7868 = vunpack.c.0.s8 %v7867
      %v7869 = vlaneseq
      %v7870 = vshrl.u32 %v7869, 7
      %v7871 = vsub.s32 %v7868, %v7870
      %v7872 = vrot.slane %v7864, %v7871
      %v7874 = vunpack.c.l.s4 1934713408
      %v7875 = vunpack.c.0.s8 %v7874
      %v7876 = vlaneseq
      %v7877 = vshrl.u32 %v7876, 7
      %v7878 = vsub.s32 %v7875, %v7877
      %v7879 = vrot.slane %v7865, %v7878
      %v7880 = vcombine.low %v7824, %v7840
      %v7881 = vcombine.high %v7824, %v7840
      %v7883 = vunpack.c.l.s4 1934713408
      %v7884 = vunpack.c.0.s8 %v7883
      %v7885 = vlaneseq
      %v7886 = vshrl.u32 %v7885, 7
      %v7887 = vsub.s32 %v7884, %v7886
      %v7888 = vrot.slane %v7880, %v7887
      %v7890 = vunpack.c.l.s4 1934713408
      %v7891 = vunpack.c.0.s8 %v7890
      %v7892 = vlaneseq
      %v7893 = vshrl.u32 %v7892, 7
      %v7894 = vsub.s32 %v7891, %v7893
      %v7895 = vrot.slane %v7881, %v7894
      %v7896 = vcombine.low %v7831, %v7847
      %v7897 = vcombine.high %v7831, %v7847
      %v7899 = vunpack.c.l.s4 1934713408
      %v7900 = vunpack.c.0.s8 %v7899
      %v7901 = vlaneseq
      %v7902 = vshrl.u32 %v7901, 7
      %v7903 = vsub.s32 %v7900, %v7902
      %v7904 = vrot.slane %v7896, %v7903
      %v7906 = vunpack.c.l.s4 1934713408
      %v7907 = vunpack.c.0.s8 %v7906
      %v7908 = vlaneseq
      %v7909 = vshrl.u32 %v7908, 7
      %v7910 = vsub.s32 %v7907, %v7909
      %v7911 = vrot.slane %v7897, %v7910
      %v7912 = vcombine.low %v7856, %v7888
      %v7913 = vcombine.high %v7856, %v7888
      %v7914 = vcombine.low %v7863, %v7895
      %v7915 = vcombine.high %v7863, %v7895
      %v7916 = vcombine.low %v7872, %v7904
      %v7917 = vcombine.high %v7872, %v7904
      %v7918 = vcombine.low %v7879, %v7911
      %v7919 = vcombine.high %v7879, %v7911
      %v7920 = vcombine.low %v7555, %v7563
      %v7921 = vcombine.high %v7555, %v7563
      %v7923 = vunpack.c.l.s4 1983009808
      %v7924 = vunpack.c.0.s8 %v7923
      %v7925 = vlaneseq
      %v7926 = vshrl.u32 %v7925, 7
      %v7927 = vsub.s32 %v7924, %v7926
      %v7928 = vrot.slane %v7920, %v7927
      %v7930 = vunpack.c.l.s4 1983009808
      %v7931 = vunpack.c.0.s8 %v7930
      %v7932 = vlaneseq
      %v7933 = vshrl.u32 %v7932, 7
      %v7934 = vsub.s32 %v7931, %v7933
      %v7935 = vrot.slane %v7921, %v7934
      %v7936 = vcombine.low %v7559, %v7567
      %v7937 = vcombine.high %v7559, %v7567
      %v7939 = vunpack.c.l.s4 1983009808
      %v7940 = vunpack.c.0.s8 %v7939
      %v7941 = vlaneseq
      %v7942 = vshrl.u32 %v7941, 7
      %v7943 = vsub.s32 %v7940, %v7942
      %v7944 = vrot.slane %v7936, %v7943
      %v7946 = vunpack.c.l.s4 1983009808
      %v7947 = vunpack.c.0.s8 %v7946
      %v7948 = vlaneseq
      %v7949 = vshrl.u32 %v7948, 7
      %v7950 = vsub.s32 %v7947, %v7949
      %v7951 = vrot.slane %v7937, %v7950
      %v7952 = vcombine.low %v7571, %v7579
      %v7953 = vcombine.high %v7571, %v7579
      %v7955 = vunpack.c.l.s4 1983009808
      %v7956 = vunpack.c.0.s8 %v7955
      %v7957 = vlaneseq
      %v7958 = vshrl.u32 %v7957, 7
      %v7959 = vsub.s32 %v7956, %v7958
      %v7960 = vrot.slane %v7952, %v7959
      %v7962 = vunpack.c.l.s4 1983009808
      %v7963 = vunpack.c.0.s8 %v7962
      %v7964 = vlaneseq
      %v7965 = vshrl.u32 %v7964, 7
      %v7966 = vsub.s32 %v7963, %v7965
      %v7967 = vrot.slane %v7953, %v7966
      %v7968 = vcombine.low %v7575, %v7583
      %v7969 = vcombine.high %v7575, %v7583
      %v7971 = vunpack.c.l.s4 1983009808
      %v7972 = vunpack.c.0.s8 %v7971
      %v7973 = vlaneseq
      %v7974 = vshrl.u32 %v7973, 7
      %v7975 = vsub.s32 %v7972, %v7974
      %v7976 = vrot.slane %v7968, %v7975
      %v7978 = vunpack.c.l.s4 1983009808
      %v7979 = vunpack.c.0.s8 %v7978
      %v7980 = vlaneseq
      %v7981 = vshrl.u32 %v7980, 7
      %v7982 = vsub.s32 %v7979, %v7981
      %v7983 = vrot.slane %v7969, %v7982
      %v7984 = vcombine.low %v7928, %v7944
      %v7985 = vcombine.high %v7928, %v7944
      %v7987 = vunpack.c.l.s4 1934713408
      %v7988 = vunpack.c.0.s8 %v7987
      %v7989 = vlaneseq
      %v7990 = vshrl.u32 %v7989, 7
      %v7991 = vsub.s32 %v7988, %v7990
      %v7992 = vrot.slane %v7984, %v7991
      %v7994 = vunpack.c.l.s4 1934713408
      %v7995 = vunpack.c.0.s8 %v7994
      %v7996 = vlaneseq
      %v7997 = vshrl.u32 %v7996, 7
      %v7998 = vsub.s32 %v7995, %v7997
      %v7999 = vrot.slane %v7985, %v7998
      %v8000 = vcombine.low %v7935, %v7951
      %v8001 = vcombine.high %v7935, %v7951
      %v8003 = vunpack.c.l.s4 1934713408
      %v8004 = vunpack.c.0.s8 %v8003
      %v8005 = vlaneseq
      %v8006 = vshrl.u32 %v8005, 7
      %v8007 = vsub.s32 %v8004, %v8006
      %v8008 = vrot.slane %v8000, %v8007
      %v8010 = vunpack.c.l.s4 1934713408
      %v8011 = vunpack.c.0.s8 %v8010
      %v8012 = vlaneseq
      %v8013 = vshrl.u32 %v8012, 7
      %v8014 = vsub.s32 %v8011, %v8013
      %v8015 = vrot.slane %v8001, %v8014
      %v8016 = vcombine.low %v7960, %v7976
      %v8017 = vcombine.high %v7960, %v7976
      %v8019 = vunpack.c.l.s4 1934713408
      %v8020 = vunpack.c.0.s8 %v8019
      %v8021 = vlaneseq
      %v8022 = vshrl.u32 %v8021, 7
      %v8023 = vsub.s32 %v8020, %v8022
      %v8024 = vrot.slane %v8016, %v8023
      %v8026 = vunpack.c.l.s4 1934713408
      %v8027 = vunpack.c.0.s8 %v8026
      %v8028 = vlaneseq
      %v8029 = vshrl.u32 %v8028, 7
      %v8030 = vsub.s32 %v8027, %v8029
      %v8031 = vrot.slane %v8017, %v8030
      %v8032 = vcombine.low %v7967, %v7983
      %v8033 = vcombine.high %v7967, %v7983
      %v8035 = vunpack.c.l.s4 1934713408
      %v8036 = vunpack.c.0.s8 %v8035
      %v8037 = vlaneseq
      %v8038 = vshrl.u32 %v8037, 7
      %v8039 = vsub.s32 %v8036, %v8038
      %v8040 = vrot.slane %v8032, %v8039
      %v8042 = vunpack.c.l.s4 1934713408
      %v8043 = vunpack.c.0.s8 %v8042
      %v8044 = vlaneseq
      %v8045 = vshrl.u32 %v8044, 7
      %v8046 = vsub.s32 %v8043, %v8045
      %v8047 = vrot.slane %v8033, %v8046
      %v8048 = vcombine.low %v7992, %v8024
      %v8049 = vcombine.high %v7992, %v8024
      %v8050 = vcombine.low %v7999, %v8031
      %v8051 = vcombine.high %v7999, %v8031
      %v8052 = vcombine.low %v8008, %v8040
      %v8053 = vcombine.high %v8008, %v8040
      %v8054 = vcombine.low %v8015, %v8047
      %v8055 = vcombine.high %v8015, %v8047
      %v8056 = vcombine.low %v7587, %v7595
      %v8057 = vcombine.high %v7587, %v7595
      %v8059 = vunpack.c.l.s4 1983009808
      %v8060 = vunpack.c.0.s8 %v8059
      %v8061 = vlaneseq
      %v8062 = vshrl.u32 %v8061, 7
      %v8063 = vsub.s32 %v8060, %v8062
      %v8064 = vrot.slane %v8056, %v8063
      %v8066 = vunpack.c.l.s4 1983009808
      %v8067 = vunpack.c.0.s8 %v8066
      %v8068 = vlaneseq
      %v8069 = vshrl.u32 %v8068, 7
      %v8070 = vsub.s32 %v8067, %v8069
      %v8071 = vrot.slane %v8057, %v8070
      %v8072 = vcombine.low %v7591, %v7599
      %v8073 = vcombine.high %v7591, %v7599
      %v8075 = vunpack.c.l.s4 1983009808
      %v8076 = vunpack.c.0.s8 %v8075
      %v8077 = vlaneseq
      %v8078 = vshrl.u32 %v8077, 7
      %v8079 = vsub.s32 %v8076, %v8078
      %v8080 = vrot.slane %v8072, %v8079
      %v8082 = vunpack.c.l.s4 1983009808
      %v8083 = vunpack.c.0.s8 %v8082
      %v8084 = vlaneseq
      %v8085 = vshrl.u32 %v8084, 7
      %v8086 = vsub.s32 %v8083, %v8085
      %v8087 = vrot.slane %v8073, %v8086
      %v8088 = vcombine.low %v7603, %v7611
      %v8089 = vcombine.high %v7603, %v7611
      %v8091 = vunpack.c.l.s4 1983009808
      %v8092 = vunpack.c.0.s8 %v8091
      %v8093 = vlaneseq
      %v8094 = vshrl.u32 %v8093, 7
      %v8095 = vsub.s32 %v8092, %v8094
      %v8096 = vrot.slane %v8088, %v8095
      %v8098 = vunpack.c.l.s4 1983009808
      %v8099 = vunpack.c.0.s8 %v8098
      %v8100 = vlaneseq
      %v8101 = vshrl.u32 %v8100, 7
      %v8102 = vsub.s32 %v8099, %v8101
      %v8103 = vrot.slane %v8089, %v8102
      %v8104 = vcombine.low %v7607, %v7615
      %v8105 = vcombine.high %v7607, %v7615
      %v8107 = vunpack.c.l.s4 1983009808
      %v8108 = vunpack.c.0.s8 %v8107
      %v8109 = vlaneseq
      %v8110 = vshrl.u32 %v8109, 7
      %v8111 = vsub.s32 %v8108, %v8110
      %v8112 = vrot.slane %v8104, %v8111
      %v8114 = vunpack.c.l.s4 1983009808
      %v8115 = vunpack.c.0.s8 %v8114
      %v8116 = vlaneseq
      %v8117 = vshrl.u32 %v8116, 7
      %v8118 = vsub.s32 %v8115, %v8117
      %v8119 = vrot.slane %v8105, %v8118
      %v8120 = vcombine.low %v8064, %v8080
      %v8121 = vcombine.high %v8064, %v8080
      %v8123 = vunpack.c.l.s4 1934713408
      %v8124 = vunpack.c.0.s8 %v8123
      %v8125 = vlaneseq
      %v8126 = vshrl.u32 %v8125, 7
      %v8127 = vsub.s32 %v8124, %v8126
      %v8128 = vrot.slane %v8120, %v8127
      %v8130 = vunpack.c.l.s4 1934713408
      %v8131 = vunpack.c.0.s8 %v8130
      %v8132 = vlaneseq
      %v8133 = vshrl.u32 %v8132, 7
      %v8134 = vsub.s32 %v8131, %v8133
      %v8135 = vrot.slane %v8121, %v8134
      %v8136 = vcombine.low %v8071, %v8087
      %v8137 = vcombine.high %v8071, %v8087
      %v8139 = vunpack.c.l.s4 1934713408
      %v8140 = vunpack.c.0.s8 %v8139
      %v8141 = vlaneseq
      %v8142 = vshrl.u32 %v8141, 7
      %v8143 = vsub.s32 %v8140, %v8142
      %v8144 = vrot.slane %v8136, %v8143
      %v8146 = vunpack.c.l.s4 1934713408
      %v8147 = vunpack.c.0.s8 %v8146
      %v8148 = vlaneseq
      %v8149 = vshrl.u32 %v8148, 7
      %v8150 = vsub.s32 %v8147, %v8149
      %v8151 = vrot.slane %v8137, %v8150
      %v8152 = vcombine.low %v8096, %v8112
      %v8153 = vcombine.high %v8096, %v8112
      %v8155 = vunpack.c.l.s4 1934713408
      %v8156 = vunpack.c.0.s8 %v8155
      %v8157 = vlaneseq
      %v8158 = vshrl.u32 %v8157, 7
      %v8159 = vsub.s32 %v8156, %v8158
      %v8160 = vrot.slane %v8152, %v8159
      %v8162 = vunpack.c.l.s4 1934713408
      %v8163 = vunpack.c.0.s8 %v8162
      %v8164 = vlaneseq
      %v8165 = vshrl.u32 %v8164, 7
      %v8166 = vsub.s32 %v8163, %v8165
      %v8167 = vrot.slane %v8153, %v8166
      %v8168 = vcombine.low %v8103, %v8119
      %v8169 = vcombine.high %v8103, %v8119
      %v8171 = vunpack.c.l.s4 1934713408
      %v8172 = vunpack.c.0.s8 %v8171
      %v8173 = vlaneseq
      %v8174 = vshrl.u32 %v8173, 7
      %v8175 = vsub.s32 %v8172, %v8174
      %v8176 = vrot.slane %v8168, %v8175
      %v8178 = vunpack.c.l.s4 1934713408
      %v8179 = vunpack.c.0.s8 %v8178
      %v8180 = vlaneseq
      %v8181 = vshrl.u32 %v8180, 7
      %v8182 = vsub.s32 %v8179, %v8181
      %v8183 = vrot.slane %v8169, %v8182
      %v8184 = vcombine.low %v8128, %v8160
      %v8185 = vcombine.high %v8128, %v8160
      %v8186 = vcombine.low %v8135, %v8167
      %v8187 = vcombine.high %v8135, %v8167
      %v8188 = vcombine.low %v8144, %v8176
      %v8189 = vcombine.high %v8144, %v8176
      %v8190 = vcombine.low %v8151, %v8183
      %v8191 = vcombine.high %v8151, %v8183
      %8194 = vrot.lane.b32.xlu0 %v7777, 16
      %v8195 = vpop.permute.xlu0 %8194
      %8196 = vrot.lane.b32.xlu0 %v7913, 16
      %v8197 = vpop.permute.xlu0 %8196
      %8202 = vrot.lane.b32.xlu0 %v7778, 32
      %v8203 = vpop.permute.xlu0 %8202
      %8204 = vrot.lane.b32.xlu0 %v7914, 32
      %v8205 = vpop.permute.xlu0 %8204
      %8210 = vrot.lane.b32.xlu0 %v7779, 48
      %v8211 = vpop.permute.xlu0 %8210
      %8212 = vrot.lane.b32.xlu0 %v7915, 48
      %v8213 = vpop.permute.xlu0 %8212
      %8218 = vrot.lane.b32.xlu0 %v7780, 64
      %v8219 = vpop.permute.xlu0 %8218
      %8220 = vrot.lane.b32.xlu0 %v7916, 64
      %v8221 = vpop.permute.xlu0 %8220
      %8226 = vrot.lane.b32.xlu0 %v7781, 80
      %v8227 = vpop.permute.xlu0 %8226
      %8228 = vrot.lane.b32.xlu0 %v7917, 80
      %v8229 = vpop.permute.xlu0 %8228
      %8234 = vrot.lane.b32.xlu0 %v7782, 96
      %v8235 = vpop.permute.xlu0 %8234
      %8236 = vrot.lane.b32.xlu0 %v7918, 96
      %v8237 = vpop.permute.xlu0 %8236
      %8242 = vrot.lane.b32.xlu0 %v7783, 112
      %v8243 = vpop.permute.xlu0 %8242
      %8244 = vrot.lane.b32.xlu0 %v7919, 112
      %v8245 = vpop.permute.xlu0 %8244
      %8250 = vrot.lane.b32.xlu0 %v8049, 16
      %v8251 = vpop.permute.xlu0 %8250
      %8252 = vrot.lane.b32.xlu0 %v8185, 16
      %v8253 = vpop.permute.xlu0 %8252
      %8258 = vrot.lane.b32.xlu0 %v8050, 32
      %v8259 = vpop.permute.xlu0 %8258
      %8260 = vrot.lane.b32.xlu0 %v8186, 32
      %v8261 = vpop.permute.xlu0 %8260
      %8266 = vrot.lane.b32.xlu0 %v8051, 48
      %v8267 = vpop.permute.xlu0 %8266
      %8268 = vrot.lane.b32.xlu0 %v8187, 48
      %v8269 = vpop.permute.xlu0 %8268
      %8274 = vrot.lane.b32.xlu0 %v8052, 64
      %v8275 = vpop.permute.xlu0 %8274
      %8276 = vrot.lane.b32.xlu0 %v8188, 64
      %v8277 = vpop.permute.xlu0 %8276
      %8282 = vrot.lane.b32.xlu0 %v8053, 80
      %v8283 = vpop.permute.xlu0 %8282
      %8284 = vrot.lane.b32.xlu0 %v8189, 80
      %v8285 = vpop.permute.xlu0 %8284
      %8290 = vrot.lane.b32.xlu0 %v8054, 96
      %v8291 = vpop.permute.xlu0 %8290
      %8292 = vrot.lane.b32.xlu0 %v8190, 96
      %v8293 = vpop.permute.xlu0 %8292
      %8298 = vrot.lane.b32.xlu0 %v8055, 112
      %v8299 = vpop.permute.xlu0 %8298
      %8300 = vrot.lane.b32.xlu0 %v8191, 112
      %v8301 = vpop.permute.xlu0 %8300
      %v8304 = vsel %vm1975, %v7776, %v8195
      %v8305 = vsel %vm1975, %v7912, %v8197
      %v8306 = vsel %vm1978, %v8304, %v8203
      %v8307 = vsel %vm1978, %v8305, %v8205
      %v8308 = vsel %vm1981, %v8306, %v8211
      %v8309 = vsel %vm1981, %v8307, %v8213
      %v8310 = vsel %vm1984, %v8308, %v8219
      %v8311 = vsel %vm1984, %v8309, %v8221
      %v8312 = vsel %vm1987, %v8310, %v8227
      %v8313 = vsel %vm1987, %v8311, %v8229
      %v8314 = vsel %vm1990, %v8312, %v8235
      %v8315 = vsel %vm1990, %v8313, %v8237
      %v8316 = vsel %vm1993, %v8314, %v8243
      %v8317 = vsel %vm1993, %v8315, %v8245
      %v8318 = vsel %vm1975, %v8048, %v8251
      %v8319 = vsel %vm1975, %v8184, %v8253
      %v8320 = vsel %vm1978, %v8318, %v8259
      %v8321 = vsel %vm1978, %v8319, %v8261
      %v8322 = vsel %vm1981, %v8320, %v8267
      %v8323 = vsel %vm1981, %v8321, %v8269
      %v8324 = vsel %vm1984, %v8322, %v8275
      %v8325 = vsel %vm1984, %v8323, %v8277
      %v8326 = vsel %vm1987, %v8324, %v8283
      %v8327 = vsel %vm1987, %v8325, %v8285
      %v8328 = vsel %vm1990, %v8326, %v8291
      %v8329 = vsel %vm1990, %v8327, %v8293
      %v8330 = vsel %vm1993, %v8328, %v8299
      %v8331 = vsel %vm1993, %v8329, %v8301
      %v8332 = vpack.c.bf16 %v1995, %v1994
      %v8333 = vpack.c.bf16 %v2009, %v2008
      %v8334 = vpack.c.bf16 %v2807, %v2806
      %v8335 = vpack.c.bf16 %v2821, %v2820
      %v8336 = vpack.c.bf16 %v3587, %v3586
      %v8337 = vpack.c.bf16 %v3601, %v3600
      %v8338 = vpack.c.bf16 %v4400, %v4399
      %v8339 = vpack.c.bf16 %v4414, %v4413
      %v8340 = vpack.c.bf16 %v5180, %v5179
      %v8341 = vpack.c.bf16 %v5194, %v5193
      %v8342 = vpack.c.bf16 %v5960, %v5959
      %v8343 = vpack.c.bf16 %v5974, %v5973
      %v8344 = vpack.c.bf16 %v6757, %v6756
      %v8345 = vpack.c.bf16 %v6771, %v6770
      %v8346 = vpack.c.bf16 %v7537, %v7536
      %v8347 = vpack.c.bf16 %v7551, %v7550
      %v8348 = vpack.c.bf16 %v8317, %v8316
      %v8349 = vpack.c.bf16 %v8331, %v8330
      %v8350 = vld [vmem:[%s3] sm:$0xff]
      %v8351 = vld [vmem:[%s3 + $0x8] sm:$0xff]
      %v8352 = vpack.c.bf16 %v8350, %v8350
      %v8353 = vpack.c.bf16 %v8351, %v8351
      %v8354 = vld [vmem:[%s4] sm:$0xff]
      %8356 = vset.pattern.permute.xlu0 0
      %8357 = vperm.xlu0 %8356, %v8354
      %v8358 = vpop.permute.xlu0 %8357
      %v8361 = vsel %vm1975, %v8353, 0
      %8363 = vmatprep.subr.bf16.mxu0 %v8333
      %8364 = vmatpush1.bf16.msra.mxu0 %v8332
      %8365 = vmatprep.subr.bf16.mxu0 %v8335
      %8366 = vmatpush1.bf16.msra.mxu0 %v8334
      %8367 = vmatprep.subr.bf16.mxu0 %v8337
      %8368 = vmatpush1.bf16.msra.mxu0 %v8336
      %8369 = vmatprep.subr.bf16.mxu0 %v8339
      %8370 = vmatpush1.bf16.msra.mxu0 %v8338
      %8371 = vmatprep.subr.bf16.mxu0 %v8341
      %8372 = vmatpush1.bf16.msra.mxu0 %v8340
      %8373 = vmatprep.subr.bf16.mxu0 %v8343
      %8374 = vmatpush1.bf16.msra.mxu0 %v8342
      %8375 = vmatprep.subr.bf16.mxu0 %v8345
      %8376 = vmatpush1.bf16.msra.mxu0 %v8344
      %8377 = vmatprep.subr.bf16.mxu0 %v8347
      %8378 = vmatpush1.bf16.msra.mxu0 %v8346
      %8379 = vmatprep.subr.bf16.mxu0 %v8349
      %8380 = vmatpush1.bf16.msra.mxu0 %v8348
      %8381 = vmatprep.subr.bf16.mxu0 0
      %8382 = vmatpush1.bf16.msra.mxu0 0
      %8383 = vmatprep.subr.bf16.mxu0 0
      %8384 = vmatpush1.bf16.msra.mxu0 0
      %8385 = vmatprep.subr.bf16.mxu0 0
      %8386 = vmatpush1.bf16.msra.mxu0 0
      %8387 = vmatprep.subr.bf16.mxu0 0
      %8388 = vmatpush1.bf16.msra.mxu0 0
      %8389 = vmatprep.subr.bf16.mxu0 0
      %8390 = vmatpush1.bf16.msra.mxu0 0
      %8391 = vmatprep.subr.bf16.mxu0 0
      %8392 = vmatpush1.bf16.msra.mxu0 0
      %8393 = vmatprep.subr.bf16.mxu0 0
      %8394 = vmatpush1.bf16.msra.mxu0 0
      %8395 = vmatprep.mubr.bf16.mxu0 %v8361
      %8396 = vmatmul.mubr.bf16.gmra.mrb[0].mxu0 %v8352
      %v8397 = vpop.f32.mrb[0].mxu0
      %v8398 = vadd.f32 %v8358, %v8397
      %v8399 = vpop.f32.mrb[0].mxu0
      %v8400 = vadd.f32 %v8358, %v8399
      %v8401 = vpop.f32.mrb[0].mxu0
      %v8402 = vpop.f32.mrb[0].mxu0
      %8403 = vdwg.mxu0
      %8404 = vst [vmem:[%s226] sm:$0xff] %v8398
      %8405 = vst [vmem:[%s226 + $0x8] sm:$0xff] %v8400
      %p8406 = scmp.lt.s32.totalorder %s16, 1
      %s8407 = scalar_select %p8406, %s16, 1
      %s8408 = smul.addr %s8407, 6
      %s8409 = sadd.s32 4, %s8408
      %s8410 = smul.addr %s8409, 8
      %s8411 = scalar_lea.vmem %s5, %s8410
      // Predicated region
      $region41: #{dense_block_forward.7} parent=39 // pred_check
        %p8412 = pneg %p144
      $region42: #{dense_block_forward.7} parent=39 // pred_check_branch
        %8414 = sbr.rel (%p8412) target = $region44
      $region43: #{dense_block_forward.7} parent=39 // pred_region
        _
      $region44: #{dense_block_forward.7} parent=39 // pred_fallthru
        _
    $region40: #{dense_block_forward.7} parent=5 // pred_fallthru
      _
    %p8415 = scmp.le.s32.totalorder 2, %s11
    // Predicated region
    $region45: #{dense_block_forward.7} parent=5 // pred_check
      %p8416 = pneg %p8415
    $region46: #{dense_block_forward.7} parent=5 // pred_check_branch
      %8418 = sbr.rel (%p8416) target = $region48
    $region47: #{dense_block_forward.7} parent=5 // pred_region
      %s8419 = ssub.s32 %s11, 2
      // Predicated region
      $region49: #{dense_block_forward.7} parent=47 // pred_check
        %p8420 = pneg %p150
      $region50: #{dense_block_forward.7} parent=47 // pred_check_branch
        %8422 = sbr.rel (%p8420) target = $region52
      $region51: #{dense_block_forward.7} parent=47 // pred_region
        %p8423 = scmp.lt.s32.totalorder %s17, 1
        %s8424 = scalar_select %p8423, %s17, 1
        %s8425 = smul.addr %s8424, 6
        %s8426 = sadd.s32 4, %s8425
        %s8427 = smul.addr %s8426, 8
        %s8428 = scalar_lea.vmem %s5, %s8427
      $region52: #{dense_block_forward.7} parent=47 // pred_fallthru
        _
    $region48: #{dense_block_forward.7} parent=5 // pred_fallthru
      _
  $region6: #{dense_block_forward.7} parent=0 // loop_footer
    %s15 = sadd.s32 1, %s11
  $region7: #{dense_block_forward.7} parent=0 // loop_footer_branch
    %10 = sbr.rel target = $region3
  $region8: #{dense_block_forward.7} parent=0 // loop_exit
    _

</llo_original>
